<compile_context>
chip_gen: v5e
topology: v5e:2x2
jax: 0.10.0
libtpu: 0.0.40
codegen_flags: <defaults>
</compile_context>

<pallas_src>
import numpy as np
import jax
import jax.numpy as jnp
from jax.experimental import pallas as pl
from jax.experimental.pallas import tpu as pltpu


# -----------------------------------------------------------------------------
# Static layer layout of the Encoder
# -----------------------------------------------------------------------------
def _encoder_layers(nic, nlc, noc, hw):
    """Returns ([(kind, cin, cout, input_spatial), ...], final_spatial)."""
    layers = []
    h = hw

    def down(cin, cout):
        nonlocal h
        layers.append(("down", cin, cout, h))
        h = (h + 2 - 4) // 2 + 1          # Conv2d(k=4, s=2, p=1)

    def res(c):
        layers.append(("res", c, c, h))

    down(nic, nlc)
    for _ in range(4):
        res(nlc)
    down(nlc, nlc)
    for _ in range(4):
        res(nlc)
    down(nlc, nlc)
    for _ in range(4):
        res(nlc)
    down(nlc, noc)
    return layers, h


# -----------------------------------------------------------------------------
# Deterministic parameter init (same shapes as the PyTorch module)
# -----------------------------------------------------------------------------
def _conv_init(key, cout, cin, k):
    kw_, kb_ = jax.random.split(key)
    fan_in = cin * k * k
    w = jax.random.normal(kw_, (cout, cin, k, k), jnp.float32) * fan_in ** -0.5
    b = jax.random.normal(kb_, (cout,), jnp.float32) * 0.01
    return {"w": w, "b": b}


def init_encoder_params(key, layers):
    raw = []
    keys = jax.random.split(key, 2 * len(layers))
    for idx, (kind, cin, cout, _) in enumerate(layers):
        k1, k2 = keys[2 * idx], keys[2 * idx + 1]
        if kind == "down":
            raw.append(_conv_init(k1, cout, cin, 4))
        else:
            raw.append((_conv_init(k1, cout, cin, 3),
                        _conv_init(k2, cout, cin, 3)))
    return raw


# -----------------------------------------------------------------------------
# Fold each conv (weights + zero-padding + stride) into ONE dense matrix acting
# on the flattened activation [c*H*W + y*W + x].  Bias stays a separate vector.
# -----------------------------------------------------------------------------
def _conv_affine_matrix(w, h, wdt, stride, pad):
    w = np.asarray(w, np.float32)
    cout, cin, kh, kw = w.shape
    ho = (h + 2 * pad - kh) // stride + 1
    wo = (wdt + 2 * pad - kw) // stride + 1
    mi, mo = h * wdt, ho * wo
    mat = np.zeros((cin * mi, cout * mo), np.float32)
    ci_off = np.arange(cin) * mi
    co_off = np.arange(cout) * mo
    for oy in range(ho):
        for ox in range(wo):
            m_out = oy * wo + ox
            for ky in range(kh):
                iy = oy * stride - pad + ky
                if iy < 0 or iy >= h:
                    continue
                for kx in range(kw):
                    ix = ox * stride - pad + kx
                    if ix < 0 or ix >= wdt:
                        continue
                    m_in = iy * wdt + ix
                    mat[(ci_off + m_in)[:, None],
                        (co_off + m_out)[None, :]] = w[:, :, ky, kx].T
    return mat, mo


def pack_encoder_params(raw, layers):
    """Returns (bf16 layer matrices, f32 bias rows, static schedule, true out dim)."""
    mats, biases, schedule = [], [], []

    def add_conv(w, b, h, stride, pad):
        mat, mo = _conv_affine_matrix(w, h, h, stride, pad)
        bias = np.repeat(np.asarray(b, np.float32), mo)[None, :]
        mats.append(mat)
        biases.append(bias)
        return len(mats) - 1

    for (kind, cin, cout, h), p in zip(layers, raw):
        if kind == "down":
            i = add_conv(p["w"], p["b"], h, 2, 1)
            schedule.append(("down", i))
        else:
            p1, p2 = p
            i = add_conv(p1["w"], p1["b"], h, 1, 1)
            j = add_conv(p2["w"], p2["b"], h, 1, 1)
            schedule.append(("res", i, j))

    out_dim = mats[-1].shape[1]
    # Zero-pad the final layer's output width to a multiple of 128 lanes so the
    # kernel's single output store is a full, unmasked, lane-dense tile.
    out_pad = -(-out_dim // 128) * 128
    if out_pad != out_dim:
        mats[-1] = np.pad(mats[-1], ((0, 0), (0, out_pad - out_dim)))
        biases[-1] = np.pad(biases[-1], ((0, 0), (0, out_pad - out_dim)))

    mats = [jnp.asarray(m, jnp.bfloat16) for m in mats]      # MXU-native weights
    biases = [jnp.asarray(b, jnp.float32) for b in biases]   # VPU adds stay f32
    return mats, biases, tuple(schedule), out_dim


# -----------------------------------------------------------------------------
# The fused Pallas kernel: whole encoder, whole batch, ONE grid step.
# -----------------------------------------------------------------------------
def _build_kernel(schedule, n_mats):
    def kernel(*refs):
        t_refs = refs[1:1 + n_mats]
        b_refs = refs[1 + n_mats:1 + 2 * n_mats]
        o_ref = refs[1 + 2 * n_mats]

        def conv(x_f32, i):
            # bf16 x bf16 MXU matmul with f32 accumulation; bias add on the VPU.
            y = jnp.dot(x_f32.astype(jnp.bfloat16), t_refs[i][...],
                        preferred_element_type=jnp.float32)
            return y + b_refs[i][...]

        a = refs[0][...]                          # (N_pad, F_in) f32 in VMEM
        for item in schedule:
            if item[0] == "down":                 # stride-2 4x4 conv
                a = conv(a, item[1])
            else:                                 # residual unit
                h = jnp.maximum(conv(a, item[1]), 0.0)     # ReLU (f32)
                a = a + conv(h, item[2])                   # residual add (f32)
        o_ref[...] = a.astype(o_ref.dtype)
    return kernel


def _vmem_padded_bytes(shape, dtype):
    r, c = shape
    itemsize = np.dtype(dtype).itemsize
    sub = 8 * (4 // itemsize)                 # f32 -> 8 sublanes, bf16 -> 16
    return (-(-r // sub) * sub) * (-(-c // 128) * 128) * itemsize


def encoder_forward(mats, biases, schedule, out_dim, x_nchw):
    """x_nchw: (N, Cin, H, W) f32 -> (N, out_dim) f32 (flattened Cout*Ho*Wo)."""
    n = x_nchw.shape[0]
    f_in = mats[0].shape[0]
    f_out_pad = mats[-1].shape[1]
    n_pad = -(-n // 8) * 8                    # full f32 sublane tile

    # Flatten NCHW (channel-major, row-major spatial) and zero-pad the batch so
    # the whole batch is one MXU-friendly (N_pad, F_in) operand.
    a0 = x_nchw.reshape(n, -1).astype(jnp.float32)
    a0 = jnp.pad(a0, ((0, n_pad - n), (0, 0)))

    # Single grid step: all layers + all batch elements in one invocation.
    in_specs = [pl.BlockSpec((n_pad, f_in), lambda i: (0, 0))]
    in_specs += [pl.BlockSpec(m.shape, lambda i: (0, 0)) for m in mats]
    in_specs += [pl.BlockSpec(b.shape, lambda i: (0, 0)) for b in biases]
    out_spec = pl.BlockSpec((n_pad, f_out_pad), lambda i: (0, 0))

    # Right-size the VMEM limit from the actual padded resident set (x2 for the
    # pipeline's buffering) plus headroom -> ~20 MiB (v7x physical is 64 MiB).
    resident = _vmem_padded_bytes((n_pad, f_in), jnp.float32)
    resident += sum(_vmem_padded_bytes(m.shape, m.dtype) for m in mats)
    resident += sum(_vmem_padded_bytes(b.shape, b.dtype) for b in biases)
    resident += _vmem_padded_bytes((n_pad, f_out_pad), jnp.float32)
    vmem_limit = 2 * int(resident) + 8 * 1024 * 1024

    flops = 2 * n_pad * sum(int(m.shape[0]) * int(m.shape[1]) for m in mats)
    bytes_accessed = int(sum(int(m.size) * m.dtype.itemsize for m in mats)
                         + sum(int(b.size) * b.dtype.itemsize for b in biases)
                         + int(a0.size) * 4 + n_pad * f_out_pad * 4)

    out = pl.pallas_call(
        _build_kernel(schedule, len(mats)),
        out_shape=jax.ShapeDtypeStruct((n_pad, f_out_pad), jnp.float32),
        grid=(1,),
        in_specs=in_specs,
        out_specs=out_spec,
        compiler_params=pltpu.CompilerParams(
            dimension_semantics=("arbitrary",),
            vmem_limit_bytes=vmem_limit),
        cost_estimate=pl.CostEstimate(
            flops=flops, transcendentals=0, bytes_accessed=bytes_accessed),
    )(a0, *mats, *biases)

    return out[:n, :out_dim]


# -----------------------------------------------------------------------------
# Pure-JAX reference (f32 lax conv) for a numerical sanity check
# -----------------------------------------------------------------------------
def _reference_forward(raw, layers, x):
    def conv(z, w, b, stride):
        y = jax.lax.conv_general_dilated(
            z, w, window_strides=(stride, stride),
            padding=((1, 1), (1, 1)),
            dimension_numbers=("NCHW", "OIHW", "NCHW"),
            precision=jax.lax.Precision.HIGHEST)
        return y + b.reshape(1, -1, 1, 1)

    for (kind, *_), p in zip(layers, raw):
        if kind == "down":
            x = conv(x, p["w"], p["b"], 2)
        else:
            p1, p2 = p
            hmid = jax.nn.relu(conv(x, p1["w"], p1["b"], 1))
            x = x + conv(hmid, p2["w"], p2["b"], 1)
    return x


# -----------------------------------------------------------------------------
if __name__ == "__main__":
    in_channels, latent_channels, out_channels = 4, 8, 8
    batch, hw = 2, 16

    key = jax.random.PRNGKey(0)
    k_params, k_input = jax.random.split(key)

    layers, final_hw = _encoder_layers(in_channels, latent_channels,
                                       out_channels, hw)
    raw_params = init_encoder_params(k_params, layers)
    mats, biases, schedule, out_dim = pack_encoder_params(raw_params, layers)

    # NCHW input consistent with the PyTorch module: (2, 4, 16, 16)
    x = jax.random.normal(k_input, (batch, in_channels, hw, hw), jnp.float32)

    fwd = jax.jit(encoder_forward, static_argnums=(2, 3))
    out_flat = fwd(mats, biases, schedule, out_dim, x)
    jax.block_until_ready(out_flat)

    # 4 stride-2 convs (k=4, p=1): 16 -> 8 -> 4 -> 2 -> 1
    out = out_flat.reshape(batch, out_channels, final_hw, final_hw)
    assert out.shape == (batch, out_channels, 1, 1), out.shape
    assert bool(jnp.all(jnp.isfinite(out)))

    # Numerical check against an f32 lax.conv reference.  Weights/activations
    # feed 28 chained bf16 MXU matmuls (f32 accumulate, f32 elementwise), so a
    # slightly looser relative tolerance than pure f32 is used.
    ref = _reference_forward(raw_params, layers, x)
    err = float(jnp.max(jnp.abs(out - ref)))
    scale = float(jnp.max(jnp.abs(ref))) + 1e-6
    assert err / scale < 7.5e-2, (err, scale)

    print("KERNEL_OK")
</pallas_src>

<mosaic_0001>
module attributes {stable_mosaic.version = 11 : i64} {
  func.func @kernel(%arg0: i32, %arg1: memref<8x1024xf32, #tpu.memory_space<vmem>>, %arg2: memref<1024x512xbf16, #tpu.memory_space<vmem>>, %arg3: memref<512x512xbf16, #tpu.memory_space<vmem>>, %arg4: memref<512x512xbf16, #tpu.memory_space<vmem>>, %arg5: memref<512x512xbf16, #tpu.memory_space<vmem>>, %arg6: memref<512x512xbf16, #tpu.memory_space<vmem>>, %arg7: memref<512x512xbf16, #tpu.memory_space<vmem>>, %arg8: memref<512x512xbf16, #tpu.memory_space<vmem>>, %arg9: memref<512x512xbf16, #tpu.memory_space<vmem>>, %arg10: memref<512x512xbf16, #tpu.memory_space<vmem>>, %arg11: memref<512x128xbf16, #tpu.memory_space<vmem>>, %arg12: memref<128x128xbf16, #tpu.memory_space<vmem>>, %arg13: memref<128x128xbf16, #tpu.memory_space<vmem>>, %arg14: memref<128x128xbf16, #tpu.memory_space<vmem>>, %arg15: memref<128x128xbf16, #tpu.memory_space<vmem>>, %arg16: memref<128x128xbf16, #tpu.memory_space<vmem>>, %arg17: memref<128x128xbf16, #tpu.memory_space<vmem>>, %arg18: memref<128x128xbf16, #tpu.memory_space<vmem>>, %arg19: memref<128x128xbf16, #tpu.memory_space<vmem>>, %arg20: memref<128x32xbf16, #tpu.memory_space<vmem>>, %arg21: memref<32x32xbf16, #tpu.memory_space<vmem>>, %arg22: memref<32x32xbf16, #tpu.memory_space<vmem>>, %arg23: memref<32x32xbf16, #tpu.memory_space<vmem>>, %arg24: memref<32x32xbf16, #tpu.memory_space<vmem>>, %arg25: memref<32x32xbf16, #tpu.memory_space<vmem>>, %arg26: memref<32x32xbf16, #tpu.memory_space<vmem>>, %arg27: memref<32x32xbf16, #tpu.memory_space<vmem>>, %arg28: memref<32x32xbf16, #tpu.memory_space<vmem>>, %arg29: memref<32x128xbf16, #tpu.memory_space<vmem>>, %arg30: memref<1x512xf32, #tpu.memory_space<vmem>>, %arg31: memref<1x512xf32, #tpu.memory_space<vmem>>, %arg32: memref<1x512xf32, #tpu.memory_space<vmem>>, %arg33: memref<1x512xf32, #tpu.memory_space<vmem>>, %arg34: memref<1x512xf32, #tpu.memory_space<vmem>>, %arg35: memref<1x512xf32, #tpu.memory_space<vmem>>, %arg36: memref<1x512xf32, #tpu.memory_space<vmem>>, %arg37: memref<1x512xf32, #tpu.memory_space<vmem>>, %arg38: memref<1x512xf32, #tpu.memory_space<vmem>>, %arg39: memref<1x128xf32, #tpu.memory_space<vmem>>, %arg40: memref<1x128xf32, #tpu.memory_space<vmem>>, %arg41: memref<1x128xf32, #tpu.memory_space<vmem>>, %arg42: memref<1x128xf32, #tpu.memory_space<vmem>>, %arg43: memref<1x128xf32, #tpu.memory_space<vmem>>, %arg44: memref<1x128xf32, #tpu.memory_space<vmem>>, %arg45: memref<1x128xf32, #tpu.memory_space<vmem>>, %arg46: memref<1x128xf32, #tpu.memory_space<vmem>>, %arg47: memref<1x128xf32, #tpu.memory_space<vmem>>, %arg48: memref<1x32xf32, #tpu.memory_space<vmem>>, %arg49: memref<1x32xf32, #tpu.memory_space<vmem>>, %arg50: memref<1x32xf32, #tpu.memory_space<vmem>>, %arg51: memref<1x32xf32, #tpu.memory_space<vmem>>, %arg52: memref<1x32xf32, #tpu.memory_space<vmem>>, %arg53: memref<1x32xf32, #tpu.memory_space<vmem>>, %arg54: memref<1x32xf32, #tpu.memory_space<vmem>>, %arg55: memref<1x32xf32, #tpu.memory_space<vmem>>, %arg56: memref<1x32xf32, #tpu.memory_space<vmem>>, %arg57: memref<1x128xf32, #tpu.memory_space<vmem>>, %arg58: memref<8x128xf32, #tpu.memory_space<vmem>>) attributes {dimension_semantics = [#tpu.dimension_semantics<arbitrary>], iteration_bounds = array<i64: 1>, scalar_prefetch = 0 : i64, scratch_operands = 0 : i64, tpu.core_type = #tpu.core_type<tc>, window_params = [{pipeline_mode = #tpu.pipeline_mode<synchronous>, transform_indices = @transform_0, window_bounds = array<i64: 8, 1024>}, {pipeline_mode = #tpu.pipeline_mode<synchronous>, transform_indices = @transform_1, window_bounds = array<i64: 1024, 512>}, {pipeline_mode = #tpu.pipeline_mode<synchronous>, transform_indices = @transform_2, window_bounds = array<i64: 512, 512>}, {pipeline_mode = #tpu.pipeline_mode<synchronous>, transform_indices = @transform_3, window_bounds = array<i64: 512, 512>}, {pipeline_mode = #tpu.pipeline_mode<synchronous>, transform_indices = @transform_4, window_bounds = array<i64: 512, 512>}, {pipeline_mode = #tpu.pipeline_mode<synchronous>, transform_indices = @transform_5, window_bounds = array<i64: 512, 512>}, {pipeline_mode = #tpu.pipeline_mode<synchronous>, transform_indices = @transform_6, window_bounds = array<i64: 512, 512>}, {pipeline_mode = #tpu.pipeline_mode<synchronous>, transform_indices = @transform_7, window_bounds = array<i64: 512, 512>}, {pipeline_mode = #tpu.pipeline_mode<synchronous>, transform_indices = @transform_8, window_bounds = array<i64: 512, 512>}, {pipeline_mode = #tpu.pipeline_mode<synchronous>, transform_indices = @transform_9, window_bounds = array<i64: 512, 512>}, {pipeline_mode = #tpu.pipeline_mode<synchronous>, transform_indices = @transform_10, window_bounds = array<i64: 512, 128>}, {pipeline_mode = #tpu.pipeline_mode<synchronous>, transform_indices = @transform_11, window_bounds = array<i64: 128, 128>}, {pipeline_mode = #tpu.pipeline_mode<synchronous>, transform_indices = @transform_12, window_bounds = array<i64: 128, 128>}, {pipeline_mode = #tpu.pipeline_mode<synchronous>, transform_indices = @transform_13, window_bounds = array<i64: 128, 128>}, {pipeline_mode = #tpu.pipeline_mode<synchronous>, transform_indices = @transform_14, window_bounds = array<i64: 128, 128>}, {pipeline_mode = #tpu.pipeline_mode<synchronous>, transform_indices = @transform_15, window_bounds = array<i64: 128, 128>}, {pipeline_mode = #tpu.pipeline_mode<synchronous>, transform_indices = @transform_16, window_bounds = array<i64: 128, 128>}, {pipeline_mode = #tpu.pipeline_mode<synchronous>, transform_indices = @transform_17, window_bounds = array<i64: 128, 128>}, {pipeline_mode = #tpu.pipeline_mode<synchronous>, transform_indices = @transform_18, window_bounds = array<i64: 128, 128>}, {pipeline_mode = #tpu.pipeline_mode<synchronous>, transform_indices = @transform_19, window_bounds = array<i64: 128, 32>}, {pipeline_mode = #tpu.pipeline_mode<synchronous>, transform_indices = @transform_20, window_bounds = array<i64: 32, 32>}, {pipeline_mode = #tpu.pipeline_mode<synchronous>, transform_indices = @transform_21, window_bounds = array<i64: 32, 32>}, {pipeline_mode = #tpu.pipeline_mode<synchronous>, transform_indices = @transform_22, window_bounds = array<i64: 32, 32>}, {pipeline_mode = #tpu.pipeline_mode<synchronous>, transform_indices = @transform_23, window_bounds = array<i64: 32, 32>}, {pipeline_mode = #tpu.pipeline_mode<synchronous>, transform_indices = @transform_24, window_bounds = array<i64: 32, 32>}, {pipeline_mode = #tpu.pipeline_mode<synchronous>, transform_indices = @transform_25, window_bounds = array<i64: 32, 32>}, {pipeline_mode = #tpu.pipeline_mode<synchronous>, transform_indices = @transform_26, window_bounds = array<i64: 32, 32>}, {pipeline_mode = #tpu.pipeline_mode<synchronous>, transform_indices = @transform_27, window_bounds = array<i64: 32, 32>}, {pipeline_mode = #tpu.pipeline_mode<synchronous>, transform_indices = @transform_28, window_bounds = array<i64: 32, 128>}, {pipeline_mode = #tpu.pipeline_mode<synchronous>, transform_indices = @transform_29, window_bounds = array<i64: 1, 512>}, {pipeline_mode = #tpu.pipeline_mode<synchronous>, transform_indices = @transform_30, window_bounds = array<i64: 1, 512>}, {pipeline_mode = #tpu.pipeline_mode<synchronous>, transform_indices = @transform_31, window_bounds = array<i64: 1, 512>}, {pipeline_mode = #tpu.pipeline_mode<synchronous>, transform_indices = @transform_32, window_bounds = array<i64: 1, 512>}, {pipeline_mode = #tpu.pipeline_mode<synchronous>, transform_indices = @transform_33, window_bounds = array<i64: 1, 512>}, {pipeline_mode = #tpu.pipeline_mode<synchronous>, transform_indices = @transform_34, window_bounds = array<i64: 1, 512>}, {pipeline_mode = #tpu.pipeline_mode<synchronous>, transform_indices = @transform_35, window_bounds = array<i64: 1, 512>}, {pipeline_mode = #tpu.pipeline_mode<synchronous>, transform_indices = @transform_36, window_bounds = array<i64: 1, 512>}, {pipeline_mode = #tpu.pipeline_mode<synchronous>, transform_indices = @transform_37, window_bounds = array<i64: 1, 512>}, {pipeline_mode = #tpu.pipeline_mode<synchronous>, transform_indices = @transform_38, window_bounds = array<i64: 1, 128>}, {pipeline_mode = #tpu.pipeline_mode<synchronous>, transform_indices = @transform_39, window_bounds = array<i64: 1, 128>}, {pipeline_mode = #tpu.pipeline_mode<synchronous>, transform_indices = @transform_40, window_bounds = array<i64: 1, 128>}, {pipeline_mode = #tpu.pipeline_mode<synchronous>, transform_indices = @transform_41, window_bounds = array<i64: 1, 128>}, {pipeline_mode = #tpu.pipeline_mode<synchronous>, transform_indices = @transform_42, window_bounds = array<i64: 1, 128>}, {pipeline_mode = #tpu.pipeline_mode<synchronous>, transform_indices = @transform_43, window_bounds = array<i64: 1, 128>}, {pipeline_mode = #tpu.pipeline_mode<synchronous>, transform_indices = @transform_44, window_bounds = array<i64: 1, 128>}, {pipeline_mode = #tpu.pipeline_mode<synchronous>, transform_indices = @transform_45, window_bounds = array<i64: 1, 128>}, {pipeline_mode = #tpu.pipeline_mode<synchronous>, transform_indices = @transform_46, window_bounds = array<i64: 1, 128>}, {pipeline_mode = #tpu.pipeline_mode<synchronous>, transform_indices = @transform_47, window_bounds = array<i64: 1, 32>}, {pipeline_mode = #tpu.pipeline_mode<synchronous>, transform_indices = @transform_48, window_bounds = array<i64: 1, 32>}, {pipeline_mode = #tpu.pipeline_mode<synchronous>, transform_indices = @transform_49, window_bounds = array<i64: 1, 32>}, {pipeline_mode = #tpu.pipeline_mode<synchronous>, transform_indices = @transform_50, window_bounds = array<i64: 1, 32>}, {pipeline_mode = #tpu.pipeline_mode<synchronous>, transform_indices = @transform_51, window_bounds = array<i64: 1, 32>}, {pipeline_mode = #tpu.pipeline_mode<synchronous>, transform_indices = @transform_52, window_bounds = array<i64: 1, 32>}, {pipeline_mode = #tpu.pipeline_mode<synchronous>, transform_indices = @transform_53, window_bounds = array<i64: 1, 32>}, {pipeline_mode = #tpu.pipeline_mode<synchronous>, transform_indices = @transform_54, window_bounds = array<i64: 1, 32>}, {pipeline_mode = #tpu.pipeline_mode<synchronous>, transform_indices = @transform_55, window_bounds = array<i64: 1, 32>}, {pipeline_mode = #tpu.pipeline_mode<synchronous>, transform_indices = @transform_56, window_bounds = array<i64: 1, 128>}, {pipeline_mode = #tpu.pipeline_mode<synchronous>, transform_indices = @transform_57, window_bounds = array<i64: 8, 128>}]} {
    %c0 = arith.constant 0 : index
    %c0_0 = arith.constant 0 : index
    %0 = vector.load %arg1[%c0, %c0_0] : memref<8x1024xf32, #tpu.memory_space<vmem>>, vector<8x1024xf32>
    %1 = arith.truncf %0 : vector<8x1024xf32> to vector<8x1024xbf16>
    %c0_1 = arith.constant 0 : index
    %c0_2 = arith.constant 0 : index
    %2 = vector.load %arg2[%c0_1, %c0_2] : memref<1024x512xbf16, #tpu.memory_space<vmem>>, vector<1024x512xbf16>
    %cst = arith.constant dense<0.000000e+00> : vector<8x512xf32>
    %3 = tpu.matmul %1, %2, %cst {dimension_numbers = #tpu.dot_dimension_numbers<[1], [0], [0], [1], [0, 0, 1, 1], [], []>} : vector<8x1024xbf16>, vector<1024x512xbf16>, vector<8x512xf32> -> vector<8x512xf32>
    %c0_3 = arith.constant 0 : index
    %c0_4 = arith.constant 0 : index
    %4 = vector.load %arg30[%c0_3, %c0_4] : memref<1x512xf32, #tpu.memory_space<vmem>>, vector<1x512xf32>
    %5 = vector.broadcast %4 : vector<1x512xf32> to vector<8x512xf32>
    %6 = arith.addf %3, %5 : vector<8x512xf32>
    %7 = arith.truncf %6 : vector<8x512xf32> to vector<8x512xbf16>
    %c0_5 = arith.constant 0 : index
    %c0_6 = arith.constant 0 : index
    %8 = vector.load %arg3[%c0_5, %c0_6] : memref<512x512xbf16, #tpu.memory_space<vmem>>, vector<512x512xbf16>
    %cst_7 = arith.constant dense<0.000000e+00> : vector<8x512xf32>
    %9 = tpu.matmul %7, %8, %cst_7 {dimension_numbers = #tpu.dot_dimension_numbers<[1], [0], [0], [1], [0, 0, 1, 1], [], []>} : vector<8x512xbf16>, vector<512x512xbf16>, vector<8x512xf32> -> vector<8x512xf32>
    %c0_8 = arith.constant 0 : index
    %c0_9 = arith.constant 0 : index
    %10 = vector.load %arg31[%c0_8, %c0_9] : memref<1x512xf32, #tpu.memory_space<vmem>>, vector<1x512xf32>
    %11 = vector.broadcast %10 : vector<1x512xf32> to vector<8x512xf32>
    %12 = arith.addf %9, %11 : vector<8x512xf32>
    %cst_10 = arith.constant 0.000000e+00 : f32
    %13 = vector.broadcast %cst_10 : f32 to vector<8x512xf32>
    %14 = arith.maximumf %12, %13 : vector<8x512xf32>
    %15 = arith.truncf %14 : vector<8x512xf32> to vector<8x512xbf16>
    %c0_11 = arith.constant 0 : index
    %c0_12 = arith.constant 0 : index
    %16 = vector.load %arg4[%c0_11, %c0_12] : memref<512x512xbf16, #tpu.memory_space<vmem>>, vector<512x512xbf16>
    %cst_13 = arith.constant dense<0.000000e+00> : vector<8x512xf32>
    %17 = tpu.matmul %15, %16, %cst_13 {dimension_numbers = #tpu.dot_dimension_numbers<[1], [0], [0], [1], [0, 0, 1, 1], [], []>} : vector<8x512xbf16>, vector<512x512xbf16>, vector<8x512xf32> -> vector<8x512xf32>
    %c0_14 = arith.constant 0 : index
    %c0_15 = arith.constant 0 : index
    %18 = vector.load %arg32[%c0_14, %c0_15] : memref<1x512xf32, #tpu.memory_space<vmem>>, vector<1x512xf32>
    %19 = vector.broadcast %18 : vector<1x512xf32> to vector<8x512xf32>
    %20 = arith.addf %17, %19 : vector<8x512xf32>
    %21 = arith.addf %6, %20 : vector<8x512xf32>
    %22 = arith.truncf %21 : vector<8x512xf32> to vector<8x512xbf16>
    %c0_16 = arith.constant 0 : index
    %c0_17 = arith.constant 0 : index
    %23 = vector.load %arg5[%c0_16, %c0_17] : memref<512x512xbf16, #tpu.memory_space<vmem>>, vector<512x512xbf16>
    %cst_18 = arith.constant dense<0.000000e+00> : vector<8x512xf32>
    %24 = tpu.matmul %22, %23, %cst_18 {dimension_numbers = #tpu.dot_dimension_numbers<[1], [0], [0], [1], [0, 0, 1, 1], [], []>} : vector<8x512xbf16>, vector<512x512xbf16>, vector<8x512xf32> -> vector<8x512xf32>
    %c0_19 = arith.constant 0 : index
    %c0_20 = arith.constant 0 : index
    %25 = vector.load %arg33[%c0_19, %c0_20] : memref<1x512xf32, #tpu.memory_space<vmem>>, vector<1x512xf32>
    %26 = vector.broadcast %25 : vector<1x512xf32> to vector<8x512xf32>
    %27 = arith.addf %24, %26 : vector<8x512xf32>
    %cst_21 = arith.constant 0.000000e+00 : f32
    %28 = vector.broadcast %cst_21 : f32 to vector<8x512xf32>
    %29 = arith.maximumf %27, %28 : vector<8x512xf32>
    %30 = arith.truncf %29 : vector<8x512xf32> to vector<8x512xbf16>
    %c0_22 = arith.constant 0 : index
    %c0_23 = arith.constant 0 : index
    %31 = vector.load %arg6[%c0_22, %c0_23] : memref<512x512xbf16, #tpu.memory_space<vmem>>, vector<512x512xbf16>
    %cst_24 = arith.constant dense<0.000000e+00> : vector<8x512xf32>
    %32 = tpu.matmul %30, %31, %cst_24 {dimension_numbers = #tpu.dot_dimension_numbers<[1], [0], [0], [1], [0, 0, 1, 1], [], []>} : vector<8x512xbf16>, vector<512x512xbf16>, vector<8x512xf32> -> vector<8x512xf32>
    %c0_25 = arith.constant 0 : index
    %c0_26 = arith.constant 0 : index
    %33 = vector.load %arg34[%c0_25, %c0_26] : memref<1x512xf32, #tpu.memory_space<vmem>>, vector<1x512xf32>
    %34 = vector.broadcast %33 : vector<1x512xf32> to vector<8x512xf32>
    %35 = arith.addf %32, %34 : vector<8x512xf32>
    %36 = arith.addf %21, %35 : vector<8x512xf32>
    %37 = arith.truncf %36 : vector<8x512xf32> to vector<8x512xbf16>
    %c0_27 = arith.constant 0 : index
    %c0_28 = arith.constant 0 : index
    %38 = vector.load %arg7[%c0_27, %c0_28] : memref<512x512xbf16, #tpu.memory_space<vmem>>, vector<512x512xbf16>
    %cst_29 = arith.constant dense<0.000000e+00> : vector<8x512xf32>
    %39 = tpu.matmul %37, %38, %cst_29 {dimension_numbers = #tpu.dot_dimension_numbers<[1], [0], [0], [1], [0, 0, 1, 1], [], []>} : vector<8x512xbf16>, vector<512x512xbf16>, vector<8x512xf32> -> vector<8x512xf32>
    %c0_30 = arith.constant 0 : index
    %c0_31 = arith.constant 0 : index
    %40 = vector.load %arg35[%c0_30, %c0_31] : memref<1x512xf32, #tpu.memory_space<vmem>>, vector<1x512xf32>
    %41 = vector.broadcast %40 : vector<1x512xf32> to vector<8x512xf32>
    %42 = arith.addf %39, %41 : vector<8x512xf32>
    %cst_32 = arith.constant 0.000000e+00 : f32
    %43 = vector.broadcast %cst_32 : f32 to vector<8x512xf32>
    %44 = arith.maximumf %42, %43 : vector<8x512xf32>
    %45 = arith.truncf %44 : vector<8x512xf32> to vector<8x512xbf16>
    %c0_33 = arith.constant 0 : index
    %c0_34 = arith.constant 0 : index
    %46 = vector.load %arg8[%c0_33, %c0_34] : memref<512x512xbf16, #tpu.memory_space<vmem>>, vector<512x512xbf16>
    %cst_35 = arith.constant dense<0.000000e+00> : vector<8x512xf32>
    %47 = tpu.matmul %45, %46, %cst_35 {dimension_numbers = #tpu.dot_dimension_numbers<[1], [0], [0], [1], [0, 0, 1, 1], [], []>} : vector<8x512xbf16>, vector<512x512xbf16>, vector<8x512xf32> -> vector<8x512xf32>
    %c0_36 = arith.constant 0 : index
    %c0_37 = arith.constant 0 : index
    %48 = vector.load %arg36[%c0_36, %c0_37] : memref<1x512xf32, #tpu.memory_space<vmem>>, vector<1x512xf32>
    %49 = vector.broadcast %48 : vector<1x512xf32> to vector<8x512xf32>
    %50 = arith.addf %47, %49 : vector<8x512xf32>
    %51 = arith.addf %36, %50 : vector<8x512xf32>
    %52 = arith.truncf %51 : vector<8x512xf32> to vector<8x512xbf16>
    %c0_38 = arith.constant 0 : index
    %c0_39 = arith.constant 0 : index
    %53 = vector.load %arg9[%c0_38, %c0_39] : memref<512x512xbf16, #tpu.memory_space<vmem>>, vector<512x512xbf16>
    %cst_40 = arith.constant dense<0.000000e+00> : vector<8x512xf32>
    %54 = tpu.matmul %52, %53, %cst_40 {dimension_numbers = #tpu.dot_dimension_numbers<[1], [0], [0], [1], [0, 0, 1, 1], [], []>} : vector<8x512xbf16>, vector<512x512xbf16>, vector<8x512xf32> -> vector<8x512xf32>
    %c0_41 = arith.constant 0 : index
    %c0_42 = arith.constant 0 : index
    %55 = vector.load %arg37[%c0_41, %c0_42] : memref<1x512xf32, #tpu.memory_space<vmem>>, vector<1x512xf32>
    %56 = vector.broadcast %55 : vector<1x512xf32> to vector<8x512xf32>
    %57 = arith.addf %54, %56 : vector<8x512xf32>
    %cst_43 = arith.constant 0.000000e+00 : f32
    %58 = vector.broadcast %cst_43 : f32 to vector<8x512xf32>
    %59 = arith.maximumf %57, %58 : vector<8x512xf32>
    %60 = arith.truncf %59 : vector<8x512xf32> to vector<8x512xbf16>
    %c0_44 = arith.constant 0 : index
    %c0_45 = arith.constant 0 : index
    %61 = vector.load %arg10[%c0_44, %c0_45] : memref<512x512xbf16, #tpu.memory_space<vmem>>, vector<512x512xbf16>
    %cst_46 = arith.constant dense<0.000000e+00> : vector<8x512xf32>
    %62 = tpu.matmul %60, %61, %cst_46 {dimension_numbers = #tpu.dot_dimension_numbers<[1], [0], [0], [1], [0, 0, 1, 1], [], []>} : vector<8x512xbf16>, vector<512x512xbf16>, vector<8x512xf32> -> vector<8x512xf32>
    %c0_47 = arith.constant 0 : index
    %c0_48 = arith.constant 0 : index
    %63 = vector.load %arg38[%c0_47, %c0_48] : memref<1x512xf32, #tpu.memory_space<vmem>>, vector<1x512xf32>
    %64 = vector.broadcast %63 : vector<1x512xf32> to vector<8x512xf32>
    %65 = arith.addf %62, %64 : vector<8x512xf32>
    %66 = arith.addf %51, %65 : vector<8x512xf32>
    %67 = arith.truncf %66 : vector<8x512xf32> to vector<8x512xbf16>
    %c0_49 = arith.constant 0 : index
    %c0_50 = arith.constant 0 : index
    %68 = vector.load %arg11[%c0_49, %c0_50] : memref<512x128xbf16, #tpu.memory_space<vmem>>, vector<512x128xbf16>
    %cst_51 = arith.constant dense<0.000000e+00> : vector<8x128xf32>
    %69 = tpu.matmul %67, %68, %cst_51 {dimension_numbers = #tpu.dot_dimension_numbers<[1], [0], [0], [1], [0, 0, 1, 1], [], []>} : vector<8x512xbf16>, vector<512x128xbf16>, vector<8x128xf32> -> vector<8x128xf32>
    %c0_52 = arith.constant 0 : index
    %c0_53 = arith.constant 0 : index
    %70 = vector.load %arg39[%c0_52, %c0_53] : memref<1x128xf32, #tpu.memory_space<vmem>>, vector<1x128xf32>
    %71 = vector.broadcast %70 : vector<1x128xf32> to vector<8x128xf32>
    %72 = arith.addf %69, %71 : vector<8x128xf32>
    %73 = arith.truncf %72 : vector<8x128xf32> to vector<8x128xbf16>
    %c0_54 = arith.constant 0 : index
    %c0_55 = arith.constant 0 : index
    %74 = vector.load %arg12[%c0_54, %c0_55] : memref<128x128xbf16, #tpu.memory_space<vmem>>, vector<128x128xbf16>
    %cst_56 = arith.constant dense<0.000000e+00> : vector<8x128xf32>
    %75 = tpu.matmul %73, %74, %cst_56 {dimension_numbers = #tpu.dot_dimension_numbers<[1], [0], [0], [1], [0, 0, 1, 1], [], []>} : vector<8x128xbf16>, vector<128x128xbf16>, vector<8x128xf32> -> vector<8x128xf32>
    %c0_57 = arith.constant 0 : index
    %c0_58 = arith.constant 0 : index
    %76 = vector.load %arg40[%c0_57, %c0_58] : memref<1x128xf32, #tpu.memory_space<vmem>>, vector<1x128xf32>
    %77 = vector.broadcast %76 : vector<1x128xf32> to vector<8x128xf32>
    %78 = arith.addf %75, %77 : vector<8x128xf32>
    %cst_59 = arith.constant 0.000000e+00 : f32
    %79 = vector.broadcast %cst_59 : f32 to vector<8x128xf32>
    %80 = arith.maximumf %78, %79 : vector<8x128xf32>
    %81 = arith.truncf %80 : vector<8x128xf32> to vector<8x128xbf16>
    %c0_60 = arith.constant 0 : index
    %c0_61 = arith.constant 0 : index
    %82 = vector.load %arg13[%c0_60, %c0_61] : memref<128x128xbf16, #tpu.memory_space<vmem>>, vector<128x128xbf16>
    %cst_62 = arith.constant dense<0.000000e+00> : vector<8x128xf32>
    %83 = tpu.matmul %81, %82, %cst_62 {dimension_numbers = #tpu.dot_dimension_numbers<[1], [0], [0], [1], [0, 0, 1, 1], [], []>} : vector<8x128xbf16>, vector<128x128xbf16>, vector<8x128xf32> -> vector<8x128xf32>
    %c0_63 = arith.constant 0 : index
    %c0_64 = arith.constant 0 : index
    %84 = vector.load %arg41[%c0_63, %c0_64] : memref<1x128xf32, #tpu.memory_space<vmem>>, vector<1x128xf32>
    %85 = vector.broadcast %84 : vector<1x128xf32> to vector<8x128xf32>
    %86 = arith.addf %83, %85 : vector<8x128xf32>
    %87 = arith.addf %72, %86 : vector<8x128xf32>
    %88 = arith.truncf %87 : vector<8x128xf32> to vector<8x128xbf16>
    %c0_65 = arith.constant 0 : index
    %c0_66 = arith.constant 0 : index
    %89 = vector.load %arg14[%c0_65, %c0_66] : memref<128x128xbf16, #tpu.memory_space<vmem>>, vector<128x128xbf16>
    %cst_67 = arith.constant dense<0.000000e+00> : vector<8x128xf32>
    %90 = tpu.matmul %88, %89, %cst_67 {dimension_numbers = #tpu.dot_dimension_numbers<[1], [0], [0], [1], [0, 0, 1, 1], [], []>} : vector<8x128xbf16>, vector<128x128xbf16>, vector<8x128xf32> -> vector<8x128xf32>
    %c0_68 = arith.constant 0 : index
    %c0_69 = arith.constant 0 : index
    %91 = vector.load %arg42[%c0_68, %c0_69] : memref<1x128xf32, #tpu.memory_space<vmem>>, vector<1x128xf32>
    %92 = vector.broadcast %91 : vector<1x128xf32> to vector<8x128xf32>
    %93 = arith.addf %90, %92 : vector<8x128xf32>
    %cst_70 = arith.constant 0.000000e+00 : f32
    %94 = vector.broadcast %cst_70 : f32 to vector<8x128xf32>
    %95 = arith.maximumf %93, %94 : vector<8x128xf32>
    %96 = arith.truncf %95 : vector<8x128xf32> to vector<8x128xbf16>
    %c0_71 = arith.constant 0 : index
    %c0_72 = arith.constant 0 : index
    %97 = vector.load %arg15[%c0_71, %c0_72] : memref<128x128xbf16, #tpu.memory_space<vmem>>, vector<128x128xbf16>
    %cst_73 = arith.constant dense<0.000000e+00> : vector<8x128xf32>
    %98 = tpu.matmul %96, %97, %cst_73 {dimension_numbers = #tpu.dot_dimension_numbers<[1], [0], [0], [1], [0, 0, 1, 1], [], []>} : vector<8x128xbf16>, vector<128x128xbf16>, vector<8x128xf32> -> vector<8x128xf32>
    %c0_74 = arith.constant 0 : index
    %c0_75 = arith.constant 0 : index
    %99 = vector.load %arg43[%c0_74, %c0_75] : memref<1x128xf32, #tpu.memory_space<vmem>>, vector<1x128xf32>
    %100 = vector.broadcast %99 : vector<1x128xf32> to vector<8x128xf32>
    %101 = arith.addf %98, %100 : vector<8x128xf32>
    %102 = arith.addf %87, %101 : vector<8x128xf32>
    %103 = arith.truncf %102 : vector<8x128xf32> to vector<8x128xbf16>
    %c0_76 = arith.constant 0 : index
    %c0_77 = arith.constant 0 : index
    %104 = vector.load %arg16[%c0_76, %c0_77] : memref<128x128xbf16, #tpu.memory_space<vmem>>, vector<128x128xbf16>
    %cst_78 = arith.constant dense<0.000000e+00> : vector<8x128xf32>
    %105 = tpu.matmul %103, %104, %cst_78 {dimension_numbers = #tpu.dot_dimension_numbers<[1], [0], [0], [1], [0, 0, 1, 1], [], []>} : vector<8x128xbf16>, vector<128x128xbf16>, vector<8x128xf32> -> vector<8x128xf32>
    %c0_79 = arith.constant 0 : index
    %c0_80 = arith.constant 0 : index
    %106 = vector.load %arg44[%c0_79, %c0_80] : memref<1x128xf32, #tpu.memory_space<vmem>>, vector<1x128xf32>
    %107 = vector.broadcast %106 : vector<1x128xf32> to vector<8x128xf32>
    %108 = arith.addf %105, %107 : vector<8x128xf32>
    %cst_81 = arith.constant 0.000000e+00 : f32
    %109 = vector.broadcast %cst_81 : f32 to vector<8x128xf32>
    %110 = arith.maximumf %108, %109 : vector<8x128xf32>
    %111 = arith.truncf %110 : vector<8x128xf32> to vector<8x128xbf16>
    %c0_82 = arith.constant 0 : index
    %c0_83 = arith.constant 0 : index
    %112 = vector.load %arg17[%c0_82, %c0_83] : memref<128x128xbf16, #tpu.memory_space<vmem>>, vector<128x128xbf16>
    %cst_84 = arith.constant dense<0.000000e+00> : vector<8x128xf32>
    %113 = tpu.matmul %111, %112, %cst_84 {dimension_numbers = #tpu.dot_dimension_numbers<[1], [0], [0], [1], [0, 0, 1, 1], [], []>} : vector<8x128xbf16>, vector<128x128xbf16>, vector<8x128xf32> -> vector<8x128xf32>
    %c0_85 = arith.constant 0 : index
    %c0_86 = arith.constant 0 : index
    %114 = vector.load %arg45[%c0_85, %c0_86] : memref<1x128xf32, #tpu.memory_space<vmem>>, vector<1x128xf32>
    %115 = vector.broadcast %114 : vector<1x128xf32> to vector<8x128xf32>
    %116 = arith.addf %113, %115 : vector<8x128xf32>
    %117 = arith.addf %102, %116 : vector<8x128xf32>
    %118 = arith.truncf %117 : vector<8x128xf32> to vector<8x128xbf16>
    %c0_87 = arith.constant 0 : index
    %c0_88 = arith.constant 0 : index
    %119 = vector.load %arg18[%c0_87, %c0_88] : memref<128x128xbf16, #tpu.memory_space<vmem>>, vector<128x128xbf16>
    %cst_89 = arith.constant dense<0.000000e+00> : vector<8x128xf32>
    %120 = tpu.matmul %118, %119, %cst_89 {dimension_numbers = #tpu.dot_dimension_numbers<[1], [0], [0], [1], [0, 0, 1, 1], [], []>} : vector<8x128xbf16>, vector<128x128xbf16>, vector<8x128xf32> -> vector<8x128xf32>
    %c0_90 = arith.constant 0 : index
    %c0_91 = arith.constant 0 : index
    %121 = vector.load %arg46[%c0_90, %c0_91] : memref<1x128xf32, #tpu.memory_space<vmem>>, vector<1x128xf32>
    %122 = vector.broadcast %121 : vector<1x128xf32> to vector<8x128xf32>
    %123 = arith.addf %120, %122 : vector<8x128xf32>
    %cst_92 = arith.constant 0.000000e+00 : f32
    %124 = vector.broadcast %cst_92 : f32 to vector<8x128xf32>
    %125 = arith.maximumf %123, %124 : vector<8x128xf32>
    %126 = arith.truncf %125 : vector<8x128xf32> to vector<8x128xbf16>
    %c0_93 = arith.constant 0 : index
    %c0_94 = arith.constant 0 : index
    %127 = vector.load %arg19[%c0_93, %c0_94] : memref<128x128xbf16, #tpu.memory_space<vmem>>, vector<128x128xbf16>
    %cst_95 = arith.constant dense<0.000000e+00> : vector<8x128xf32>
    %128 = tpu.matmul %126, %127, %cst_95 {dimension_numbers = #tpu.dot_dimension_numbers<[1], [0], [0], [1], [0, 0, 1, 1], [], []>} : vector<8x128xbf16>, vector<128x128xbf16>, vector<8x128xf32> -> vector<8x128xf32>
    %c0_96 = arith.constant 0 : index
    %c0_97 = arith.constant 0 : index
    %129 = vector.load %arg47[%c0_96, %c0_97] : memref<1x128xf32, #tpu.memory_space<vmem>>, vector<1x128xf32>
    %130 = vector.broadcast %129 : vector<1x128xf32> to vector<8x128xf32>
    %131 = arith.addf %128, %130 : vector<8x128xf32>
    %132 = arith.addf %117, %131 : vector<8x128xf32>
    %133 = arith.truncf %132 : vector<8x128xf32> to vector<8x128xbf16>
    %c0_98 = arith.constant 0 : index
    %c0_99 = arith.constant 0 : index
    %134 = vector.load %arg20[%c0_98, %c0_99] : memref<128x32xbf16, #tpu.memory_space<vmem>>, vector<128x32xbf16>
    %cst_100 = arith.constant dense<0.000000e+00> : vector<8x32xf32>
    %135 = tpu.matmul %133, %134, %cst_100 {dimension_numbers = #tpu.dot_dimension_numbers<[1], [0], [0], [1], [0, 0, 1, 1], [], []>} : vector<8x128xbf16>, vector<128x32xbf16>, vector<8x32xf32> -> vector<8x32xf32>
    %c0_101 = arith.constant 0 : index
    %c0_102 = arith.constant 0 : index
    %136 = vector.load %arg48[%c0_101, %c0_102] : memref<1x32xf32, #tpu.memory_space<vmem>>, vector<1x32xf32>
    %137 = vector.broadcast %136 : vector<1x32xf32> to vector<8x32xf32>
    %138 = arith.addf %135, %137 : vector<8x32xf32>
    %139 = arith.truncf %138 : vector<8x32xf32> to vector<8x32xbf16>
    %c0_103 = arith.constant 0 : index
    %c0_104 = arith.constant 0 : index
    %140 = vector.load %arg21[%c0_103, %c0_104] : memref<32x32xbf16, #tpu.memory_space<vmem>>, vector<32x32xbf16>
    %cst_105 = arith.constant dense<0.000000e+00> : vector<8x32xf32>
    %141 = tpu.matmul %139, %140, %cst_105 {dimension_numbers = #tpu.dot_dimension_numbers<[1], [0], [0], [1], [0, 0, 1, 1], [], []>} : vector<8x32xbf16>, vector<32x32xbf16>, vector<8x32xf32> -> vector<8x32xf32>
    %c0_106 = arith.constant 0 : index
    %c0_107 = arith.constant 0 : index
    %142 = vector.load %arg49[%c0_106, %c0_107] : memref<1x32xf32, #tpu.memory_space<vmem>>, vector<1x32xf32>
    %143 = vector.broadcast %142 : vector<1x32xf32> to vector<8x32xf32>
    %144 = arith.addf %141, %143 : vector<8x32xf32>
    %cst_108 = arith.constant 0.000000e+00 : f32
    %145 = vector.broadcast %cst_108 : f32 to vector<8x32xf32>
    %146 = arith.maximumf %144, %145 : vector<8x32xf32>
    %147 = arith.truncf %146 : vector<8x32xf32> to vector<8x32xbf16>
    %c0_109 = arith.constant 0 : index
    %c0_110 = arith.constant 0 : index
    %148 = vector.load %arg22[%c0_109, %c0_110] : memref<32x32xbf16, #tpu.memory_space<vmem>>, vector<32x32xbf16>
    %cst_111 = arith.constant dense<0.000000e+00> : vector<8x32xf32>
    %149 = tpu.matmul %147, %148, %cst_111 {dimension_numbers = #tpu.dot_dimension_numbers<[1], [0], [0], [1], [0, 0, 1, 1], [], []>} : vector<8x32xbf16>, vector<32x32xbf16>, vector<8x32xf32> -> vector<8x32xf32>
    %c0_112 = arith.constant 0 : index
    %c0_113 = arith.constant 0 : index
    %150 = vector.load %arg50[%c0_112, %c0_113] : memref<1x32xf32, #tpu.memory_space<vmem>>, vector<1x32xf32>
    %151 = vector.broadcast %150 : vector<1x32xf32> to vector<8x32xf32>
    %152 = arith.addf %149, %151 : vector<8x32xf32>
    %153 = arith.addf %138, %152 : vector<8x32xf32>
    %154 = arith.truncf %153 : vector<8x32xf32> to vector<8x32xbf16>
    %c0_114 = arith.constant 0 : index
    %c0_115 = arith.constant 0 : index
    %155 = vector.load %arg23[%c0_114, %c0_115] : memref<32x32xbf16, #tpu.memory_space<vmem>>, vector<32x32xbf16>
    %cst_116 = arith.constant dense<0.000000e+00> : vector<8x32xf32>
    %156 = tpu.matmul %154, %155, %cst_116 {dimension_numbers = #tpu.dot_dimension_numbers<[1], [0], [0], [1], [0, 0, 1, 1], [], []>} : vector<8x32xbf16>, vector<32x32xbf16>, vector<8x32xf32> -> vector<8x32xf32>
    %c0_117 = arith.constant 0 : index
    %c0_118 = arith.constant 0 : index
    %157 = vector.load %arg51[%c0_117, %c0_118] : memref<1x32xf32, #tpu.memory_space<vmem>>, vector<1x32xf32>
    %158 = vector.broadcast %157 : vector<1x32xf32> to vector<8x32xf32>
    %159 = arith.addf %156, %158 : vector<8x32xf32>
    %cst_119 = arith.constant 0.000000e+00 : f32
    %160 = vector.broadcast %cst_119 : f32 to vector<8x32xf32>
    %161 = arith.maximumf %159, %160 : vector<8x32xf32>
    %162 = arith.truncf %161 : vector<8x32xf32> to vector<8x32xbf16>
    %c0_120 = arith.constant 0 : index
    %c0_121 = arith.constant 0 : index
    %163 = vector.load %arg24[%c0_120, %c0_121] : memref<32x32xbf16, #tpu.memory_space<vmem>>, vector<32x32xbf16>
    %cst_122 = arith.constant dense<0.000000e+00> : vector<8x32xf32>
    %164 = tpu.matmul %162, %163, %cst_122 {dimension_numbers = #tpu.dot_dimension_numbers<[1], [0], [0], [1], [0, 0, 1, 1], [], []>} : vector<8x32xbf16>, vector<32x32xbf16>, vector<8x32xf32> -> vector<8x32xf32>
    %c0_123 = arith.constant 0 : index
    %c0_124 = arith.constant 0 : index
    %165 = vector.load %arg52[%c0_123, %c0_124] : memref<1x32xf32, #tpu.memory_space<vmem>>, vector<1x32xf32>
    %166 = vector.broadcast %165 : vector<1x32xf32> to vector<8x32xf32>
    %167 = arith.addf %164, %166 : vector<8x32xf32>
    %168 = arith.addf %153, %167 : vector<8x32xf32>
    %169 = arith.truncf %168 : vector<8x32xf32> to vector<8x32xbf16>
    %c0_125 = arith.constant 0 : index
    %c0_126 = arith.constant 0 : index
    %170 = vector.load %arg25[%c0_125, %c0_126] : memref<32x32xbf16, #tpu.memory_space<vmem>>, vector<32x32xbf16>
    %cst_127 = arith.constant dense<0.000000e+00> : vector<8x32xf32>
    %171 = tpu.matmul %169, %170, %cst_127 {dimension_numbers = #tpu.dot_dimension_numbers<[1], [0], [0], [1], [0, 0, 1, 1], [], []>} : vector<8x32xbf16>, vector<32x32xbf16>, vector<8x32xf32> -> vector<8x32xf32>
    %c0_128 = arith.constant 0 : index
    %c0_129 = arith.constant 0 : index
    %172 = vector.load %arg53[%c0_128, %c0_129] : memref<1x32xf32, #tpu.memory_space<vmem>>, vector<1x32xf32>
    %173 = vector.broadcast %172 : vector<1x32xf32> to vector<8x32xf32>
    %174 = arith.addf %171, %173 : vector<8x32xf32>
    %cst_130 = arith.constant 0.000000e+00 : f32
    %175 = vector.broadcast %cst_130 : f32 to vector<8x32xf32>
    %176 = arith.maximumf %174, %175 : vector<8x32xf32>
    %177 = arith.truncf %176 : vector<8x32xf32> to vector<8x32xbf16>
    %c0_131 = arith.constant 0 : index
    %c0_132 = arith.constant 0 : index
    %178 = vector.load %arg26[%c0_131, %c0_132] : memref<32x32xbf16, #tpu.memory_space<vmem>>, vector<32x32xbf16>
    %cst_133 = arith.constant dense<0.000000e+00> : vector<8x32xf32>
    %179 = tpu.matmul %177, %178, %cst_133 {dimension_numbers = #tpu.dot_dimension_numbers<[1], [0], [0], [1], [0, 0, 1, 1], [], []>} : vector<8x32xbf16>, vector<32x32xbf16>, vector<8x32xf32> -> vector<8x32xf32>
    %c0_134 = arith.constant 0 : index
    %c0_135 = arith.constant 0 : index
    %180 = vector.load %arg54[%c0_134, %c0_135] : memref<1x32xf32, #tpu.memory_space<vmem>>, vector<1x32xf32>
    %181 = vector.broadcast %180 : vector<1x32xf32> to vector<8x32xf32>
    %182 = arith.addf %179, %181 : vector<8x32xf32>
    %183 = arith.addf %168, %182 : vector<8x32xf32>
    %184 = arith.truncf %183 : vector<8x32xf32> to vector<8x32xbf16>
    %c0_136 = arith.constant 0 : index
    %c0_137 = arith.constant 0 : index
    %185 = vector.load %arg27[%c0_136, %c0_137] : memref<32x32xbf16, #tpu.memory_space<vmem>>, vector<32x32xbf16>
    %cst_138 = arith.constant dense<0.000000e+00> : vector<8x32xf32>
    %186 = tpu.matmul %184, %185, %cst_138 {dimension_numbers = #tpu.dot_dimension_numbers<[1], [0], [0], [1], [0, 0, 1, 1], [], []>} : vector<8x32xbf16>, vector<32x32xbf16>, vector<8x32xf32> -> vector<8x32xf32>
    %c0_139 = arith.constant 0 : index
    %c0_140 = arith.constant 0 : index
    %187 = vector.load %arg55[%c0_139, %c0_140] : memref<1x32xf32, #tpu.memory_space<vmem>>, vector<1x32xf32>
    %188 = vector.broadcast %187 : vector<1x32xf32> to vector<8x32xf32>
    %189 = arith.addf %186, %188 : vector<8x32xf32>
    %cst_141 = arith.constant 0.000000e+00 : f32
    %190 = vector.broadcast %cst_141 : f32 to vector<8x32xf32>
    %191 = arith.maximumf %189, %190 : vector<8x32xf32>
    %192 = arith.truncf %191 : vector<8x32xf32> to vector<8x32xbf16>
    %c0_142 = arith.constant 0 : index
    %c0_143 = arith.constant 0 : index
    %193 = vector.load %arg28[%c0_142, %c0_143] : memref<32x32xbf16, #tpu.memory_space<vmem>>, vector<32x32xbf16>
    %cst_144 = arith.constant dense<0.000000e+00> : vector<8x32xf32>
    %194 = tpu.matmul %192, %193, %cst_144 {dimension_numbers = #tpu.dot_dimension_numbers<[1], [0], [0], [1], [0, 0, 1, 1], [], []>} : vector<8x32xbf16>, vector<32x32xbf16>, vector<8x32xf32> -> vector<8x32xf32>
    %c0_145 = arith.constant 0 : index
    %c0_146 = arith.constant 0 : index
    %195 = vector.load %arg56[%c0_145, %c0_146] : memref<1x32xf32, #tpu.memory_space<vmem>>, vector<1x32xf32>
    %196 = vector.broadcast %195 : vector<1x32xf32> to vector<8x32xf32>
    %197 = arith.addf %194, %196 : vector<8x32xf32>
    %198 = arith.addf %183, %197 : vector<8x32xf32>
    %199 = arith.truncf %198 : vector<8x32xf32> to vector<8x32xbf16>
    %c0_147 = arith.constant 0 : index
    %c0_148 = arith.constant 0 : index
    %200 = vector.load %arg29[%c0_147, %c0_148] : memref<32x128xbf16, #tpu.memory_space<vmem>>, vector<32x128xbf16>
    %cst_149 = arith.constant dense<0.000000e+00> : vector<8x128xf32>
    %201 = tpu.matmul %199, %200, %cst_149 {dimension_numbers = #tpu.dot_dimension_numbers<[1], [0], [0], [1], [0, 0, 1, 1], [], []>} : vector<8x32xbf16>, vector<32x128xbf16>, vector<8x128xf32> -> vector<8x128xf32>
    %c0_150 = arith.constant 0 : index
    %c0_151 = arith.constant 0 : index
    %202 = vector.load %arg57[%c0_150, %c0_151] : memref<1x128xf32, #tpu.memory_space<vmem>>, vector<1x128xf32>
    %203 = vector.broadcast %202 : vector<1x128xf32> to vector<8x128xf32>
    %204 = arith.addf %201, %203 : vector<8x128xf32>
    %c0_152 = arith.constant 0 : index
    %c0_153 = arith.constant 0 : index
    %205 = vector.load %arg58[%c0_152, %c0_153] : memref<8x128xf32, #tpu.memory_space<vmem>>, vector<8x128xf32>
    tpu.vector_store %arg58[%c0_152, %c0_153], %204 {strides = array<i32>} : memref<8x128xf32, #tpu.memory_space<vmem>>, vector<8x128xf32>,
    return
  }
  func.func @transform_0(%arg0: i32) -> (i32, i32) {
    %c0_i32 = arith.constant 0 : i32
    %c0_i32_0 = arith.constant 0 : i32
    %c0_i32_1 = arith.constant 0 : i32
    return %c0_i32, %c0_i32_0 : i32, i32
  }
  func.func @transform_1(%arg0: i32) -> (i32, i32) {
    %c0_i32 = arith.constant 0 : i32
    %c0_i32_0 = arith.constant 0 : i32
    %c0_i32_1 = arith.constant 0 : i32
    return %c0_i32, %c0_i32_0 : i32, i32
  }
  func.func @transform_2(%arg0: i32) -> (i32, i32) {
    %c0_i32 = arith.constant 0 : i32
    %c0_i32_0 = arith.constant 0 : i32
    %c0_i32_1 = arith.constant 0 : i32
    return %c0_i32, %c0_i32_0 : i32, i32
  }
  func.func @transform_3(%arg0: i32) -> (i32, i32) {
    %c0_i32 = arith.constant 0 : i32
    %c0_i32_0 = arith.constant 0 : i32
    %c0_i32_1 = arith.constant 0 : i32
    return %c0_i32, %c0_i32_0 : i32, i32
  }
  func.func @transform_4(%arg0: i32) -> (i32, i32) {
    %c0_i32 = arith.constant 0 : i32
    %c0_i32_0 = arith.constant 0 : i32
    %c0_i32_1 = arith.constant 0 : i32
    return %c0_i32, %c0_i32_0 : i32, i32
  }
  func.func @transform_5(%arg0: i32) -> (i32, i32) {
    %c0_i32 = arith.constant 0 : i32
    %c0_i32_0 = arith.constant 0 : i32
    %c0_i32_1 = arith.constant 0 : i32
    return %c0_i32, %c0_i32_0 : i32, i32
  }
  func.func @transform_6(%arg0: i32) -> (i32, i32) {
    %c0_i32 = arith.constant 0 : i32
    %c0_i32_0 = arith.constant 0 : i32
    %c0_i32_1 = arith.constant 0 : i32
    return %c0_i32, %c0_i32_0 : i32, i32
  }
  func.func @transform_7(%arg0: i32) -> (i32, i32) {
    %c0_i32 = arith.constant 0 : i32
    %c0_i32_0 = arith.constant 0 : i32
    %c0_i32_1 = arith.constant 0 : i32
    return %c0_i32, %c0_i32_0 : i32, i32
  }
  func.func @transform_8(%arg0: i32) -> (i32, i32) {
    %c0_i32 = arith.constant 0 : i32
    %c0_i32_0 = arith.constant 0 : i32
    %c0_i32_1 = arith.constant 0 : i32
    return %c0_i32, %c0_i32_0 : i32, i32
  }
  func.func @transform_9(%arg0: i32) -> (i32, i32) {
    %c0_i32 = arith.constant 0 : i32
    %c0_i32_0 = arith.constant 0 : i32
    %c0_i32_1 = arith.constant 0 : i32
    return %c0_i32, %c0_i32_0 : i32, i32
  }
  func.func @transform_10(%arg0: i32) -> (i32, i32) {
    %c0_i32 = arith.constant 0 : i32
    %c0_i32_0 = arith.constant 0 : i32
    %c0_i32_1 = arith.constant 0 : i32
    return %c0_i32, %c0_i32_0 : i32, i32
  }
  func.func @transform_11(%arg0: i32) -> (i32, i32) {
    %c0_i32 = arith.constant 0 : i32
    %c0_i32_0 = arith.constant 0 : i32
    %c0_i32_1 = arith.constant 0 : i32
    return %c0_i32, %c0_i32_0 : i32, i32
  }
  func.func @transform_12(%arg0: i32) -> (i32, i32) {
    %c0_i32 = arith.constant 0 : i32
    %c0_i32_0 = arith.constant 0 : i32
    %c0_i32_1 = arith.constant 0 : i32
    return %c0_i32, %c0_i32_0 : i32, i32
  }
  func.func @transform_13(%arg0: i32) -> (i32, i32) {
    %c0_i32 = arith.constant 0 : i32
    %c0_i32_0 = arith.constant 0 : i32
    %c0_i32_1 = arith.constant 0 : i32
    return %c0_i32, %c0_i32_0 : i32, i32
  }
  func.func @transform_14(%arg0: i32) -> (i32, i32) {
    %c0_i32 = arith.constant 0 : i32
    %c0_i32_0 = arith.constant 0 : i32
    %c0_i32_1 = arith.constant 0 : i32
    return %c0_i32, %c0_i32_0 : i32, i32
  }
  func.func @transform_15(%arg0: i32) -> (i32, i32) {
    %c0_i32 = arith.constant 0 : i32
    %c0_i32_0 = arith.constant 0 : i32
    %c0_i32_1 = arith.constant 0 : i32
    return %c0_i32, %c0_i32_0 : i32, i32
  }
  func.func @transform_16(%arg0: i32) -> (i32, i32) {
    %c0_i32 = arith.constant 0 : i32
    %c0_i32_0 = arith.constant 0 : i32
    %c0_i32_1 = arith.constant 0 : i32
    return %c0_i32, %c0_i32_0 : i32, i32
  }
  func.func @transform_17(%arg0: i32) -> (i32, i32) {
    %c0_i32 = arith.constant 0 : i32
    %c0_i32_0 = arith.constant 0 : i32
    %c0_i32_1 = arith.constant 0 : i32
    return %c0_i32, %c0_i32_0 : i32, i32
  }
  func.func @transform_18(%arg0: i32) -> (i32, i32) {
    %c0_i32 = arith.constant 0 : i32
    %c0_i32_0 = arith.constant 0 : i32
    %c0_i32_1 = arith.constant 0 : i32
    return %c0_i32, %c0_i32_0 : i32, i32
  }
  func.func @transform_19(%arg0: i32) -> (i32, i32) {
    %c0_i32 = arith.constant 0 : i32
    %c0_i32_0 = arith.constant 0 : i32
    %c0_i32_1 = arith.constant 0 : i32
    return %c0_i32, %c0_i32_0 : i32, i32
  }
  func.func @transform_20(%arg0: i32) -> (i32, i32) {
    %c0_i32 = arith.constant 0 : i32
    %c0_i32_0 = arith.constant 0 : i32
    %c0_i32_1 = arith.constant 0 : i32
    return %c0_i32, %c0_i32_0 : i32, i32
  }
  func.func @transform_21(%arg0: i32) -> (i32, i32) {
    %c0_i32 = arith.constant 0 : i32
    %c0_i32_0 = arith.constant 0 : i32
    %c0_i32_1 = arith.constant 0 : i32
    return %c0_i32, %c0_i32_0 : i32, i32
  }
  func.func @transform_22(%arg0: i32) -> (i32, i32) {
    %c0_i32 = arith.constant 0 : i32
    %c0_i32_0 = arith.constant 0 : i32
    %c0_i32_1 = arith.constant 0 : i32
    return %c0_i32, %c0_i32_0 : i32, i32
  }
  func.func @transform_23(%arg0: i32) -> (i32, i32) {
    %c0_i32 = arith.constant 0 : i32
    %c0_i32_0 = arith.constant 0 : i32
    %c0_i32_1 = arith.constant 0 : i32
    return %c0_i32, %c0_i32_0 : i32, i32
  }
  func.func @transform_24(%arg0: i32) -> (i32, i32) {
    %c0_i32 = arith.constant 0 : i32
    %c0_i32_0 = arith.constant 0 : i32
    %c0_i32_1 = arith.constant 0 : i32
    return %c0_i32, %c0_i32_0 : i32, i32
  }
  func.func @transform_25(%arg0: i32) -> (i32, i32) {
    %c0_i32 = arith.constant 0 : i32
    %c0_i32_0 = arith.constant 0 : i32
    %c0_i32_1 = arith.constant 0 : i32
    return %c0_i32, %c0_i32_0 : i32, i32
  }
  func.func @transform_26(%arg0: i32) -> (i32, i32) {
    %c0_i32 = arith.constant 0 : i32
    %c0_i32_0 = arith.constant 0 : i32
    %c0_i32_1 = arith.constant 0 : i32
    return %c0_i32, %c0_i32_0 : i32, i32
  }
  func.func @transform_27(%arg0: i32) -> (i32, i32) {
    %c0_i32 = arith.constant 0 : i32
    %c0_i32_0 = arith.constant 0 : i32
    %c0_i32_1 = arith.constant 0 : i32
    return %c0_i32, %c0_i32_0 : i32, i32
  }
  func.func @transform_28(%arg0: i32) -> (i32, i32) {
    %c0_i32 = arith.constant 0 : i32
    %c0_i32_0 = arith.constant 0 : i32
    %c0_i32_1 = arith.constant 0 : i32
    return %c0_i32, %c0_i32_0 : i32, i32
  }
  func.func @transform_29(%arg0: i32) -> (i32, i32) {
    %c0_i32 = arith.constant 0 : i32
    %c0_i32_0 = arith.constant 0 : i32
    %c0_i32_1 = arith.constant 0 : i32
    return %c0_i32, %c0_i32_0 : i32, i32
  }
  func.func @transform_30(%arg0: i32) -> (i32, i32) {
    %c0_i32 = arith.constant 0 : i32
    %c0_i32_0 = arith.constant 0 : i32
    %c0_i32_1 = arith.constant 0 : i32
    return %c0_i32, %c0_i32_0 : i32, i32
  }
  func.func @transform_31(%arg0: i32) -> (i32, i32) {
    %c0_i32 = arith.constant 0 : i32
    %c0_i32_0 = arith.constant 0 : i32
    %c0_i32_1 = arith.constant 0 : i32
    return %c0_i32, %c0_i32_0 : i32, i32
  }
  func.func @transform_32(%arg0: i32) -> (i32, i32) {
    %c0_i32 = arith.constant 0 : i32
    %c0_i32_0 = arith.constant 0 : i32
    %c0_i32_1 = arith.constant 0 : i32
    return %c0_i32, %c0_i32_0 : i32, i32
  }
  func.func @transform_33(%arg0: i32) -> (i32, i32) {
    %c0_i32 = arith.constant 0 : i32
    %c0_i32_0 = arith.constant 0 : i32
    %c0_i32_1 = arith.constant 0 : i32
    return %c0_i32, %c0_i32_0 : i32, i32
  }
  func.func @transform_34(%arg0: i32) -> (i32, i32) {
    %c0_i32 = arith.constant 0 : i32
    %c0_i32_0 = arith.constant 0 : i32
    %c0_i32_1 = arith.constant 0 : i32
    return %c0_i32, %c0_i32_0 : i32, i32
  }
  func.func @transform_35(%arg0: i32) -> (i32, i32) {
    %c0_i32 = arith.constant 0 : i32
    %c0_i32_0 = arith.constant 0 : i32
    %c0_i32_1 = arith.constant 0 : i32
    return %c0_i32, %c0_i32_0 : i32, i32
  }
  func.func @transform_36(%arg0: i32) -> (i32, i32) {
    %c0_i32 = arith.constant 0 : i32
    %c0_i32_0 = arith.constant 0 : i32
    %c0_i32_1 = arith.constant 0 : i32
    return %c0_i32, %c0_i32_0 : i32, i32
  }
  func.func @transform_37(%arg0: i32) -> (i32, i32) {
    %c0_i32 = arith.constant 0 : i32
    %c0_i32_0 = arith.constant 0 : i32
    %c0_i32_1 = arith.constant 0 : i32
    return %c0_i32, %c0_i32_0 : i32, i32
  }
  func.func @transform_38(%arg0: i32) -> (i32, i32) {
    %c0_i32 = arith.constant 0 : i32
    %c0_i32_0 = arith.constant 0 : i32
    %c0_i32_1 = arith.constant 0 : i32
    return %c0_i32, %c0_i32_0 : i32, i32
  }
  func.func @transform_39(%arg0: i32) -> (i32, i32) {
    %c0_i32 = arith.constant 0 : i32
    %c0_i32_0 = arith.constant 0 : i32
    %c0_i32_1 = arith.constant 0 : i32
    return %c0_i32, %c0_i32_0 : i32, i32
  }
  func.func @transform_40(%arg0: i32) -> (i32, i32) {
    %c0_i32 = arith.constant 0 : i32
    %c0_i32_0 = arith.constant 0 : i32
    %c0_i32_1 = arith.constant 0 : i32
    return %c0_i32, %c0_i32_0 : i32, i32
  }
  func.func @transform_41(%arg0: i32) -> (i32, i32) {
    %c0_i32 = arith.constant 0 : i32
    %c0_i32_0 = arith.constant 0 : i32
    %c0_i32_1 = arith.constant 0 : i32
    return %c0_i32, %c0_i32_0 : i32, i32
  }
  func.func @transform_42(%arg0: i32) -> (i32, i32) {
    %c0_i32 = arith.constant 0 : i32
    %c0_i32_0 = arith.constant 0 : i32
    %c0_i32_1 = arith.constant 0 : i32
    return %c0_i32, %c0_i32_0 : i32, i32
  }
  func.func @transform_43(%arg0: i32) -> (i32, i32) {
    %c0_i32 = arith.constant 0 : i32
    %c0_i32_0 = arith.constant 0 : i32
    %c0_i32_1 = arith.constant 0 : i32
    return %c0_i32, %c0_i32_0 : i32, i32
  }
  func.func @transform_44(%arg0: i32) -> (i32, i32) {
    %c0_i32 = arith.constant 0 : i32
    %c0_i32_0 = arith.constant 0 : i32
    %c0_i32_1 = arith.constant 0 : i32
    return %c0_i32, %c0_i32_0 : i32, i32
  }
  func.func @transform_45(%arg0: i32) -> (i32, i32) {
    %c0_i32 = arith.constant 0 : i32
    %c0_i32_0 = arith.constant 0 : i32
    %c0_i32_1 = arith.constant 0 : i32
    return %c0_i32, %c0_i32_0 : i32, i32
  }
  func.func @transform_46(%arg0: i32) -> (i32, i32) {
    %c0_i32 = arith.constant 0 : i32
    %c0_i32_0 = arith.constant 0 : i32
    %c0_i32_1 = arith.constant 0 : i32
    return %c0_i32, %c0_i32_0 : i32, i32
  }
  func.func @transform_47(%arg0: i32) -> (i32, i32) {
    %c0_i32 = arith.constant 0 : i32
    %c0_i32_0 = arith.constant 0 : i32
    %c0_i32_1 = arith.constant 0 : i32
    return %c0_i32, %c0_i32_0 : i32, i32
  }
  func.func @transform_48(%arg0: i32) -> (i32, i32) {
    %c0_i32 = arith.constant 0 : i32
    %c0_i32_0 = arith.constant 0 : i32
    %c0_i32_1 = arith.constant 0 : i32
    return %c0_i32, %c0_i32_0 : i32, i32
  }
  func.func @transform_49(%arg0: i32) -> (i32, i32) {
    %c0_i32 = arith.constant 0 : i32
    %c0_i32_0 = arith.constant 0 : i32
    %c0_i32_1 = arith.constant 0 : i32
    return %c0_i32, %c0_i32_0 : i32, i32
  }
  func.func @transform_50(%arg0: i32) -> (i32, i32) {
    %c0_i32 = arith.constant 0 : i32
    %c0_i32_0 = arith.constant 0 : i32
    %c0_i32_1 = arith.constant 0 : i32
    return %c0_i32, %c0_i32_0 : i32, i32
  }
  func.func @transform_51(%arg0: i32) -> (i32, i32) {
    %c0_i32 = arith.constant 0 : i32
    %c0_i32_0 = arith.constant 0 : i32
    %c0_i32_1 = arith.constant 0 : i32
    return %c0_i32, %c0_i32_0 : i32, i32
  }
  func.func @transform_52(%arg0: i32) -> (i32, i32) {
    %c0_i32 = arith.constant 0 : i32
    %c0_i32_0 = arith.constant 0 : i32
    %c0_i32_1 = arith.constant 0 : i32
    return %c0_i32, %c0_i32_0 : i32, i32
  }
  func.func @transform_53(%arg0: i32) -> (i32, i32) {
    %c0_i32 = arith.constant 0 : i32
    %c0_i32_0 = arith.constant 0 : i32
    %c0_i32_1 = arith.constant 0 : i32
    return %c0_i32, %c0_i32_0 : i32, i32
  }
  func.func @transform_54(%arg0: i32) -> (i32, i32) {
    %c0_i32 = arith.constant 0 : i32
    %c0_i32_0 = arith.constant 0 : i32
    %c0_i32_1 = arith.constant 0 : i32
    return %c0_i32, %c0_i32_0 : i32, i32
  }
  func.func @transform_55(%arg0: i32) -> (i32, i32) {
    %c0_i32 = arith.constant 0 : i32
    %c0_i32_0 = arith.constant 0 : i32
    %c0_i32_1 = arith.constant 0 : i32
    return %c0_i32, %c0_i32_0 : i32, i32
  }
  func.func @transform_56(%arg0: i32) -> (i32, i32) {
    %c0_i32 = arith.constant 0 : i32
    %c0_i32_0 = arith.constant 0 : i32
    %c0_i32_1 = arith.constant 0 : i32
    return %c0_i32, %c0_i32_0 : i32, i32
  }
  func.func @transform_57(%arg0: i32) -> (i32, i32) {
    %c0_i32 = arith.constant 0 : i32
    %c0_i32_0 = arith.constant 0 : i32
    %c0_i32_1 = arith.constant 0 : i32
    return %c0_i32, %c0_i32_0 : i32, i32
  }
}

</mosaic_0001>

<llo_original>
// kernel: encoder_forward.1
$region0: #{encoder_forward.1}
  #allocation0 [shape = 'u32[]', space=smem, size = 0x4, offset = 0x4, fixed_abs, tag = 'smem constant byte address 0x4 - core index']
  #allocation1 [shape = 'u32[72,128]{1,0:T(1,128)}', space=vmem, size = 0x9000, scoped, tag = 'internal scratch']
  %s0 = inlined_call_operand.smem [shape: u32[58], index: -1, kind: input, shape index: {}]
  %s1 = sld [smem:[%s0]]
  %s2 = scalar_lea.smem %s0, 1
  %s3 = sld [smem:[%s2]]
  %s4 = scalar_lea.smem %s0, 2
  %s5 = sld [smem:[%s4]]
  %s6 = scalar_lea.smem %s0, 3
  %s7 = sld [smem:[%s6]]
  %s8 = scalar_lea.smem %s0, 4
  %s9 = sld [smem:[%s8]]
  %s10 = scalar_lea.smem %s0, 5
  %s11 = sld [smem:[%s10]]
  %s12 = scalar_lea.smem %s0, 6
  %s13 = sld [smem:[%s12]]
  %s14 = scalar_lea.smem %s0, 7
  %s15 = sld [smem:[%s14]]
  %s16 = scalar_lea.smem %s0, 8
  %s17 = sld [smem:[%s16]]
  %s18 = scalar_lea.smem %s0, 9
  %s19 = sld [smem:[%s18]]
  %s20 = scalar_lea.smem %s0, 10
  %s21 = sld [smem:[%s20]]
  %s22 = scalar_lea.smem %s0, 11
  %s23 = sld [smem:[%s22]]
  %s24 = scalar_lea.smem %s0, 12
  %s25 = sld [smem:[%s24]]
  %s26 = scalar_lea.smem %s0, 13
  %s27 = sld [smem:[%s26]]
  %s28 = scalar_lea.smem %s0, 14
  %s29 = sld [smem:[%s28]]
  %s30 = scalar_lea.smem %s0, 15
  %s31 = sld [smem:[%s30]]
  %s32 = scalar_lea.smem %s0, 16
  %s33 = sld [smem:[%s32]]
  %s34 = scalar_lea.smem %s0, 17
  %s35 = sld [smem:[%s34]]
  %s36 = scalar_lea.smem %s0, 18
  %s37 = sld [smem:[%s36]]
  %s38 = scalar_lea.smem %s0, 19
  %s39 = sld [smem:[%s38]]
  %s40 = scalar_lea.smem %s0, 20
  %s41 = sld [smem:[%s40]]
  %s42 = scalar_lea.smem %s0, 21
  %s43 = sld [smem:[%s42]]
  %s44 = scalar_lea.smem %s0, 22
  %s45 = sld [smem:[%s44]]
  %s46 = scalar_lea.smem %s0, 23
  %s47 = sld [smem:[%s46]]
  %s48 = scalar_lea.smem %s0, 24
  %s49 = sld [smem:[%s48]]
  %s50 = scalar_lea.smem %s0, 25
  %s51 = sld [smem:[%s50]]
  %s52 = scalar_lea.smem %s0, 26
  %s53 = sld [smem:[%s52]]
  %s54 = scalar_lea.smem %s0, 27
  %s55 = sld [smem:[%s54]]
  %s56 = scalar_lea.smem %s0, 28
  %s57 = sld [smem:[%s56]]
  %s58 = scalar_lea.smem %s0, 29
  %s59 = sld [smem:[%s58]]
  %s60 = scalar_lea.smem %s0, 30
  %s61 = sld [smem:[%s60]]
  %s62 = scalar_lea.smem %s0, 31
  %s63 = sld [smem:[%s62]]
  %s64 = scalar_lea.smem %s0, 32
  %s65 = sld [smem:[%s64]]
  %s66 = scalar_lea.smem %s0, 33
  %s67 = sld [smem:[%s66]]
  %s68 = scalar_lea.smem %s0, 34
  %s69 = sld [smem:[%s68]]
  %s70 = scalar_lea.smem %s0, 35
  %s71 = sld [smem:[%s70]]
  %s72 = scalar_lea.smem %s0, 36
  %s73 = sld [smem:[%s72]]
  %s74 = scalar_lea.smem %s0, 37
  %s75 = sld [smem:[%s74]]
  %s76 = scalar_lea.smem %s0, 38
  %s77 = sld [smem:[%s76]]
  %s78 = scalar_lea.smem %s0, 39
  %s79 = sld [smem:[%s78]]
  %s80 = scalar_lea.smem %s0, 40
  %s81 = sld [smem:[%s80]]
  %s82 = scalar_lea.smem %s0, 41
  %s83 = sld [smem:[%s82]]
  %s84 = scalar_lea.smem %s0, 42
  %s85 = sld [smem:[%s84]]
  %s86 = scalar_lea.smem %s0, 43
  %s87 = sld [smem:[%s86]]
  %s88 = scalar_lea.smem %s0, 44
  %s89 = sld [smem:[%s88]]
  %s90 = scalar_lea.smem %s0, 45
  %s91 = sld [smem:[%s90]]
  %s92 = scalar_lea.smem %s0, 46
  %s93 = sld [smem:[%s92]]
  %s94 = scalar_lea.smem %s0, 47
  %s95 = sld [smem:[%s94]]
  %s96 = scalar_lea.smem %s0, 48
  %s97 = sld [smem:[%s96]]
  %s98 = scalar_lea.smem %s0, 49
  %s99 = sld [smem:[%s98]]
  %s100 = scalar_lea.smem %s0, 50
  %s101 = sld [smem:[%s100]]
  %s102 = scalar_lea.smem %s0, 51
  %s103 = sld [smem:[%s102]]
  %s104 = scalar_lea.smem %s0, 52
  %s105 = sld [smem:[%s104]]
  %s106 = scalar_lea.smem %s0, 53
  %s107 = sld [smem:[%s106]]
  %s108 = scalar_lea.smem %s0, 54
  %s109 = sld [smem:[%s108]]
  %s110 = scalar_lea.smem %s0, 55
  %s111 = sld [smem:[%s110]]
  %s112 = scalar_lea.smem %s0, 56
  %s113 = sld [smem:[%s112]]
  %s114 = scalar_lea.smem %s0, 57
  %s115 = sld [smem:[%s114]]
  %s116 = sld [smem:[#allocation0]]
  $region362: #{encoder_forward.1} parent=0
    _
  %s118 = ssub.s32 1, %s116
  %s119 = scalar_select 0, %s118, %s116
  $region1: #{encoder_forward.1} parent=0
    #allocation2 [shape = 'u8[1048576]{0}', space=vmem, size = 0x100000, scoped, tag = 'input window, operand 1, single buffered']
    #allocation3 [shape = 's32[1]{0}', space=sflag, size = 0x4, scoped, tag = 'scoped memory for encoder_forward.1']
    #allocation4 [shape = 'u8[524288]{0}', space=vmem, size = 0x80000, scoped, tag = 'input window, operand 2, single buffered']
    #allocation5 [shape = 's32[1]{0}', space=sflag, size = 0x4, scoped, tag = 'scoped memory for encoder_forward.1']
    #allocation6 [shape = 'u8[524288]{0}', space=vmem, size = 0x80000, scoped, tag = 'input window, operand 3, single buffered']
    #allocation7 [shape = 'u8[524288]{0}', space=vmem, size = 0x80000, scoped, tag = 'input window, operand 4, single buffered']
    #allocation8 [shape = 's32[1]{0}', space=sflag, size = 0x4, scoped, tag = 'scoped memory for encoder_forward.1']
    #allocation9 [shape = 'u8[524288]{0}', space=vmem, size = 0x80000, scoped, tag = 'input window, operand 5, single buffered']
    #allocation10 [shape = 'u8[524288]{0}', space=vmem, size = 0x80000, scoped, tag = 'input window, operand 6, single buffered']
    #allocation11 [shape = 's32[1]{0}', space=sflag, size = 0x4, scoped, tag = 'scoped memory for encoder_forward.1']
    #allocation12 [shape = 'u8[524288]{0}', space=vmem, size = 0x80000, scoped, tag = 'input window, operand 7, single buffered']
    #allocation13 [shape = 'u8[524288]{0}', space=vmem, size = 0x80000, scoped, tag = 'input window, operand 8, single buffered']
    #allocation14 [shape = 's32[1]{0}', space=sflag, size = 0x4, scoped, tag = 'scoped memory for encoder_forward.1']
    #allocation15 [shape = 'u8[524288]{0}', space=vmem, size = 0x80000, scoped, tag = 'input window, operand 9, single buffered']
    #allocation16 [shape = 'u8[32768]{0}', space=vmem, size = 0x8000, scoped, tag = 'input window, operand 11, single buffered']
    #allocation17 [shape = 's32[1]{0}', space=sflag, size = 0x4, scoped, tag = 'scoped memory for encoder_forward.1']
    #allocation18 [shape = 'u8[32768]{0}', space=vmem, size = 0x8000, scoped, tag = 'input window, operand 12, single buffered']
    #allocation19 [shape = 'u8[32768]{0}', space=vmem, size = 0x8000, scoped, tag = 'input window, operand 13, single buffered']
    #allocation20 [shape = 's32[1]{0}', space=sflag, size = 0x4, scoped, tag = 'scoped memory for encoder_forward.1']
    #allocation21 [shape = 'u8[32768]{0}', space=vmem, size = 0x8000, scoped, tag = 'input window, operand 14, single buffered']
    #allocation22 [shape = 'u8[32768]{0}', space=vmem, size = 0x8000, scoped, tag = 'input window, operand 15, single buffered']
    #allocation23 [shape = 's32[1]{0}', space=sflag, size = 0x4, scoped, tag = 'scoped memory for encoder_forward.1']
    #allocation24 [shape = 'u8[32768]{0}', space=vmem, size = 0x8000, scoped, tag = 'input window, operand 16, single buffered']
    #allocation25 [shape = 'u8[32768]{0}', space=vmem, size = 0x8000, scoped, tag = 'input window, operand 18, single buffered']
    #allocation26 [shape = 's32[1]{0}', space=sflag, size = 0x4, scoped, tag = 'scoped memory for encoder_forward.1']
    #allocation27 [shape = 'u8[8192]{0}', space=vmem, size = 0x2000, scoped, tag = 'input window, operand 20, single buffered']
    #allocation28 [shape = 'u8[8192]{0}', space=vmem, size = 0x2000, scoped, tag = 'input window, operand 21, single buffered']
    #allocation29 [shape = 's32[1]{0}', space=sflag, size = 0x4, scoped, tag = 'scoped memory for encoder_forward.1']
    #allocation30 [shape = 'u8[8192]{0}', space=vmem, size = 0x2000, scoped, tag = 'input window, operand 22, single buffered']
    #allocation31 [shape = 'u8[8192]{0}', space=vmem, size = 0x2000, scoped, tag = 'input window, operand 23, single buffered']
    #allocation32 [shape = 's32[1]{0}', space=sflag, size = 0x4, scoped, tag = 'scoped memory for encoder_forward.1']
    #allocation33 [shape = 'u8[8192]{0}', space=vmem, size = 0x2000, scoped, tag = 'input window, operand 24, single buffered']
    #allocation34 [shape = 'u8[8192]{0}', space=vmem, size = 0x2000, scoped, tag = 'input window, operand 25, single buffered']
    #allocation35 [shape = 's32[1]{0}', space=sflag, size = 0x4, scoped, tag = 'scoped memory for encoder_forward.1']
    #allocation36 [shape = 'u8[8192]{0}', space=vmem, size = 0x2000, scoped, tag = 'input window, operand 26, single buffered']
    #allocation37 [shape = 'u8[8192]{0}', space=vmem, size = 0x2000, scoped, tag = 'input window, operand 27, single buffered']
    #allocation38 [shape = 's32[1]{0}', space=sflag, size = 0x4, scoped, tag = 'scoped memory for encoder_forward.1']
    #allocation39 [shape = 'u8[8192]{0}', space=vmem, size = 0x2000, scoped, tag = 'input window, operand 28, single buffered']
    #allocation40 [shape = 'u8[2048]{0}', space=vmem, size = 0x800, scoped, tag = 'input window, operand 31, single buffered']
    #allocation41 [shape = 's32[1]{0}', space=sflag, size = 0x4, scoped, tag = 'scoped memory for encoder_forward.1']
    #allocation42 [shape = 'u8[2048]{0}', space=vmem, size = 0x800, scoped, tag = 'input window, operand 32, single buffered']
    #allocation43 [shape = 'u8[2048]{0}', space=vmem, size = 0x800, scoped, tag = 'input window, operand 34, single buffered']
    #allocation44 [shape = 's32[1]{0}', space=sflag, size = 0x4, scoped, tag = 'scoped memory for encoder_forward.1']
    #allocation45 [shape = 'u8[2048]{0}', space=vmem, size = 0x800, scoped, tag = 'input window, operand 35, single buffered']
    #allocation46 [shape = 'u8[2048]{0}', space=vmem, size = 0x800, scoped, tag = 'input window, operand 36, single buffered']
    #allocation47 [shape = 's32[1]{0}', space=sflag, size = 0x4, scoped, tag = 'scoped memory for encoder_forward.1']
    #allocation48 [shape = 'u8[512]{0}', space=vmem, size = 0x400, scoped, tag = 'input window, operand 56, single buffered']
    %120 = vsyncpa [#allocation3], 0
    %121 = vsyncpa [#allocation5], 0
    %122 = vsyncpa [#allocation8], 0
    %123 = vsyncpa [#allocation11], 0
    %124 = vsyncpa [#allocation14], 0
    %125 = vsyncpa [#allocation17], 0
    %126 = vsyncpa [#allocation20], 0
    %127 = vsyncpa [#allocation23], 0
    %128 = vsyncpa [#allocation26], 0
    %129 = vsyncpa [#allocation29], 0
    %130 = vsyncpa [#allocation32], 0
    %131 = vsyncpa [#allocation35], 0
    %132 = vsyncpa [#allocation38], 0
    %133 = vsyncpa [#allocation41], 0
    %134 = vsyncpa [#allocation44], 0
    %135 = vsyncpa [#allocation47], 0
    // Predicated region
    $region2: #{encoder_forward.1} parent=1 // pred_check
      _
    $region3: #{encoder_forward.1} parent=1 // pred_check_branch
      %137 = sbr.rel (0) target = $region5
    $region4: #{encoder_forward.1} parent=1 // pred_region
      _
    $region5: #{encoder_forward.1} parent=1 // pred_fallthru
      _
    // Predicated region
    $region6: #{encoder_forward.1} parent=1 // pred_check
      _
    $region7: #{encoder_forward.1} parent=1 // pred_check_branch
      %139 = sbr.rel (0) target = $region9
    $region8: #{encoder_forward.1} parent=1 // pred_region
      %141 = vsyncadd [#allocation3], 0
      %s142 = sshll.u32 %s3, 4
      %s143 = int_to_ptr.hbm [resolvable:$true] %s142
      %s144 = sshll.u32 [#allocation2], 4
      %s145 = int_to_ptr.vmem [resolvable:$true] %s144
      %150 = dma.hbm_to_vmem [thread:$0]  %s143, 32768, %s145, [#allocation3], 256, 256, 16
    $region9: #{encoder_forward.1} parent=1 // pred_fallthru
      _
    // Predicated region
    $region10: #{encoder_forward.1} parent=1 // pred_check
      _
    $region11: #{encoder_forward.1} parent=1 // pred_check_branch
      %152 = sbr.rel (0) target = $region13
    $region12: #{encoder_forward.1} parent=1 // pred_region
      %154 = vsyncadd [#allocation5], 0
      %s155 = sshll.u32 %s5, 4
      %s156 = int_to_ptr.hbm [resolvable:$true] %s155
      %s157 = sshll.u32 [#allocation4], 4
      %s158 = int_to_ptr.vmem [resolvable:$true] %s157
      %163 = dma.hbm_to_vmem [thread:$0]  %s156, 16384, %s158, [#allocation5], 256, 256, 16
    $region13: #{encoder_forward.1} parent=1 // pred_fallthru
      _
    // Predicated region
    $region14: #{encoder_forward.1} parent=1 // pred_check
      _
    $region15: #{encoder_forward.1} parent=1 // pred_check_branch
      %165 = sbr.rel (0) target = $region17
    $region16: #{encoder_forward.1} parent=1 // pred_region
      %167 = vsyncadd [#allocation5], 0
      %s168 = sshll.u32 %s7, 4
      %s169 = int_to_ptr.hbm [resolvable:$true] %s168
      %s170 = sshll.u32 [#allocation6], 4
      %s171 = int_to_ptr.vmem [resolvable:$true] %s170
      %176 = dma.hbm_to_vmem [thread:$0]  %s169, 16384, %s171, [#allocation5], 256, 256, 16
    $region17: #{encoder_forward.1} parent=1 // pred_fallthru
      _
    // Predicated region
    $region18: #{encoder_forward.1} parent=1 // pred_check
      _
    $region19: #{encoder_forward.1} parent=1 // pred_check_branch
      %178 = sbr.rel (0) target = $region21
    $region20: #{encoder_forward.1} parent=1 // pred_region
      %180 = vsyncadd [#allocation8], 0
      %s181 = sshll.u32 %s9, 4
      %s182 = int_to_ptr.hbm [resolvable:$true] %s181
      %s183 = sshll.u32 [#allocation7], 4
      %s184 = int_to_ptr.vmem [resolvable:$true] %s183
      %189 = dma.hbm_to_vmem [thread:$0]  %s182, 16384, %s184, [#allocation8], 256, 256, 16
    $region21: #{encoder_forward.1} parent=1 // pred_fallthru
      _
    // Predicated region
    $region22: #{encoder_forward.1} parent=1 // pred_check
      _
    $region23: #{encoder_forward.1} parent=1 // pred_check_branch
      %191 = sbr.rel (0) target = $region25
    $region24: #{encoder_forward.1} parent=1 // pred_region
      %193 = vsyncadd [#allocation8], 0
      %s194 = sshll.u32 %s11, 4
      %s195 = int_to_ptr.hbm [resolvable:$true] %s194
      %s196 = sshll.u32 [#allocation9], 4
      %s197 = int_to_ptr.vmem [resolvable:$true] %s196
      %202 = dma.hbm_to_vmem [thread:$0]  %s195, 16384, %s197, [#allocation8], 256, 256, 16
    $region25: #{encoder_forward.1} parent=1 // pred_fallthru
      _
    // Predicated region
    $region26: #{encoder_forward.1} parent=1 // pred_check
      _
    $region27: #{encoder_forward.1} parent=1 // pred_check_branch
      %204 = sbr.rel (0) target = $region29
    $region28: #{encoder_forward.1} parent=1 // pred_region
      %206 = vsyncadd [#allocation11], 0
      %s207 = sshll.u32 %s13, 4
      %s208 = int_to_ptr.hbm [resolvable:$true] %s207
      %s209 = sshll.u32 [#allocation10], 4
      %s210 = int_to_ptr.vmem [resolvable:$true] %s209
      %215 = dma.hbm_to_vmem [thread:$0]  %s208, 16384, %s210, [#allocation11], 256, 256, 16
    $region29: #{encoder_forward.1} parent=1 // pred_fallthru
      _
    // Predicated region
    $region30: #{encoder_forward.1} parent=1 // pred_check
      _
    $region31: #{encoder_forward.1} parent=1 // pred_check_branch
      %217 = sbr.rel (0) target = $region33
    $region32: #{encoder_forward.1} parent=1 // pred_region
      %219 = vsyncadd [#allocation11], 0
      %s220 = sshll.u32 %s15, 4
      %s221 = int_to_ptr.hbm [resolvable:$true] %s220
      %s222 = sshll.u32 [#allocation12], 4
      %s223 = int_to_ptr.vmem [resolvable:$true] %s222
      %228 = dma.hbm_to_vmem [thread:$0]  %s221, 16384, %s223, [#allocation11], 256, 256, 16
    $region33: #{encoder_forward.1} parent=1 // pred_fallthru
      _
    // Predicated region
    $region34: #{encoder_forward.1} parent=1 // pred_check
      _
    $region35: #{encoder_forward.1} parent=1 // pred_check_branch
      %230 = sbr.rel (0) target = $region37
    $region36: #{encoder_forward.1} parent=1 // pred_region
      %232 = vsyncadd [#allocation14], 0
      %s233 = sshll.u32 %s17, 4
      %s234 = int_to_ptr.hbm [resolvable:$true] %s233
      %s235 = sshll.u32 [#allocation13], 4
      %s236 = int_to_ptr.vmem [resolvable:$true] %s235
      %241 = dma.hbm_to_vmem [thread:$0]  %s234, 16384, %s236, [#allocation14], 256, 256, 16
    $region37: #{encoder_forward.1} parent=1 // pred_fallthru
      _
    // Predicated region
    $region38: #{encoder_forward.1} parent=1 // pred_check
      _
    $region39: #{encoder_forward.1} parent=1 // pred_check_branch
      %243 = sbr.rel (0) target = $region41
    $region40: #{encoder_forward.1} parent=1 // pred_region
      %245 = vsyncadd [#allocation14], 0
      %s246 = sshll.u32 %s19, 4
      %s247 = int_to_ptr.hbm [resolvable:$true] %s246
      %s248 = sshll.u32 [#allocation15], 4
      %s249 = int_to_ptr.vmem [resolvable:$true] %s248
      %254 = dma.hbm_to_vmem [thread:$0]  %s247, 16384, %s249, [#allocation14], 256, 256, 16
    $region41: #{encoder_forward.1} parent=1 // pred_fallthru
      _
    // Predicated region
    $region42: #{encoder_forward.1} parent=1 // pred_check
      _
    $region43: #{encoder_forward.1} parent=1 // pred_check_branch
      %256 = sbr.rel (0) target = $region45
    $region44: #{encoder_forward.1} parent=1 // pred_region
      _
    $region45: #{encoder_forward.1} parent=1 // pred_fallthru
      _
    // Predicated region
    $region46: #{encoder_forward.1} parent=1 // pred_check
      _
    $region47: #{encoder_forward.1} parent=1 // pred_check_branch
      %258 = sbr.rel (0) target = $region49
    $region48: #{encoder_forward.1} parent=1 // pred_region
      %260 = vsyncadd [#allocation17], 0
      %s261 = sshll.u32 %s23, 4
      %s262 = int_to_ptr.hbm [resolvable:$true] %s261
      %s263 = sshll.u32 [#allocation16], 4
      %s264 = int_to_ptr.vmem [resolvable:$true] %s263
      %269 = dma.hbm_to_vmem [thread:$0]  %s262, 1024, %s264, [#allocation17], 64, 64, 4
    $region49: #{encoder_forward.1} parent=1 // pred_fallthru
      _
    // Predicated region
    $region50: #{encoder_forward.1} parent=1 // pred_check
      _
    $region51: #{encoder_forward.1} parent=1 // pred_check_branch
      %271 = sbr.rel (0) target = $region53
    $region52: #{encoder_forward.1} parent=1 // pred_region
      %273 = vsyncadd [#allocation17], 0
      %s274 = sshll.u32 %s25, 4
      %s275 = int_to_ptr.hbm [resolvable:$true] %s274
      %s276 = sshll.u32 [#allocation18], 4
      %s277 = int_to_ptr.vmem [resolvable:$true] %s276
      %282 = dma.hbm_to_vmem [thread:$0]  %s275, 1024, %s277, [#allocation17], 64, 64, 4
    $region53: #{encoder_forward.1} parent=1 // pred_fallthru
      _
    // Predicated region
    $region54: #{encoder_forward.1} parent=1 // pred_check
      _
    $region55: #{encoder_forward.1} parent=1 // pred_check_branch
      %284 = sbr.rel (0) target = $region57
    $region56: #{encoder_forward.1} parent=1 // pred_region
      %286 = vsyncadd [#allocation20], 0
      %s287 = sshll.u32 %s27, 4
      %s288 = int_to_ptr.hbm [resolvable:$true] %s287
      %s289 = sshll.u32 [#allocation19], 4
      %s290 = int_to_ptr.vmem [resolvable:$true] %s289
      %295 = dma.hbm_to_vmem [thread:$0]  %s288, 1024, %s290, [#allocation20], 64, 64, 4
    $region57: #{encoder_forward.1} parent=1 // pred_fallthru
      _
    // Predicated region
    $region58: #{encoder_forward.1} parent=1 // pred_check
      _
    $region59: #{encoder_forward.1} parent=1 // pred_check_branch
      %297 = sbr.rel (0) target = $region61
    $region60: #{encoder_forward.1} parent=1 // pred_region
      %299 = vsyncadd [#allocation20], 0
      %s300 = sshll.u32 %s29, 4
      %s301 = int_to_ptr.hbm [resolvable:$true] %s300
      %s302 = sshll.u32 [#allocation21], 4
      %s303 = int_to_ptr.vmem [resolvable:$true] %s302
      %308 = dma.hbm_to_vmem [thread:$0]  %s301, 1024, %s303, [#allocation20], 64, 64, 4
    $region61: #{encoder_forward.1} parent=1 // pred_fallthru
      _
    // Predicated region
    $region62: #{encoder_forward.1} parent=1 // pred_check
      _
    $region63: #{encoder_forward.1} parent=1 // pred_check_branch
      %310 = sbr.rel (0) target = $region65
    $region64: #{encoder_forward.1} parent=1 // pred_region
      %312 = vsyncadd [#allocation23], 0
      %s313 = sshll.u32 %s31, 4
      %s314 = int_to_ptr.hbm [resolvable:$true] %s313
      %s315 = sshll.u32 [#allocation22], 4
      %s316 = int_to_ptr.vmem [resolvable:$true] %s315
      %321 = dma.hbm_to_vmem [thread:$0]  %s314, 1024, %s316, [#allocation23], 64, 64, 4
    $region65: #{encoder_forward.1} parent=1 // pred_fallthru
      _
    // Predicated region
    $region66: #{encoder_forward.1} parent=1 // pred_check
      _
    $region67: #{encoder_forward.1} parent=1 // pred_check_branch
      %323 = sbr.rel (0) target = $region69
    $region68: #{encoder_forward.1} parent=1 // pred_region
      %325 = vsyncadd [#allocation23], 0
      %s326 = sshll.u32 %s33, 4
      %s327 = int_to_ptr.hbm [resolvable:$true] %s326
      %s328 = sshll.u32 [#allocation24], 4
      %s329 = int_to_ptr.vmem [resolvable:$true] %s328
      %334 = dma.hbm_to_vmem [thread:$0]  %s327, 1024, %s329, [#allocation23], 64, 64, 4
    $region69: #{encoder_forward.1} parent=1 // pred_fallthru
      _
    // Predicated region
    $region70: #{encoder_forward.1} parent=1 // pred_check
      _
    $region71: #{encoder_forward.1} parent=1 // pred_check_branch
      %336 = sbr.rel (0) target = $region73
    $region72: #{encoder_forward.1} parent=1 // pred_region
      _
    $region73: #{encoder_forward.1} parent=1 // pred_fallthru
      _
    // Predicated region
    $region74: #{encoder_forward.1} parent=1 // pred_check
      _
    $region75: #{encoder_forward.1} parent=1 // pred_check_branch
      %338 = sbr.rel (0) target = $region77
    $region76: #{encoder_forward.1} parent=1 // pred_region
      %340 = vsyncadd [#allocation26], 0
      %s341 = sshll.u32 %s37, 4
      %s342 = int_to_ptr.hbm [resolvable:$true] %s341
      %s343 = sshll.u32 [#allocation25], 4
      %s344 = int_to_ptr.vmem [resolvable:$true] %s343
      %349 = dma.hbm_to_vmem [thread:$0]  %s342, 1024, %s344, [#allocation26], 64, 64, 4
    $region77: #{encoder_forward.1} parent=1 // pred_fallthru
      _
    // Predicated region
    $region78: #{encoder_forward.1} parent=1 // pred_check
      _
    $region79: #{encoder_forward.1} parent=1 // pred_check_branch
      %351 = sbr.rel (0) target = $region81
    $region80: #{encoder_forward.1} parent=1 // pred_region
      _
    $region81: #{encoder_forward.1} parent=1 // pred_fallthru
      _
    // Predicated region
    $region82: #{encoder_forward.1} parent=1 // pred_check
      _
    $region83: #{encoder_forward.1} parent=1 // pred_check_branch
      %353 = sbr.rel (0) target = $region85
    $region84: #{encoder_forward.1} parent=1 // pred_region
      %355 = vsyncadd [#allocation26], 0
      %s356 = sshll.u32 %s41, 4
      %s357 = int_to_ptr.hbm [resolvable:$true] %s356
      %s358 = sshll.u32 [#allocation27], 4
      %s359 = int_to_ptr.vmem [resolvable:$true] %s358
      %364 = dma.hbm_to_vmem [thread:$0]  %s357, 256, %s359, [#allocation26], 64, 64, 4
    $region85: #{encoder_forward.1} parent=1 // pred_fallthru
      _
    // Predicated region
    $region86: #{encoder_forward.1} parent=1 // pred_check
      _
    $region87: #{encoder_forward.1} parent=1 // pred_check_branch
      %366 = sbr.rel (0) target = $region89
    $region88: #{encoder_forward.1} parent=1 // pred_region
      %368 = vsyncadd [#allocation29], 0
      %s369 = sshll.u32 %s43, 4
      %s370 = int_to_ptr.hbm [resolvable:$true] %s369
      %s371 = sshll.u32 [#allocation28], 4
      %s372 = int_to_ptr.vmem [resolvable:$true] %s371
      %377 = dma.hbm_to_vmem [thread:$0]  %s370, 256, %s372, [#allocation29], 64, 64, 4
    $region89: #{encoder_forward.1} parent=1 // pred_fallthru
      _
    // Predicated region
    $region90: #{encoder_forward.1} parent=1 // pred_check
      _
    $region91: #{encoder_forward.1} parent=1 // pred_check_branch
      %379 = sbr.rel (0) target = $region93
    $region92: #{encoder_forward.1} parent=1 // pred_region
      %381 = vsyncadd [#allocation29], 0
      %s382 = sshll.u32 %s45, 4
      %s383 = int_to_ptr.hbm [resolvable:$true] %s382
      %s384 = sshll.u32 [#allocation30], 4
      %s385 = int_to_ptr.vmem [resolvable:$true] %s384
      %390 = dma.hbm_to_vmem [thread:$0]  %s383, 256, %s385, [#allocation29], 64, 64, 4
    $region93: #{encoder_forward.1} parent=1 // pred_fallthru
      _
    // Predicated region
    $region94: #{encoder_forward.1} parent=1 // pred_check
      _
    $region95: #{encoder_forward.1} parent=1 // pred_check_branch
      %392 = sbr.rel (0) target = $region97
    $region96: #{encoder_forward.1} parent=1 // pred_region
      %394 = vsyncadd [#allocation32], 0
      %s395 = sshll.u32 %s47, 4
      %s396 = int_to_ptr.hbm [resolvable:$true] %s395
      %s397 = sshll.u32 [#allocation31], 4
      %s398 = int_to_ptr.vmem [resolvable:$true] %s397
      %403 = dma.hbm_to_vmem [thread:$0]  %s396, 256, %s398, [#allocation32], 64, 64, 4
    $region97: #{encoder_forward.1} parent=1 // pred_fallthru
      _
    // Predicated region
    $region98: #{encoder_forward.1} parent=1 // pred_check
      _
    $region99: #{encoder_forward.1} parent=1 // pred_check_branch
      %405 = sbr.rel (0) target = $region101
    $region100: #{encoder_forward.1} parent=1 // pred_region
      %407 = vsyncadd [#allocation32], 0
      %s408 = sshll.u32 %s49, 4
      %s409 = int_to_ptr.hbm [resolvable:$true] %s408
      %s410 = sshll.u32 [#allocation33], 4
      %s411 = int_to_ptr.vmem [resolvable:$true] %s410
      %416 = dma.hbm_to_vmem [thread:$0]  %s409, 256, %s411, [#allocation32], 64, 64, 4
    $region101: #{encoder_forward.1} parent=1 // pred_fallthru
      _
    // Predicated region
    $region102: #{encoder_forward.1} parent=1 // pred_check
      _
    $region103: #{encoder_forward.1} parent=1 // pred_check_branch
      %418 = sbr.rel (0) target = $region105
    $region104: #{encoder_forward.1} parent=1 // pred_region
      %420 = vsyncadd [#allocation35], 0
      %s421 = sshll.u32 %s51, 4
      %s422 = int_to_ptr.hbm [resolvable:$true] %s421
      %s423 = sshll.u32 [#allocation34], 4
      %s424 = int_to_ptr.vmem [resolvable:$true] %s423
      %429 = dma.hbm_to_vmem [thread:$0]  %s422, 256, %s424, [#allocation35], 64, 64, 4
    $region105: #{encoder_forward.1} parent=1 // pred_fallthru
      _
    // Predicated region
    $region106: #{encoder_forward.1} parent=1 // pred_check
      _
    $region107: #{encoder_forward.1} parent=1 // pred_check_branch
      %431 = sbr.rel (0) target = $region109
    $region108: #{encoder_forward.1} parent=1 // pred_region
      %433 = vsyncadd [#allocation35], 0
      %s434 = sshll.u32 %s53, 4
      %s435 = int_to_ptr.hbm [resolvable:$true] %s434
      %s436 = sshll.u32 [#allocation36], 4
      %s437 = int_to_ptr.vmem [resolvable:$true] %s436
      %442 = dma.hbm_to_vmem [thread:$0]  %s435, 256, %s437, [#allocation35], 64, 64, 4
    $region109: #{encoder_forward.1} parent=1 // pred_fallthru
      _
    // Predicated region
    $region110: #{encoder_forward.1} parent=1 // pred_check
      _
    $region111: #{encoder_forward.1} parent=1 // pred_check_branch
      %444 = sbr.rel (0) target = $region113
    $region112: #{encoder_forward.1} parent=1 // pred_region
      %446 = vsyncadd [#allocation38], 0
      %s447 = sshll.u32 %s55, 4
      %s448 = int_to_ptr.hbm [resolvable:$true] %s447
      %s449 = sshll.u32 [#allocation37], 4
      %s450 = int_to_ptr.vmem [resolvable:$true] %s449
      %455 = dma.hbm_to_vmem [thread:$0]  %s448, 256, %s450, [#allocation38], 64, 64, 4
    $region113: #{encoder_forward.1} parent=1 // pred_fallthru
      _
    // Predicated region
    $region114: #{encoder_forward.1} parent=1 // pred_check
      _
    $region115: #{encoder_forward.1} parent=1 // pred_check_branch
      %457 = sbr.rel (0) target = $region117
    $region116: #{encoder_forward.1} parent=1 // pred_region
      %459 = vsyncadd [#allocation38], 0
      %s460 = sshll.u32 %s57, 4
      %s461 = int_to_ptr.hbm [resolvable:$true] %s460
      %s462 = sshll.u32 [#allocation39], 4
      %s463 = int_to_ptr.vmem [resolvable:$true] %s462
      %468 = dma.hbm_to_vmem [thread:$0]  %s461, 256, %s463, [#allocation38], 64, 64, 4
    $region117: #{encoder_forward.1} parent=1 // pred_fallthru
      _
    // Predicated region
    $region118: #{encoder_forward.1} parent=1 // pred_check
      _
    $region119: #{encoder_forward.1} parent=1 // pred_check_branch
      %470 = sbr.rel (0) target = $region121
    $region120: #{encoder_forward.1} parent=1 // pred_region
      _
    $region121: #{encoder_forward.1} parent=1 // pred_fallthru
      _
    // Predicated region
    $region122: #{encoder_forward.1} parent=1 // pred_check
      _
    $region123: #{encoder_forward.1} parent=1 // pred_check_branch
      %472 = sbr.rel (0) target = $region125
    $region124: #{encoder_forward.1} parent=1 // pred_region
      _
    $region125: #{encoder_forward.1} parent=1 // pred_fallthru
      _
    // Predicated region
    $region126: #{encoder_forward.1} parent=1 // pred_check
      _
    $region127: #{encoder_forward.1} parent=1 // pred_check_branch
      %474 = sbr.rel (0) target = $region129
    $region128: #{encoder_forward.1} parent=1 // pred_region
      %476 = vsyncadd [#allocation41], 0
      %s478 = sshll.u32 %s63, 4
      %s479 = int_to_ptr.hbm [resolvable:$true] %s478
      %s480 = sshll.u32 [#allocation40], 4
      %s481 = int_to_ptr.vmem [resolvable:$true] %s480
      %483 = dma.hbm_to_vmem [thread:$0]  %s479, 64, %s481, [#allocation41]
    $region129: #{encoder_forward.1} parent=1 // pred_fallthru
      _
    // Predicated region
    $region130: #{encoder_forward.1} parent=1 // pred_check
      _
    $region131: #{encoder_forward.1} parent=1 // pred_check_branch
      %485 = sbr.rel (0) target = $region133
    $region132: #{encoder_forward.1} parent=1 // pred_region
      %487 = vsyncadd [#allocation41], 0
      %s489 = sshll.u32 %s65, 4
      %s490 = int_to_ptr.hbm [resolvable:$true] %s489
      %s491 = sshll.u32 [#allocation42], 4
      %s492 = int_to_ptr.vmem [resolvable:$true] %s491
      %494 = dma.hbm_to_vmem [thread:$0]  %s490, 64, %s492, [#allocation41]
    $region133: #{encoder_forward.1} parent=1 // pred_fallthru
      _
    // Predicated region
    $region134: #{encoder_forward.1} parent=1 // pred_check
      _
    $region135: #{encoder_forward.1} parent=1 // pred_check_branch
      %496 = sbr.rel (0) target = $region137
    $region136: #{encoder_forward.1} parent=1 // pred_region
      _
    $region137: #{encoder_forward.1} parent=1 // pred_fallthru
      _
    // Predicated region
    $region138: #{encoder_forward.1} parent=1 // pred_check
      _
    $region139: #{encoder_forward.1} parent=1 // pred_check_branch
      %498 = sbr.rel (0) target = $region141
    $region140: #{encoder_forward.1} parent=1 // pred_region
      %500 = vsyncadd [#allocation44], 0
      %s502 = sshll.u32 %s69, 4
      %s503 = int_to_ptr.hbm [resolvable:$true] %s502
      %s504 = sshll.u32 [#allocation43], 4
      %s505 = int_to_ptr.vmem [resolvable:$true] %s504
      %507 = dma.hbm_to_vmem [thread:$0]  %s503, 64, %s505, [#allocation44]
    $region141: #{encoder_forward.1} parent=1 // pred_fallthru
      _
    // Predicated region
    $region142: #{encoder_forward.1} parent=1 // pred_check
      _
    $region143: #{encoder_forward.1} parent=1 // pred_check_branch
      %509 = sbr.rel (0) target = $region145
    $region144: #{encoder_forward.1} parent=1 // pred_region
      %511 = vsyncadd [#allocation44], 0
      %s513 = sshll.u32 %s71, 4
      %s514 = int_to_ptr.hbm [resolvable:$true] %s513
      %s515 = sshll.u32 [#allocation45], 4
      %s516 = int_to_ptr.vmem [resolvable:$true] %s515
      %518 = dma.hbm_to_vmem [thread:$0]  %s514, 64, %s516, [#allocation44]
    $region145: #{encoder_forward.1} parent=1 // pred_fallthru
      _
    // Predicated region
    $region146: #{encoder_forward.1} parent=1 // pred_check
      _
    $region147: #{encoder_forward.1} parent=1 // pred_check_branch
      %520 = sbr.rel (0) target = $region149
    $region148: #{encoder_forward.1} parent=1 // pred_region
      %522 = vsyncadd [#allocation47], 0
      %s524 = sshll.u32 %s73, 4
      %s525 = int_to_ptr.hbm [resolvable:$true] %s524
      %s526 = sshll.u32 [#allocation46], 4
      %s527 = int_to_ptr.vmem [resolvable:$true] %s526
      %529 = dma.hbm_to_vmem [thread:$0]  %s525, 64, %s527, [#allocation47]
    $region149: #{encoder_forward.1} parent=1 // pred_fallthru
      _
    // Predicated region
    $region150: #{encoder_forward.1} parent=1 // pred_check
      _
    $region151: #{encoder_forward.1} parent=1 // pred_check_branch
      %531 = sbr.rel (0) target = $region153
    $region152: #{encoder_forward.1} parent=1 // pred_region
      _
    $region153: #{encoder_forward.1} parent=1 // pred_fallthru
      _
    // Predicated region
    $region154: #{encoder_forward.1} parent=1 // pred_check
      _
    $region155: #{encoder_forward.1} parent=1 // pred_check_branch
      %533 = sbr.rel (0) target = $region157
    $region156: #{encoder_forward.1} parent=1 // pred_region
      _
    $region157: #{encoder_forward.1} parent=1 // pred_fallthru
      _
    // Predicated region
    $region158: #{encoder_forward.1} parent=1 // pred_check
      _
    $region159: #{encoder_forward.1} parent=1 // pred_check_branch
      %535 = sbr.rel (0) target = $region161
    $region160: #{encoder_forward.1} parent=1 // pred_region
      _
    $region161: #{encoder_forward.1} parent=1 // pred_fallthru
      _
    // Predicated region
    $region162: #{encoder_forward.1} parent=1 // pred_check
      _
    $region163: #{encoder_forward.1} parent=1 // pred_check_branch
      %537 = sbr.rel (0) target = $region165
    $region164: #{encoder_forward.1} parent=1 // pred_region
      _
    $region165: #{encoder_forward.1} parent=1 // pred_fallthru
      _
    // Predicated region
    $region166: #{encoder_forward.1} parent=1 // pred_check
      _
    $region167: #{encoder_forward.1} parent=1 // pred_check_branch
      %539 = sbr.rel (0) target = $region169
    $region168: #{encoder_forward.1} parent=1 // pred_region
      _
    $region169: #{encoder_forward.1} parent=1 // pred_fallthru
      _
    // Predicated region
    $region170: #{encoder_forward.1} parent=1 // pred_check
      _
    $region171: #{encoder_forward.1} parent=1 // pred_check_branch
      %541 = sbr.rel (0) target = $region173
    $region172: #{encoder_forward.1} parent=1 // pred_region
      _
    $region173: #{encoder_forward.1} parent=1 // pred_fallthru
      _
    // Predicated region
    $region174: #{encoder_forward.1} parent=1 // pred_check
      _
    $region175: #{encoder_forward.1} parent=1 // pred_check_branch
      %543 = sbr.rel (0) target = $region177
    $region176: #{encoder_forward.1} parent=1 // pred_region
      _
    $region177: #{encoder_forward.1} parent=1 // pred_fallthru
      _
    // Predicated region
    $region178: #{encoder_forward.1} parent=1 // pred_check
      _
    $region179: #{encoder_forward.1} parent=1 // pred_check_branch
      %545 = sbr.rel (0) target = $region181
    $region180: #{encoder_forward.1} parent=1 // pred_region
      _
    $region181: #{encoder_forward.1} parent=1 // pred_fallthru
      _
    // Predicated region
    $region182: #{encoder_forward.1} parent=1 // pred_check
      _
    $region183: #{encoder_forward.1} parent=1 // pred_check_branch
      %547 = sbr.rel (0) target = $region185
    $region184: #{encoder_forward.1} parent=1 // pred_region
      _
    $region185: #{encoder_forward.1} parent=1 // pred_fallthru
      _
    // Predicated region
    $region186: #{encoder_forward.1} parent=1 // pred_check
      _
    $region187: #{encoder_forward.1} parent=1 // pred_check_branch
      %549 = sbr.rel (0) target = $region189
    $region188: #{encoder_forward.1} parent=1 // pred_region
      _
    $region189: #{encoder_forward.1} parent=1 // pred_fallthru
      _
    // Predicated region
    $region190: #{encoder_forward.1} parent=1 // pred_check
      _
    $region191: #{encoder_forward.1} parent=1 // pred_check_branch
      %551 = sbr.rel (0) target = $region193
    $region192: #{encoder_forward.1} parent=1 // pred_region
      _
    $region193: #{encoder_forward.1} parent=1 // pred_fallthru
      _
    // Predicated region
    $region194: #{encoder_forward.1} parent=1 // pred_check
      _
    $region195: #{encoder_forward.1} parent=1 // pred_check_branch
      %553 = sbr.rel (0) target = $region197
    $region196: #{encoder_forward.1} parent=1 // pred_region
      _
    $region197: #{encoder_forward.1} parent=1 // pred_fallthru
      _
    // Predicated region
    $region198: #{encoder_forward.1} parent=1 // pred_check
      _
    $region199: #{encoder_forward.1} parent=1 // pred_check_branch
      %555 = sbr.rel (0) target = $region201
    $region200: #{encoder_forward.1} parent=1 // pred_region
      _
    $region201: #{encoder_forward.1} parent=1 // pred_fallthru
      _
    // Predicated region
    $region202: #{encoder_forward.1} parent=1 // pred_check
      _
    $region203: #{encoder_forward.1} parent=1 // pred_check_branch
      %557 = sbr.rel (0) target = $region205
    $region204: #{encoder_forward.1} parent=1 // pred_region
      _
    $region205: #{encoder_forward.1} parent=1 // pred_fallthru
      _
    // Predicated region
    $region206: #{encoder_forward.1} parent=1 // pred_check
      _
    $region207: #{encoder_forward.1} parent=1 // pred_check_branch
      %559 = sbr.rel (0) target = $region209
    $region208: #{encoder_forward.1} parent=1 // pred_region
      _
    $region209: #{encoder_forward.1} parent=1 // pred_fallthru
      _
    // Predicated region
    $region210: #{encoder_forward.1} parent=1 // pred_check
      _
    $region211: #{encoder_forward.1} parent=1 // pred_check_branch
      %561 = sbr.rel (0) target = $region213
    $region212: #{encoder_forward.1} parent=1 // pred_region
      _
    $region213: #{encoder_forward.1} parent=1 // pred_fallthru
      _
    // Predicated region
    $region214: #{encoder_forward.1} parent=1 // pred_check
      _
    $region215: #{encoder_forward.1} parent=1 // pred_check_branch
      %563 = sbr.rel (0) target = $region217
    $region216: #{encoder_forward.1} parent=1 // pred_region
      _
    $region217: #{encoder_forward.1} parent=1 // pred_fallthru
      _
    // Predicated region
    $region218: #{encoder_forward.1} parent=1 // pred_check
      _
    $region219: #{encoder_forward.1} parent=1 // pred_check_branch
      %565 = sbr.rel (0) target = $region221
    $region220: #{encoder_forward.1} parent=1 // pred_region
      _
    $region221: #{encoder_forward.1} parent=1 // pred_fallthru
      _
    // Predicated region
    $region222: #{encoder_forward.1} parent=1 // pred_check
      _
    $region223: #{encoder_forward.1} parent=1 // pred_check_branch
      %567 = sbr.rel (0) target = $region225
    $region224: #{encoder_forward.1} parent=1 // pred_region
      _
    $region225: #{encoder_forward.1} parent=1 // pred_fallthru
      _
    // Predicated region
    $region226: #{encoder_forward.1} parent=1 // pred_check
      _
    $region227: #{encoder_forward.1} parent=1 // pred_check_branch
      %569 = sbr.rel (0) target = $region229
    $region228: #{encoder_forward.1} parent=1 // pred_region
      %571 = vsyncadd [#allocation47], 0
      %s573 = sshll.u32 %s113, 4
      %s574 = int_to_ptr.hbm [resolvable:$true] %s573
      %s575 = sshll.u32 [#allocation48], 4
      %s576 = int_to_ptr.vmem [resolvable:$true] %s575
      %578 = dma.hbm_to_vmem [thread:$0]  %s574, 16, %s576, [#allocation47]
    $region229: #{encoder_forward.1} parent=1 // pred_fallthru
      _
    // Predicated region
    $region230: #{encoder_forward.1} parent=1 // pred_check
      _
    $region231: #{encoder_forward.1} parent=1 // pred_check_branch
      %580 = sbr.rel (0) target = $region233
    $region232: #{encoder_forward.1} parent=1 // pred_region
      %582 = dma.done [#allocation3], 32768
    $region233: #{encoder_forward.1} parent=1 // pred_fallthru
      _
    // Predicated region
    $region234: #{encoder_forward.1} parent=1 // pred_check
      _
    $region235: #{encoder_forward.1} parent=1 // pred_check_branch
      %584 = sbr.rel (0) target = $region237
    $region236: #{encoder_forward.1} parent=1 // pred_region
      %586 = dma.done [#allocation5], 16384
    $region237: #{encoder_forward.1} parent=1 // pred_fallthru
      _
    // Predicated region
    $region238: #{encoder_forward.1} parent=1 // pred_check
      _
    $region239: #{encoder_forward.1} parent=1 // pred_check_branch
      %588 = sbr.rel (0) target = $region241
    $region240: #{encoder_forward.1} parent=1 // pred_region
      %590 = dma.done [#allocation5], 16384
    $region241: #{encoder_forward.1} parent=1 // pred_fallthru
      _
    // Predicated region
    $region242: #{encoder_forward.1} parent=1 // pred_check
      _
    $region243: #{encoder_forward.1} parent=1 // pred_check_branch
      %592 = sbr.rel (0) target = $region245
    $region244: #{encoder_forward.1} parent=1 // pred_region
      %594 = dma.done [#allocation8], 16384
    $region245: #{encoder_forward.1} parent=1 // pred_fallthru
      _
    // Predicated region
    $region246: #{encoder_forward.1} parent=1 // pred_check
      _
    $region247: #{encoder_forward.1} parent=1 // pred_check_branch
      %596 = sbr.rel (0) target = $region249
    $region248: #{encoder_forward.1} parent=1 // pred_region
      %598 = dma.done [#allocation8], 16384
    $region249: #{encoder_forward.1} parent=1 // pred_fallthru
      _
    // Predicated region
    $region250: #{encoder_forward.1} parent=1 // pred_check
      _
    $region251: #{encoder_forward.1} parent=1 // pred_check_branch
      %600 = sbr.rel (0) target = $region253
    $region252: #{encoder_forward.1} parent=1 // pred_region
      %602 = dma.done [#allocation11], 16384
    $region253: #{encoder_forward.1} parent=1 // pred_fallthru
      _
    // Predicated region
    $region254: #{encoder_forward.1} parent=1 // pred_check
      _
    $region255: #{encoder_forward.1} parent=1 // pred_check_branch
      %604 = sbr.rel (0) target = $region257
    $region256: #{encoder_forward.1} parent=1 // pred_region
      %606 = dma.done [#allocation11], 16384
    $region257: #{encoder_forward.1} parent=1 // pred_fallthru
      _
    // Predicated region
    $region258: #{encoder_forward.1} parent=1 // pred_check
      _
    $region259: #{encoder_forward.1} parent=1 // pred_check_branch
      %608 = sbr.rel (0) target = $region261
    $region260: #{encoder_forward.1} parent=1 // pred_region
      %610 = dma.done [#allocation14], 16384
    $region261: #{encoder_forward.1} parent=1 // pred_fallthru
      _
    // Predicated region
    $region262: #{encoder_forward.1} parent=1 // pred_check
      _
    $region263: #{encoder_forward.1} parent=1 // pred_check_branch
      %612 = sbr.rel (0) target = $region265
    $region264: #{encoder_forward.1} parent=1 // pred_region
      %614 = dma.done [#allocation14], 16384
    $region265: #{encoder_forward.1} parent=1 // pred_fallthru
      _
    // Predicated region
    $region266: #{encoder_forward.1} parent=1 // pred_check
      _
    $region267: #{encoder_forward.1} parent=1 // pred_check_branch
      %616 = sbr.rel (0) target = $region269
    $region268: #{encoder_forward.1} parent=1 // pred_region
      %618 = dma.done [#allocation17], 1024
    $region269: #{encoder_forward.1} parent=1 // pred_fallthru
      _
    // Predicated region
    $region270: #{encoder_forward.1} parent=1 // pred_check
      _
    $region271: #{encoder_forward.1} parent=1 // pred_check_branch
      %620 = sbr.rel (0) target = $region273
    $region272: #{encoder_forward.1} parent=1 // pred_region
      %622 = dma.done [#allocation17], 1024
    $region273: #{encoder_forward.1} parent=1 // pred_fallthru
      _
    // Predicated region
    $region274: #{encoder_forward.1} parent=1 // pred_check
      _
    $region275: #{encoder_forward.1} parent=1 // pred_check_branch
      %624 = sbr.rel (0) target = $region277
    $region276: #{encoder_forward.1} parent=1 // pred_region
      %626 = dma.done [#allocation20], 1024
    $region277: #{encoder_forward.1} parent=1 // pred_fallthru
      _
    // Predicated region
    $region278: #{encoder_forward.1} parent=1 // pred_check
      _
    $region279: #{encoder_forward.1} parent=1 // pred_check_branch
      %628 = sbr.rel (0) target = $region281
    $region280: #{encoder_forward.1} parent=1 // pred_region
      %630 = dma.done [#allocation20], 1024
    $region281: #{encoder_forward.1} parent=1 // pred_fallthru
      _
    // Predicated region
    $region282: #{encoder_forward.1} parent=1 // pred_check
      _
    $region283: #{encoder_forward.1} parent=1 // pred_check_branch
      %632 = sbr.rel (0) target = $region285
    $region284: #{encoder_forward.1} parent=1 // pred_region
      %634 = dma.done [#allocation23], 1024
    $region285: #{encoder_forward.1} parent=1 // pred_fallthru
      _
    // Predicated region
    $region286: #{encoder_forward.1} parent=1 // pred_check
      _
    $region287: #{encoder_forward.1} parent=1 // pred_check_branch
      %636 = sbr.rel (0) target = $region289
    $region288: #{encoder_forward.1} parent=1 // pred_region
      %638 = dma.done [#allocation23], 1024
    $region289: #{encoder_forward.1} parent=1 // pred_fallthru
      _
    // Predicated region
    $region290: #{encoder_forward.1} parent=1 // pred_check
      _
    $region291: #{encoder_forward.1} parent=1 // pred_check_branch
      %640 = sbr.rel (0) target = $region293
    $region292: #{encoder_forward.1} parent=1 // pred_region
      %642 = dma.done [#allocation26], 1024
    $region293: #{encoder_forward.1} parent=1 // pred_fallthru
      _
    // Predicated region
    $region294: #{encoder_forward.1} parent=1 // pred_check
      _
    $region295: #{encoder_forward.1} parent=1 // pred_check_branch
      %644 = sbr.rel (0) target = $region297
    $region296: #{encoder_forward.1} parent=1 // pred_region
      %646 = dma.done [#allocation26], 256
    $region297: #{encoder_forward.1} parent=1 // pred_fallthru
      _
    // Predicated region
    $region298: #{encoder_forward.1} parent=1 // pred_check
      _
    $region299: #{encoder_forward.1} parent=1 // pred_check_branch
      %648 = sbr.rel (0) target = $region301
    $region300: #{encoder_forward.1} parent=1 // pred_region
      %650 = dma.done [#allocation29], 256
    $region301: #{encoder_forward.1} parent=1 // pred_fallthru
      _
    // Predicated region
    $region302: #{encoder_forward.1} parent=1 // pred_check
      _
    $region303: #{encoder_forward.1} parent=1 // pred_check_branch
      %652 = sbr.rel (0) target = $region305
    $region304: #{encoder_forward.1} parent=1 // pred_region
      %654 = dma.done [#allocation29], 256
    $region305: #{encoder_forward.1} parent=1 // pred_fallthru
      _
    // Predicated region
    $region306: #{encoder_forward.1} parent=1 // pred_check
      _
    $region307: #{encoder_forward.1} parent=1 // pred_check_branch
      %656 = sbr.rel (0) target = $region309
    $region308: #{encoder_forward.1} parent=1 // pred_region
      %658 = dma.done [#allocation32], 256
    $region309: #{encoder_forward.1} parent=1 // pred_fallthru
      _
    // Predicated region
    $region310: #{encoder_forward.1} parent=1 // pred_check
      _
    $region311: #{encoder_forward.1} parent=1 // pred_check_branch
      %660 = sbr.rel (0) target = $region313
    $region312: #{encoder_forward.1} parent=1 // pred_region
      %662 = dma.done [#allocation32], 256
    $region313: #{encoder_forward.1} parent=1 // pred_fallthru
      _
    // Predicated region
    $region314: #{encoder_forward.1} parent=1 // pred_check
      _
    $region315: #{encoder_forward.1} parent=1 // pred_check_branch
      %664 = sbr.rel (0) target = $region317
    $region316: #{encoder_forward.1} parent=1 // pred_region
      %666 = dma.done [#allocation35], 256
    $region317: #{encoder_forward.1} parent=1 // pred_fallthru
      _
    // Predicated region
    $region318: #{encoder_forward.1} parent=1 // pred_check
      _
    $region319: #{encoder_forward.1} parent=1 // pred_check_branch
      %668 = sbr.rel (0) target = $region321
    $region320: #{encoder_forward.1} parent=1 // pred_region
      %670 = dma.done [#allocation35], 256
    $region321: #{encoder_forward.1} parent=1 // pred_fallthru
      _
    // Predicated region
    $region322: #{encoder_forward.1} parent=1 // pred_check
      _
    $region323: #{encoder_forward.1} parent=1 // pred_check_branch
      %672 = sbr.rel (0) target = $region325
    $region324: #{encoder_forward.1} parent=1 // pred_region
      %674 = dma.done [#allocation38], 256
    $region325: #{encoder_forward.1} parent=1 // pred_fallthru
      _
    // Predicated region
    $region326: #{encoder_forward.1} parent=1 // pred_check
      _
    $region327: #{encoder_forward.1} parent=1 // pred_check_branch
      %676 = sbr.rel (0) target = $region329
    $region328: #{encoder_forward.1} parent=1 // pred_region
      %678 = dma.done [#allocation38], 256
    $region329: #{encoder_forward.1} parent=1 // pred_fallthru
      _
    // Predicated region
    $region330: #{encoder_forward.1} parent=1 // pred_check
      _
    $region331: #{encoder_forward.1} parent=1 // pred_check_branch
      %680 = sbr.rel (0) target = $region333
    $region332: #{encoder_forward.1} parent=1 // pred_region
      %682 = dma.done [#allocation41], 64
    $region333: #{encoder_forward.1} parent=1 // pred_fallthru
      _
    // Predicated region
    $region334: #{encoder_forward.1} parent=1 // pred_check
      _
    $region335: #{encoder_forward.1} parent=1 // pred_check_branch
      %684 = sbr.rel (0) target = $region337
    $region336: #{encoder_forward.1} parent=1 // pred_region
      %686 = dma.done [#allocation41], 64
    $region337: #{encoder_forward.1} parent=1 // pred_fallthru
      _
    // Predicated region
    $region338: #{encoder_forward.1} parent=1 // pred_check
      _
    $region339: #{encoder_forward.1} parent=1 // pred_check_branch
      %688 = sbr.rel (0) target = $region341
    $region340: #{encoder_forward.1} parent=1 // pred_region
      %690 = dma.done [#allocation44], 64
    $region341: #{encoder_forward.1} parent=1 // pred_fallthru
      _
    // Predicated region
    $region342: #{encoder_forward.1} parent=1 // pred_check
      _
    $region343: #{encoder_forward.1} parent=1 // pred_check_branch
      %692 = sbr.rel (0) target = $region345
    $region344: #{encoder_forward.1} parent=1 // pred_region
      %694 = dma.done [#allocation44], 64
    $region345: #{encoder_forward.1} parent=1 // pred_fallthru
      _
    // Predicated region
    $region346: #{encoder_forward.1} parent=1 // pred_check
      _
    $region347: #{encoder_forward.1} parent=1 // pred_check_branch
      %696 = sbr.rel (0) target = $region349
    $region348: #{encoder_forward.1} parent=1 // pred_region
      %698 = dma.done [#allocation47], 64
    $region349: #{encoder_forward.1} parent=1 // pred_fallthru
      _
    // Predicated region
    $region350: #{encoder_forward.1} parent=1 // pred_check
      _
    $region351: #{encoder_forward.1} parent=1 // pred_check_branch
      %700 = sbr.rel (0) target = $region353
    $region352: #{encoder_forward.1} parent=1 // pred_region
      %702 = dma.done [#allocation47], 16
    $region353: #{encoder_forward.1} parent=1 // pred_fallthru
      _
    %v704 = vld [vmem:[%s1] sm:$0xff]
    %v705 = vld [vmem:[%s1 + $0x8] sm:$0xff]
    %v706 = vld [vmem:[%s1 + $0x10] sm:$0xff]
    %v707 = vld [vmem:[%s1 + $0x18] sm:$0xff]
    %v708 = vld [vmem:[%s1 + $0x20] sm:$0xff]
    %v709 = vld [vmem:[%s1 + $0x28] sm:$0xff]
    %v710 = vld [vmem:[%s1 + $0x30] sm:$0xff]
    %v711 = vld [vmem:[%s1 + $0x38] sm:$0xff]
    %v712 = vpack.c.bf16 %v704, %v704
    %v713 = vpack.c.bf16 %v705, %v705
    %v714 = vpack.c.bf16 %v706, %v706
    %v715 = vpack.c.bf16 %v707, %v707
    %v716 = vpack.c.bf16 %v708, %v708
    %v717 = vpack.c.bf16 %v709, %v709
    %v718 = vpack.c.bf16 %v710, %v710
    %v719 = vpack.c.bf16 %v711, %v711
    %v720 = vld [vmem:[#allocation2] sm:$0xff]
    %v721 = vld [vmem:[#allocation2 + $0x8] sm:$0xff]
    %v722 = vld [vmem:[#allocation2 + $0x10] sm:$0xff]
    %v723 = vld [vmem:[#allocation2 + $0x18] sm:$0xff]
    %v724 = vld [vmem:[#allocation2 + $0x20] sm:$0xff]
    %v725 = vld [vmem:[#allocation2 + $0x28] sm:$0xff]
    %v726 = vld [vmem:[#allocation2 + $0x30] sm:$0xff]
    %v727 = vld [vmem:[#allocation2 + $0x38] sm:$0xff]
    %v728 = vld [vmem:[#allocation2 + $0x40] sm:$0xff]
    %v729 = vld [vmem:[#allocation2 + $0x48] sm:$0xff]
    %v730 = vld [vmem:[#allocation2 + $0x50] sm:$0xff]
    %v731 = vld [vmem:[#allocation2 + $0x58] sm:$0xff]
    %v732 = vld [vmem:[#allocation2 + $0x60] sm:$0xff]
    %v733 = vld [vmem:[#allocation2 + $0x68] sm:$0xff]
    %v734 = vld [vmem:[#allocation2 + $0x70] sm:$0xff]
    %v735 = vld [vmem:[#allocation2 + $0x78] sm:$0xff]
    %v736 = vld [vmem:[#allocation2 + $0x80] sm:$0xff]
    %v737 = vld [vmem:[#allocation2 + $0x88] sm:$0xff]
    %v738 = vld [vmem:[#allocation2 + $0x90] sm:$0xff]
    %v739 = vld [vmem:[#allocation2 + $0x98] sm:$0xff]
    %v740 = vld [vmem:[#allocation2 + $0xa0] sm:$0xff]
    %v741 = vld [vmem:[#allocation2 + $0xa8] sm:$0xff]
    %v742 = vld [vmem:[#allocation2 + $0xb0] sm:$0xff]
    %v743 = vld [vmem:[#allocation2 + $0xb8] sm:$0xff]
    %v744 = vld [vmem:[#allocation2 + $0xc0] sm:$0xff]
    %v745 = vld [vmem:[#allocation2 + $0xc8] sm:$0xff]
    %v746 = vld [vmem:[#allocation2 + $0xd0] sm:$0xff]
    %v747 = vld [vmem:[#allocation2 + $0xd8] sm:$0xff]
    %v748 = vld [vmem:[#allocation2 + $0xe0] sm:$0xff]
    %v749 = vld [vmem:[#allocation2 + $0xe8] sm:$0xff]
    %v750 = vld [vmem:[#allocation2 + $0xf0] sm:$0xff]
    %v751 = vld [vmem:[#allocation2 + $0xf8] sm:$0xff]
    %v752 = vld [vmem:[#allocation2 + $0x100] sm:$0xff]
    %v753 = vld [vmem:[#allocation2 + $0x108] sm:$0xff]
    %v754 = vld [vmem:[#allocation2 + $0x110] sm:$0xff]
    %v755 = vld [vmem:[#allocation2 + $0x118] sm:$0xff]
    %v756 = vld [vmem:[#allocation2 + $0x120] sm:$0xff]
    %v757 = vld [vmem:[#allocation2 + $0x128] sm:$0xff]
    %v758 = vld [vmem:[#allocation2 + $0x130] sm:$0xff]
    %v759 = vld [vmem:[#allocation2 + $0x138] sm:$0xff]
    %v760 = vld [vmem:[#allocation2 + $0x140] sm:$0xff]
    %v761 = vld [vmem:[#allocation2 + $0x148] sm:$0xff]
    %v762 = vld [vmem:[#allocation2 + $0x150] sm:$0xff]
    %v763 = vld [vmem:[#allocation2 + $0x158] sm:$0xff]
    %v764 = vld [vmem:[#allocation2 + $0x160] sm:$0xff]
    %v765 = vld [vmem:[#allocation2 + $0x168] sm:$0xff]
    %v766 = vld [vmem:[#allocation2 + $0x170] sm:$0xff]
    %v767 = vld [vmem:[#allocation2 + $0x178] sm:$0xff]
    %v768 = vld [vmem:[#allocation2 + $0x180] sm:$0xff]
    %v769 = vld [vmem:[#allocation2 + $0x188] sm:$0xff]
    %v770 = vld [vmem:[#allocation2 + $0x190] sm:$0xff]
    %v771 = vld [vmem:[#allocation2 + $0x198] sm:$0xff]
    %v772 = vld [vmem:[#allocation2 + $0x1a0] sm:$0xff]
    %v773 = vld [vmem:[#allocation2 + $0x1a8] sm:$0xff]
    %v774 = vld [vmem:[#allocation2 + $0x1b0] sm:$0xff]
    %v775 = vld [vmem:[#allocation2 + $0x1b8] sm:$0xff]
    %v776 = vld [vmem:[#allocation2 + $0x1c0] sm:$0xff]
    %v777 = vld [vmem:[#allocation2 + $0x1c8] sm:$0xff]
    %v778 = vld [vmem:[#allocation2 + $0x1d0] sm:$0xff]
    %v779 = vld [vmem:[#allocation2 + $0x1d8] sm:$0xff]
    %v780 = vld [vmem:[#allocation2 + $0x1e0] sm:$0xff]
    %v781 = vld [vmem:[#allocation2 + $0x1e8] sm:$0xff]
    %v782 = vld [vmem:[#allocation2 + $0x1f0] sm:$0xff]
    %v783 = vld [vmem:[#allocation2 + $0x1f8] sm:$0xff]
    %v784 = vld [vmem:[#allocation2 + $0x200] sm:$0xff]
    %v785 = vld [vmem:[#allocation2 + $0x208] sm:$0xff]
    %v786 = vld [vmem:[#allocation2 + $0x210] sm:$0xff]
    %v787 = vld [vmem:[#allocation2 + $0x218] sm:$0xff]
    %v788 = vld [vmem:[#allocation2 + $0x220] sm:$0xff]
    %v789 = vld [vmem:[#allocation2 + $0x228] sm:$0xff]
    %v790 = vld [vmem:[#allocation2 + $0x230] sm:$0xff]
    %v791 = vld [vmem:[#allocation2 + $0x238] sm:$0xff]
    %v792 = vld [vmem:[#allocation2 + $0x240] sm:$0xff]
    %v793 = vld [vmem:[#allocation2 + $0x248] sm:$0xff]
    %v794 = vld [vmem:[#allocation2 + $0x250] sm:$0xff]
    %v795 = vld [vmem:[#allocation2 + $0x258] sm:$0xff]
    %v796 = vld [vmem:[#allocation2 + $0x260] sm:$0xff]
    %v797 = vld [vmem:[#allocation2 + $0x268] sm:$0xff]
    %v798 = vld [vmem:[#allocation2 + $0x270] sm:$0xff]
    %v799 = vld [vmem:[#allocation2 + $0x278] sm:$0xff]
    %v800 = vld [vmem:[#allocation2 + $0x280] sm:$0xff]
    %v801 = vld [vmem:[#allocation2 + $0x288] sm:$0xff]
    %v802 = vld [vmem:[#allocation2 + $0x290] sm:$0xff]
    %v803 = vld [vmem:[#allocation2 + $0x298] sm:$0xff]
    %v804 = vld [vmem:[#allocation2 + $0x2a0] sm:$0xff]
    %v805 = vld [vmem:[#allocation2 + $0x2a8] sm:$0xff]
    %v806 = vld [vmem:[#allocation2 + $0x2b0] sm:$0xff]
    %v807 = vld [vmem:[#allocation2 + $0x2b8] sm:$0xff]
    %v808 = vld [vmem:[#allocation2 + $0x2c0] sm:$0xff]
    %v809 = vld [vmem:[#allocation2 + $0x2c8] sm:$0xff]
    %v810 = vld [vmem:[#allocation2 + $0x2d0] sm:$0xff]
    %v811 = vld [vmem:[#allocation2 + $0x2d8] sm:$0xff]
    %v812 = vld [vmem:[#allocation2 + $0x2e0] sm:$0xff]
    %v813 = vld [vmem:[#allocation2 + $0x2e8] sm:$0xff]
    %v814 = vld [vmem:[#allocation2 + $0x2f0] sm:$0xff]
    %v815 = vld [vmem:[#allocation2 + $0x2f8] sm:$0xff]
    %v816 = vld [vmem:[#allocation2 + $0x300] sm:$0xff]
    %v817 = vld [vmem:[#allocation2 + $0x308] sm:$0xff]
    %v818 = vld [vmem:[#allocation2 + $0x310] sm:$0xff]
    %v819 = vld [vmem:[#allocation2 + $0x318] sm:$0xff]
    %v820 = vld [vmem:[#allocation2 + $0x320] sm:$0xff]
    %v821 = vld [vmem:[#allocation2 + $0x328] sm:$0xff]
    %v822 = vld [vmem:[#allocation2 + $0x330] sm:$0xff]
    %v823 = vld [vmem:[#allocation2 + $0x338] sm:$0xff]
    %v824 = vld [vmem:[#allocation2 + $0x340] sm:$0xff]
    %v825 = vld [vmem:[#allocation2 + $0x348] sm:$0xff]
    %v826 = vld [vmem:[#allocation2 + $0x350] sm:$0xff]
    %v827 = vld [vmem:[#allocation2 + $0x358] sm:$0xff]
    %v828 = vld [vmem:[#allocation2 + $0x360] sm:$0xff]
    %v829 = vld [vmem:[#allocation2 + $0x368] sm:$0xff]
    %v830 = vld [vmem:[#allocation2 + $0x370] sm:$0xff]
    %v831 = vld [vmem:[#allocation2 + $0x378] sm:$0xff]
    %v832 = vld [vmem:[#allocation2 + $0x380] sm:$0xff]
    %v833 = vld [vmem:[#allocation2 + $0x388] sm:$0xff]
    %v834 = vld [vmem:[#allocation2 + $0x390] sm:$0xff]
    %v835 = vld [vmem:[#allocation2 + $0x398] sm:$0xff]
    %v836 = vld [vmem:[#allocation2 + $0x3a0] sm:$0xff]
    %v837 = vld [vmem:[#allocation2 + $0x3a8] sm:$0xff]
    %v838 = vld [vmem:[#allocation2 + $0x3b0] sm:$0xff]
    %v839 = vld [vmem:[#allocation2 + $0x3b8] sm:$0xff]
    %v840 = vld [vmem:[#allocation2 + $0x3c0] sm:$0xff]
    %v841 = vld [vmem:[#allocation2 + $0x3c8] sm:$0xff]
    %v842 = vld [vmem:[#allocation2 + $0x3d0] sm:$0xff]
    %v843 = vld [vmem:[#allocation2 + $0x3d8] sm:$0xff]
    %v844 = vld [vmem:[#allocation2 + $0x3e0] sm:$0xff]
    %v845 = vld [vmem:[#allocation2 + $0x3e8] sm:$0xff]
    %v846 = vld [vmem:[#allocation2 + $0x3f0] sm:$0xff]
    %v847 = vld [vmem:[#allocation2 + $0x3f8] sm:$0xff]
    %v848 = vld [vmem:[#allocation2 + $0x400] sm:$0xff]
    %v849 = vld [vmem:[#allocation2 + $0x408] sm:$0xff]
    %v850 = vld [vmem:[#allocation2 + $0x410] sm:$0xff]
    %v851 = vld [vmem:[#allocation2 + $0x418] sm:$0xff]
    %v852 = vld [vmem:[#allocation2 + $0x420] sm:$0xff]
    %v853 = vld [vmem:[#allocation2 + $0x428] sm:$0xff]
    %v854 = vld [vmem:[#allocation2 + $0x430] sm:$0xff]
    %v855 = vld [vmem:[#allocation2 + $0x438] sm:$0xff]
    %v856 = vld [vmem:[#allocation2 + $0x440] sm:$0xff]
    %v857 = vld [vmem:[#allocation2 + $0x448] sm:$0xff]
    %v858 = vld [vmem:[#allocation2 + $0x450] sm:$0xff]
    %v859 = vld [vmem:[#allocation2 + $0x458] sm:$0xff]
    %v860 = vld [vmem:[#allocation2 + $0x460] sm:$0xff]
    %v861 = vld [vmem:[#allocation2 + $0x468] sm:$0xff]
    %v862 = vld [vmem:[#allocation2 + $0x470] sm:$0xff]
    %v863 = vld [vmem:[#allocation2 + $0x478] sm:$0xff]
    %v864 = vld [vmem:[#allocation2 + $0x480] sm:$0xff]
    %v865 = vld [vmem:[#allocation2 + $0x488] sm:$0xff]
    %v866 = vld [vmem:[#allocation2 + $0x490] sm:$0xff]
    %v867 = vld [vmem:[#allocation2 + $0x498] sm:$0xff]
    %v868 = vld [vmem:[#allocation2 + $0x4a0] sm:$0xff]
    %v869 = vld [vmem:[#allocation2 + $0x4a8] sm:$0xff]
    %v870 = vld [vmem:[#allocation2 + $0x4b0] sm:$0xff]
    %v871 = vld [vmem:[#allocation2 + $0x4b8] sm:$0xff]
    %v872 = vld [vmem:[#allocation2 + $0x4c0] sm:$0xff]
    %v873 = vld [vmem:[#allocation2 + $0x4c8] sm:$0xff]
    %v874 = vld [vmem:[#allocation2 + $0x4d0] sm:$0xff]
    %v875 = vld [vmem:[#allocation2 + $0x4d8] sm:$0xff]
    %v876 = vld [vmem:[#allocation2 + $0x4e0] sm:$0xff]
    %v877 = vld [vmem:[#allocation2 + $0x4e8] sm:$0xff]
    %v878 = vld [vmem:[#allocation2 + $0x4f0] sm:$0xff]
    %v879 = vld [vmem:[#allocation2 + $0x4f8] sm:$0xff]
    %v880 = vld [vmem:[#allocation2 + $0x500] sm:$0xff]
    %v881 = vld [vmem:[#allocation2 + $0x508] sm:$0xff]
    %v882 = vld [vmem:[#allocation2 + $0x510] sm:$0xff]
    %v883 = vld [vmem:[#allocation2 + $0x518] sm:$0xff]
    %v884 = vld [vmem:[#allocation2 + $0x520] sm:$0xff]
    %v885 = vld [vmem:[#allocation2 + $0x528] sm:$0xff]
    %v886 = vld [vmem:[#allocation2 + $0x530] sm:$0xff]
    %v887 = vld [vmem:[#allocation2 + $0x538] sm:$0xff]
    %v888 = vld [vmem:[#allocation2 + $0x540] sm:$0xff]
    %v889 = vld [vmem:[#allocation2 + $0x548] sm:$0xff]
    %v890 = vld [vmem:[#allocation2 + $0x550] sm:$0xff]
    %v891 = vld [vmem:[#allocation2 + $0x558] sm:$0xff]
    %v892 = vld [vmem:[#allocation2 + $0x560] sm:$0xff]
    %v893 = vld [vmem:[#allocation2 + $0x568] sm:$0xff]
    %v894 = vld [vmem:[#allocation2 + $0x570] sm:$0xff]
    %v895 = vld [vmem:[#allocation2 + $0x578] sm:$0xff]
    %v896 = vld [vmem:[#allocation2 + $0x580] sm:$0xff]
    %v897 = vld [vmem:[#allocation2 + $0x588] sm:$0xff]
    %v898 = vld [vmem:[#allocation2 + $0x590] sm:$0xff]
    %v899 = vld [vmem:[#allocation2 + $0x598] sm:$0xff]
    %v900 = vld [vmem:[#allocation2 + $0x5a0] sm:$0xff]
    %v901 = vld [vmem:[#allocation2 + $0x5a8] sm:$0xff]
    %v902 = vld [vmem:[#allocation2 + $0x5b0] sm:$0xff]
    %v903 = vld [vmem:[#allocation2 + $0x5b8] sm:$0xff]
    %v904 = vld [vmem:[#allocation2 + $0x5c0] sm:$0xff]
    %v905 = vld [vmem:[#allocation2 + $0x5c8] sm:$0xff]
    %v906 = vld [vmem:[#allocation2 + $0x5d0] sm:$0xff]
    %v907 = vld [vmem:[#allocation2 + $0x5d8] sm:$0xff]
    %v908 = vld [vmem:[#allocation2 + $0x5e0] sm:$0xff]
    %v909 = vld [vmem:[#allocation2 + $0x5e8] sm:$0xff]
    %v910 = vld [vmem:[#allocation2 + $0x5f0] sm:$0xff]
    %v911 = vld [vmem:[#allocation2 + $0x5f8] sm:$0xff]
    %v912 = vld [vmem:[#allocation2 + $0x600] sm:$0xff]
    %v913 = vld [vmem:[#allocation2 + $0x608] sm:$0xff]
    %v914 = vld [vmem:[#allocation2 + $0x610] sm:$0xff]
    %v915 = vld [vmem:[#allocation2 + $0x618] sm:$0xff]
    %v916 = vld [vmem:[#allocation2 + $0x620] sm:$0xff]
    %v917 = vld [vmem:[#allocation2 + $0x628] sm:$0xff]
    %v918 = vld [vmem:[#allocation2 + $0x630] sm:$0xff]
    %v919 = vld [vmem:[#allocation2 + $0x638] sm:$0xff]
    %v920 = vld [vmem:[#allocation2 + $0x640] sm:$0xff]
    %v921 = vld [vmem:[#allocation2 + $0x648] sm:$0xff]
    %v922 = vld [vmem:[#allocation2 + $0x650] sm:$0xff]
    %v923 = vld [vmem:[#allocation2 + $0x658] sm:$0xff]
    %v924 = vld [vmem:[#allocation2 + $0x660] sm:$0xff]
    %v925 = vld [vmem:[#allocation2 + $0x668] sm:$0xff]
    %v926 = vld [vmem:[#allocation2 + $0x670] sm:$0xff]
    %v927 = vld [vmem:[#allocation2 + $0x678] sm:$0xff]
    %v928 = vld [vmem:[#allocation2 + $0x680] sm:$0xff]
    %v929 = vld [vmem:[#allocation2 + $0x688] sm:$0xff]
    %v930 = vld [vmem:[#allocation2 + $0x690] sm:$0xff]
    %v931 = vld [vmem:[#allocation2 + $0x698] sm:$0xff]
    %v932 = vld [vmem:[#allocation2 + $0x6a0] sm:$0xff]
    %v933 = vld [vmem:[#allocation2 + $0x6a8] sm:$0xff]
    %v934 = vld [vmem:[#allocation2 + $0x6b0] sm:$0xff]
    %v935 = vld [vmem:[#allocation2 + $0x6b8] sm:$0xff]
    %v936 = vld [vmem:[#allocation2 + $0x6c0] sm:$0xff]
    %v937 = vld [vmem:[#allocation2 + $0x6c8] sm:$0xff]
    %v938 = vld [vmem:[#allocation2 + $0x6d0] sm:$0xff]
    %v939 = vld [vmem:[#allocation2 + $0x6d8] sm:$0xff]
    %v940 = vld [vmem:[#allocation2 + $0x6e0] sm:$0xff]
    %v941 = vld [vmem:[#allocation2 + $0x6e8] sm:$0xff]
    %v942 = vld [vmem:[#allocation2 + $0x6f0] sm:$0xff]
    %v943 = vld [vmem:[#allocation2 + $0x6f8] sm:$0xff]
    %v944 = vld [vmem:[#allocation2 + $0x700] sm:$0xff]
    %v945 = vld [vmem:[#allocation2 + $0x708] sm:$0xff]
    %v946 = vld [vmem:[#allocation2 + $0x710] sm:$0xff]
    %v947 = vld [vmem:[#allocation2 + $0x718] sm:$0xff]
    %v948 = vld [vmem:[#allocation2 + $0x720] sm:$0xff]
    %v949 = vld [vmem:[#allocation2 + $0x728] sm:$0xff]
    %v950 = vld [vmem:[#allocation2 + $0x730] sm:$0xff]
    %v951 = vld [vmem:[#allocation2 + $0x738] sm:$0xff]
    %v952 = vld [vmem:[#allocation2 + $0x740] sm:$0xff]
    %v953 = vld [vmem:[#allocation2 + $0x748] sm:$0xff]
    %v954 = vld [vmem:[#allocation2 + $0x750] sm:$0xff]
    %v955 = vld [vmem:[#allocation2 + $0x758] sm:$0xff]
    %v956 = vld [vmem:[#allocation2 + $0x760] sm:$0xff]
    %v957 = vld [vmem:[#allocation2 + $0x768] sm:$0xff]
    %v958 = vld [vmem:[#allocation2 + $0x770] sm:$0xff]
    %v959 = vld [vmem:[#allocation2 + $0x778] sm:$0xff]
    %v960 = vld [vmem:[#allocation2 + $0x780] sm:$0xff]
    %v961 = vld [vmem:[#allocation2 + $0x788] sm:$0xff]
    %v962 = vld [vmem:[#allocation2 + $0x790] sm:$0xff]
    %v963 = vld [vmem:[#allocation2 + $0x798] sm:$0xff]
    %v964 = vld [vmem:[#allocation2 + $0x7a0] sm:$0xff]
    %v965 = vld [vmem:[#allocation2 + $0x7a8] sm:$0xff]
    %v966 = vld [vmem:[#allocation2 + $0x7b0] sm:$0xff]
    %v967 = vld [vmem:[#allocation2 + $0x7b8] sm:$0xff]
    %v968 = vld [vmem:[#allocation2 + $0x7c0] sm:$0xff]
    %v969 = vld [vmem:[#allocation2 + $0x7c8] sm:$0xff]
    %v970 = vld [vmem:[#allocation2 + $0x7d0] sm:$0xff]
    %v971 = vld [vmem:[#allocation2 + $0x7d8] sm:$0xff]
    %v972 = vld [vmem:[#allocation2 + $0x7e0] sm:$0xff]
    %v973 = vld [vmem:[#allocation2 + $0x7e8] sm:$0xff]
    %v974 = vld [vmem:[#allocation2 + $0x7f0] sm:$0xff]
    %v975 = vld [vmem:[#allocation2 + $0x7f8] sm:$0xff]
    %v976 = vld [vmem:[%s59] sm:$0xf]
    %v978 = vperm.slane %v976, 0
    %v979 = vperm.slane %v976, 1
    %v980 = vperm.slane %v976, 2
    %v981 = vperm.slane %v976, 3
    %v1242 = vunpack.c.l.b16 %v720
    %v1243 = vunpack.c.h.b16 %v720
    %v1244 = vunpack.c.l.b16 %v721
    %v1245 = vunpack.c.h.b16 %v721
    %v1246 = vunpack.c.l.b16 %v722
    %v1247 = vunpack.c.h.b16 %v722
    %v1248 = vunpack.c.l.b16 %v723
    %v1249 = vunpack.c.h.b16 %v723
    %v1250 = vunpack.c.l.b16 %v724
    %v1251 = vunpack.c.h.b16 %v724
    %v1252 = vunpack.c.l.b16 %v725
    %v1253 = vunpack.c.h.b16 %v725
    %v1254 = vunpack.c.l.b16 %v726
    %v1255 = vunpack.c.h.b16 %v726
    %v1256 = vunpack.c.l.b16 %v727
    %v1257 = vunpack.c.h.b16 %v727
    %v1258 = vunpack.c.l.b16 %v728
    %v1259 = vunpack.c.h.b16 %v728
    %v1260 = vunpack.c.l.b16 %v729
    %v1261 = vunpack.c.h.b16 %v729
    %v1262 = vunpack.c.l.b16 %v730
    %v1263 = vunpack.c.h.b16 %v730
    %v1264 = vunpack.c.l.b16 %v731
    %v1265 = vunpack.c.h.b16 %v731
    %v1266 = vunpack.c.l.b16 %v732
    %v1267 = vunpack.c.h.b16 %v732
    %v1268 = vunpack.c.l.b16 %v733
    %v1269 = vunpack.c.h.b16 %v733
    %v1270 = vunpack.c.l.b16 %v734
    %v1271 = vunpack.c.h.b16 %v734
    %v1272 = vunpack.c.l.b16 %v735
    %v1273 = vunpack.c.h.b16 %v735
    %v1274 = vunpack.c.l.b16 %v736
    %v1275 = vunpack.c.h.b16 %v736
    %v1276 = vunpack.c.l.b16 %v737
    %v1277 = vunpack.c.h.b16 %v737
    %v1278 = vunpack.c.l.b16 %v738
    %v1279 = vunpack.c.h.b16 %v738
    %v1280 = vunpack.c.l.b16 %v739
    %v1281 = vunpack.c.h.b16 %v739
    %v1282 = vunpack.c.l.b16 %v740
    %v1283 = vunpack.c.h.b16 %v740
    %v1284 = vunpack.c.l.b16 %v741
    %v1285 = vunpack.c.h.b16 %v741
    %v1286 = vunpack.c.l.b16 %v742
    %v1287 = vunpack.c.h.b16 %v742
    %v1288 = vunpack.c.l.b16 %v743
    %v1289 = vunpack.c.h.b16 %v743
    %v1290 = vunpack.c.l.b16 %v744
    %v1291 = vunpack.c.h.b16 %v744
    %v1292 = vunpack.c.l.b16 %v745
    %v1293 = vunpack.c.h.b16 %v745
    %v1294 = vunpack.c.l.b16 %v746
    %v1295 = vunpack.c.h.b16 %v746
    %v1296 = vunpack.c.l.b16 %v747
    %v1297 = vunpack.c.h.b16 %v747
    %v1298 = vunpack.c.l.b16 %v748
    %v1299 = vunpack.c.h.b16 %v748
    %v1300 = vunpack.c.l.b16 %v749
    %v1301 = vunpack.c.h.b16 %v749
    %v1302 = vunpack.c.l.b16 %v750
    %v1303 = vunpack.c.h.b16 %v750
    %v1304 = vunpack.c.l.b16 %v751
    %v1305 = vunpack.c.h.b16 %v751
    %v1306 = vunpack.c.l.b16 %v752
    %v1307 = vunpack.c.h.b16 %v752
    %v1308 = vunpack.c.l.b16 %v753
    %v1309 = vunpack.c.h.b16 %v753
    %v1310 = vunpack.c.l.b16 %v754
    %v1311 = vunpack.c.h.b16 %v754
    %v1312 = vunpack.c.l.b16 %v755
    %v1313 = vunpack.c.h.b16 %v755
    %v1314 = vunpack.c.l.b16 %v756
    %v1315 = vunpack.c.h.b16 %v756
    %v1316 = vunpack.c.l.b16 %v757
    %v1317 = vunpack.c.h.b16 %v757
    %v1318 = vunpack.c.l.b16 %v758
    %v1319 = vunpack.c.h.b16 %v758
    %v1320 = vunpack.c.l.b16 %v759
    %v1321 = vunpack.c.h.b16 %v759
    %v1322 = vunpack.c.l.b16 %v760
    %v1323 = vunpack.c.h.b16 %v760
    %v1324 = vunpack.c.l.b16 %v761
    %v1325 = vunpack.c.h.b16 %v761
    %v1326 = vunpack.c.l.b16 %v762
    %v1327 = vunpack.c.h.b16 %v762
    %v1328 = vunpack.c.l.b16 %v763
    %v1329 = vunpack.c.h.b16 %v763
    %v1330 = vunpack.c.l.b16 %v764
    %v1331 = vunpack.c.h.b16 %v764
    %v1332 = vunpack.c.l.b16 %v765
    %v1333 = vunpack.c.h.b16 %v765
    %v1334 = vunpack.c.l.b16 %v766
    %v1335 = vunpack.c.h.b16 %v766
    %v1336 = vunpack.c.l.b16 %v767
    %v1337 = vunpack.c.h.b16 %v767
    %v1338 = vunpack.c.l.b16 %v768
    %v1339 = vunpack.c.h.b16 %v768
    %v1340 = vunpack.c.l.b16 %v769
    %v1341 = vunpack.c.h.b16 %v769
    %v1342 = vunpack.c.l.b16 %v770
    %v1343 = vunpack.c.h.b16 %v770
    %v1344 = vunpack.c.l.b16 %v771
    %v1345 = vunpack.c.h.b16 %v771
    %v1346 = vunpack.c.l.b16 %v772
    %v1347 = vunpack.c.h.b16 %v772
    %v1348 = vunpack.c.l.b16 %v773
    %v1349 = vunpack.c.h.b16 %v773
    %v1350 = vunpack.c.l.b16 %v774
    %v1351 = vunpack.c.h.b16 %v774
    %v1352 = vunpack.c.l.b16 %v775
    %v1353 = vunpack.c.h.b16 %v775
    %v1354 = vunpack.c.l.b16 %v776
    %v1355 = vunpack.c.h.b16 %v776
    %v1356 = vunpack.c.l.b16 %v777
    %v1357 = vunpack.c.h.b16 %v777
    %v1358 = vunpack.c.l.b16 %v778
    %v1359 = vunpack.c.h.b16 %v778
    %v1360 = vunpack.c.l.b16 %v779
    %v1361 = vunpack.c.h.b16 %v779
    %v1362 = vunpack.c.l.b16 %v780
    %v1363 = vunpack.c.h.b16 %v780
    %v1364 = vunpack.c.l.b16 %v781
    %v1365 = vunpack.c.h.b16 %v781
    %v1366 = vunpack.c.l.b16 %v782
    %v1367 = vunpack.c.h.b16 %v782
    %v1368 = vunpack.c.l.b16 %v783
    %v1369 = vunpack.c.h.b16 %v783
    %v1370 = vunpack.c.l.b16 %v784
    %v1371 = vunpack.c.h.b16 %v784
    %v1372 = vunpack.c.l.b16 %v785
    %v1373 = vunpack.c.h.b16 %v785
    %v1374 = vunpack.c.l.b16 %v786
    %v1375 = vunpack.c.h.b16 %v786
    %v1376 = vunpack.c.l.b16 %v787
    %v1377 = vunpack.c.h.b16 %v787
    %v1378 = vunpack.c.l.b16 %v788
    %v1379 = vunpack.c.h.b16 %v788
    %v1380 = vunpack.c.l.b16 %v789
    %v1381 = vunpack.c.h.b16 %v789
    %v1382 = vunpack.c.l.b16 %v790
    %v1383 = vunpack.c.h.b16 %v790
    %v1384 = vunpack.c.l.b16 %v791
    %v1385 = vunpack.c.h.b16 %v791
    %v1386 = vunpack.c.l.b16 %v792
    %v1387 = vunpack.c.h.b16 %v792
    %v1388 = vunpack.c.l.b16 %v793
    %v1389 = vunpack.c.h.b16 %v793
    %v1390 = vunpack.c.l.b16 %v794
    %v1391 = vunpack.c.h.b16 %v794
    %v1392 = vunpack.c.l.b16 %v795
    %v1393 = vunpack.c.h.b16 %v795
    %v1394 = vunpack.c.l.b16 %v796
    %v1395 = vunpack.c.h.b16 %v796
    %v1396 = vunpack.c.l.b16 %v797
    %v1397 = vunpack.c.h.b16 %v797
    %v1398 = vunpack.c.l.b16 %v798
    %v1399 = vunpack.c.h.b16 %v798
    %v1400 = vunpack.c.l.b16 %v799
    %v1401 = vunpack.c.h.b16 %v799
    %v1402 = vunpack.c.l.b16 %v800
    %v1403 = vunpack.c.h.b16 %v800
    %v1404 = vunpack.c.l.b16 %v801
    %v1405 = vunpack.c.h.b16 %v801
    %v1406 = vunpack.c.l.b16 %v802
    %v1407 = vunpack.c.h.b16 %v802
    %v1408 = vunpack.c.l.b16 %v803
    %v1409 = vunpack.c.h.b16 %v803
    %v1410 = vunpack.c.l.b16 %v804
    %v1411 = vunpack.c.h.b16 %v804
    %v1412 = vunpack.c.l.b16 %v805
    %v1413 = vunpack.c.h.b16 %v805
    %v1414 = vunpack.c.l.b16 %v806
    %v1415 = vunpack.c.h.b16 %v806
    %v1416 = vunpack.c.l.b16 %v807
    %v1417 = vunpack.c.h.b16 %v807
    %v1418 = vunpack.c.l.b16 %v808
    %v1419 = vunpack.c.h.b16 %v808
    %v1420 = vunpack.c.l.b16 %v809
    %v1421 = vunpack.c.h.b16 %v809
    %v1422 = vunpack.c.l.b16 %v810
    %v1423 = vunpack.c.h.b16 %v810
    %v1424 = vunpack.c.l.b16 %v811
    %v1425 = vunpack.c.h.b16 %v811
    %v1426 = vunpack.c.l.b16 %v812
    %v1427 = vunpack.c.h.b16 %v812
    %v1428 = vunpack.c.l.b16 %v813
    %v1429 = vunpack.c.h.b16 %v813
    %v1430 = vunpack.c.l.b16 %v814
    %v1431 = vunpack.c.h.b16 %v814
    %v1432 = vunpack.c.l.b16 %v815
    %v1433 = vunpack.c.h.b16 %v815
    %v1434 = vunpack.c.l.b16 %v816
    %v1435 = vunpack.c.h.b16 %v816
    %v1436 = vunpack.c.l.b16 %v817
    %v1437 = vunpack.c.h.b16 %v817
    %v1438 = vunpack.c.l.b16 %v818
    %v1439 = vunpack.c.h.b16 %v818
    %v1440 = vunpack.c.l.b16 %v819
    %v1441 = vunpack.c.h.b16 %v819
    %v1442 = vunpack.c.l.b16 %v820
    %v1443 = vunpack.c.h.b16 %v820
    %v1444 = vunpack.c.l.b16 %v821
    %v1445 = vunpack.c.h.b16 %v821
    %v1446 = vunpack.c.l.b16 %v822
    %v1447 = vunpack.c.h.b16 %v822
    %v1448 = vunpack.c.l.b16 %v823
    %v1449 = vunpack.c.h.b16 %v823
    %v1450 = vunpack.c.l.b16 %v824
    %v1451 = vunpack.c.h.b16 %v824
    %v1452 = vunpack.c.l.b16 %v825
    %v1453 = vunpack.c.h.b16 %v825
    %v1454 = vunpack.c.l.b16 %v826
    %v1455 = vunpack.c.h.b16 %v826
    %v1456 = vunpack.c.l.b16 %v827
    %v1457 = vunpack.c.h.b16 %v827
    %v1458 = vunpack.c.l.b16 %v828
    %v1459 = vunpack.c.h.b16 %v828
    %v1460 = vunpack.c.l.b16 %v829
    %v1461 = vunpack.c.h.b16 %v829
    %v1462 = vunpack.c.l.b16 %v830
    %v1463 = vunpack.c.h.b16 %v830
    %v1464 = vunpack.c.l.b16 %v831
    %v1465 = vunpack.c.h.b16 %v831
    %v1466 = vunpack.c.l.b16 %v832
    %v1467 = vunpack.c.h.b16 %v832
    %v1468 = vunpack.c.l.b16 %v833
    %v1469 = vunpack.c.h.b16 %v833
    %v1470 = vunpack.c.l.b16 %v834
    %v1471 = vunpack.c.h.b16 %v834
    %v1472 = vunpack.c.l.b16 %v835
    %v1473 = vunpack.c.h.b16 %v835
    %v1474 = vunpack.c.l.b16 %v836
    %v1475 = vunpack.c.h.b16 %v836
    %v1476 = vunpack.c.l.b16 %v837
    %v1477 = vunpack.c.h.b16 %v837
    %v1478 = vunpack.c.l.b16 %v838
    %v1479 = vunpack.c.h.b16 %v838
    %v1480 = vunpack.c.l.b16 %v839
    %v1481 = vunpack.c.h.b16 %v839
    %v1482 = vunpack.c.l.b16 %v840
    %v1483 = vunpack.c.h.b16 %v840
    %v1484 = vunpack.c.l.b16 %v841
    %v1485 = vunpack.c.h.b16 %v841
    %v1486 = vunpack.c.l.b16 %v842
    %v1487 = vunpack.c.h.b16 %v842
    %v1488 = vunpack.c.l.b16 %v843
    %v1489 = vunpack.c.h.b16 %v843
    %v1490 = vunpack.c.l.b16 %v844
    %v1491 = vunpack.c.h.b16 %v844
    %v1492 = vunpack.c.l.b16 %v845
    %v1493 = vunpack.c.h.b16 %v845
    %v1494 = vunpack.c.l.b16 %v846
    %v1495 = vunpack.c.h.b16 %v846
    %v1496 = vunpack.c.l.b16 %v847
    %v1497 = vunpack.c.h.b16 %v847
    %v1498 = vunpack.c.l.b16 %v848
    %v1499 = vunpack.c.h.b16 %v848
    %v1500 = vunpack.c.l.b16 %v849
    %v1501 = vunpack.c.h.b16 %v849
    %v1502 = vunpack.c.l.b16 %v850
    %v1503 = vunpack.c.h.b16 %v850
    %v1504 = vunpack.c.l.b16 %v851
    %v1505 = vunpack.c.h.b16 %v851
    %v1506 = vunpack.c.l.b16 %v852
    %v1507 = vunpack.c.h.b16 %v852
    %v1508 = vunpack.c.l.b16 %v853
    %v1509 = vunpack.c.h.b16 %v853
    %v1510 = vunpack.c.l.b16 %v854
    %v1511 = vunpack.c.h.b16 %v854
    %v1512 = vunpack.c.l.b16 %v855
    %v1513 = vunpack.c.h.b16 %v855
    %v1514 = vunpack.c.l.b16 %v856
    %v1515 = vunpack.c.h.b16 %v856
    %v1516 = vunpack.c.l.b16 %v857
    %v1517 = vunpack.c.h.b16 %v857
    %v1518 = vunpack.c.l.b16 %v858
    %v1519 = vunpack.c.h.b16 %v858
    %v1520 = vunpack.c.l.b16 %v859
    %v1521 = vunpack.c.h.b16 %v859
    %v1522 = vunpack.c.l.b16 %v860
    %v1523 = vunpack.c.h.b16 %v860
    %v1524 = vunpack.c.l.b16 %v861
    %v1525 = vunpack.c.h.b16 %v861
    %v1526 = vunpack.c.l.b16 %v862
    %v1527 = vunpack.c.h.b16 %v862
    %v1528 = vunpack.c.l.b16 %v863
    %v1529 = vunpack.c.h.b16 %v863
    %v1530 = vunpack.c.l.b16 %v864
    %v1531 = vunpack.c.h.b16 %v864
    %v1532 = vunpack.c.l.b16 %v865
    %v1533 = vunpack.c.h.b16 %v865
    %v1534 = vunpack.c.l.b16 %v866
    %v1535 = vunpack.c.h.b16 %v866
    %v1536 = vunpack.c.l.b16 %v867
    %v1537 = vunpack.c.h.b16 %v867
    %v1538 = vunpack.c.l.b16 %v868
    %v1539 = vunpack.c.h.b16 %v868
    %v1540 = vunpack.c.l.b16 %v869
    %v1541 = vunpack.c.h.b16 %v869
    %v1542 = vunpack.c.l.b16 %v870
    %v1543 = vunpack.c.h.b16 %v870
    %v1544 = vunpack.c.l.b16 %v871
    %v1545 = vunpack.c.h.b16 %v871
    %v1546 = vunpack.c.l.b16 %v872
    %v1547 = vunpack.c.h.b16 %v872
    %v1548 = vunpack.c.l.b16 %v873
    %v1549 = vunpack.c.h.b16 %v873
    %v1550 = vunpack.c.l.b16 %v874
    %v1551 = vunpack.c.h.b16 %v874
    %v1552 = vunpack.c.l.b16 %v875
    %v1553 = vunpack.c.h.b16 %v875
    %v1554 = vunpack.c.l.b16 %v876
    %v1555 = vunpack.c.h.b16 %v876
    %v1556 = vunpack.c.l.b16 %v877
    %v1557 = vunpack.c.h.b16 %v877
    %v1558 = vunpack.c.l.b16 %v878
    %v1559 = vunpack.c.h.b16 %v878
    %v1560 = vunpack.c.l.b16 %v879
    %v1561 = vunpack.c.h.b16 %v879
    %v1562 = vunpack.c.l.b16 %v880
    %v1563 = vunpack.c.h.b16 %v880
    %v1564 = vunpack.c.l.b16 %v881
    %v1565 = vunpack.c.h.b16 %v881
    %v1566 = vunpack.c.l.b16 %v882
    %v1567 = vunpack.c.h.b16 %v882
    %v1568 = vunpack.c.l.b16 %v883
    %v1569 = vunpack.c.h.b16 %v883
    %v1570 = vunpack.c.l.b16 %v884
    %v1571 = vunpack.c.h.b16 %v884
    %v1572 = vunpack.c.l.b16 %v885
    %v1573 = vunpack.c.h.b16 %v885
    %v1574 = vunpack.c.l.b16 %v886
    %v1575 = vunpack.c.h.b16 %v886
    %v1576 = vunpack.c.l.b16 %v887
    %v1577 = vunpack.c.h.b16 %v887
    %v1578 = vunpack.c.l.b16 %v888
    %v1579 = vunpack.c.h.b16 %v888
    %v1580 = vunpack.c.l.b16 %v889
    %v1581 = vunpack.c.h.b16 %v889
    %v1582 = vunpack.c.l.b16 %v890
    %v1583 = vunpack.c.h.b16 %v890
    %v1584 = vunpack.c.l.b16 %v891
    %v1585 = vunpack.c.h.b16 %v891
    %v1586 = vunpack.c.l.b16 %v892
    %v1587 = vunpack.c.h.b16 %v892
    %v1588 = vunpack.c.l.b16 %v893
    %v1589 = vunpack.c.h.b16 %v893
    %v1590 = vunpack.c.l.b16 %v894
    %v1591 = vunpack.c.h.b16 %v894
    %v1592 = vunpack.c.l.b16 %v895
    %v1593 = vunpack.c.h.b16 %v895
    %v1594 = vunpack.c.l.b16 %v896
    %v1595 = vunpack.c.h.b16 %v896
    %v1596 = vunpack.c.l.b16 %v897
    %v1597 = vunpack.c.h.b16 %v897
    %v1598 = vunpack.c.l.b16 %v898
    %v1599 = vunpack.c.h.b16 %v898
    %v1600 = vunpack.c.l.b16 %v899
    %v1601 = vunpack.c.h.b16 %v899
    %v1602 = vunpack.c.l.b16 %v900
    %v1603 = vunpack.c.h.b16 %v900
    %v1604 = vunpack.c.l.b16 %v901
    %v1605 = vunpack.c.h.b16 %v901
    %v1606 = vunpack.c.l.b16 %v902
    %v1607 = vunpack.c.h.b16 %v902
    %v1608 = vunpack.c.l.b16 %v903
    %v1609 = vunpack.c.h.b16 %v903
    %v1610 = vunpack.c.l.b16 %v904
    %v1611 = vunpack.c.h.b16 %v904
    %v1612 = vunpack.c.l.b16 %v905
    %v1613 = vunpack.c.h.b16 %v905
    %v1614 = vunpack.c.l.b16 %v906
    %v1615 = vunpack.c.h.b16 %v906
    %v1616 = vunpack.c.l.b16 %v907
    %v1617 = vunpack.c.h.b16 %v907
    %v1618 = vunpack.c.l.b16 %v908
    %v1619 = vunpack.c.h.b16 %v908
    %v1620 = vunpack.c.l.b16 %v909
    %v1621 = vunpack.c.h.b16 %v909
    %v1622 = vunpack.c.l.b16 %v910
    %v1623 = vunpack.c.h.b16 %v910
    %v1624 = vunpack.c.l.b16 %v911
    %v1625 = vunpack.c.h.b16 %v911
    %v1626 = vunpack.c.l.b16 %v912
    %v1627 = vunpack.c.h.b16 %v912
    %v1628 = vunpack.c.l.b16 %v913
    %v1629 = vunpack.c.h.b16 %v913
    %v1630 = vunpack.c.l.b16 %v914
    %v1631 = vunpack.c.h.b16 %v914
    %v1632 = vunpack.c.l.b16 %v915
    %v1633 = vunpack.c.h.b16 %v915
    %v1634 = vunpack.c.l.b16 %v916
    %v1635 = vunpack.c.h.b16 %v916
    %v1636 = vunpack.c.l.b16 %v917
    %v1637 = vunpack.c.h.b16 %v917
    %v1638 = vunpack.c.l.b16 %v918
    %v1639 = vunpack.c.h.b16 %v918
    %v1640 = vunpack.c.l.b16 %v919
    %v1641 = vunpack.c.h.b16 %v919
    %v1642 = vunpack.c.l.b16 %v920
    %v1643 = vunpack.c.h.b16 %v920
    %v1644 = vunpack.c.l.b16 %v921
    %v1645 = vunpack.c.h.b16 %v921
    %v1646 = vunpack.c.l.b16 %v922
    %v1647 = vunpack.c.h.b16 %v922
    %v1648 = vunpack.c.l.b16 %v923
    %v1649 = vunpack.c.h.b16 %v923
    %v1650 = vunpack.c.l.b16 %v924
    %v1651 = vunpack.c.h.b16 %v924
    %v1652 = vunpack.c.l.b16 %v925
    %v1653 = vunpack.c.h.b16 %v925
    %v1654 = vunpack.c.l.b16 %v926
    %v1655 = vunpack.c.h.b16 %v926
    %v1656 = vunpack.c.l.b16 %v927
    %v1657 = vunpack.c.h.b16 %v927
    %v1658 = vunpack.c.l.b16 %v928
    %v1659 = vunpack.c.h.b16 %v928
    %v1660 = vunpack.c.l.b16 %v929
    %v1661 = vunpack.c.h.b16 %v929
    %v1662 = vunpack.c.l.b16 %v930
    %v1663 = vunpack.c.h.b16 %v930
    %v1664 = vunpack.c.l.b16 %v931
    %v1665 = vunpack.c.h.b16 %v931
    %v1666 = vunpack.c.l.b16 %v932
    %v1667 = vunpack.c.h.b16 %v932
    %v1668 = vunpack.c.l.b16 %v933
    %v1669 = vunpack.c.h.b16 %v933
    %v1670 = vunpack.c.l.b16 %v934
    %v1671 = vunpack.c.h.b16 %v934
    %v1672 = vunpack.c.l.b16 %v935
    %v1673 = vunpack.c.h.b16 %v935
    %v1674 = vunpack.c.l.b16 %v936
    %v1675 = vunpack.c.h.b16 %v936
    %v1676 = vunpack.c.l.b16 %v937
    %v1677 = vunpack.c.h.b16 %v937
    %v1678 = vunpack.c.l.b16 %v938
    %v1679 = vunpack.c.h.b16 %v938
    %v1680 = vunpack.c.l.b16 %v939
    %v1681 = vunpack.c.h.b16 %v939
    %v1682 = vunpack.c.l.b16 %v940
    %v1683 = vunpack.c.h.b16 %v940
    %v1684 = vunpack.c.l.b16 %v941
    %v1685 = vunpack.c.h.b16 %v941
    %v1686 = vunpack.c.l.b16 %v942
    %v1687 = vunpack.c.h.b16 %v942
    %v1688 = vunpack.c.l.b16 %v943
    %v1689 = vunpack.c.h.b16 %v943
    %v1690 = vunpack.c.l.b16 %v944
    %v1691 = vunpack.c.h.b16 %v944
    %v1692 = vunpack.c.l.b16 %v945
    %v1693 = vunpack.c.h.b16 %v945
    %v1694 = vunpack.c.l.b16 %v946
    %v1695 = vunpack.c.h.b16 %v946
    %v1696 = vunpack.c.l.b16 %v947
    %v1697 = vunpack.c.h.b16 %v947
    %v1698 = vunpack.c.l.b16 %v948
    %v1699 = vunpack.c.h.b16 %v948
    %v1700 = vunpack.c.l.b16 %v949
    %v1701 = vunpack.c.h.b16 %v949
    %v1702 = vunpack.c.l.b16 %v950
    %v1703 = vunpack.c.h.b16 %v950
    %v1704 = vunpack.c.l.b16 %v951
    %v1705 = vunpack.c.h.b16 %v951
    %v1706 = vunpack.c.l.b16 %v952
    %v1707 = vunpack.c.h.b16 %v952
    %v1708 = vunpack.c.l.b16 %v953
    %v1709 = vunpack.c.h.b16 %v953
    %v1710 = vunpack.c.l.b16 %v954
    %v1711 = vunpack.c.h.b16 %v954
    %v1712 = vunpack.c.l.b16 %v955
    %v1713 = vunpack.c.h.b16 %v955
    %v1714 = vunpack.c.l.b16 %v956
    %v1715 = vunpack.c.h.b16 %v956
    %v1716 = vunpack.c.l.b16 %v957
    %v1717 = vunpack.c.h.b16 %v957
    %v1718 = vunpack.c.l.b16 %v958
    %v1719 = vunpack.c.h.b16 %v958
    %v1720 = vunpack.c.l.b16 %v959
    %v1721 = vunpack.c.h.b16 %v959
    %v1722 = vunpack.c.l.b16 %v960
    %v1723 = vunpack.c.h.b16 %v960
    %v1724 = vunpack.c.l.b16 %v961
    %v1725 = vunpack.c.h.b16 %v961
    %v1726 = vunpack.c.l.b16 %v962
    %v1727 = vunpack.c.h.b16 %v962
    %v1728 = vunpack.c.l.b16 %v963
    %v1729 = vunpack.c.h.b16 %v963
    %v1730 = vunpack.c.l.b16 %v964
    %v1731 = vunpack.c.h.b16 %v964
    %v1732 = vunpack.c.l.b16 %v965
    %v1733 = vunpack.c.h.b16 %v965
    %v1734 = vunpack.c.l.b16 %v966
    %v1735 = vunpack.c.h.b16 %v966
    %v1736 = vunpack.c.l.b16 %v967
    %v1737 = vunpack.c.h.b16 %v967
    %v1738 = vunpack.c.l.b16 %v968
    %v1739 = vunpack.c.h.b16 %v968
    %v1740 = vunpack.c.l.b16 %v969
    %v1741 = vunpack.c.h.b16 %v969
    %v1742 = vunpack.c.l.b16 %v970
    %v1743 = vunpack.c.h.b16 %v970
    %v1744 = vunpack.c.l.b16 %v971
    %v1745 = vunpack.c.h.b16 %v971
    %v1746 = vunpack.c.l.b16 %v972
    %v1747 = vunpack.c.h.b16 %v972
    %v1748 = vunpack.c.l.b16 %v973
    %v1749 = vunpack.c.h.b16 %v973
    %v1750 = vunpack.c.l.b16 %v974
    %v1751 = vunpack.c.h.b16 %v974
    %v1752 = vunpack.c.l.b16 %v975
    %v1753 = vunpack.c.h.b16 %v975
    %v1754 = vpack.c.b16 %v1246, %v1242
    %v1755 = vpack.c.b16 %v1247, %v1243
    %v1756 = vpack.c.b16 %v1248, %v1244
    %v1757 = vpack.c.b16 %v1249, %v1245
    %v1758 = vpack.c.b16 %v1254, %v1250
    %v1759 = vpack.c.b16 %v1255, %v1251
    %v1760 = vpack.c.b16 %v1256, %v1252
    %v1761 = vpack.c.b16 %v1257, %v1253
    %v1762 = vpack.c.b16 %v1262, %v1258
    %v1763 = vpack.c.b16 %v1263, %v1259
    %v1764 = vpack.c.b16 %v1264, %v1260
    %v1765 = vpack.c.b16 %v1265, %v1261
    %v1766 = vpack.c.b16 %v1270, %v1266
    %v1767 = vpack.c.b16 %v1271, %v1267
    %v1768 = vpack.c.b16 %v1272, %v1268
    %v1769 = vpack.c.b16 %v1273, %v1269
    %v1770 = vpack.c.b16 %v1278, %v1274
    %v1771 = vpack.c.b16 %v1279, %v1275
    %v1772 = vpack.c.b16 %v1280, %v1276
    %v1773 = vpack.c.b16 %v1281, %v1277
    %v1774 = vpack.c.b16 %v1286, %v1282
    %v1775 = vpack.c.b16 %v1287, %v1283
    %v1776 = vpack.c.b16 %v1288, %v1284
    %v1777 = vpack.c.b16 %v1289, %v1285
    %v1778 = vpack.c.b16 %v1294, %v1290
    %v1779 = vpack.c.b16 %v1295, %v1291
    %v1780 = vpack.c.b16 %v1296, %v1292
    %v1781 = vpack.c.b16 %v1297, %v1293
    %v1782 = vpack.c.b16 %v1302, %v1298
    %v1783 = vpack.c.b16 %v1303, %v1299
    %v1784 = vpack.c.b16 %v1304, %v1300
    %v1785 = vpack.c.b16 %v1305, %v1301
    %v1786 = vpack.c.b16 %v1310, %v1306
    %v1787 = vpack.c.b16 %v1311, %v1307
    %v1788 = vpack.c.b16 %v1312, %v1308
    %v1789 = vpack.c.b16 %v1313, %v1309
    %v1790 = vpack.c.b16 %v1318, %v1314
    %v1791 = vpack.c.b16 %v1319, %v1315
    %v1792 = vpack.c.b16 %v1320, %v1316
    %v1793 = vpack.c.b16 %v1321, %v1317
    %v1794 = vpack.c.b16 %v1326, %v1322
    %v1795 = vpack.c.b16 %v1327, %v1323
    %v1796 = vpack.c.b16 %v1328, %v1324
    %v1797 = vpack.c.b16 %v1329, %v1325
    %v1798 = vpack.c.b16 %v1334, %v1330
    %v1799 = vpack.c.b16 %v1335, %v1331
    %v1800 = vpack.c.b16 %v1336, %v1332
    %v1801 = vpack.c.b16 %v1337, %v1333
    %v1802 = vpack.c.b16 %v1342, %v1338
    %v1803 = vpack.c.b16 %v1343, %v1339
    %v1804 = vpack.c.b16 %v1344, %v1340
    %v1805 = vpack.c.b16 %v1345, %v1341
    %v1806 = vpack.c.b16 %v1350, %v1346
    %v1807 = vpack.c.b16 %v1351, %v1347
    %v1808 = vpack.c.b16 %v1352, %v1348
    %v1809 = vpack.c.b16 %v1353, %v1349
    %v1810 = vpack.c.b16 %v1358, %v1354
    %v1811 = vpack.c.b16 %v1359, %v1355
    %v1812 = vpack.c.b16 %v1360, %v1356
    %v1813 = vpack.c.b16 %v1361, %v1357
    %v1814 = vpack.c.b16 %v1366, %v1362
    %v1815 = vpack.c.b16 %v1367, %v1363
    %v1816 = vpack.c.b16 %v1368, %v1364
    %v1817 = vpack.c.b16 %v1369, %v1365
    %v1818 = vpack.c.b16 %v1374, %v1370
    %v1819 = vpack.c.b16 %v1375, %v1371
    %v1820 = vpack.c.b16 %v1376, %v1372
    %v1821 = vpack.c.b16 %v1377, %v1373
    %v1822 = vpack.c.b16 %v1382, %v1378
    %v1823 = vpack.c.b16 %v1383, %v1379
    %v1824 = vpack.c.b16 %v1384, %v1380
    %v1825 = vpack.c.b16 %v1385, %v1381
    %v1826 = vpack.c.b16 %v1390, %v1386
    %v1827 = vpack.c.b16 %v1391, %v1387
    %v1828 = vpack.c.b16 %v1392, %v1388
    %v1829 = vpack.c.b16 %v1393, %v1389
    %v1830 = vpack.c.b16 %v1398, %v1394
    %v1831 = vpack.c.b16 %v1399, %v1395
    %v1832 = vpack.c.b16 %v1400, %v1396
    %v1833 = vpack.c.b16 %v1401, %v1397
    %v1834 = vpack.c.b16 %v1406, %v1402
    %v1835 = vpack.c.b16 %v1407, %v1403
    %v1836 = vpack.c.b16 %v1408, %v1404
    %v1837 = vpack.c.b16 %v1409, %v1405
    %v1838 = vpack.c.b16 %v1414, %v1410
    %v1839 = vpack.c.b16 %v1415, %v1411
    %v1840 = vpack.c.b16 %v1416, %v1412
    %v1841 = vpack.c.b16 %v1417, %v1413
    %v1842 = vpack.c.b16 %v1422, %v1418
    %v1843 = vpack.c.b16 %v1423, %v1419
    %v1844 = vpack.c.b16 %v1424, %v1420
    %v1845 = vpack.c.b16 %v1425, %v1421
    %v1846 = vpack.c.b16 %v1430, %v1426
    %v1847 = vpack.c.b16 %v1431, %v1427
    %v1848 = vpack.c.b16 %v1432, %v1428
    %v1849 = vpack.c.b16 %v1433, %v1429
    %v1850 = vpack.c.b16 %v1438, %v1434
    %v1851 = vpack.c.b16 %v1439, %v1435
    %v1852 = vpack.c.b16 %v1440, %v1436
    %v1853 = vpack.c.b16 %v1441, %v1437
    %v1854 = vpack.c.b16 %v1446, %v1442
    %v1855 = vpack.c.b16 %v1447, %v1443
    %v1856 = vpack.c.b16 %v1448, %v1444
    %v1857 = vpack.c.b16 %v1449, %v1445
    %v1858 = vpack.c.b16 %v1454, %v1450
    %v1859 = vpack.c.b16 %v1455, %v1451
    %v1860 = vpack.c.b16 %v1456, %v1452
    %v1861 = vpack.c.b16 %v1457, %v1453
    %v1862 = vpack.c.b16 %v1462, %v1458
    %v1863 = vpack.c.b16 %v1463, %v1459
    %v1864 = vpack.c.b16 %v1464, %v1460
    %v1865 = vpack.c.b16 %v1465, %v1461
    %v1866 = vpack.c.b16 %v1470, %v1466
    %v1867 = vpack.c.b16 %v1471, %v1467
    %v1868 = vpack.c.b16 %v1472, %v1468
    %v1869 = vpack.c.b16 %v1473, %v1469
    %v1870 = vpack.c.b16 %v1478, %v1474
    %v1871 = vpack.c.b16 %v1479, %v1475
    %v1872 = vpack.c.b16 %v1480, %v1476
    %v1873 = vpack.c.b16 %v1481, %v1477
    %v1874 = vpack.c.b16 %v1486, %v1482
    %v1875 = vpack.c.b16 %v1487, %v1483
    %v1876 = vpack.c.b16 %v1488, %v1484
    %v1877 = vpack.c.b16 %v1489, %v1485
    %v1878 = vpack.c.b16 %v1494, %v1490
    %v1879 = vpack.c.b16 %v1495, %v1491
    %v1880 = vpack.c.b16 %v1496, %v1492
    %v1881 = vpack.c.b16 %v1497, %v1493
    %v1882 = vpack.c.b16 %v1502, %v1498
    %v1883 = vpack.c.b16 %v1503, %v1499
    %v1884 = vpack.c.b16 %v1504, %v1500
    %v1885 = vpack.c.b16 %v1505, %v1501
    %v1886 = vpack.c.b16 %v1510, %v1506
    %v1887 = vpack.c.b16 %v1511, %v1507
    %v1888 = vpack.c.b16 %v1512, %v1508
    %v1889 = vpack.c.b16 %v1513, %v1509
    %v1890 = vpack.c.b16 %v1518, %v1514
    %v1891 = vpack.c.b16 %v1519, %v1515
    %v1892 = vpack.c.b16 %v1520, %v1516
    %v1893 = vpack.c.b16 %v1521, %v1517
    %v1894 = vpack.c.b16 %v1526, %v1522
    %v1895 = vpack.c.b16 %v1527, %v1523
    %v1896 = vpack.c.b16 %v1528, %v1524
    %v1897 = vpack.c.b16 %v1529, %v1525
    %v1898 = vpack.c.b16 %v1534, %v1530
    %v1899 = vpack.c.b16 %v1535, %v1531
    %v1900 = vpack.c.b16 %v1536, %v1532
    %v1901 = vpack.c.b16 %v1537, %v1533
    %v1902 = vpack.c.b16 %v1542, %v1538
    %v1903 = vpack.c.b16 %v1543, %v1539
    %v1904 = vpack.c.b16 %v1544, %v1540
    %v1905 = vpack.c.b16 %v1545, %v1541
    %v1906 = vpack.c.b16 %v1550, %v1546
    %v1907 = vpack.c.b16 %v1551, %v1547
    %v1908 = vpack.c.b16 %v1552, %v1548
    %v1909 = vpack.c.b16 %v1553, %v1549
    %v1910 = vpack.c.b16 %v1558, %v1554
    %v1911 = vpack.c.b16 %v1559, %v1555
    %v1912 = vpack.c.b16 %v1560, %v1556
    %v1913 = vpack.c.b16 %v1561, %v1557
    %v1914 = vpack.c.b16 %v1566, %v1562
    %v1915 = vpack.c.b16 %v1567, %v1563
    %v1916 = vpack.c.b16 %v1568, %v1564
    %v1917 = vpack.c.b16 %v1569, %v1565
    %v1918 = vpack.c.b16 %v1574, %v1570
    %v1919 = vpack.c.b16 %v1575, %v1571
    %v1920 = vpack.c.b16 %v1576, %v1572
    %v1921 = vpack.c.b16 %v1577, %v1573
    %v1922 = vpack.c.b16 %v1582, %v1578
    %v1923 = vpack.c.b16 %v1583, %v1579
    %v1924 = vpack.c.b16 %v1584, %v1580
    %v1925 = vpack.c.b16 %v1585, %v1581
    %v1926 = vpack.c.b16 %v1590, %v1586
    %v1927 = vpack.c.b16 %v1591, %v1587
    %v1928 = vpack.c.b16 %v1592, %v1588
    %v1929 = vpack.c.b16 %v1593, %v1589
    %v1930 = vpack.c.b16 %v1598, %v1594
    %v1931 = vpack.c.b16 %v1599, %v1595
    %v1932 = vpack.c.b16 %v1600, %v1596
    %v1933 = vpack.c.b16 %v1601, %v1597
    %v1934 = vpack.c.b16 %v1606, %v1602
    %v1935 = vpack.c.b16 %v1607, %v1603
    %v1936 = vpack.c.b16 %v1608, %v1604
    %v1937 = vpack.c.b16 %v1609, %v1605
    %v1938 = vpack.c.b16 %v1614, %v1610
    %v1939 = vpack.c.b16 %v1615, %v1611
    %v1940 = vpack.c.b16 %v1616, %v1612
    %v1941 = vpack.c.b16 %v1617, %v1613
    %v1942 = vpack.c.b16 %v1622, %v1618
    %v1943 = vpack.c.b16 %v1623, %v1619
    %v1944 = vpack.c.b16 %v1624, %v1620
    %v1945 = vpack.c.b16 %v1625, %v1621
    %v1946 = vpack.c.b16 %v1630, %v1626
    %v1947 = vpack.c.b16 %v1631, %v1627
    %v1948 = vpack.c.b16 %v1632, %v1628
    %v1949 = vpack.c.b16 %v1633, %v1629
    %v1950 = vpack.c.b16 %v1638, %v1634
    %v1951 = vpack.c.b16 %v1639, %v1635
    %v1952 = vpack.c.b16 %v1640, %v1636
    %v1953 = vpack.c.b16 %v1641, %v1637
    %v1954 = vpack.c.b16 %v1646, %v1642
    %v1955 = vpack.c.b16 %v1647, %v1643
    %v1956 = vpack.c.b16 %v1648, %v1644
    %v1957 = vpack.c.b16 %v1649, %v1645
    %v1958 = vpack.c.b16 %v1654, %v1650
    %v1959 = vpack.c.b16 %v1655, %v1651
    %v1960 = vpack.c.b16 %v1656, %v1652
    %v1961 = vpack.c.b16 %v1657, %v1653
    %v1962 = vpack.c.b16 %v1662, %v1658
    %v1963 = vpack.c.b16 %v1663, %v1659
    %v1964 = vpack.c.b16 %v1664, %v1660
    %v1965 = vpack.c.b16 %v1665, %v1661
    %v1966 = vpack.c.b16 %v1670, %v1666
    %v1967 = vpack.c.b16 %v1671, %v1667
    %v1968 = vpack.c.b16 %v1672, %v1668
    %v1969 = vpack.c.b16 %v1673, %v1669
    %v1970 = vpack.c.b16 %v1678, %v1674
    %v1971 = vpack.c.b16 %v1679, %v1675
    %v1972 = vpack.c.b16 %v1680, %v1676
    %v1973 = vpack.c.b16 %v1681, %v1677
    %v1974 = vpack.c.b16 %v1686, %v1682
    %v1975 = vpack.c.b16 %v1687, %v1683
    %v1976 = vpack.c.b16 %v1688, %v1684
    %v1977 = vpack.c.b16 %v1689, %v1685
    %v1978 = vpack.c.b16 %v1694, %v1690
    %v1979 = vpack.c.b16 %v1695, %v1691
    %v1980 = vpack.c.b16 %v1696, %v1692
    %v1981 = vpack.c.b16 %v1697, %v1693
    %v1982 = vpack.c.b16 %v1702, %v1698
    %v1983 = vpack.c.b16 %v1703, %v1699
    %v1984 = vpack.c.b16 %v1704, %v1700
    %v1985 = vpack.c.b16 %v1705, %v1701
    %v1986 = vpack.c.b16 %v1710, %v1706
    %v1987 = vpack.c.b16 %v1711, %v1707
    %v1988 = vpack.c.b16 %v1712, %v1708
    %v1989 = vpack.c.b16 %v1713, %v1709
    %v1990 = vpack.c.b16 %v1718, %v1714
    %v1991 = vpack.c.b16 %v1719, %v1715
    %v1992 = vpack.c.b16 %v1720, %v1716
    %v1993 = vpack.c.b16 %v1721, %v1717
    %v1994 = vpack.c.b16 %v1726, %v1722
    %v1995 = vpack.c.b16 %v1727, %v1723
    %v1996 = vpack.c.b16 %v1728, %v1724
    %v1997 = vpack.c.b16 %v1729, %v1725
    %v1998 = vpack.c.b16 %v1734, %v1730
    %v1999 = vpack.c.b16 %v1735, %v1731
    %v2000 = vpack.c.b16 %v1736, %v1732
    %v2001 = vpack.c.b16 %v1737, %v1733
    %v2002 = vpack.c.b16 %v1742, %v1738
    %v2003 = vpack.c.b16 %v1743, %v1739
    %v2004 = vpack.c.b16 %v1744, %v1740
    %v2005 = vpack.c.b16 %v1745, %v1741
    %v2006 = vpack.c.b16 %v1750, %v1746
    %v2007 = vpack.c.b16 %v1751, %v1747
    %v2008 = vpack.c.b16 %v1752, %v1748
    %v2009 = vpack.c.b16 %v1753, %v1749
    %2266 = vmatpush.bf16.msra.mxu0 %v1782
    %2267 = vmatpush.bf16.msra.mxu0 %v1778
    %2268 = vmatpush.bf16.msra.mxu0 %v1774
    %2269 = vmatpush.bf16.msra.mxu0 %v1770
    %2270 = vmatpush.bf16.msra.mxu0 %v1766
    %2271 = vmatpush.bf16.msra.mxu0 %v1762
    %2272 = vmatpush.bf16.msra.mxu0 %v1758
    %2273 = vmatpush.bf16.msra.mxu0 %v1754
    %2274 = vmatmul.bf16.gmra.mxu0 %v712
    %v2275 = vpop.f32.mrf.mxu0
    %v2276 = vadd.f32 %v978, %v2275
    %v2277 = vpop.f32.mrf.mxu0
    %2278 = vdwg.mxu0
    %2279 = vmatpush.bf16.msra.mxu0 %v1814
    %2280 = vmatpush.bf16.msra.mxu0 %v1810
    %2281 = vmatpush.bf16.msra.mxu0 %v1806
    %2282 = vmatpush.bf16.msra.mxu0 %v1802
    %2283 = vmatpush.bf16.msra.mxu0 %v1798
    %2284 = vmatpush.bf16.msra.mxu0 %v1794
    %2285 = vmatpush.bf16.msra.mxu0 %v1790
    %2286 = vmatpush.bf16.msra.mxu0 %v1786
    %2287 = vmatmul.bf16.gmra.mxu0 %v713
    %v2288 = vpop.f32.mrf.mxu0
    %v2289 = vadd.f32 %v2276, %v2288
    %v2290 = vpop.f32.mrf.mxu0
    %2291 = vdwg.mxu0
    %2292 = vmatpush.bf16.msra.mxu0 %v1846
    %2293 = vmatpush.bf16.msra.mxu0 %v1842
    %2294 = vmatpush.bf16.msra.mxu0 %v1838
    %2295 = vmatpush.bf16.msra.mxu0 %v1834
    %2296 = vmatpush.bf16.msra.mxu0 %v1830
    %2297 = vmatpush.bf16.msra.mxu0 %v1826
    %2298 = vmatpush.bf16.msra.mxu0 %v1822
    %2299 = vmatpush.bf16.msra.mxu0 %v1818
    %2300 = vmatmul.bf16.gmra.mxu0 %v714
    %v2301 = vpop.f32.mrf.mxu0
    %v2302 = vadd.f32 %v2289, %v2301
    %v2303 = vpop.f32.mrf.mxu0
    %2304 = vdwg.mxu0
    %2305 = vmatpush.bf16.msra.mxu0 %v1878
    %2306 = vmatpush.bf16.msra.mxu0 %v1874
    %2307 = vmatpush.bf16.msra.mxu0 %v1870
    %2308 = vmatpush.bf16.msra.mxu0 %v1866
    %2309 = vmatpush.bf16.msra.mxu0 %v1862
    %2310 = vmatpush.bf16.msra.mxu0 %v1858
    %2311 = vmatpush.bf16.msra.mxu0 %v1854
    %2312 = vmatpush.bf16.msra.mxu0 %v1850
    %2313 = vmatmul.bf16.gmra.mxu0 %v715
    %v2314 = vpop.f32.mrf.mxu0
    %v2315 = vadd.f32 %v2302, %v2314
    %v2316 = vpop.f32.mrf.mxu0
    %2317 = vdwg.mxu0
    %2318 = vmatpush.bf16.msra.mxu0 %v1910
    %2319 = vmatpush.bf16.msra.mxu0 %v1906
    %2320 = vmatpush.bf16.msra.mxu0 %v1902
    %2321 = vmatpush.bf16.msra.mxu0 %v1898
    %2322 = vmatpush.bf16.msra.mxu0 %v1894
    %2323 = vmatpush.bf16.msra.mxu0 %v1890
    %2324 = vmatpush.bf16.msra.mxu0 %v1886
    %2325 = vmatpush.bf16.msra.mxu0 %v1882
    %2326 = vmatmul.bf16.gmra.mxu0 %v716
    %v2327 = vpop.f32.mrf.mxu0
    %v2328 = vadd.f32 %v2315, %v2327
    %v2329 = vpop.f32.mrf.mxu0
    %2330 = vdwg.mxu0
    %2331 = vmatpush.bf16.msra.mxu0 %v1942
    %2332 = vmatpush.bf16.msra.mxu0 %v1938
    %2333 = vmatpush.bf16.msra.mxu0 %v1934
    %2334 = vmatpush.bf16.msra.mxu0 %v1930
    %2335 = vmatpush.bf16.msra.mxu0 %v1926
    %2336 = vmatpush.bf16.msra.mxu0 %v1922
    %2337 = vmatpush.bf16.msra.mxu0 %v1918
    %2338 = vmatpush.bf16.msra.mxu0 %v1914
    %2339 = vmatmul.bf16.gmra.mxu0 %v717
    %v2340 = vpop.f32.mrf.mxu0
    %v2341 = vadd.f32 %v2328, %v2340
    %v2342 = vpop.f32.mrf.mxu0
    %2343 = vdwg.mxu0
    %2344 = vmatpush.bf16.msra.mxu0 %v1974
    %2345 = vmatpush.bf16.msra.mxu0 %v1970
    %2346 = vmatpush.bf16.msra.mxu0 %v1966
    %2347 = vmatpush.bf16.msra.mxu0 %v1962
    %2348 = vmatpush.bf16.msra.mxu0 %v1958
    %2349 = vmatpush.bf16.msra.mxu0 %v1954
    %2350 = vmatpush.bf16.msra.mxu0 %v1950
    %2351 = vmatpush.bf16.msra.mxu0 %v1946
    %2352 = vmatmul.bf16.gmra.mxu0 %v718
    %v2353 = vpop.f32.mrf.mxu0
    %v2354 = vadd.f32 %v2341, %v2353
    %v2355 = vpop.f32.mrf.mxu0
    %2356 = vdwg.mxu0
    %2357 = vmatpush.bf16.msra.mxu0 %v2006
    %2358 = vmatpush.bf16.msra.mxu0 %v2002
    %2359 = vmatpush.bf16.msra.mxu0 %v1998
    %2360 = vmatpush.bf16.msra.mxu0 %v1994
    %2361 = vmatpush.bf16.msra.mxu0 %v1990
    %2362 = vmatpush.bf16.msra.mxu0 %v1986
    %2363 = vmatpush.bf16.msra.mxu0 %v1982
    %2364 = vmatpush.bf16.msra.mxu0 %v1978
    %2365 = vmatmul.bf16.gmra.mxu0 %v719
    %v2366 = vpop.f32.mrf.mxu0
    %v2367 = vadd.f32 %v2354, %v2366
    %v2368 = vpop.f32.mrf.mxu0
    %2369 = vdwg.mxu0
    %2370 = vmatpush.bf16.msra.mxu0 %v1783
    %2371 = vmatpush.bf16.msra.mxu0 %v1779
    %2372 = vmatpush.bf16.msra.mxu0 %v1775
    %2373 = vmatpush.bf16.msra.mxu0 %v1771
    %2374 = vmatpush.bf16.msra.mxu0 %v1767
    %2375 = vmatpush.bf16.msra.mxu0 %v1763
    %2376 = vmatpush.bf16.msra.mxu0 %v1759
    %2377 = vmatpush.bf16.msra.mxu0 %v1755
    %2378 = vmatmul.bf16.gmra.mxu0 %v712
    %v2379 = vpop.f32.mrf.mxu0
    %v2380 = vadd.f32 %v979, %v2379
    %v2381 = vpop.f32.mrf.mxu0
    %2382 = vdwg.mxu0
    %2383 = vmatpush.bf16.msra.mxu0 %v1815
    %2384 = vmatpush.bf16.msra.mxu0 %v1811
    %2385 = vmatpush.bf16.msra.mxu0 %v1807
    %2386 = vmatpush.bf16.msra.mxu0 %v1803
    %2387 = vmatpush.bf16.msra.mxu0 %v1799
    %2388 = vmatpush.bf16.msra.mxu0 %v1795
    %2389 = vmatpush.bf16.msra.mxu0 %v1791
    %2390 = vmatpush.bf16.msra.mxu0 %v1787
    %2391 = vmatmul.bf16.gmra.mxu0 %v713
    %v2392 = vpop.f32.mrf.mxu0
    %v2393 = vadd.f32 %v2380, %v2392
    %v2394 = vpop.f32.mrf.mxu0
    %2395 = vdwg.mxu0
    %2396 = vmatpush.bf16.msra.mxu0 %v1847
    %2397 = vmatpush.bf16.msra.mxu0 %v1843
    %2398 = vmatpush.bf16.msra.mxu0 %v1839
    %2399 = vmatpush.bf16.msra.mxu0 %v1835
    %2400 = vmatpush.bf16.msra.mxu0 %v1831
    %2401 = vmatpush.bf16.msra.mxu0 %v1827
    %2402 = vmatpush.bf16.msra.mxu0 %v1823
    %2403 = vmatpush.bf16.msra.mxu0 %v1819
    %2404 = vmatmul.bf16.gmra.mxu0 %v714
    %v2405 = vpop.f32.mrf.mxu0
    %v2406 = vadd.f32 %v2393, %v2405
    %v2407 = vpop.f32.mrf.mxu0
    %2408 = vdwg.mxu0
    %2409 = vmatpush.bf16.msra.mxu0 %v1879
    %2410 = vmatpush.bf16.msra.mxu0 %v1875
    %2411 = vmatpush.bf16.msra.mxu0 %v1871
    %2412 = vmatpush.bf16.msra.mxu0 %v1867
    %2413 = vmatpush.bf16.msra.mxu0 %v1863
    %2414 = vmatpush.bf16.msra.mxu0 %v1859
    %2415 = vmatpush.bf16.msra.mxu0 %v1855
    %2416 = vmatpush.bf16.msra.mxu0 %v1851
    %2417 = vmatmul.bf16.gmra.mxu0 %v715
    %v2418 = vpop.f32.mrf.mxu0
    %v2419 = vadd.f32 %v2406, %v2418
    %v2420 = vpop.f32.mrf.mxu0
    %2421 = vdwg.mxu0
    %2422 = vmatpush.bf16.msra.mxu0 %v1911
    %2423 = vmatpush.bf16.msra.mxu0 %v1907
    %2424 = vmatpush.bf16.msra.mxu0 %v1903
    %2425 = vmatpush.bf16.msra.mxu0 %v1899
    %2426 = vmatpush.bf16.msra.mxu0 %v1895
    %2427 = vmatpush.bf16.msra.mxu0 %v1891
    %2428 = vmatpush.bf16.msra.mxu0 %v1887
    %2429 = vmatpush.bf16.msra.mxu0 %v1883
    %2430 = vmatmul.bf16.gmra.mxu0 %v716
    %v2431 = vpop.f32.mrf.mxu0
    %v2432 = vadd.f32 %v2419, %v2431
    %v2433 = vpop.f32.mrf.mxu0
    %2434 = vdwg.mxu0
    %2435 = vmatpush.bf16.msra.mxu0 %v1943
    %2436 = vmatpush.bf16.msra.mxu0 %v1939
    %2437 = vmatpush.bf16.msra.mxu0 %v1935
    %2438 = vmatpush.bf16.msra.mxu0 %v1931
    %2439 = vmatpush.bf16.msra.mxu0 %v1927
    %2440 = vmatpush.bf16.msra.mxu0 %v1923
    %2441 = vmatpush.bf16.msra.mxu0 %v1919
    %2442 = vmatpush.bf16.msra.mxu0 %v1915
    %2443 = vmatmul.bf16.gmra.mxu0 %v717
    %v2444 = vpop.f32.mrf.mxu0
    %v2445 = vadd.f32 %v2432, %v2444
    %v2446 = vpop.f32.mrf.mxu0
    %2447 = vdwg.mxu0
    %2448 = vmatpush.bf16.msra.mxu0 %v1975
    %2449 = vmatpush.bf16.msra.mxu0 %v1971
    %2450 = vmatpush.bf16.msra.mxu0 %v1967
    %2451 = vmatpush.bf16.msra.mxu0 %v1963
    %2452 = vmatpush.bf16.msra.mxu0 %v1959
    %2453 = vmatpush.bf16.msra.mxu0 %v1955
    %2454 = vmatpush.bf16.msra.mxu0 %v1951
    %2455 = vmatpush.bf16.msra.mxu0 %v1947
    %2456 = vmatmul.bf16.gmra.mxu0 %v718
    %v2457 = vpop.f32.mrf.mxu0
    %v2458 = vadd.f32 %v2445, %v2457
    %v2459 = vpop.f32.mrf.mxu0
    %2460 = vdwg.mxu0
    %2461 = vmatpush.bf16.msra.mxu0 %v2007
    %2462 = vmatpush.bf16.msra.mxu0 %v2003
    %2463 = vmatpush.bf16.msra.mxu0 %v1999
    %2464 = vmatpush.bf16.msra.mxu0 %v1995
    %2465 = vmatpush.bf16.msra.mxu0 %v1991
    %2466 = vmatpush.bf16.msra.mxu0 %v1987
    %2467 = vmatpush.bf16.msra.mxu0 %v1983
    %2468 = vmatpush.bf16.msra.mxu0 %v1979
    %2469 = vmatmul.bf16.gmra.mxu0 %v719
    %v2470 = vpop.f32.mrf.mxu0
    %v2471 = vadd.f32 %v2458, %v2470
    %v2472 = vpop.f32.mrf.mxu0
    %2473 = vdwg.mxu0
    %2474 = vmatpush.bf16.msra.mxu0 %v1784
    %2475 = vmatpush.bf16.msra.mxu0 %v1780
    %2476 = vmatpush.bf16.msra.mxu0 %v1776
    %2477 = vmatpush.bf16.msra.mxu0 %v1772
    %2478 = vmatpush.bf16.msra.mxu0 %v1768
    %2479 = vmatpush.bf16.msra.mxu0 %v1764
    %2480 = vmatpush.bf16.msra.mxu0 %v1760
    %2481 = vmatpush.bf16.msra.mxu0 %v1756
    %2482 = vmatmul.bf16.gmra.mxu0 %v712
    %v2483 = vpop.f32.mrf.mxu0
    %v2484 = vadd.f32 %v980, %v2483
    %v2485 = vpop.f32.mrf.mxu0
    %2486 = vdwg.mxu0
    %2487 = vmatpush.bf16.msra.mxu0 %v1816
    %2488 = vmatpush.bf16.msra.mxu0 %v1812
    %2489 = vmatpush.bf16.msra.mxu0 %v1808
    %2490 = vmatpush.bf16.msra.mxu0 %v1804
    %2491 = vmatpush.bf16.msra.mxu0 %v1800
    %2492 = vmatpush.bf16.msra.mxu0 %v1796
    %2493 = vmatpush.bf16.msra.mxu0 %v1792
    %2494 = vmatpush.bf16.msra.mxu0 %v1788
    %2495 = vmatmul.bf16.gmra.mxu0 %v713
    %v2496 = vpop.f32.mrf.mxu0
    %v2497 = vadd.f32 %v2484, %v2496
    %v2498 = vpop.f32.mrf.mxu0
    %2499 = vdwg.mxu0
    %2500 = vmatpush.bf16.msra.mxu0 %v1848
    %2501 = vmatpush.bf16.msra.mxu0 %v1844
    %2502 = vmatpush.bf16.msra.mxu0 %v1840
    %2503 = vmatpush.bf16.msra.mxu0 %v1836
    %2504 = vmatpush.bf16.msra.mxu0 %v1832
    %2505 = vmatpush.bf16.msra.mxu0 %v1828
    %2506 = vmatpush.bf16.msra.mxu0 %v1824
    %2507 = vmatpush.bf16.msra.mxu0 %v1820
    %2508 = vmatmul.bf16.gmra.mxu0 %v714
    %v2509 = vpop.f32.mrf.mxu0
    %v2510 = vadd.f32 %v2497, %v2509
    %v2511 = vpop.f32.mrf.mxu0
    %2512 = vdwg.mxu0
    %2513 = vmatpush.bf16.msra.mxu0 %v1880
    %2514 = vmatpush.bf16.msra.mxu0 %v1876
    %2515 = vmatpush.bf16.msra.mxu0 %v1872
    %2516 = vmatpush.bf16.msra.mxu0 %v1868
    %2517 = vmatpush.bf16.msra.mxu0 %v1864
    %2518 = vmatpush.bf16.msra.mxu0 %v1860
    %2519 = vmatpush.bf16.msra.mxu0 %v1856
    %2520 = vmatpush.bf16.msra.mxu0 %v1852
    %2521 = vmatmul.bf16.gmra.mxu0 %v715
    %v2522 = vpop.f32.mrf.mxu0
    %v2523 = vadd.f32 %v2510, %v2522
    %v2524 = vpop.f32.mrf.mxu0
    %2525 = vdwg.mxu0
    %2526 = vmatpush.bf16.msra.mxu0 %v1912
    %2527 = vmatpush.bf16.msra.mxu0 %v1908
    %2528 = vmatpush.bf16.msra.mxu0 %v1904
    %2529 = vmatpush.bf16.msra.mxu0 %v1900
    %2530 = vmatpush.bf16.msra.mxu0 %v1896
    %2531 = vmatpush.bf16.msra.mxu0 %v1892
    %2532 = vmatpush.bf16.msra.mxu0 %v1888
    %2533 = vmatpush.bf16.msra.mxu0 %v1884
    %2534 = vmatmul.bf16.gmra.mxu0 %v716
    %v2535 = vpop.f32.mrf.mxu0
    %v2536 = vadd.f32 %v2523, %v2535
    %v2537 = vpop.f32.mrf.mxu0
    %2538 = vdwg.mxu0
    %2539 = vmatpush.bf16.msra.mxu0 %v1944
    %2540 = vmatpush.bf16.msra.mxu0 %v1940
    %2541 = vmatpush.bf16.msra.mxu0 %v1936
    %2542 = vmatpush.bf16.msra.mxu0 %v1932
    %2543 = vmatpush.bf16.msra.mxu0 %v1928
    %2544 = vmatpush.bf16.msra.mxu0 %v1924
    %2545 = vmatpush.bf16.msra.mxu0 %v1920
    %2546 = vmatpush.bf16.msra.mxu0 %v1916
    %2547 = vmatmul.bf16.gmra.mxu0 %v717
    %v2548 = vpop.f32.mrf.mxu0
    %v2549 = vadd.f32 %v2536, %v2548
    %v2550 = vpop.f32.mrf.mxu0
    %2551 = vdwg.mxu0
    %2552 = vmatpush.bf16.msra.mxu0 %v1976
    %2553 = vmatpush.bf16.msra.mxu0 %v1972
    %2554 = vmatpush.bf16.msra.mxu0 %v1968
    %2555 = vmatpush.bf16.msra.mxu0 %v1964
    %2556 = vmatpush.bf16.msra.mxu0 %v1960
    %2557 = vmatpush.bf16.msra.mxu0 %v1956
    %2558 = vmatpush.bf16.msra.mxu0 %v1952
    %2559 = vmatpush.bf16.msra.mxu0 %v1948
    %2560 = vmatmul.bf16.gmra.mxu0 %v718
    %v2561 = vpop.f32.mrf.mxu0
    %v2562 = vadd.f32 %v2549, %v2561
    %v2563 = vpop.f32.mrf.mxu0
    %2564 = vdwg.mxu0
    %2565 = vmatpush.bf16.msra.mxu0 %v2008
    %2566 = vmatpush.bf16.msra.mxu0 %v2004
    %2567 = vmatpush.bf16.msra.mxu0 %v2000
    %2568 = vmatpush.bf16.msra.mxu0 %v1996
    %2569 = vmatpush.bf16.msra.mxu0 %v1992
    %2570 = vmatpush.bf16.msra.mxu0 %v1988
    %2571 = vmatpush.bf16.msra.mxu0 %v1984
    %2572 = vmatpush.bf16.msra.mxu0 %v1980
    %2573 = vmatmul.bf16.gmra.mxu0 %v719
    %v2574 = vpop.f32.mrf.mxu0
    %v2575 = vadd.f32 %v2562, %v2574
    %v2576 = vpop.f32.mrf.mxu0
    %2577 = vdwg.mxu0
    %2578 = vmatpush.bf16.msra.mxu0 %v1785
    %2579 = vmatpush.bf16.msra.mxu0 %v1781
    %2580 = vmatpush.bf16.msra.mxu0 %v1777
    %2581 = vmatpush.bf16.msra.mxu0 %v1773
    %2582 = vmatpush.bf16.msra.mxu0 %v1769
    %2583 = vmatpush.bf16.msra.mxu0 %v1765
    %2584 = vmatpush.bf16.msra.mxu0 %v1761
    %2585 = vmatpush.bf16.msra.mxu0 %v1757
    %2586 = vmatmul.bf16.gmra.mxu0 %v712
    %v2587 = vpop.f32.mrf.mxu0
    %v2588 = vadd.f32 %v981, %v2587
    %v2589 = vpop.f32.mrf.mxu0
    %2590 = vdwg.mxu0
    %2591 = vmatpush.bf16.msra.mxu0 %v1817
    %2592 = vmatpush.bf16.msra.mxu0 %v1813
    %2593 = vmatpush.bf16.msra.mxu0 %v1809
    %2594 = vmatpush.bf16.msra.mxu0 %v1805
    %2595 = vmatpush.bf16.msra.mxu0 %v1801
    %2596 = vmatpush.bf16.msra.mxu0 %v1797
    %2597 = vmatpush.bf16.msra.mxu0 %v1793
    %2598 = vmatpush.bf16.msra.mxu0 %v1789
    %2599 = vmatmul.bf16.gmra.mxu0 %v713
    %v2600 = vpop.f32.mrf.mxu0
    %v2601 = vadd.f32 %v2588, %v2600
    %v2602 = vpop.f32.mrf.mxu0
    %2603 = vdwg.mxu0
    %2604 = vmatpush.bf16.msra.mxu0 %v1849
    %2605 = vmatpush.bf16.msra.mxu0 %v1845
    %2606 = vmatpush.bf16.msra.mxu0 %v1841
    %2607 = vmatpush.bf16.msra.mxu0 %v1837
    %2608 = vmatpush.bf16.msra.mxu0 %v1833
    %2609 = vmatpush.bf16.msra.mxu0 %v1829
    %2610 = vmatpush.bf16.msra.mxu0 %v1825
    %2611 = vmatpush.bf16.msra.mxu0 %v1821
    %2612 = vmatmul.bf16.gmra.mxu0 %v714
    %v2613 = vpop.f32.mrf.mxu0
    %v2614 = vadd.f32 %v2601, %v2613
    %v2615 = vpop.f32.mrf.mxu0
    %2616 = vdwg.mxu0
    %2617 = vmatpush.bf16.msra.mxu0 %v1881
    %2618 = vmatpush.bf16.msra.mxu0 %v1877
    %2619 = vmatpush.bf16.msra.mxu0 %v1873
    %2620 = vmatpush.bf16.msra.mxu0 %v1869
    %2621 = vmatpush.bf16.msra.mxu0 %v1865
    %2622 = vmatpush.bf16.msra.mxu0 %v1861
    %2623 = vmatpush.bf16.msra.mxu0 %v1857
    %2624 = vmatpush.bf16.msra.mxu0 %v1853
    %2625 = vmatmul.bf16.gmra.mxu0 %v715
    %v2626 = vpop.f32.mrf.mxu0
    %v2627 = vadd.f32 %v2614, %v2626
    %v2628 = vpop.f32.mrf.mxu0
    %2629 = vdwg.mxu0
    %2630 = vmatpush.bf16.msra.mxu0 %v1913
    %2631 = vmatpush.bf16.msra.mxu0 %v1909
    %2632 = vmatpush.bf16.msra.mxu0 %v1905
    %2633 = vmatpush.bf16.msra.mxu0 %v1901
    %2634 = vmatpush.bf16.msra.mxu0 %v1897
    %2635 = vmatpush.bf16.msra.mxu0 %v1893
    %2636 = vmatpush.bf16.msra.mxu0 %v1889
    %2637 = vmatpush.bf16.msra.mxu0 %v1885
    %2638 = vmatmul.bf16.gmra.mxu0 %v716
    %v2639 = vpop.f32.mrf.mxu0
    %v2640 = vadd.f32 %v2627, %v2639
    %v2641 = vpop.f32.mrf.mxu0
    %2642 = vdwg.mxu0
    %2643 = vmatpush.bf16.msra.mxu0 %v1945
    %2644 = vmatpush.bf16.msra.mxu0 %v1941
    %2645 = vmatpush.bf16.msra.mxu0 %v1937
    %2646 = vmatpush.bf16.msra.mxu0 %v1933
    %2647 = vmatpush.bf16.msra.mxu0 %v1929
    %2648 = vmatpush.bf16.msra.mxu0 %v1925
    %2649 = vmatpush.bf16.msra.mxu0 %v1921
    %2650 = vmatpush.bf16.msra.mxu0 %v1917
    %2651 = vmatmul.bf16.gmra.mxu0 %v717
    %v2652 = vpop.f32.mrf.mxu0
    %v2653 = vadd.f32 %v2640, %v2652
    %v2654 = vpop.f32.mrf.mxu0
    %2655 = vdwg.mxu0
    %2656 = vmatpush.bf16.msra.mxu0 %v1977
    %2657 = vmatpush.bf16.msra.mxu0 %v1973
    %2658 = vmatpush.bf16.msra.mxu0 %v1969
    %2659 = vmatpush.bf16.msra.mxu0 %v1965
    %2660 = vmatpush.bf16.msra.mxu0 %v1961
    %2661 = vmatpush.bf16.msra.mxu0 %v1957
    %2662 = vmatpush.bf16.msra.mxu0 %v1953
    %2663 = vmatpush.bf16.msra.mxu0 %v1949
    %2664 = vmatmul.bf16.gmra.mxu0 %v718
    %v2665 = vpop.f32.mrf.mxu0
    %v2666 = vadd.f32 %v2653, %v2665
    %v2667 = vpop.f32.mrf.mxu0
    %2668 = vdwg.mxu0
    %2669 = vmatpush.bf16.msra.mxu0 %v2009
    %2670 = vmatpush.bf16.msra.mxu0 %v2005
    %2671 = vmatpush.bf16.msra.mxu0 %v2001
    %2672 = vmatpush.bf16.msra.mxu0 %v1997
    %2673 = vmatpush.bf16.msra.mxu0 %v1993
    %2674 = vmatpush.bf16.msra.mxu0 %v1989
    %2675 = vmatpush.bf16.msra.mxu0 %v1985
    %2676 = vmatpush.bf16.msra.mxu0 %v1981
    %2677 = vmatmul.bf16.gmra.mxu0 %v719
    %v2678 = vpop.f32.mrf.mxu0
    %v2679 = vadd.f32 %v2666, %v2678
    %v2680 = vpop.f32.mrf.mxu0
    %2681 = vdwg.mxu0
    %v2682 = vpack.c.bf16 %v2367, %v2367
    %v2683 = vpack.c.bf16 %v2471, %v2471
    %v2684 = vpack.c.bf16 %v2575, %v2575
    %v2685 = vpack.c.bf16 %v2679, %v2679
    %v2686 = vld [vmem:[#allocation4] sm:$0xff]
    %v2687 = vld [vmem:[#allocation4 + $0x8] sm:$0xff]
    %v2688 = vld [vmem:[#allocation4 + $0x10] sm:$0xff]
    %v2689 = vld [vmem:[#allocation4 + $0x18] sm:$0xff]
    %v2690 = vld [vmem:[#allocation4 + $0x20] sm:$0xff]
    %v2691 = vld [vmem:[#allocation4 + $0x28] sm:$0xff]
    %v2692 = vld [vmem:[#allocation4 + $0x30] sm:$0xff]
    %v2693 = vld [vmem:[#allocation4 + $0x38] sm:$0xff]
    %v2694 = vld [vmem:[#allocation4 + $0x40] sm:$0xff]
    %v2695 = vld [vmem:[#allocation4 + $0x48] sm:$0xff]
    %v2696 = vld [vmem:[#allocation4 + $0x50] sm:$0xff]
    %v2697 = vld [vmem:[#allocation4 + $0x58] sm:$0xff]
    %v2698 = vld [vmem:[#allocation4 + $0x60] sm:$0xff]
    %v2699 = vld [vmem:[#allocation4 + $0x68] sm:$0xff]
    %v2700 = vld [vmem:[#allocation4 + $0x70] sm:$0xff]
    %v2701 = vld [vmem:[#allocation4 + $0x78] sm:$0xff]
    %v2702 = vld [vmem:[#allocation4 + $0x80] sm:$0xff]
    %v2703 = vld [vmem:[#allocation4 + $0x88] sm:$0xff]
    %v2704 = vld [vmem:[#allocation4 + $0x90] sm:$0xff]
    %v2705 = vld [vmem:[#allocation4 + $0x98] sm:$0xff]
    %v2706 = vld [vmem:[#allocation4 + $0xa0] sm:$0xff]
    %v2707 = vld [vmem:[#allocation4 + $0xa8] sm:$0xff]
    %v2708 = vld [vmem:[#allocation4 + $0xb0] sm:$0xff]
    %v2709 = vld [vmem:[#allocation4 + $0xb8] sm:$0xff]
    %v2710 = vld [vmem:[#allocation4 + $0xc0] sm:$0xff]
    %v2711 = vld [vmem:[#allocation4 + $0xc8] sm:$0xff]
    %v2712 = vld [vmem:[#allocation4 + $0xd0] sm:$0xff]
    %v2713 = vld [vmem:[#allocation4 + $0xd8] sm:$0xff]
    %v2714 = vld [vmem:[#allocation4 + $0xe0] sm:$0xff]
    %v2715 = vld [vmem:[#allocation4 + $0xe8] sm:$0xff]
    %v2716 = vld [vmem:[#allocation4 + $0xf0] sm:$0xff]
    %v2717 = vld [vmem:[#allocation4 + $0xf8] sm:$0xff]
    %v2718 = vld [vmem:[#allocation4 + $0x100] sm:$0xff]
    %v2719 = vld [vmem:[#allocation4 + $0x108] sm:$0xff]
    %v2720 = vld [vmem:[#allocation4 + $0x110] sm:$0xff]
    %v2721 = vld [vmem:[#allocation4 + $0x118] sm:$0xff]
    %v2722 = vld [vmem:[#allocation4 + $0x120] sm:$0xff]
    %v2723 = vld [vmem:[#allocation4 + $0x128] sm:$0xff]
    %v2724 = vld [vmem:[#allocation4 + $0x130] sm:$0xff]
    %v2725 = vld [vmem:[#allocation4 + $0x138] sm:$0xff]
    %v2726 = vld [vmem:[#allocation4 + $0x140] sm:$0xff]
    %v2727 = vld [vmem:[#allocation4 + $0x148] sm:$0xff]
    %v2728 = vld [vmem:[#allocation4 + $0x150] sm:$0xff]
    %v2729 = vld [vmem:[#allocation4 + $0x158] sm:$0xff]
    %v2730 = vld [vmem:[#allocation4 + $0x160] sm:$0xff]
    %v2731 = vld [vmem:[#allocation4 + $0x168] sm:$0xff]
    %v2732 = vld [vmem:[#allocation4 + $0x170] sm:$0xff]
    %v2733 = vld [vmem:[#allocation4 + $0x178] sm:$0xff]
    %v2734 = vld [vmem:[#allocation4 + $0x180] sm:$0xff]
    %v2735 = vld [vmem:[#allocation4 + $0x188] sm:$0xff]
    %v2736 = vld [vmem:[#allocation4 + $0x190] sm:$0xff]
    %v2737 = vld [vmem:[#allocation4 + $0x198] sm:$0xff]
    %v2738 = vld [vmem:[#allocation4 + $0x1a0] sm:$0xff]
    %v2739 = vld [vmem:[#allocation4 + $0x1a8] sm:$0xff]
    %v2740 = vld [vmem:[#allocation4 + $0x1b0] sm:$0xff]
    %v2741 = vld [vmem:[#allocation4 + $0x1b8] sm:$0xff]
    %v2742 = vld [vmem:[#allocation4 + $0x1c0] sm:$0xff]
    %v2743 = vld [vmem:[#allocation4 + $0x1c8] sm:$0xff]
    %v2744 = vld [vmem:[#allocation4 + $0x1d0] sm:$0xff]
    %v2745 = vld [vmem:[#allocation4 + $0x1d8] sm:$0xff]
    %v2746 = vld [vmem:[#allocation4 + $0x1e0] sm:$0xff]
    %v2747 = vld [vmem:[#allocation4 + $0x1e8] sm:$0xff]
    %v2748 = vld [vmem:[#allocation4 + $0x1f0] sm:$0xff]
    %v2749 = vld [vmem:[#allocation4 + $0x1f8] sm:$0xff]
    %v2750 = vld [vmem:[#allocation4 + $0x200] sm:$0xff]
    %v2751 = vld [vmem:[#allocation4 + $0x208] sm:$0xff]
    %v2752 = vld [vmem:[#allocation4 + $0x210] sm:$0xff]
    %v2753 = vld [vmem:[#allocation4 + $0x218] sm:$0xff]
    %v2754 = vld [vmem:[#allocation4 + $0x220] sm:$0xff]
    %v2755 = vld [vmem:[#allocation4 + $0x228] sm:$0xff]
    %v2756 = vld [vmem:[#allocation4 + $0x230] sm:$0xff]
    %v2757 = vld [vmem:[#allocation4 + $0x238] sm:$0xff]
    %v2758 = vld [vmem:[#allocation4 + $0x240] sm:$0xff]
    %v2759 = vld [vmem:[#allocation4 + $0x248] sm:$0xff]
    %v2760 = vld [vmem:[#allocation4 + $0x250] sm:$0xff]
    %v2761 = vld [vmem:[#allocation4 + $0x258] sm:$0xff]
    %v2762 = vld [vmem:[#allocation4 + $0x260] sm:$0xff]
    %v2763 = vld [vmem:[#allocation4 + $0x268] sm:$0xff]
    %v2764 = vld [vmem:[#allocation4 + $0x270] sm:$0xff]
    %v2765 = vld [vmem:[#allocation4 + $0x278] sm:$0xff]
    %v2766 = vld [vmem:[#allocation4 + $0x280] sm:$0xff]
    %v2767 = vld [vmem:[#allocation4 + $0x288] sm:$0xff]
    %v2768 = vld [vmem:[#allocation4 + $0x290] sm:$0xff]
    %v2769 = vld [vmem:[#allocation4 + $0x298] sm:$0xff]
    %v2770 = vld [vmem:[#allocation4 + $0x2a0] sm:$0xff]
    %v2771 = vld [vmem:[#allocation4 + $0x2a8] sm:$0xff]
    %v2772 = vld [vmem:[#allocation4 + $0x2b0] sm:$0xff]
    %v2773 = vld [vmem:[#allocation4 + $0x2b8] sm:$0xff]
    %v2774 = vld [vmem:[#allocation4 + $0x2c0] sm:$0xff]
    %v2775 = vld [vmem:[#allocation4 + $0x2c8] sm:$0xff]
    %v2776 = vld [vmem:[#allocation4 + $0x2d0] sm:$0xff]
    %v2777 = vld [vmem:[#allocation4 + $0x2d8] sm:$0xff]
    %v2778 = vld [vmem:[#allocation4 + $0x2e0] sm:$0xff]
    %v2779 = vld [vmem:[#allocation4 + $0x2e8] sm:$0xff]
    %v2780 = vld [vmem:[#allocation4 + $0x2f0] sm:$0xff]
    %v2781 = vld [vmem:[#allocation4 + $0x2f8] sm:$0xff]
    %v2782 = vld [vmem:[#allocation4 + $0x300] sm:$0xff]
    %v2783 = vld [vmem:[#allocation4 + $0x308] sm:$0xff]
    %v2784 = vld [vmem:[#allocation4 + $0x310] sm:$0xff]
    %v2785 = vld [vmem:[#allocation4 + $0x318] sm:$0xff]
    %v2786 = vld [vmem:[#allocation4 + $0x320] sm:$0xff]
    %v2787 = vld [vmem:[#allocation4 + $0x328] sm:$0xff]
    %v2788 = vld [vmem:[#allocation4 + $0x330] sm:$0xff]
    %v2789 = vld [vmem:[#allocation4 + $0x338] sm:$0xff]
    %v2790 = vld [vmem:[#allocation4 + $0x340] sm:$0xff]
    %v2791 = vld [vmem:[#allocation4 + $0x348] sm:$0xff]
    %v2792 = vld [vmem:[#allocation4 + $0x350] sm:$0xff]
    %v2793 = vld [vmem:[#allocation4 + $0x358] sm:$0xff]
    %v2794 = vld [vmem:[#allocation4 + $0x360] sm:$0xff]
    %v2795 = vld [vmem:[#allocation4 + $0x368] sm:$0xff]
    %v2796 = vld [vmem:[#allocation4 + $0x370] sm:$0xff]
    %v2797 = vld [vmem:[#allocation4 + $0x378] sm:$0xff]
    %v2798 = vld [vmem:[#allocation4 + $0x380] sm:$0xff]
    %v2799 = vld [vmem:[#allocation4 + $0x388] sm:$0xff]
    %v2800 = vld [vmem:[#allocation4 + $0x390] sm:$0xff]
    %v2801 = vld [vmem:[#allocation4 + $0x398] sm:$0xff]
    %v2802 = vld [vmem:[#allocation4 + $0x3a0] sm:$0xff]
    %v2803 = vld [vmem:[#allocation4 + $0x3a8] sm:$0xff]
    %v2804 = vld [vmem:[#allocation4 + $0x3b0] sm:$0xff]
    %v2805 = vld [vmem:[#allocation4 + $0x3b8] sm:$0xff]
    %v2806 = vld [vmem:[#allocation4 + $0x3c0] sm:$0xff]
    %v2807 = vld [vmem:[#allocation4 + $0x3c8] sm:$0xff]
    %v2808 = vld [vmem:[#allocation4 + $0x3d0] sm:$0xff]
    %v2809 = vld [vmem:[#allocation4 + $0x3d8] sm:$0xff]
    %v2810 = vld [vmem:[#allocation4 + $0x3e0] sm:$0xff]
    %v2811 = vld [vmem:[#allocation4 + $0x3e8] sm:$0xff]
    %v2812 = vld [vmem:[#allocation4 + $0x3f0] sm:$0xff]
    %v2813 = vld [vmem:[#allocation4 + $0x3f8] sm:$0xff]
    %v2814 = vld [vmem:[%s61] sm:$0xf]
    %v2816 = vperm.slane %v2814, 0
    %v2817 = vperm.slane %v2814, 1
    %v2818 = vperm.slane %v2814, 2
    %v2819 = vperm.slane %v2814, 3
    %v2952 = vunpack.c.l.b16 %v2686
    %v2953 = vunpack.c.h.b16 %v2686
    %v2954 = vunpack.c.l.b16 %v2687
    %v2955 = vunpack.c.h.b16 %v2687
    %v2956 = vunpack.c.l.b16 %v2688
    %v2957 = vunpack.c.h.b16 %v2688
    %v2958 = vunpack.c.l.b16 %v2689
    %v2959 = vunpack.c.h.b16 %v2689
    %v2960 = vunpack.c.l.b16 %v2690
    %v2961 = vunpack.c.h.b16 %v2690
    %v2962 = vunpack.c.l.b16 %v2691
    %v2963 = vunpack.c.h.b16 %v2691
    %v2964 = vunpack.c.l.b16 %v2692
    %v2965 = vunpack.c.h.b16 %v2692
    %v2966 = vunpack.c.l.b16 %v2693
    %v2967 = vunpack.c.h.b16 %v2693
    %v2968 = vunpack.c.l.b16 %v2694
    %v2969 = vunpack.c.h.b16 %v2694
    %v2970 = vunpack.c.l.b16 %v2695
    %v2971 = vunpack.c.h.b16 %v2695
    %v2972 = vunpack.c.l.b16 %v2696
    %v2973 = vunpack.c.h.b16 %v2696
    %v2974 = vunpack.c.l.b16 %v2697
    %v2975 = vunpack.c.h.b16 %v2697
    %v2976 = vunpack.c.l.b16 %v2698
    %v2977 = vunpack.c.h.b16 %v2698
    %v2978 = vunpack.c.l.b16 %v2699
    %v2979 = vunpack.c.h.b16 %v2699
    %v2980 = vunpack.c.l.b16 %v2700
    %v2981 = vunpack.c.h.b16 %v2700
    %v2982 = vunpack.c.l.b16 %v2701
    %v2983 = vunpack.c.h.b16 %v2701
    %v2984 = vunpack.c.l.b16 %v2702
    %v2985 = vunpack.c.h.b16 %v2702
    %v2986 = vunpack.c.l.b16 %v2703
    %v2987 = vunpack.c.h.b16 %v2703
    %v2988 = vunpack.c.l.b16 %v2704
    %v2989 = vunpack.c.h.b16 %v2704
    %v2990 = vunpack.c.l.b16 %v2705
    %v2991 = vunpack.c.h.b16 %v2705
    %v2992 = vunpack.c.l.b16 %v2706
    %v2993 = vunpack.c.h.b16 %v2706
    %v2994 = vunpack.c.l.b16 %v2707
    %v2995 = vunpack.c.h.b16 %v2707
    %v2996 = vunpack.c.l.b16 %v2708
    %v2997 = vunpack.c.h.b16 %v2708
    %v2998 = vunpack.c.l.b16 %v2709
    %v2999 = vunpack.c.h.b16 %v2709
    %v3000 = vunpack.c.l.b16 %v2710
    %v3001 = vunpack.c.h.b16 %v2710
    %v3002 = vunpack.c.l.b16 %v2711
    %v3003 = vunpack.c.h.b16 %v2711
    %v3004 = vunpack.c.l.b16 %v2712
    %v3005 = vunpack.c.h.b16 %v2712
    %v3006 = vunpack.c.l.b16 %v2713
    %v3007 = vunpack.c.h.b16 %v2713
    %v3008 = vunpack.c.l.b16 %v2714
    %v3009 = vunpack.c.h.b16 %v2714
    %v3010 = vunpack.c.l.b16 %v2715
    %v3011 = vunpack.c.h.b16 %v2715
    %v3012 = vunpack.c.l.b16 %v2716
    %v3013 = vunpack.c.h.b16 %v2716
    %v3014 = vunpack.c.l.b16 %v2717
    %v3015 = vunpack.c.h.b16 %v2717
    %v3016 = vunpack.c.l.b16 %v2718
    %v3017 = vunpack.c.h.b16 %v2718
    %v3018 = vunpack.c.l.b16 %v2719
    %v3019 = vunpack.c.h.b16 %v2719
    %v3020 = vunpack.c.l.b16 %v2720
    %v3021 = vunpack.c.h.b16 %v2720
    %v3022 = vunpack.c.l.b16 %v2721
    %v3023 = vunpack.c.h.b16 %v2721
    %v3024 = vunpack.c.l.b16 %v2722
    %v3025 = vunpack.c.h.b16 %v2722
    %v3026 = vunpack.c.l.b16 %v2723
    %v3027 = vunpack.c.h.b16 %v2723
    %v3028 = vunpack.c.l.b16 %v2724
    %v3029 = vunpack.c.h.b16 %v2724
    %v3030 = vunpack.c.l.b16 %v2725
    %v3031 = vunpack.c.h.b16 %v2725
    %v3032 = vunpack.c.l.b16 %v2726
    %v3033 = vunpack.c.h.b16 %v2726
    %v3034 = vunpack.c.l.b16 %v2727
    %v3035 = vunpack.c.h.b16 %v2727
    %v3036 = vunpack.c.l.b16 %v2728
    %v3037 = vunpack.c.h.b16 %v2728
    %v3038 = vunpack.c.l.b16 %v2729
    %v3039 = vunpack.c.h.b16 %v2729
    %v3040 = vunpack.c.l.b16 %v2730
    %v3041 = vunpack.c.h.b16 %v2730
    %v3042 = vunpack.c.l.b16 %v2731
    %v3043 = vunpack.c.h.b16 %v2731
    %v3044 = vunpack.c.l.b16 %v2732
    %v3045 = vunpack.c.h.b16 %v2732
    %v3046 = vunpack.c.l.b16 %v2733
    %v3047 = vunpack.c.h.b16 %v2733
    %v3048 = vunpack.c.l.b16 %v2734
    %v3049 = vunpack.c.h.b16 %v2734
    %v3050 = vunpack.c.l.b16 %v2735
    %v3051 = vunpack.c.h.b16 %v2735
    %v3052 = vunpack.c.l.b16 %v2736
    %v3053 = vunpack.c.h.b16 %v2736
    %v3054 = vunpack.c.l.b16 %v2737
    %v3055 = vunpack.c.h.b16 %v2737
    %v3056 = vunpack.c.l.b16 %v2738
    %v3057 = vunpack.c.h.b16 %v2738
    %v3058 = vunpack.c.l.b16 %v2739
    %v3059 = vunpack.c.h.b16 %v2739
    %v3060 = vunpack.c.l.b16 %v2740
    %v3061 = vunpack.c.h.b16 %v2740
    %v3062 = vunpack.c.l.b16 %v2741
    %v3063 = vunpack.c.h.b16 %v2741
    %v3064 = vunpack.c.l.b16 %v2742
    %v3065 = vunpack.c.h.b16 %v2742
    %v3066 = vunpack.c.l.b16 %v2743
    %v3067 = vunpack.c.h.b16 %v2743
    %v3068 = vunpack.c.l.b16 %v2744
    %v3069 = vunpack.c.h.b16 %v2744
    %v3070 = vunpack.c.l.b16 %v2745
    %v3071 = vunpack.c.h.b16 %v2745
    %v3072 = vunpack.c.l.b16 %v2746
    %v3073 = vunpack.c.h.b16 %v2746
    %v3074 = vunpack.c.l.b16 %v2747
    %v3075 = vunpack.c.h.b16 %v2747
    %v3076 = vunpack.c.l.b16 %v2748
    %v3077 = vunpack.c.h.b16 %v2748
    %v3078 = vunpack.c.l.b16 %v2749
    %v3079 = vunpack.c.h.b16 %v2749
    %v3080 = vunpack.c.l.b16 %v2750
    %v3081 = vunpack.c.h.b16 %v2750
    %v3082 = vunpack.c.l.b16 %v2751
    %v3083 = vunpack.c.h.b16 %v2751
    %v3084 = vunpack.c.l.b16 %v2752
    %v3085 = vunpack.c.h.b16 %v2752
    %v3086 = vunpack.c.l.b16 %v2753
    %v3087 = vunpack.c.h.b16 %v2753
    %v3088 = vunpack.c.l.b16 %v2754
    %v3089 = vunpack.c.h.b16 %v2754
    %v3090 = vunpack.c.l.b16 %v2755
    %v3091 = vunpack.c.h.b16 %v2755
    %v3092 = vunpack.c.l.b16 %v2756
    %v3093 = vunpack.c.h.b16 %v2756
    %v3094 = vunpack.c.l.b16 %v2757
    %v3095 = vunpack.c.h.b16 %v2757
    %v3096 = vunpack.c.l.b16 %v2758
    %v3097 = vunpack.c.h.b16 %v2758
    %v3098 = vunpack.c.l.b16 %v2759
    %v3099 = vunpack.c.h.b16 %v2759
    %v3100 = vunpack.c.l.b16 %v2760
    %v3101 = vunpack.c.h.b16 %v2760
    %v3102 = vunpack.c.l.b16 %v2761
    %v3103 = vunpack.c.h.b16 %v2761
    %v3104 = vunpack.c.l.b16 %v2762
    %v3105 = vunpack.c.h.b16 %v2762
    %v3106 = vunpack.c.l.b16 %v2763
    %v3107 = vunpack.c.h.b16 %v2763
    %v3108 = vunpack.c.l.b16 %v2764
    %v3109 = vunpack.c.h.b16 %v2764
    %v3110 = vunpack.c.l.b16 %v2765
    %v3111 = vunpack.c.h.b16 %v2765
    %v3112 = vunpack.c.l.b16 %v2766
    %v3113 = vunpack.c.h.b16 %v2766
    %v3114 = vunpack.c.l.b16 %v2767
    %v3115 = vunpack.c.h.b16 %v2767
    %v3116 = vunpack.c.l.b16 %v2768
    %v3117 = vunpack.c.h.b16 %v2768
    %v3118 = vunpack.c.l.b16 %v2769
    %v3119 = vunpack.c.h.b16 %v2769
    %v3120 = vunpack.c.l.b16 %v2770
    %v3121 = vunpack.c.h.b16 %v2770
    %v3122 = vunpack.c.l.b16 %v2771
    %v3123 = vunpack.c.h.b16 %v2771
    %v3124 = vunpack.c.l.b16 %v2772
    %v3125 = vunpack.c.h.b16 %v2772
    %v3126 = vunpack.c.l.b16 %v2773
    %v3127 = vunpack.c.h.b16 %v2773
    %v3128 = vunpack.c.l.b16 %v2774
    %v3129 = vunpack.c.h.b16 %v2774
    %v3130 = vunpack.c.l.b16 %v2775
    %v3131 = vunpack.c.h.b16 %v2775
    %v3132 = vunpack.c.l.b16 %v2776
    %v3133 = vunpack.c.h.b16 %v2776
    %v3134 = vunpack.c.l.b16 %v2777
    %v3135 = vunpack.c.h.b16 %v2777
    %v3136 = vunpack.c.l.b16 %v2778
    %v3137 = vunpack.c.h.b16 %v2778
    %v3138 = vunpack.c.l.b16 %v2779
    %v3139 = vunpack.c.h.b16 %v2779
    %v3140 = vunpack.c.l.b16 %v2780
    %v3141 = vunpack.c.h.b16 %v2780
    %v3142 = vunpack.c.l.b16 %v2781
    %v3143 = vunpack.c.h.b16 %v2781
    %v3144 = vunpack.c.l.b16 %v2782
    %v3145 = vunpack.c.h.b16 %v2782
    %v3146 = vunpack.c.l.b16 %v2783
    %v3147 = vunpack.c.h.b16 %v2783
    %v3148 = vunpack.c.l.b16 %v2784
    %v3149 = vunpack.c.h.b16 %v2784
    %v3150 = vunpack.c.l.b16 %v2785
    %v3151 = vunpack.c.h.b16 %v2785
    %v3152 = vunpack.c.l.b16 %v2786
    %v3153 = vunpack.c.h.b16 %v2786
    %v3154 = vunpack.c.l.b16 %v2787
    %v3155 = vunpack.c.h.b16 %v2787
    %v3156 = vunpack.c.l.b16 %v2788
    %v3157 = vunpack.c.h.b16 %v2788
    %v3158 = vunpack.c.l.b16 %v2789
    %v3159 = vunpack.c.h.b16 %v2789
    %v3160 = vunpack.c.l.b16 %v2790
    %v3161 = vunpack.c.h.b16 %v2790
    %v3162 = vunpack.c.l.b16 %v2791
    %v3163 = vunpack.c.h.b16 %v2791
    %v3164 = vunpack.c.l.b16 %v2792
    %v3165 = vunpack.c.h.b16 %v2792
    %v3166 = vunpack.c.l.b16 %v2793
    %v3167 = vunpack.c.h.b16 %v2793
    %v3168 = vunpack.c.l.b16 %v2794
    %v3169 = vunpack.c.h.b16 %v2794
    %v3170 = vunpack.c.l.b16 %v2795
    %v3171 = vunpack.c.h.b16 %v2795
    %v3172 = vunpack.c.l.b16 %v2796
    %v3173 = vunpack.c.h.b16 %v2796
    %v3174 = vunpack.c.l.b16 %v2797
    %v3175 = vunpack.c.h.b16 %v2797
    %v3176 = vunpack.c.l.b16 %v2798
    %v3177 = vunpack.c.h.b16 %v2798
    %v3178 = vunpack.c.l.b16 %v2799
    %v3179 = vunpack.c.h.b16 %v2799
    %v3180 = vunpack.c.l.b16 %v2800
    %v3181 = vunpack.c.h.b16 %v2800
    %v3182 = vunpack.c.l.b16 %v2801
    %v3183 = vunpack.c.h.b16 %v2801
    %v3184 = vunpack.c.l.b16 %v2802
    %v3185 = vunpack.c.h.b16 %v2802
    %v3186 = vunpack.c.l.b16 %v2803
    %v3187 = vunpack.c.h.b16 %v2803
    %v3188 = vunpack.c.l.b16 %v2804
    %v3189 = vunpack.c.h.b16 %v2804
    %v3190 = vunpack.c.l.b16 %v2805
    %v3191 = vunpack.c.h.b16 %v2805
    %v3192 = vunpack.c.l.b16 %v2806
    %v3193 = vunpack.c.h.b16 %v2806
    %v3194 = vunpack.c.l.b16 %v2807
    %v3195 = vunpack.c.h.b16 %v2807
    %v3196 = vunpack.c.l.b16 %v2808
    %v3197 = vunpack.c.h.b16 %v2808
    %v3198 = vunpack.c.l.b16 %v2809
    %v3199 = vunpack.c.h.b16 %v2809
    %v3200 = vunpack.c.l.b16 %v2810
    %v3201 = vunpack.c.h.b16 %v2810
    %v3202 = vunpack.c.l.b16 %v2811
    %v3203 = vunpack.c.h.b16 %v2811
    %v3204 = vunpack.c.l.b16 %v2812
    %v3205 = vunpack.c.h.b16 %v2812
    %v3206 = vunpack.c.l.b16 %v2813
    %v3207 = vunpack.c.h.b16 %v2813
    %v3208 = vpack.c.b16 %v2956, %v2952
    %v3209 = vpack.c.b16 %v2957, %v2953
    %v3210 = vpack.c.b16 %v2958, %v2954
    %v3211 = vpack.c.b16 %v2959, %v2955
    %v3212 = vpack.c.b16 %v2964, %v2960
    %v3213 = vpack.c.b16 %v2965, %v2961
    %v3214 = vpack.c.b16 %v2966, %v2962
    %v3215 = vpack.c.b16 %v2967, %v2963
    %v3216 = vpack.c.b16 %v2972, %v2968
    %v3217 = vpack.c.b16 %v2973, %v2969
    %v3218 = vpack.c.b16 %v2974, %v2970
    %v3219 = vpack.c.b16 %v2975, %v2971
    %v3220 = vpack.c.b16 %v2980, %v2976
    %v3221 = vpack.c.b16 %v2981, %v2977
    %v3222 = vpack.c.b16 %v2982, %v2978
    %v3223 = vpack.c.b16 %v2983, %v2979
    %v3224 = vpack.c.b16 %v2988, %v2984
    %v3225 = vpack.c.b16 %v2989, %v2985
    %v3226 = vpack.c.b16 %v2990, %v2986
    %v3227 = vpack.c.b16 %v2991, %v2987
    %v3228 = vpack.c.b16 %v2996, %v2992
    %v3229 = vpack.c.b16 %v2997, %v2993
    %v3230 = vpack.c.b16 %v2998, %v2994
    %v3231 = vpack.c.b16 %v2999, %v2995
    %v3232 = vpack.c.b16 %v3004, %v3000
    %v3233 = vpack.c.b16 %v3005, %v3001
    %v3234 = vpack.c.b16 %v3006, %v3002
    %v3235 = vpack.c.b16 %v3007, %v3003
    %v3236 = vpack.c.b16 %v3012, %v3008
    %v3237 = vpack.c.b16 %v3013, %v3009
    %v3238 = vpack.c.b16 %v3014, %v3010
    %v3239 = vpack.c.b16 %v3015, %v3011
    %v3240 = vpack.c.b16 %v3020, %v3016
    %v3241 = vpack.c.b16 %v3021, %v3017
    %v3242 = vpack.c.b16 %v3022, %v3018
    %v3243 = vpack.c.b16 %v3023, %v3019
    %v3244 = vpack.c.b16 %v3028, %v3024
    %v3245 = vpack.c.b16 %v3029, %v3025
    %v3246 = vpack.c.b16 %v3030, %v3026
    %v3247 = vpack.c.b16 %v3031, %v3027
    %v3248 = vpack.c.b16 %v3036, %v3032
    %v3249 = vpack.c.b16 %v3037, %v3033
    %v3250 = vpack.c.b16 %v3038, %v3034
    %v3251 = vpack.c.b16 %v3039, %v3035
    %v3252 = vpack.c.b16 %v3044, %v3040
    %v3253 = vpack.c.b16 %v3045, %v3041
    %v3254 = vpack.c.b16 %v3046, %v3042
    %v3255 = vpack.c.b16 %v3047, %v3043
    %v3256 = vpack.c.b16 %v3052, %v3048
    %v3257 = vpack.c.b16 %v3053, %v3049
    %v3258 = vpack.c.b16 %v3054, %v3050
    %v3259 = vpack.c.b16 %v3055, %v3051
    %v3260 = vpack.c.b16 %v3060, %v3056
    %v3261 = vpack.c.b16 %v3061, %v3057
    %v3262 = vpack.c.b16 %v3062, %v3058
    %v3263 = vpack.c.b16 %v3063, %v3059
    %v3264 = vpack.c.b16 %v3068, %v3064
    %v3265 = vpack.c.b16 %v3069, %v3065
    %v3266 = vpack.c.b16 %v3070, %v3066
    %v3267 = vpack.c.b16 %v3071, %v3067
    %v3268 = vpack.c.b16 %v3076, %v3072
    %v3269 = vpack.c.b16 %v3077, %v3073
    %v3270 = vpack.c.b16 %v3078, %v3074
    %v3271 = vpack.c.b16 %v3079, %v3075
    %v3272 = vpack.c.b16 %v3084, %v3080
    %v3273 = vpack.c.b16 %v3085, %v3081
    %v3274 = vpack.c.b16 %v3086, %v3082
    %v3275 = vpack.c.b16 %v3087, %v3083
    %v3276 = vpack.c.b16 %v3092, %v3088
    %v3277 = vpack.c.b16 %v3093, %v3089
    %v3278 = vpack.c.b16 %v3094, %v3090
    %v3279 = vpack.c.b16 %v3095, %v3091
    %v3280 = vpack.c.b16 %v3100, %v3096
    %v3281 = vpack.c.b16 %v3101, %v3097
    %v3282 = vpack.c.b16 %v3102, %v3098
    %v3283 = vpack.c.b16 %v3103, %v3099
    %v3284 = vpack.c.b16 %v3108, %v3104
    %v3285 = vpack.c.b16 %v3109, %v3105
    %v3286 = vpack.c.b16 %v3110, %v3106
    %v3287 = vpack.c.b16 %v3111, %v3107
    %v3288 = vpack.c.b16 %v3116, %v3112
    %v3289 = vpack.c.b16 %v3117, %v3113
    %v3290 = vpack.c.b16 %v3118, %v3114
    %v3291 = vpack.c.b16 %v3119, %v3115
    %v3292 = vpack.c.b16 %v3124, %v3120
    %v3293 = vpack.c.b16 %v3125, %v3121
    %v3294 = vpack.c.b16 %v3126, %v3122
    %v3295 = vpack.c.b16 %v3127, %v3123
    %v3296 = vpack.c.b16 %v3132, %v3128
    %v3297 = vpack.c.b16 %v3133, %v3129
    %v3298 = vpack.c.b16 %v3134, %v3130
    %v3299 = vpack.c.b16 %v3135, %v3131
    %v3300 = vpack.c.b16 %v3140, %v3136
    %v3301 = vpack.c.b16 %v3141, %v3137
    %v3302 = vpack.c.b16 %v3142, %v3138
    %v3303 = vpack.c.b16 %v3143, %v3139
    %v3304 = vpack.c.b16 %v3148, %v3144
    %v3305 = vpack.c.b16 %v3149, %v3145
    %v3306 = vpack.c.b16 %v3150, %v3146
    %v3307 = vpack.c.b16 %v3151, %v3147
    %v3308 = vpack.c.b16 %v3156, %v3152
    %v3309 = vpack.c.b16 %v3157, %v3153
    %v3310 = vpack.c.b16 %v3158, %v3154
    %v3311 = vpack.c.b16 %v3159, %v3155
    %v3312 = vpack.c.b16 %v3164, %v3160
    %v3313 = vpack.c.b16 %v3165, %v3161
    %v3314 = vpack.c.b16 %v3166, %v3162
    %v3315 = vpack.c.b16 %v3167, %v3163
    %v3316 = vpack.c.b16 %v3172, %v3168
    %v3317 = vpack.c.b16 %v3173, %v3169
    %v3318 = vpack.c.b16 %v3174, %v3170
    %v3319 = vpack.c.b16 %v3175, %v3171
    %v3320 = vpack.c.b16 %v3180, %v3176
    %v3321 = vpack.c.b16 %v3181, %v3177
    %v3322 = vpack.c.b16 %v3182, %v3178
    %v3323 = vpack.c.b16 %v3183, %v3179
    %v3324 = vpack.c.b16 %v3188, %v3184
    %v3325 = vpack.c.b16 %v3189, %v3185
    %v3326 = vpack.c.b16 %v3190, %v3186
    %v3327 = vpack.c.b16 %v3191, %v3187
    %v3328 = vpack.c.b16 %v3196, %v3192
    %v3329 = vpack.c.b16 %v3197, %v3193
    %v3330 = vpack.c.b16 %v3198, %v3194
    %v3331 = vpack.c.b16 %v3199, %v3195
    %v3332 = vpack.c.b16 %v3204, %v3200
    %v3333 = vpack.c.b16 %v3205, %v3201
    %v3334 = vpack.c.b16 %v3206, %v3202
    %v3335 = vpack.c.b16 %v3207, %v3203
    %3464 = vmatpush.bf16.msra.mxu0 %v3236
    %3465 = vmatpush.bf16.msra.mxu0 %v3232
    %3466 = vmatpush.bf16.msra.mxu0 %v3228
    %3467 = vmatpush.bf16.msra.mxu0 %v3224
    %3468 = vmatpush.bf16.msra.mxu0 %v3220
    %3469 = vmatpush.bf16.msra.mxu0 %v3216
    %3470 = vmatpush.bf16.msra.mxu0 %v3212
    %3471 = vmatpush.bf16.msra.mxu0 %v3208
    %3472 = vmatmul.bf16.gmra.mxu0 %v2682
    %v3473 = vpop.f32.mrf.mxu0
    %v3474 = vadd.f32 %v2816, %v3473
    %v3475 = vpop.f32.mrf.mxu0
    %3476 = vdwg.mxu0
    %3477 = vmatpush.bf16.msra.mxu0 %v3268
    %3478 = vmatpush.bf16.msra.mxu0 %v3264
    %3479 = vmatpush.bf16.msra.mxu0 %v3260
    %3480 = vmatpush.bf16.msra.mxu0 %v3256
    %3481 = vmatpush.bf16.msra.mxu0 %v3252
    %3482 = vmatpush.bf16.msra.mxu0 %v3248
    %3483 = vmatpush.bf16.msra.mxu0 %v3244
    %3484 = vmatpush.bf16.msra.mxu0 %v3240
    %3485 = vmatmul.bf16.gmra.mxu0 %v2683
    %v3486 = vpop.f32.mrf.mxu0
    %v3487 = vadd.f32 %v3474, %v3486
    %v3488 = vpop.f32.mrf.mxu0
    %3489 = vdwg.mxu0
    %3490 = vmatpush.bf16.msra.mxu0 %v3300
    %3491 = vmatpush.bf16.msra.mxu0 %v3296
    %3492 = vmatpush.bf16.msra.mxu0 %v3292
    %3493 = vmatpush.bf16.msra.mxu0 %v3288
    %3494 = vmatpush.bf16.msra.mxu0 %v3284
    %3495 = vmatpush.bf16.msra.mxu0 %v3280
    %3496 = vmatpush.bf16.msra.mxu0 %v3276
    %3497 = vmatpush.bf16.msra.mxu0 %v3272
    %3498 = vmatmul.bf16.gmra.mxu0 %v2684
    %v3499 = vpop.f32.mrf.mxu0
    %v3500 = vadd.f32 %v3487, %v3499
    %v3501 = vpop.f32.mrf.mxu0
    %3502 = vdwg.mxu0
    %3503 = vmatpush.bf16.msra.mxu0 %v3332
    %3504 = vmatpush.bf16.msra.mxu0 %v3328
    %3505 = vmatpush.bf16.msra.mxu0 %v3324
    %3506 = vmatpush.bf16.msra.mxu0 %v3320
    %3507 = vmatpush.bf16.msra.mxu0 %v3316
    %3508 = vmatpush.bf16.msra.mxu0 %v3312
    %3509 = vmatpush.bf16.msra.mxu0 %v3308
    %3510 = vmatpush.bf16.msra.mxu0 %v3304
    %3511 = vmatmul.bf16.gmra.mxu0 %v2685
    %v3512 = vpop.f32.mrf.mxu0
    %v3513 = vadd.f32 %v3500, %v3512
    %v3514 = vpop.f32.mrf.mxu0
    %3515 = vdwg.mxu0
    %3516 = vmatpush.bf16.msra.mxu0 %v3237
    %3517 = vmatpush.bf16.msra.mxu0 %v3233
    %3518 = vmatpush.bf16.msra.mxu0 %v3229
    %3519 = vmatpush.bf16.msra.mxu0 %v3225
    %3520 = vmatpush.bf16.msra.mxu0 %v3221
    %3521 = vmatpush.bf16.msra.mxu0 %v3217
    %3522 = vmatpush.bf16.msra.mxu0 %v3213
    %3523 = vmatpush.bf16.msra.mxu0 %v3209
    %3524 = vmatmul.bf16.gmra.mxu0 %v2682
    %v3525 = vpop.f32.mrf.mxu0
    %v3526 = vadd.f32 %v2817, %v3525
    %v3527 = vpop.f32.mrf.mxu0
    %3528 = vdwg.mxu0
    %3529 = vmatpush.bf16.msra.mxu0 %v3269
    %3530 = vmatpush.bf16.msra.mxu0 %v3265
    %3531 = vmatpush.bf16.msra.mxu0 %v3261
    %3532 = vmatpush.bf16.msra.mxu0 %v3257
    %3533 = vmatpush.bf16.msra.mxu0 %v3253
    %3534 = vmatpush.bf16.msra.mxu0 %v3249
    %3535 = vmatpush.bf16.msra.mxu0 %v3245
    %3536 = vmatpush.bf16.msra.mxu0 %v3241
    %3537 = vmatmul.bf16.gmra.mxu0 %v2683
    %v3538 = vpop.f32.mrf.mxu0
    %v3539 = vadd.f32 %v3526, %v3538
    %v3540 = vpop.f32.mrf.mxu0
    %3541 = vdwg.mxu0
    %3542 = vmatpush.bf16.msra.mxu0 %v3301
    %3543 = vmatpush.bf16.msra.mxu0 %v3297
    %3544 = vmatpush.bf16.msra.mxu0 %v3293
    %3545 = vmatpush.bf16.msra.mxu0 %v3289
    %3546 = vmatpush.bf16.msra.mxu0 %v3285
    %3547 = vmatpush.bf16.msra.mxu0 %v3281
    %3548 = vmatpush.bf16.msra.mxu0 %v3277
    %3549 = vmatpush.bf16.msra.mxu0 %v3273
    %3550 = vmatmul.bf16.gmra.mxu0 %v2684
    %v3551 = vpop.f32.mrf.mxu0
    %v3552 = vadd.f32 %v3539, %v3551
    %v3553 = vpop.f32.mrf.mxu0
    %3554 = vdwg.mxu0
    %3555 = vmatpush.bf16.msra.mxu0 %v3333
    %3556 = vmatpush.bf16.msra.mxu0 %v3329
    %3557 = vmatpush.bf16.msra.mxu0 %v3325
    %3558 = vmatpush.bf16.msra.mxu0 %v3321
    %3559 = vmatpush.bf16.msra.mxu0 %v3317
    %3560 = vmatpush.bf16.msra.mxu0 %v3313
    %3561 = vmatpush.bf16.msra.mxu0 %v3309
    %3562 = vmatpush.bf16.msra.mxu0 %v3305
    %3563 = vmatmul.bf16.gmra.mxu0 %v2685
    %v3564 = vpop.f32.mrf.mxu0
    %v3565 = vadd.f32 %v3552, %v3564
    %v3566 = vpop.f32.mrf.mxu0
    %3567 = vdwg.mxu0
    %3568 = vmatpush.bf16.msra.mxu0 %v3238
    %3569 = vmatpush.bf16.msra.mxu0 %v3234
    %3570 = vmatpush.bf16.msra.mxu0 %v3230
    %3571 = vmatpush.bf16.msra.mxu0 %v3226
    %3572 = vmatpush.bf16.msra.mxu0 %v3222
    %3573 = vmatpush.bf16.msra.mxu0 %v3218
    %3574 = vmatpush.bf16.msra.mxu0 %v3214
    %3575 = vmatpush.bf16.msra.mxu0 %v3210
    %3576 = vmatmul.bf16.gmra.mxu0 %v2682
    %v3577 = vpop.f32.mrf.mxu0
    %v3578 = vadd.f32 %v2818, %v3577
    %v3579 = vpop.f32.mrf.mxu0
    %3580 = vdwg.mxu0
    %3581 = vmatpush.bf16.msra.mxu0 %v3270
    %3582 = vmatpush.bf16.msra.mxu0 %v3266
    %3583 = vmatpush.bf16.msra.mxu0 %v3262
    %3584 = vmatpush.bf16.msra.mxu0 %v3258
    %3585 = vmatpush.bf16.msra.mxu0 %v3254
    %3586 = vmatpush.bf16.msra.mxu0 %v3250
    %3587 = vmatpush.bf16.msra.mxu0 %v3246
    %3588 = vmatpush.bf16.msra.mxu0 %v3242
    %3589 = vmatmul.bf16.gmra.mxu0 %v2683
    %v3590 = vpop.f32.mrf.mxu0
    %v3591 = vadd.f32 %v3578, %v3590
    %v3592 = vpop.f32.mrf.mxu0
    %3593 = vdwg.mxu0
    %3594 = vmatpush.bf16.msra.mxu0 %v3302
    %3595 = vmatpush.bf16.msra.mxu0 %v3298
    %3596 = vmatpush.bf16.msra.mxu0 %v3294
    %3597 = vmatpush.bf16.msra.mxu0 %v3290
    %3598 = vmatpush.bf16.msra.mxu0 %v3286
    %3599 = vmatpush.bf16.msra.mxu0 %v3282
    %3600 = vmatpush.bf16.msra.mxu0 %v3278
    %3601 = vmatpush.bf16.msra.mxu0 %v3274
    %3602 = vmatmul.bf16.gmra.mxu0 %v2684
    %v3603 = vpop.f32.mrf.mxu0
    %v3604 = vadd.f32 %v3591, %v3603
    %v3605 = vpop.f32.mrf.mxu0
    %3606 = vdwg.mxu0
    %3607 = vmatpush.bf16.msra.mxu0 %v3334
    %3608 = vmatpush.bf16.msra.mxu0 %v3330
    %3609 = vmatpush.bf16.msra.mxu0 %v3326
    %3610 = vmatpush.bf16.msra.mxu0 %v3322
    %3611 = vmatpush.bf16.msra.mxu0 %v3318
    %3612 = vmatpush.bf16.msra.mxu0 %v3314
    %3613 = vmatpush.bf16.msra.mxu0 %v3310
    %3614 = vmatpush.bf16.msra.mxu0 %v3306
    %3615 = vmatmul.bf16.gmra.mxu0 %v2685
    %v3616 = vpop.f32.mrf.mxu0
    %v3617 = vadd.f32 %v3604, %v3616
    %v3618 = vpop.f32.mrf.mxu0
    %3619 = vdwg.mxu0
    %3620 = vmatpush.bf16.msra.mxu0 %v3239
    %3621 = vmatpush.bf16.msra.mxu0 %v3235
    %3622 = vmatpush.bf16.msra.mxu0 %v3231
    %3623 = vmatpush.bf16.msra.mxu0 %v3227
    %3624 = vmatpush.bf16.msra.mxu0 %v3223
    %3625 = vmatpush.bf16.msra.mxu0 %v3219
    %3626 = vmatpush.bf16.msra.mxu0 %v3215
    %3627 = vmatpush.bf16.msra.mxu0 %v3211
    %3628 = vmatmul.bf16.gmra.mxu0 %v2682
    %v3629 = vpop.f32.mrf.mxu0
    %v3630 = vadd.f32 %v2819, %v3629
    %v3631 = vpop.f32.mrf.mxu0
    %3632 = vdwg.mxu0
    %3633 = vmatpush.bf16.msra.mxu0 %v3271
    %3634 = vmatpush.bf16.msra.mxu0 %v3267
    %3635 = vmatpush.bf16.msra.mxu0 %v3263
    %3636 = vmatpush.bf16.msra.mxu0 %v3259
    %3637 = vmatpush.bf16.msra.mxu0 %v3255
    %3638 = vmatpush.bf16.msra.mxu0 %v3251
    %3639 = vmatpush.bf16.msra.mxu0 %v3247
    %3640 = vmatpush.bf16.msra.mxu0 %v3243
    %3641 = vmatmul.bf16.gmra.mxu0 %v2683
    %v3642 = vpop.f32.mrf.mxu0
    %v3643 = vadd.f32 %v3630, %v3642
    %v3644 = vpop.f32.mrf.mxu0
    %3645 = vdwg.mxu0
    %3646 = vmatpush.bf16.msra.mxu0 %v3303
    %3647 = vmatpush.bf16.msra.mxu0 %v3299
    %3648 = vmatpush.bf16.msra.mxu0 %v3295
    %3649 = vmatpush.bf16.msra.mxu0 %v3291
    %3650 = vmatpush.bf16.msra.mxu0 %v3287
    %3651 = vmatpush.bf16.msra.mxu0 %v3283
    %3652 = vmatpush.bf16.msra.mxu0 %v3279
    %3653 = vmatpush.bf16.msra.mxu0 %v3275
    %3654 = vmatmul.bf16.gmra.mxu0 %v2684
    %v3655 = vpop.f32.mrf.mxu0
    %v3656 = vadd.f32 %v3643, %v3655
    %v3657 = vpop.f32.mrf.mxu0
    %3658 = vdwg.mxu0
    %3659 = vmatpush.bf16.msra.mxu0 %v3335
    %3660 = vmatpush.bf16.msra.mxu0 %v3331
    %3661 = vmatpush.bf16.msra.mxu0 %v3327
    %3662 = vmatpush.bf16.msra.mxu0 %v3323
    %3663 = vmatpush.bf16.msra.mxu0 %v3319
    %3664 = vmatpush.bf16.msra.mxu0 %v3315
    %3665 = vmatpush.bf16.msra.mxu0 %v3311
    %3666 = vmatpush.bf16.msra.mxu0 %v3307
    %3667 = vmatmul.bf16.gmra.mxu0 %v2685
    %v3668 = vpop.f32.mrf.mxu0
    %v3669 = vadd.f32 %v3656, %v3668
    %v3670 = vpop.f32.mrf.mxu0
    %3671 = vdwg.mxu0
    %v3672 = vmax.f32 %v3513, 0.0
    %v3673 = vmax.f32 %v3565, 0.0
    %v3674 = vmax.f32 %v3617, 0.0
    %v3675 = vmax.f32 %v3669, 0.0
    %v3676 = vpack.c.bf16 %v3672, %v3672
    %v3677 = vpack.c.bf16 %v3673, %v3673
    %v3678 = vpack.c.bf16 %v3674, %v3674
    %v3679 = vpack.c.bf16 %v3675, %v3675
    %v3680 = vld [vmem:[#allocation6] sm:$0xff]
    %v3681 = vld [vmem:[#allocation6 + $0x8] sm:$0xff]
    %v3682 = vld [vmem:[#allocation6 + $0x10] sm:$0xff]
    %v3683 = vld [vmem:[#allocation6 + $0x18] sm:$0xff]
    %v3684 = vld [vmem:[#allocation6 + $0x20] sm:$0xff]
    %v3685 = vld [vmem:[#allocation6 + $0x28] sm:$0xff]
    %v3686 = vld [vmem:[#allocation6 + $0x30] sm:$0xff]
    %v3687 = vld [vmem:[#allocation6 + $0x38] sm:$0xff]
    %v3688 = vld [vmem:[#allocation6 + $0x40] sm:$0xff]
    %v3689 = vld [vmem:[#allocation6 + $0x48] sm:$0xff]
    %v3690 = vld [vmem:[#allocation6 + $0x50] sm:$0xff]
    %v3691 = vld [vmem:[#allocation6 + $0x58] sm:$0xff]
    %v3692 = vld [vmem:[#allocation6 + $0x60] sm:$0xff]
    %v3693 = vld [vmem:[#allocation6 + $0x68] sm:$0xff]
    %v3694 = vld [vmem:[#allocation6 + $0x70] sm:$0xff]
    %v3695 = vld [vmem:[#allocation6 + $0x78] sm:$0xff]
    %v3696 = vld [vmem:[#allocation6 + $0x80] sm:$0xff]
    %v3697 = vld [vmem:[#allocation6 + $0x88] sm:$0xff]
    %v3698 = vld [vmem:[#allocation6 + $0x90] sm:$0xff]
    %v3699 = vld [vmem:[#allocation6 + $0x98] sm:$0xff]
    %v3700 = vld [vmem:[#allocation6 + $0xa0] sm:$0xff]
    %v3701 = vld [vmem:[#allocation6 + $0xa8] sm:$0xff]
    %v3702 = vld [vmem:[#allocation6 + $0xb0] sm:$0xff]
    %v3703 = vld [vmem:[#allocation6 + $0xb8] sm:$0xff]
    %v3704 = vld [vmem:[#allocation6 + $0xc0] sm:$0xff]
    %v3705 = vld [vmem:[#allocation6 + $0xc8] sm:$0xff]
    %v3706 = vld [vmem:[#allocation6 + $0xd0] sm:$0xff]
    %v3707 = vld [vmem:[#allocation6 + $0xd8] sm:$0xff]
    %v3708 = vld [vmem:[#allocation6 + $0xe0] sm:$0xff]
    %v3709 = vld [vmem:[#allocation6 + $0xe8] sm:$0xff]
    %v3710 = vld [vmem:[#allocation6 + $0xf0] sm:$0xff]
    %v3711 = vld [vmem:[#allocation6 + $0xf8] sm:$0xff]
    %v3712 = vld [vmem:[#allocation6 + $0x100] sm:$0xff]
    %v3713 = vld [vmem:[#allocation6 + $0x108] sm:$0xff]
    %v3714 = vld [vmem:[#allocation6 + $0x110] sm:$0xff]
    %v3715 = vld [vmem:[#allocation6 + $0x118] sm:$0xff]
    %v3716 = vld [vmem:[#allocation6 + $0x120] sm:$0xff]
    %v3717 = vld [vmem:[#allocation6 + $0x128] sm:$0xff]
    %v3718 = vld [vmem:[#allocation6 + $0x130] sm:$0xff]
    %v3719 = vld [vmem:[#allocation6 + $0x138] sm:$0xff]
    %v3720 = vld [vmem:[#allocation6 + $0x140] sm:$0xff]
    %v3721 = vld [vmem:[#allocation6 + $0x148] sm:$0xff]
    %v3722 = vld [vmem:[#allocation6 + $0x150] sm:$0xff]
    %v3723 = vld [vmem:[#allocation6 + $0x158] sm:$0xff]
    %v3724 = vld [vmem:[#allocation6 + $0x160] sm:$0xff]
    %v3725 = vld [vmem:[#allocation6 + $0x168] sm:$0xff]
    %v3726 = vld [vmem:[#allocation6 + $0x170] sm:$0xff]
    %v3727 = vld [vmem:[#allocation6 + $0x178] sm:$0xff]
    %v3728 = vld [vmem:[#allocation6 + $0x180] sm:$0xff]
    %v3729 = vld [vmem:[#allocation6 + $0x188] sm:$0xff]
    %v3730 = vld [vmem:[#allocation6 + $0x190] sm:$0xff]
    %v3731 = vld [vmem:[#allocation6 + $0x198] sm:$0xff]
    %v3732 = vld [vmem:[#allocation6 + $0x1a0] sm:$0xff]
    %v3733 = vld [vmem:[#allocation6 + $0x1a8] sm:$0xff]
    %v3734 = vld [vmem:[#allocation6 + $0x1b0] sm:$0xff]
    %v3735 = vld [vmem:[#allocation6 + $0x1b8] sm:$0xff]
    %v3736 = vld [vmem:[#allocation6 + $0x1c0] sm:$0xff]
    %v3737 = vld [vmem:[#allocation6 + $0x1c8] sm:$0xff]
    %v3738 = vld [vmem:[#allocation6 + $0x1d0] sm:$0xff]
    %v3739 = vld [vmem:[#allocation6 + $0x1d8] sm:$0xff]
    %v3740 = vld [vmem:[#allocation6 + $0x1e0] sm:$0xff]
    %v3741 = vld [vmem:[#allocation6 + $0x1e8] sm:$0xff]
    %v3742 = vld [vmem:[#allocation6 + $0x1f0] sm:$0xff]
    %v3743 = vld [vmem:[#allocation6 + $0x1f8] sm:$0xff]
    %v3744 = vld [vmem:[#allocation6 + $0x200] sm:$0xff]
    %v3745 = vld [vmem:[#allocation6 + $0x208] sm:$0xff]
    %v3746 = vld [vmem:[#allocation6 + $0x210] sm:$0xff]
    %v3747 = vld [vmem:[#allocation6 + $0x218] sm:$0xff]
    %v3748 = vld [vmem:[#allocation6 + $0x220] sm:$0xff]
    %v3749 = vld [vmem:[#allocation6 + $0x228] sm:$0xff]
    %v3750 = vld [vmem:[#allocation6 + $0x230] sm:$0xff]
    %v3751 = vld [vmem:[#allocation6 + $0x238] sm:$0xff]
    %v3752 = vld [vmem:[#allocation6 + $0x240] sm:$0xff]
    %v3753 = vld [vmem:[#allocation6 + $0x248] sm:$0xff]
    %v3754 = vld [vmem:[#allocation6 + $0x250] sm:$0xff]
    %v3755 = vld [vmem:[#allocation6 + $0x258] sm:$0xff]
    %v3756 = vld [vmem:[#allocation6 + $0x260] sm:$0xff]
    %v3757 = vld [vmem:[#allocation6 + $0x268] sm:$0xff]
    %v3758 = vld [vmem:[#allocation6 + $0x270] sm:$0xff]
    %v3759 = vld [vmem:[#allocation6 + $0x278] sm:$0xff]
    %v3760 = vld [vmem:[#allocation6 + $0x280] sm:$0xff]
    %v3761 = vld [vmem:[#allocation6 + $0x288] sm:$0xff]
    %v3762 = vld [vmem:[#allocation6 + $0x290] sm:$0xff]
    %v3763 = vld [vmem:[#allocation6 + $0x298] sm:$0xff]
    %v3764 = vld [vmem:[#allocation6 + $0x2a0] sm:$0xff]
    %v3765 = vld [vmem:[#allocation6 + $0x2a8] sm:$0xff]
    %v3766 = vld [vmem:[#allocation6 + $0x2b0] sm:$0xff]
    %v3767 = vld [vmem:[#allocation6 + $0x2b8] sm:$0xff]
    %v3768 = vld [vmem:[#allocation6 + $0x2c0] sm:$0xff]
    %v3769 = vld [vmem:[#allocation6 + $0x2c8] sm:$0xff]
    %v3770 = vld [vmem:[#allocation6 + $0x2d0] sm:$0xff]
    %v3771 = vld [vmem:[#allocation6 + $0x2d8] sm:$0xff]
    %v3772 = vld [vmem:[#allocation6 + $0x2e0] sm:$0xff]
    %v3773 = vld [vmem:[#allocation6 + $0x2e8] sm:$0xff]
    %v3774 = vld [vmem:[#allocation6 + $0x2f0] sm:$0xff]
    %v3775 = vld [vmem:[#allocation6 + $0x2f8] sm:$0xff]
    %v3776 = vld [vmem:[#allocation6 + $0x300] sm:$0xff]
    %v3777 = vld [vmem:[#allocation6 + $0x308] sm:$0xff]
    %v3778 = vld [vmem:[#allocation6 + $0x310] sm:$0xff]
    %v3779 = vld [vmem:[#allocation6 + $0x318] sm:$0xff]
    %v3780 = vld [vmem:[#allocation6 + $0x320] sm:$0xff]
    %v3781 = vld [vmem:[#allocation6 + $0x328] sm:$0xff]
    %v3782 = vld [vmem:[#allocation6 + $0x330] sm:$0xff]
    %v3783 = vld [vmem:[#allocation6 + $0x338] sm:$0xff]
    %v3784 = vld [vmem:[#allocation6 + $0x340] sm:$0xff]
    %v3785 = vld [vmem:[#allocation6 + $0x348] sm:$0xff]
    %v3786 = vld [vmem:[#allocation6 + $0x350] sm:$0xff]
    %v3787 = vld [vmem:[#allocation6 + $0x358] sm:$0xff]
    %v3788 = vld [vmem:[#allocation6 + $0x360] sm:$0xff]
    %v3789 = vld [vmem:[#allocation6 + $0x368] sm:$0xff]
    %v3790 = vld [vmem:[#allocation6 + $0x370] sm:$0xff]
    %v3791 = vld [vmem:[#allocation6 + $0x378] sm:$0xff]
    %v3792 = vld [vmem:[#allocation6 + $0x380] sm:$0xff]
    %v3793 = vld [vmem:[#allocation6 + $0x388] sm:$0xff]
    %v3794 = vld [vmem:[#allocation6 + $0x390] sm:$0xff]
    %v3795 = vld [vmem:[#allocation6 + $0x398] sm:$0xff]
    %v3796 = vld [vmem:[#allocation6 + $0x3a0] sm:$0xff]
    %v3797 = vld [vmem:[#allocation6 + $0x3a8] sm:$0xff]
    %v3798 = vld [vmem:[#allocation6 + $0x3b0] sm:$0xff]
    %v3799 = vld [vmem:[#allocation6 + $0x3b8] sm:$0xff]
    %v3800 = vld [vmem:[#allocation6 + $0x3c0] sm:$0xff]
    %v3801 = vld [vmem:[#allocation6 + $0x3c8] sm:$0xff]
    %v3802 = vld [vmem:[#allocation6 + $0x3d0] sm:$0xff]
    %v3803 = vld [vmem:[#allocation6 + $0x3d8] sm:$0xff]
    %v3804 = vld [vmem:[#allocation6 + $0x3e0] sm:$0xff]
    %v3805 = vld [vmem:[#allocation6 + $0x3e8] sm:$0xff]
    %v3806 = vld [vmem:[#allocation6 + $0x3f0] sm:$0xff]
    %v3807 = vld [vmem:[#allocation6 + $0x3f8] sm:$0xff]
    %v3808 = vld [vmem:[#allocation40] sm:$0xf]
    %v3810 = vperm.slane %v3808, 0
    %v3811 = vperm.slane %v3808, 1
    %v3812 = vperm.slane %v3808, 2
    %v3813 = vperm.slane %v3808, 3
    %v3946 = vunpack.c.l.b16 %v3680
    %v3947 = vunpack.c.h.b16 %v3680
    %v3948 = vunpack.c.l.b16 %v3681
    %v3949 = vunpack.c.h.b16 %v3681
    %v3950 = vunpack.c.l.b16 %v3682
    %v3951 = vunpack.c.h.b16 %v3682
    %v3952 = vunpack.c.l.b16 %v3683
    %v3953 = vunpack.c.h.b16 %v3683
    %v3954 = vunpack.c.l.b16 %v3684
    %v3955 = vunpack.c.h.b16 %v3684
    %v3956 = vunpack.c.l.b16 %v3685
    %v3957 = vunpack.c.h.b16 %v3685
    %v3958 = vunpack.c.l.b16 %v3686
    %v3959 = vunpack.c.h.b16 %v3686
    %v3960 = vunpack.c.l.b16 %v3687
    %v3961 = vunpack.c.h.b16 %v3687
    %v3962 = vunpack.c.l.b16 %v3688
    %v3963 = vunpack.c.h.b16 %v3688
    %v3964 = vunpack.c.l.b16 %v3689
    %v3965 = vunpack.c.h.b16 %v3689
    %v3966 = vunpack.c.l.b16 %v3690
    %v3967 = vunpack.c.h.b16 %v3690
    %v3968 = vunpack.c.l.b16 %v3691
    %v3969 = vunpack.c.h.b16 %v3691
    %v3970 = vunpack.c.l.b16 %v3692
    %v3971 = vunpack.c.h.b16 %v3692
    %v3972 = vunpack.c.l.b16 %v3693
    %v3973 = vunpack.c.h.b16 %v3693
    %v3974 = vunpack.c.l.b16 %v3694
    %v3975 = vunpack.c.h.b16 %v3694
    %v3976 = vunpack.c.l.b16 %v3695
    %v3977 = vunpack.c.h.b16 %v3695
    %v3978 = vunpack.c.l.b16 %v3696
    %v3979 = vunpack.c.h.b16 %v3696
    %v3980 = vunpack.c.l.b16 %v3697
    %v3981 = vunpack.c.h.b16 %v3697
    %v3982 = vunpack.c.l.b16 %v3698
    %v3983 = vunpack.c.h.b16 %v3698
    %v3984 = vunpack.c.l.b16 %v3699
    %v3985 = vunpack.c.h.b16 %v3699
    %v3986 = vunpack.c.l.b16 %v3700
    %v3987 = vunpack.c.h.b16 %v3700
    %v3988 = vunpack.c.l.b16 %v3701
    %v3989 = vunpack.c.h.b16 %v3701
    %v3990 = vunpack.c.l.b16 %v3702
    %v3991 = vunpack.c.h.b16 %v3702
    %v3992 = vunpack.c.l.b16 %v3703
    %v3993 = vunpack.c.h.b16 %v3703
    %v3994 = vunpack.c.l.b16 %v3704
    %v3995 = vunpack.c.h.b16 %v3704
    %v3996 = vunpack.c.l.b16 %v3705
    %v3997 = vunpack.c.h.b16 %v3705
    %v3998 = vunpack.c.l.b16 %v3706
    %v3999 = vunpack.c.h.b16 %v3706
    %v4000 = vunpack.c.l.b16 %v3707
    %v4001 = vunpack.c.h.b16 %v3707
    %v4002 = vunpack.c.l.b16 %v3708
    %v4003 = vunpack.c.h.b16 %v3708
    %v4004 = vunpack.c.l.b16 %v3709
    %v4005 = vunpack.c.h.b16 %v3709
    %v4006 = vunpack.c.l.b16 %v3710
    %v4007 = vunpack.c.h.b16 %v3710
    %v4008 = vunpack.c.l.b16 %v3711
    %v4009 = vunpack.c.h.b16 %v3711
    %v4010 = vunpack.c.l.b16 %v3712
    %v4011 = vunpack.c.h.b16 %v3712
    %v4012 = vunpack.c.l.b16 %v3713
    %v4013 = vunpack.c.h.b16 %v3713
    %v4014 = vunpack.c.l.b16 %v3714
    %v4015 = vunpack.c.h.b16 %v3714
    %v4016 = vunpack.c.l.b16 %v3715
    %v4017 = vunpack.c.h.b16 %v3715
    %v4018 = vunpack.c.l.b16 %v3716
    %v4019 = vunpack.c.h.b16 %v3716
    %v4020 = vunpack.c.l.b16 %v3717
    %v4021 = vunpack.c.h.b16 %v3717
    %v4022 = vunpack.c.l.b16 %v3718
    %v4023 = vunpack.c.h.b16 %v3718
    %v4024 = vunpack.c.l.b16 %v3719
    %v4025 = vunpack.c.h.b16 %v3719
    %v4026 = vunpack.c.l.b16 %v3720
    %v4027 = vunpack.c.h.b16 %v3720
    %v4028 = vunpack.c.l.b16 %v3721
    %v4029 = vunpack.c.h.b16 %v3721
    %v4030 = vunpack.c.l.b16 %v3722
    %v4031 = vunpack.c.h.b16 %v3722
    %v4032 = vunpack.c.l.b16 %v3723
    %v4033 = vunpack.c.h.b16 %v3723
    %v4034 = vunpack.c.l.b16 %v3724
    %v4035 = vunpack.c.h.b16 %v3724
    %v4036 = vunpack.c.l.b16 %v3725
    %v4037 = vunpack.c.h.b16 %v3725
    %v4038 = vunpack.c.l.b16 %v3726
    %v4039 = vunpack.c.h.b16 %v3726
    %v4040 = vunpack.c.l.b16 %v3727
    %v4041 = vunpack.c.h.b16 %v3727
    %v4042 = vunpack.c.l.b16 %v3728
    %v4043 = vunpack.c.h.b16 %v3728
    %v4044 = vunpack.c.l.b16 %v3729
    %v4045 = vunpack.c.h.b16 %v3729
    %v4046 = vunpack.c.l.b16 %v3730
    %v4047 = vunpack.c.h.b16 %v3730
    %v4048 = vunpack.c.l.b16 %v3731
    %v4049 = vunpack.c.h.b16 %v3731
    %v4050 = vunpack.c.l.b16 %v3732
    %v4051 = vunpack.c.h.b16 %v3732
    %v4052 = vunpack.c.l.b16 %v3733
    %v4053 = vunpack.c.h.b16 %v3733
    %v4054 = vunpack.c.l.b16 %v3734
    %v4055 = vunpack.c.h.b16 %v3734
    %v4056 = vunpack.c.l.b16 %v3735
    %v4057 = vunpack.c.h.b16 %v3735
    %v4058 = vunpack.c.l.b16 %v3736
    %v4059 = vunpack.c.h.b16 %v3736
    %v4060 = vunpack.c.l.b16 %v3737
    %v4061 = vunpack.c.h.b16 %v3737
    %v4062 = vunpack.c.l.b16 %v3738
    %v4063 = vunpack.c.h.b16 %v3738
    %v4064 = vunpack.c.l.b16 %v3739
    %v4065 = vunpack.c.h.b16 %v3739
    %v4066 = vunpack.c.l.b16 %v3740
    %v4067 = vunpack.c.h.b16 %v3740
    %v4068 = vunpack.c.l.b16 %v3741
    %v4069 = vunpack.c.h.b16 %v3741
    %v4070 = vunpack.c.l.b16 %v3742
    %v4071 = vunpack.c.h.b16 %v3742
    %v4072 = vunpack.c.l.b16 %v3743
    %v4073 = vunpack.c.h.b16 %v3743
    %v4074 = vunpack.c.l.b16 %v3744
    %v4075 = vunpack.c.h.b16 %v3744
    %v4076 = vunpack.c.l.b16 %v3745
    %v4077 = vunpack.c.h.b16 %v3745
    %v4078 = vunpack.c.l.b16 %v3746
    %v4079 = vunpack.c.h.b16 %v3746
    %v4080 = vunpack.c.l.b16 %v3747
    %v4081 = vunpack.c.h.b16 %v3747
    %v4082 = vunpack.c.l.b16 %v3748
    %v4083 = vunpack.c.h.b16 %v3748
    %v4084 = vunpack.c.l.b16 %v3749
    %v4085 = vunpack.c.h.b16 %v3749
    %v4086 = vunpack.c.l.b16 %v3750
    %v4087 = vunpack.c.h.b16 %v3750
    %v4088 = vunpack.c.l.b16 %v3751
    %v4089 = vunpack.c.h.b16 %v3751
    %v4090 = vunpack.c.l.b16 %v3752
    %v4091 = vunpack.c.h.b16 %v3752
    %v4092 = vunpack.c.l.b16 %v3753
    %v4093 = vunpack.c.h.b16 %v3753
    %v4094 = vunpack.c.l.b16 %v3754
    %v4095 = vunpack.c.h.b16 %v3754
    %v4096 = vunpack.c.l.b16 %v3755
    %v4097 = vunpack.c.h.b16 %v3755
    %v4098 = vunpack.c.l.b16 %v3756
    %v4099 = vunpack.c.h.b16 %v3756
    %v4100 = vunpack.c.l.b16 %v3757
    %v4101 = vunpack.c.h.b16 %v3757
    %v4102 = vunpack.c.l.b16 %v3758
    %v4103 = vunpack.c.h.b16 %v3758
    %v4104 = vunpack.c.l.b16 %v3759
    %v4105 = vunpack.c.h.b16 %v3759
    %v4106 = vunpack.c.l.b16 %v3760
    %v4107 = vunpack.c.h.b16 %v3760
    %v4108 = vunpack.c.l.b16 %v3761
    %v4109 = vunpack.c.h.b16 %v3761
    %v4110 = vunpack.c.l.b16 %v3762
    %v4111 = vunpack.c.h.b16 %v3762
    %v4112 = vunpack.c.l.b16 %v3763
    %v4113 = vunpack.c.h.b16 %v3763
    %v4114 = vunpack.c.l.b16 %v3764
    %v4115 = vunpack.c.h.b16 %v3764
    %v4116 = vunpack.c.l.b16 %v3765
    %v4117 = vunpack.c.h.b16 %v3765
    %v4118 = vunpack.c.l.b16 %v3766
    %v4119 = vunpack.c.h.b16 %v3766
    %v4120 = vunpack.c.l.b16 %v3767
    %v4121 = vunpack.c.h.b16 %v3767
    %v4122 = vunpack.c.l.b16 %v3768
    %v4123 = vunpack.c.h.b16 %v3768
    %v4124 = vunpack.c.l.b16 %v3769
    %v4125 = vunpack.c.h.b16 %v3769
    %v4126 = vunpack.c.l.b16 %v3770
    %v4127 = vunpack.c.h.b16 %v3770
    %v4128 = vunpack.c.l.b16 %v3771
    %v4129 = vunpack.c.h.b16 %v3771
    %v4130 = vunpack.c.l.b16 %v3772
    %v4131 = vunpack.c.h.b16 %v3772
    %v4132 = vunpack.c.l.b16 %v3773
    %v4133 = vunpack.c.h.b16 %v3773
    %v4134 = vunpack.c.l.b16 %v3774
    %v4135 = vunpack.c.h.b16 %v3774
    %v4136 = vunpack.c.l.b16 %v3775
    %v4137 = vunpack.c.h.b16 %v3775
    %v4138 = vunpack.c.l.b16 %v3776
    %v4139 = vunpack.c.h.b16 %v3776
    %v4140 = vunpack.c.l.b16 %v3777
    %v4141 = vunpack.c.h.b16 %v3777
    %v4142 = vunpack.c.l.b16 %v3778
    %v4143 = vunpack.c.h.b16 %v3778
    %v4144 = vunpack.c.l.b16 %v3779
    %v4145 = vunpack.c.h.b16 %v3779
    %v4146 = vunpack.c.l.b16 %v3780
    %v4147 = vunpack.c.h.b16 %v3780
    %v4148 = vunpack.c.l.b16 %v3781
    %v4149 = vunpack.c.h.b16 %v3781
    %v4150 = vunpack.c.l.b16 %v3782
    %v4151 = vunpack.c.h.b16 %v3782
    %v4152 = vunpack.c.l.b16 %v3783
    %v4153 = vunpack.c.h.b16 %v3783
    %v4154 = vunpack.c.l.b16 %v3784
    %v4155 = vunpack.c.h.b16 %v3784
    %v4156 = vunpack.c.l.b16 %v3785
    %v4157 = vunpack.c.h.b16 %v3785
    %v4158 = vunpack.c.l.b16 %v3786
    %v4159 = vunpack.c.h.b16 %v3786
    %v4160 = vunpack.c.l.b16 %v3787
    %v4161 = vunpack.c.h.b16 %v3787
    %v4162 = vunpack.c.l.b16 %v3788
    %v4163 = vunpack.c.h.b16 %v3788
    %v4164 = vunpack.c.l.b16 %v3789
    %v4165 = vunpack.c.h.b16 %v3789
    %v4166 = vunpack.c.l.b16 %v3790
    %v4167 = vunpack.c.h.b16 %v3790
    %v4168 = vunpack.c.l.b16 %v3791
    %v4169 = vunpack.c.h.b16 %v3791
    %v4170 = vunpack.c.l.b16 %v3792
    %v4171 = vunpack.c.h.b16 %v3792
    %v4172 = vunpack.c.l.b16 %v3793
    %v4173 = vunpack.c.h.b16 %v3793
    %v4174 = vunpack.c.l.b16 %v3794
    %v4175 = vunpack.c.h.b16 %v3794
    %v4176 = vunpack.c.l.b16 %v3795
    %v4177 = vunpack.c.h.b16 %v3795
    %v4178 = vunpack.c.l.b16 %v3796
    %v4179 = vunpack.c.h.b16 %v3796
    %v4180 = vunpack.c.l.b16 %v3797
    %v4181 = vunpack.c.h.b16 %v3797
    %v4182 = vunpack.c.l.b16 %v3798
    %v4183 = vunpack.c.h.b16 %v3798
    %v4184 = vunpack.c.l.b16 %v3799
    %v4185 = vunpack.c.h.b16 %v3799
    %v4186 = vunpack.c.l.b16 %v3800
    %v4187 = vunpack.c.h.b16 %v3800
    %v4188 = vunpack.c.l.b16 %v3801
    %v4189 = vunpack.c.h.b16 %v3801
    %v4190 = vunpack.c.l.b16 %v3802
    %v4191 = vunpack.c.h.b16 %v3802
    %v4192 = vunpack.c.l.b16 %v3803
    %v4193 = vunpack.c.h.b16 %v3803
    %v4194 = vunpack.c.l.b16 %v3804
    %v4195 = vunpack.c.h.b16 %v3804
    %v4196 = vunpack.c.l.b16 %v3805
    %v4197 = vunpack.c.h.b16 %v3805
    %v4198 = vunpack.c.l.b16 %v3806
    %v4199 = vunpack.c.h.b16 %v3806
    %v4200 = vunpack.c.l.b16 %v3807
    %v4201 = vunpack.c.h.b16 %v3807
    %v4202 = vpack.c.b16 %v3950, %v3946
    %v4203 = vpack.c.b16 %v3951, %v3947
    %v4204 = vpack.c.b16 %v3952, %v3948
    %v4205 = vpack.c.b16 %v3953, %v3949
    %v4206 = vpack.c.b16 %v3958, %v3954
    %v4207 = vpack.c.b16 %v3959, %v3955
    %v4208 = vpack.c.b16 %v3960, %v3956
    %v4209 = vpack.c.b16 %v3961, %v3957
    %v4210 = vpack.c.b16 %v3966, %v3962
    %v4211 = vpack.c.b16 %v3967, %v3963
    %v4212 = vpack.c.b16 %v3968, %v3964
    %v4213 = vpack.c.b16 %v3969, %v3965
    %v4214 = vpack.c.b16 %v3974, %v3970
    %v4215 = vpack.c.b16 %v3975, %v3971
    %v4216 = vpack.c.b16 %v3976, %v3972
    %v4217 = vpack.c.b16 %v3977, %v3973
    %v4218 = vpack.c.b16 %v3982, %v3978
    %v4219 = vpack.c.b16 %v3983, %v3979
    %v4220 = vpack.c.b16 %v3984, %v3980
    %v4221 = vpack.c.b16 %v3985, %v3981
    %v4222 = vpack.c.b16 %v3990, %v3986
    %v4223 = vpack.c.b16 %v3991, %v3987
    %v4224 = vpack.c.b16 %v3992, %v3988
    %v4225 = vpack.c.b16 %v3993, %v3989
    %v4226 = vpack.c.b16 %v3998, %v3994
    %v4227 = vpack.c.b16 %v3999, %v3995
    %v4228 = vpack.c.b16 %v4000, %v3996
    %v4229 = vpack.c.b16 %v4001, %v3997
    %v4230 = vpack.c.b16 %v4006, %v4002
    %v4231 = vpack.c.b16 %v4007, %v4003
    %v4232 = vpack.c.b16 %v4008, %v4004
    %v4233 = vpack.c.b16 %v4009, %v4005
    %v4234 = vpack.c.b16 %v4014, %v4010
    %v4235 = vpack.c.b16 %v4015, %v4011
    %v4236 = vpack.c.b16 %v4016, %v4012
    %v4237 = vpack.c.b16 %v4017, %v4013
    %v4238 = vpack.c.b16 %v4022, %v4018
    %v4239 = vpack.c.b16 %v4023, %v4019
    %v4240 = vpack.c.b16 %v4024, %v4020
    %v4241 = vpack.c.b16 %v4025, %v4021
    %v4242 = vpack.c.b16 %v4030, %v4026
    %v4243 = vpack.c.b16 %v4031, %v4027
    %v4244 = vpack.c.b16 %v4032, %v4028
    %v4245 = vpack.c.b16 %v4033, %v4029
    %v4246 = vpack.c.b16 %v4038, %v4034
    %v4247 = vpack.c.b16 %v4039, %v4035
    %v4248 = vpack.c.b16 %v4040, %v4036
    %v4249 = vpack.c.b16 %v4041, %v4037
    %v4250 = vpack.c.b16 %v4046, %v4042
    %v4251 = vpack.c.b16 %v4047, %v4043
    %v4252 = vpack.c.b16 %v4048, %v4044
    %v4253 = vpack.c.b16 %v4049, %v4045
    %v4254 = vpack.c.b16 %v4054, %v4050
    %v4255 = vpack.c.b16 %v4055, %v4051
    %v4256 = vpack.c.b16 %v4056, %v4052
    %v4257 = vpack.c.b16 %v4057, %v4053
    %v4258 = vpack.c.b16 %v4062, %v4058
    %v4259 = vpack.c.b16 %v4063, %v4059
    %v4260 = vpack.c.b16 %v4064, %v4060
    %v4261 = vpack.c.b16 %v4065, %v4061
    %v4262 = vpack.c.b16 %v4070, %v4066
    %v4263 = vpack.c.b16 %v4071, %v4067
    %v4264 = vpack.c.b16 %v4072, %v4068
    %v4265 = vpack.c.b16 %v4073, %v4069
    %v4266 = vpack.c.b16 %v4078, %v4074
    %v4267 = vpack.c.b16 %v4079, %v4075
    %v4268 = vpack.c.b16 %v4080, %v4076
    %v4269 = vpack.c.b16 %v4081, %v4077
    %v4270 = vpack.c.b16 %v4086, %v4082
    %v4271 = vpack.c.b16 %v4087, %v4083
    %v4272 = vpack.c.b16 %v4088, %v4084
    %v4273 = vpack.c.b16 %v4089, %v4085
    %v4274 = vpack.c.b16 %v4094, %v4090
    %v4275 = vpack.c.b16 %v4095, %v4091
    %v4276 = vpack.c.b16 %v4096, %v4092
    %v4277 = vpack.c.b16 %v4097, %v4093
    %v4278 = vpack.c.b16 %v4102, %v4098
    %v4279 = vpack.c.b16 %v4103, %v4099
    %v4280 = vpack.c.b16 %v4104, %v4100
    %v4281 = vpack.c.b16 %v4105, %v4101
    %v4282 = vpack.c.b16 %v4110, %v4106
    %v4283 = vpack.c.b16 %v4111, %v4107
    %v4284 = vpack.c.b16 %v4112, %v4108
    %v4285 = vpack.c.b16 %v4113, %v4109
    %v4286 = vpack.c.b16 %v4118, %v4114
    %v4287 = vpack.c.b16 %v4119, %v4115
    %v4288 = vpack.c.b16 %v4120, %v4116
    %v4289 = vpack.c.b16 %v4121, %v4117
    %v4290 = vpack.c.b16 %v4126, %v4122
    %v4291 = vpack.c.b16 %v4127, %v4123
    %v4292 = vpack.c.b16 %v4128, %v4124
    %v4293 = vpack.c.b16 %v4129, %v4125
    %v4294 = vpack.c.b16 %v4134, %v4130
    %v4295 = vpack.c.b16 %v4135, %v4131
    %v4296 = vpack.c.b16 %v4136, %v4132
    %v4297 = vpack.c.b16 %v4137, %v4133
    %v4298 = vpack.c.b16 %v4142, %v4138
    %v4299 = vpack.c.b16 %v4143, %v4139
    %v4300 = vpack.c.b16 %v4144, %v4140
    %v4301 = vpack.c.b16 %v4145, %v4141
    %v4302 = vpack.c.b16 %v4150, %v4146
    %v4303 = vpack.c.b16 %v4151, %v4147
    %v4304 = vpack.c.b16 %v4152, %v4148
    %v4305 = vpack.c.b16 %v4153, %v4149
    %v4306 = vpack.c.b16 %v4158, %v4154
    %v4307 = vpack.c.b16 %v4159, %v4155
    %v4308 = vpack.c.b16 %v4160, %v4156
    %v4309 = vpack.c.b16 %v4161, %v4157
    %v4310 = vpack.c.b16 %v4166, %v4162
    %v4311 = vpack.c.b16 %v4167, %v4163
    %v4312 = vpack.c.b16 %v4168, %v4164
    %v4313 = vpack.c.b16 %v4169, %v4165
    %v4314 = vpack.c.b16 %v4174, %v4170
    %v4315 = vpack.c.b16 %v4175, %v4171
    %v4316 = vpack.c.b16 %v4176, %v4172
    %v4317 = vpack.c.b16 %v4177, %v4173
    %v4318 = vpack.c.b16 %v4182, %v4178
    %v4319 = vpack.c.b16 %v4183, %v4179
    %v4320 = vpack.c.b16 %v4184, %v4180
    %v4321 = vpack.c.b16 %v4185, %v4181
    %v4322 = vpack.c.b16 %v4190, %v4186
    %v4323 = vpack.c.b16 %v4191, %v4187
    %v4324 = vpack.c.b16 %v4192, %v4188
    %v4325 = vpack.c.b16 %v4193, %v4189
    %v4326 = vpack.c.b16 %v4198, %v4194
    %v4327 = vpack.c.b16 %v4199, %v4195
    %v4328 = vpack.c.b16 %v4200, %v4196
    %v4329 = vpack.c.b16 %v4201, %v4197
    %4458 = vmatpush.bf16.msra.mxu0 %v4230
    %4459 = vmatpush.bf16.msra.mxu0 %v4226
    %4460 = vmatpush.bf16.msra.mxu0 %v4222
    %4461 = vmatpush.bf16.msra.mxu0 %v4218
    %4462 = vmatpush.bf16.msra.mxu0 %v4214
    %4463 = vmatpush.bf16.msra.mxu0 %v4210
    %4464 = vmatpush.bf16.msra.mxu0 %v4206
    %4465 = vmatpush.bf16.msra.mxu0 %v4202
    %4466 = vmatmul.bf16.gmra.mxu0 %v3676
    %v4467 = vpop.f32.mrf.mxu0
    %v4468 = vadd.f32 %v3810, %v4467
    %v4469 = vpop.f32.mrf.mxu0
    %4470 = vdwg.mxu0
    %4471 = vmatpush.bf16.msra.mxu0 %v4262
    %4472 = vmatpush.bf16.msra.mxu0 %v4258
    %4473 = vmatpush.bf16.msra.mxu0 %v4254
    %4474 = vmatpush.bf16.msra.mxu0 %v4250
    %4475 = vmatpush.bf16.msra.mxu0 %v4246
    %4476 = vmatpush.bf16.msra.mxu0 %v4242
    %4477 = vmatpush.bf16.msra.mxu0 %v4238
    %4478 = vmatpush.bf16.msra.mxu0 %v4234
    %4479 = vmatmul.bf16.gmra.mxu0 %v3677
    %v4480 = vpop.f32.mrf.mxu0
    %v4481 = vadd.f32 %v4468, %v4480
    %v4482 = vpop.f32.mrf.mxu0
    %4483 = vdwg.mxu0
    %4484 = vmatpush.bf16.msra.mxu0 %v4294
    %4485 = vmatpush.bf16.msra.mxu0 %v4290
    %4486 = vmatpush.bf16.msra.mxu0 %v4286
    %4487 = vmatpush.bf16.msra.mxu0 %v4282
    %4488 = vmatpush.bf16.msra.mxu0 %v4278
    %4489 = vmatpush.bf16.msra.mxu0 %v4274
    %4490 = vmatpush.bf16.msra.mxu0 %v4270
    %4491 = vmatpush.bf16.msra.mxu0 %v4266
    %4492 = vmatmul.bf16.gmra.mxu0 %v3678
    %v4493 = vpop.f32.mrf.mxu0
    %v4494 = vadd.f32 %v4481, %v4493
    %v4495 = vpop.f32.mrf.mxu0
    %4496 = vdwg.mxu0
    %4497 = vmatpush.bf16.msra.mxu0 %v4326
    %4498 = vmatpush.bf16.msra.mxu0 %v4322
    %4499 = vmatpush.bf16.msra.mxu0 %v4318
    %4500 = vmatpush.bf16.msra.mxu0 %v4314
    %4501 = vmatpush.bf16.msra.mxu0 %v4310
    %4502 = vmatpush.bf16.msra.mxu0 %v4306
    %4503 = vmatpush.bf16.msra.mxu0 %v4302
    %4504 = vmatpush.bf16.msra.mxu0 %v4298
    %4505 = vmatmul.bf16.gmra.mxu0 %v3679
    %v4506 = vpop.f32.mrf.mxu0
    %v4507 = vadd.f32 %v4494, %v4506
    %v4508 = vpop.f32.mrf.mxu0
    %4509 = vdwg.mxu0
    %4510 = vmatpush.bf16.msra.mxu0 %v4231
    %4511 = vmatpush.bf16.msra.mxu0 %v4227
    %4512 = vmatpush.bf16.msra.mxu0 %v4223
    %4513 = vmatpush.bf16.msra.mxu0 %v4219
    %4514 = vmatpush.bf16.msra.mxu0 %v4215
    %4515 = vmatpush.bf16.msra.mxu0 %v4211
    %4516 = vmatpush.bf16.msra.mxu0 %v4207
    %4517 = vmatpush.bf16.msra.mxu0 %v4203
    %4518 = vmatmul.bf16.gmra.mxu0 %v3676
    %v4519 = vpop.f32.mrf.mxu0
    %v4520 = vadd.f32 %v3811, %v4519
    %v4521 = vpop.f32.mrf.mxu0
    %4522 = vdwg.mxu0
    %4523 = vmatpush.bf16.msra.mxu0 %v4263
    %4524 = vmatpush.bf16.msra.mxu0 %v4259
    %4525 = vmatpush.bf16.msra.mxu0 %v4255
    %4526 = vmatpush.bf16.msra.mxu0 %v4251
    %4527 = vmatpush.bf16.msra.mxu0 %v4247
    %4528 = vmatpush.bf16.msra.mxu0 %v4243
    %4529 = vmatpush.bf16.msra.mxu0 %v4239
    %4530 = vmatpush.bf16.msra.mxu0 %v4235
    %4531 = vmatmul.bf16.gmra.mxu0 %v3677
    %v4532 = vpop.f32.mrf.mxu0
    %v4533 = vadd.f32 %v4520, %v4532
    %v4534 = vpop.f32.mrf.mxu0
    %4535 = vdwg.mxu0
    %4536 = vmatpush.bf16.msra.mxu0 %v4295
    %4537 = vmatpush.bf16.msra.mxu0 %v4291
    %4538 = vmatpush.bf16.msra.mxu0 %v4287
    %4539 = vmatpush.bf16.msra.mxu0 %v4283
    %4540 = vmatpush.bf16.msra.mxu0 %v4279
    %4541 = vmatpush.bf16.msra.mxu0 %v4275
    %4542 = vmatpush.bf16.msra.mxu0 %v4271
    %4543 = vmatpush.bf16.msra.mxu0 %v4267
    %4544 = vmatmul.bf16.gmra.mxu0 %v3678
    %v4545 = vpop.f32.mrf.mxu0
    %v4546 = vadd.f32 %v4533, %v4545
    %v4547 = vpop.f32.mrf.mxu0
    %4548 = vdwg.mxu0
    %4549 = vmatpush.bf16.msra.mxu0 %v4327
    %4550 = vmatpush.bf16.msra.mxu0 %v4323
    %4551 = vmatpush.bf16.msra.mxu0 %v4319
    %4552 = vmatpush.bf16.msra.mxu0 %v4315
    %4553 = vmatpush.bf16.msra.mxu0 %v4311
    %4554 = vmatpush.bf16.msra.mxu0 %v4307
    %4555 = vmatpush.bf16.msra.mxu0 %v4303
    %4556 = vmatpush.bf16.msra.mxu0 %v4299
    %4557 = vmatmul.bf16.gmra.mxu0 %v3679
    %v4558 = vpop.f32.mrf.mxu0
    %v4559 = vadd.f32 %v4546, %v4558
    %v4560 = vpop.f32.mrf.mxu0
    %4561 = vdwg.mxu0
    %4562 = vmatpush.bf16.msra.mxu0 %v4232
    %4563 = vmatpush.bf16.msra.mxu0 %v4228
    %4564 = vmatpush.bf16.msra.mxu0 %v4224
    %4565 = vmatpush.bf16.msra.mxu0 %v4220
    %4566 = vmatpush.bf16.msra.mxu0 %v4216
    %4567 = vmatpush.bf16.msra.mxu0 %v4212
    %4568 = vmatpush.bf16.msra.mxu0 %v4208
    %4569 = vmatpush.bf16.msra.mxu0 %v4204
    %4570 = vmatmul.bf16.gmra.mxu0 %v3676
    %v4571 = vpop.f32.mrf.mxu0
    %v4572 = vadd.f32 %v3812, %v4571
    %v4573 = vpop.f32.mrf.mxu0
    %4574 = vdwg.mxu0
    %4575 = vmatpush.bf16.msra.mxu0 %v4264
    %4576 = vmatpush.bf16.msra.mxu0 %v4260
    %4577 = vmatpush.bf16.msra.mxu0 %v4256
    %4578 = vmatpush.bf16.msra.mxu0 %v4252
    %4579 = vmatpush.bf16.msra.mxu0 %v4248
    %4580 = vmatpush.bf16.msra.mxu0 %v4244
    %4581 = vmatpush.bf16.msra.mxu0 %v4240
    %4582 = vmatpush.bf16.msra.mxu0 %v4236
    %4583 = vmatmul.bf16.gmra.mxu0 %v3677
    %v4584 = vpop.f32.mrf.mxu0
    %v4585 = vadd.f32 %v4572, %v4584
    %v4586 = vpop.f32.mrf.mxu0
    %4587 = vdwg.mxu0
    %4588 = vmatpush.bf16.msra.mxu0 %v4296
    %4589 = vmatpush.bf16.msra.mxu0 %v4292
    %4590 = vmatpush.bf16.msra.mxu0 %v4288
    %4591 = vmatpush.bf16.msra.mxu0 %v4284
    %4592 = vmatpush.bf16.msra.mxu0 %v4280
    %4593 = vmatpush.bf16.msra.mxu0 %v4276
    %4594 = vmatpush.bf16.msra.mxu0 %v4272
    %4595 = vmatpush.bf16.msra.mxu0 %v4268
    %4596 = vmatmul.bf16.gmra.mxu0 %v3678
    %v4597 = vpop.f32.mrf.mxu0
    %v4598 = vadd.f32 %v4585, %v4597
    %v4599 = vpop.f32.mrf.mxu0
    %4600 = vdwg.mxu0
    %4601 = vmatpush.bf16.msra.mxu0 %v4328
    %4602 = vmatpush.bf16.msra.mxu0 %v4324
    %4603 = vmatpush.bf16.msra.mxu0 %v4320
    %4604 = vmatpush.bf16.msra.mxu0 %v4316
    %4605 = vmatpush.bf16.msra.mxu0 %v4312
    %4606 = vmatpush.bf16.msra.mxu0 %v4308
    %4607 = vmatpush.bf16.msra.mxu0 %v4304
    %4608 = vmatpush.bf16.msra.mxu0 %v4300
    %4609 = vmatmul.bf16.gmra.mxu0 %v3679
    %v4610 = vpop.f32.mrf.mxu0
    %v4611 = vadd.f32 %v4598, %v4610
    %v4612 = vpop.f32.mrf.mxu0
    %4613 = vdwg.mxu0
    %4614 = vmatpush.bf16.msra.mxu0 %v4233
    %4615 = vmatpush.bf16.msra.mxu0 %v4229
    %4616 = vmatpush.bf16.msra.mxu0 %v4225
    %4617 = vmatpush.bf16.msra.mxu0 %v4221
    %4618 = vmatpush.bf16.msra.mxu0 %v4217
    %4619 = vmatpush.bf16.msra.mxu0 %v4213
    %4620 = vmatpush.bf16.msra.mxu0 %v4209
    %4621 = vmatpush.bf16.msra.mxu0 %v4205
    %4622 = vmatmul.bf16.gmra.mxu0 %v3676
    %v4623 = vpop.f32.mrf.mxu0
    %v4624 = vadd.f32 %v3813, %v4623
    %v4625 = vpop.f32.mrf.mxu0
    %4626 = vdwg.mxu0
    %4627 = vmatpush.bf16.msra.mxu0 %v4265
    %4628 = vmatpush.bf16.msra.mxu0 %v4261
    %4629 = vmatpush.bf16.msra.mxu0 %v4257
    %4630 = vmatpush.bf16.msra.mxu0 %v4253
    %4631 = vmatpush.bf16.msra.mxu0 %v4249
    %4632 = vmatpush.bf16.msra.mxu0 %v4245
    %4633 = vmatpush.bf16.msra.mxu0 %v4241
    %4634 = vmatpush.bf16.msra.mxu0 %v4237
    %4635 = vmatmul.bf16.gmra.mxu0 %v3677
    %v4636 = vpop.f32.mrf.mxu0
    %v4637 = vadd.f32 %v4624, %v4636
    %v4638 = vpop.f32.mrf.mxu0
    %4639 = vdwg.mxu0
    %4640 = vmatpush.bf16.msra.mxu0 %v4297
    %4641 = vmatpush.bf16.msra.mxu0 %v4293
    %4642 = vmatpush.bf16.msra.mxu0 %v4289
    %4643 = vmatpush.bf16.msra.mxu0 %v4285
    %4644 = vmatpush.bf16.msra.mxu0 %v4281
    %4645 = vmatpush.bf16.msra.mxu0 %v4277
    %4646 = vmatpush.bf16.msra.mxu0 %v4273
    %4647 = vmatpush.bf16.msra.mxu0 %v4269
    %4648 = vmatmul.bf16.gmra.mxu0 %v3678
    %v4649 = vpop.f32.mrf.mxu0
    %v4650 = vadd.f32 %v4637, %v4649
    %v4651 = vpop.f32.mrf.mxu0
    %4652 = vdwg.mxu0
    %4653 = vmatpush.bf16.msra.mxu0 %v4329
    %4654 = vmatpush.bf16.msra.mxu0 %v4325
    %4655 = vmatpush.bf16.msra.mxu0 %v4321
    %4656 = vmatpush.bf16.msra.mxu0 %v4317
    %4657 = vmatpush.bf16.msra.mxu0 %v4313
    %4658 = vmatpush.bf16.msra.mxu0 %v4309
    %4659 = vmatpush.bf16.msra.mxu0 %v4305
    %4660 = vmatpush.bf16.msra.mxu0 %v4301
    %4661 = vmatmul.bf16.gmra.mxu0 %v3679
    %v4662 = vpop.f32.mrf.mxu0
    %v4663 = vadd.f32 %v4650, %v4662
    %v4664 = vpop.f32.mrf.mxu0
    %4665 = vdwg.mxu0
    %v4666 = vadd.f32 %v2367, %v4507
    %v4667 = vadd.f32 %v2471, %v4559
    %v4668 = vadd.f32 %v2575, %v4611
    %v4669 = vadd.f32 %v2679, %v4663
    %v4670 = vpack.c.bf16 %v4666, %v4666
    %v4671 = vpack.c.bf16 %v4667, %v4667
    %v4672 = vpack.c.bf16 %v4668, %v4668
    %v4673 = vpack.c.bf16 %v4669, %v4669
    %v4674 = vld [vmem:[#allocation7] sm:$0xff]
    %v4675 = vld [vmem:[#allocation7 + $0x8] sm:$0xff]
    %v4676 = vld [vmem:[#allocation7 + $0x10] sm:$0xff]
    %v4677 = vld [vmem:[#allocation7 + $0x18] sm:$0xff]
    %v4678 = vld [vmem:[#allocation7 + $0x20] sm:$0xff]
    %v4679 = vld [vmem:[#allocation7 + $0x28] sm:$0xff]
    %v4680 = vld [vmem:[#allocation7 + $0x30] sm:$0xff]
    %v4681 = vld [vmem:[#allocation7 + $0x38] sm:$0xff]
    %v4682 = vld [vmem:[#allocation7 + $0x40] sm:$0xff]
    %v4683 = vld [vmem:[#allocation7 + $0x48] sm:$0xff]
    %v4684 = vld [vmem:[#allocation7 + $0x50] sm:$0xff]
    %v4685 = vld [vmem:[#allocation7 + $0x58] sm:$0xff]
    %v4686 = vld [vmem:[#allocation7 + $0x60] sm:$0xff]
    %v4687 = vld [vmem:[#allocation7 + $0x68] sm:$0xff]
    %v4688 = vld [vmem:[#allocation7 + $0x70] sm:$0xff]
    %v4689 = vld [vmem:[#allocation7 + $0x78] sm:$0xff]
    %v4690 = vld [vmem:[#allocation7 + $0x80] sm:$0xff]
    %v4691 = vld [vmem:[#allocation7 + $0x88] sm:$0xff]
    %v4692 = vld [vmem:[#allocation7 + $0x90] sm:$0xff]
    %v4693 = vld [vmem:[#allocation7 + $0x98] sm:$0xff]
    %v4694 = vld [vmem:[#allocation7 + $0xa0] sm:$0xff]
    %v4695 = vld [vmem:[#allocation7 + $0xa8] sm:$0xff]
    %v4696 = vld [vmem:[#allocation7 + $0xb0] sm:$0xff]
    %v4697 = vld [vmem:[#allocation7 + $0xb8] sm:$0xff]
    %v4698 = vld [vmem:[#allocation7 + $0xc0] sm:$0xff]
    %v4699 = vld [vmem:[#allocation7 + $0xc8] sm:$0xff]
    %v4700 = vld [vmem:[#allocation7 + $0xd0] sm:$0xff]
    %v4701 = vld [vmem:[#allocation7 + $0xd8] sm:$0xff]
    %v4702 = vld [vmem:[#allocation7 + $0xe0] sm:$0xff]
    %v4703 = vld [vmem:[#allocation7 + $0xe8] sm:$0xff]
    %v4704 = vld [vmem:[#allocation7 + $0xf0] sm:$0xff]
    %v4705 = vld [vmem:[#allocation7 + $0xf8] sm:$0xff]
    %v4706 = vld [vmem:[#allocation7 + $0x100] sm:$0xff]
    %v4707 = vld [vmem:[#allocation7 + $0x108] sm:$0xff]
    %v4708 = vld [vmem:[#allocation7 + $0x110] sm:$0xff]
    %v4709 = vld [vmem:[#allocation7 + $0x118] sm:$0xff]
    %v4710 = vld [vmem:[#allocation7 + $0x120] sm:$0xff]
    %v4711 = vld [vmem:[#allocation7 + $0x128] sm:$0xff]
    %v4712 = vld [vmem:[#allocation7 + $0x130] sm:$0xff]
    %v4713 = vld [vmem:[#allocation7 + $0x138] sm:$0xff]
    %v4714 = vld [vmem:[#allocation7 + $0x140] sm:$0xff]
    %v4715 = vld [vmem:[#allocation7 + $0x148] sm:$0xff]
    %v4716 = vld [vmem:[#allocation7 + $0x150] sm:$0xff]
    %v4717 = vld [vmem:[#allocation7 + $0x158] sm:$0xff]
    %v4718 = vld [vmem:[#allocation7 + $0x160] sm:$0xff]
    %v4719 = vld [vmem:[#allocation7 + $0x168] sm:$0xff]
    %v4720 = vld [vmem:[#allocation7 + $0x170] sm:$0xff]
    %v4721 = vld [vmem:[#allocation7 + $0x178] sm:$0xff]
    %v4722 = vld [vmem:[#allocation7 + $0x180] sm:$0xff]
    %v4723 = vld [vmem:[#allocation7 + $0x188] sm:$0xff]
    %v4724 = vld [vmem:[#allocation7 + $0x190] sm:$0xff]
    %v4725 = vld [vmem:[#allocation7 + $0x198] sm:$0xff]
    %v4726 = vld [vmem:[#allocation7 + $0x1a0] sm:$0xff]
    %v4727 = vld [vmem:[#allocation7 + $0x1a8] sm:$0xff]
    %v4728 = vld [vmem:[#allocation7 + $0x1b0] sm:$0xff]
    %v4729 = vld [vmem:[#allocation7 + $0x1b8] sm:$0xff]
    %v4730 = vld [vmem:[#allocation7 + $0x1c0] sm:$0xff]
    %v4731 = vld [vmem:[#allocation7 + $0x1c8] sm:$0xff]
    %v4732 = vld [vmem:[#allocation7 + $0x1d0] sm:$0xff]
    %v4733 = vld [vmem:[#allocation7 + $0x1d8] sm:$0xff]
    %v4734 = vld [vmem:[#allocation7 + $0x1e0] sm:$0xff]
    %v4735 = vld [vmem:[#allocation7 + $0x1e8] sm:$0xff]
    %v4736 = vld [vmem:[#allocation7 + $0x1f0] sm:$0xff]
    %v4737 = vld [vmem:[#allocation7 + $0x1f8] sm:$0xff]
    %v4738 = vld [vmem:[#allocation7 + $0x200] sm:$0xff]
    %v4739 = vld [vmem:[#allocation7 + $0x208] sm:$0xff]
    %v4740 = vld [vmem:[#allocation7 + $0x210] sm:$0xff]
    %v4741 = vld [vmem:[#allocation7 + $0x218] sm:$0xff]
    %v4742 = vld [vmem:[#allocation7 + $0x220] sm:$0xff]
    %v4743 = vld [vmem:[#allocation7 + $0x228] sm:$0xff]
    %v4744 = vld [vmem:[#allocation7 + $0x230] sm:$0xff]
    %v4745 = vld [vmem:[#allocation7 + $0x238] sm:$0xff]
    %v4746 = vld [vmem:[#allocation7 + $0x240] sm:$0xff]
    %v4747 = vld [vmem:[#allocation7 + $0x248] sm:$0xff]
    %v4748 = vld [vmem:[#allocation7 + $0x250] sm:$0xff]
    %v4749 = vld [vmem:[#allocation7 + $0x258] sm:$0xff]
    %v4750 = vld [vmem:[#allocation7 + $0x260] sm:$0xff]
    %v4751 = vld [vmem:[#allocation7 + $0x268] sm:$0xff]
    %v4752 = vld [vmem:[#allocation7 + $0x270] sm:$0xff]
    %v4753 = vld [vmem:[#allocation7 + $0x278] sm:$0xff]
    %v4754 = vld [vmem:[#allocation7 + $0x280] sm:$0xff]
    %v4755 = vld [vmem:[#allocation7 + $0x288] sm:$0xff]
    %v4756 = vld [vmem:[#allocation7 + $0x290] sm:$0xff]
    %v4757 = vld [vmem:[#allocation7 + $0x298] sm:$0xff]
    %v4758 = vld [vmem:[#allocation7 + $0x2a0] sm:$0xff]
    %v4759 = vld [vmem:[#allocation7 + $0x2a8] sm:$0xff]
    %v4760 = vld [vmem:[#allocation7 + $0x2b0] sm:$0xff]
    %v4761 = vld [vmem:[#allocation7 + $0x2b8] sm:$0xff]
    %v4762 = vld [vmem:[#allocation7 + $0x2c0] sm:$0xff]
    %v4763 = vld [vmem:[#allocation7 + $0x2c8] sm:$0xff]
    %v4764 = vld [vmem:[#allocation7 + $0x2d0] sm:$0xff]
    %v4765 = vld [vmem:[#allocation7 + $0x2d8] sm:$0xff]
    %v4766 = vld [vmem:[#allocation7 + $0x2e0] sm:$0xff]
    %v4767 = vld [vmem:[#allocation7 + $0x2e8] sm:$0xff]
    %v4768 = vld [vmem:[#allocation7 + $0x2f0] sm:$0xff]
    %v4769 = vld [vmem:[#allocation7 + $0x2f8] sm:$0xff]
    %v4770 = vld [vmem:[#allocation7 + $0x300] sm:$0xff]
    %v4771 = vld [vmem:[#allocation7 + $0x308] sm:$0xff]
    %v4772 = vld [vmem:[#allocation7 + $0x310] sm:$0xff]
    %v4773 = vld [vmem:[#allocation7 + $0x318] sm:$0xff]
    %v4774 = vld [vmem:[#allocation7 + $0x320] sm:$0xff]
    %v4775 = vld [vmem:[#allocation7 + $0x328] sm:$0xff]
    %v4776 = vld [vmem:[#allocation7 + $0x330] sm:$0xff]
    %v4777 = vld [vmem:[#allocation7 + $0x338] sm:$0xff]
    %v4778 = vld [vmem:[#allocation7 + $0x340] sm:$0xff]
    %v4779 = vld [vmem:[#allocation7 + $0x348] sm:$0xff]
    %v4780 = vld [vmem:[#allocation7 + $0x350] sm:$0xff]
    %v4781 = vld [vmem:[#allocation7 + $0x358] sm:$0xff]
    %v4782 = vld [vmem:[#allocation7 + $0x360] sm:$0xff]
    %v4783 = vld [vmem:[#allocation7 + $0x368] sm:$0xff]
    %v4784 = vld [vmem:[#allocation7 + $0x370] sm:$0xff]
    %v4785 = vld [vmem:[#allocation7 + $0x378] sm:$0xff]
    %v4786 = vld [vmem:[#allocation7 + $0x380] sm:$0xff]
    %v4787 = vld [vmem:[#allocation7 + $0x388] sm:$0xff]
    %v4788 = vld [vmem:[#allocation7 + $0x390] sm:$0xff]
    %v4789 = vld [vmem:[#allocation7 + $0x398] sm:$0xff]
    %v4790 = vld [vmem:[#allocation7 + $0x3a0] sm:$0xff]
    %v4791 = vld [vmem:[#allocation7 + $0x3a8] sm:$0xff]
    %v4792 = vld [vmem:[#allocation7 + $0x3b0] sm:$0xff]
    %v4793 = vld [vmem:[#allocation7 + $0x3b8] sm:$0xff]
    %v4794 = vld [vmem:[#allocation7 + $0x3c0] sm:$0xff]
    %v4795 = vld [vmem:[#allocation7 + $0x3c8] sm:$0xff]
    %v4796 = vld [vmem:[#allocation7 + $0x3d0] sm:$0xff]
    %v4797 = vld [vmem:[#allocation7 + $0x3d8] sm:$0xff]
    %v4798 = vld [vmem:[#allocation7 + $0x3e0] sm:$0xff]
    %v4799 = vld [vmem:[#allocation7 + $0x3e8] sm:$0xff]
    %v4800 = vld [vmem:[#allocation7 + $0x3f0] sm:$0xff]
    %v4801 = vld [vmem:[#allocation7 + $0x3f8] sm:$0xff]
    %v4802 = vld [vmem:[#allocation42] sm:$0xf]
    %v4804 = vperm.slane %v4802, 0
    %v4805 = vperm.slane %v4802, 1
    %v4806 = vperm.slane %v4802, 2
    %v4807 = vperm.slane %v4802, 3
    %v4940 = vunpack.c.l.b16 %v4674
    %v4941 = vunpack.c.h.b16 %v4674
    %v4942 = vunpack.c.l.b16 %v4675
    %v4943 = vunpack.c.h.b16 %v4675
    %v4944 = vunpack.c.l.b16 %v4676
    %v4945 = vunpack.c.h.b16 %v4676
    %v4946 = vunpack.c.l.b16 %v4677
    %v4947 = vunpack.c.h.b16 %v4677
    %v4948 = vunpack.c.l.b16 %v4678
    %v4949 = vunpack.c.h.b16 %v4678
    %v4950 = vunpack.c.l.b16 %v4679
    %v4951 = vunpack.c.h.b16 %v4679
    %v4952 = vunpack.c.l.b16 %v4680
    %v4953 = vunpack.c.h.b16 %v4680
    %v4954 = vunpack.c.l.b16 %v4681
    %v4955 = vunpack.c.h.b16 %v4681
    %v4956 = vunpack.c.l.b16 %v4682
    %v4957 = vunpack.c.h.b16 %v4682
    %v4958 = vunpack.c.l.b16 %v4683
    %v4959 = vunpack.c.h.b16 %v4683
    %v4960 = vunpack.c.l.b16 %v4684
    %v4961 = vunpack.c.h.b16 %v4684
    %v4962 = vunpack.c.l.b16 %v4685
    %v4963 = vunpack.c.h.b16 %v4685
    %v4964 = vunpack.c.l.b16 %v4686
    %v4965 = vunpack.c.h.b16 %v4686
    %v4966 = vunpack.c.l.b16 %v4687
    %v4967 = vunpack.c.h.b16 %v4687
    %v4968 = vunpack.c.l.b16 %v4688
    %v4969 = vunpack.c.h.b16 %v4688
    %v4970 = vunpack.c.l.b16 %v4689
    %v4971 = vunpack.c.h.b16 %v4689
    %v4972 = vunpack.c.l.b16 %v4690
    %v4973 = vunpack.c.h.b16 %v4690
    %v4974 = vunpack.c.l.b16 %v4691
    %v4975 = vunpack.c.h.b16 %v4691
    %v4976 = vunpack.c.l.b16 %v4692
    %v4977 = vunpack.c.h.b16 %v4692
    %v4978 = vunpack.c.l.b16 %v4693
    %v4979 = vunpack.c.h.b16 %v4693
    %v4980 = vunpack.c.l.b16 %v4694
    %v4981 = vunpack.c.h.b16 %v4694
    %v4982 = vunpack.c.l.b16 %v4695
    %v4983 = vunpack.c.h.b16 %v4695
    %v4984 = vunpack.c.l.b16 %v4696
    %v4985 = vunpack.c.h.b16 %v4696
    %v4986 = vunpack.c.l.b16 %v4697
    %v4987 = vunpack.c.h.b16 %v4697
    %v4988 = vunpack.c.l.b16 %v4698
    %v4989 = vunpack.c.h.b16 %v4698
    %v4990 = vunpack.c.l.b16 %v4699
    %v4991 = vunpack.c.h.b16 %v4699
    %v4992 = vunpack.c.l.b16 %v4700
    %v4993 = vunpack.c.h.b16 %v4700
    %v4994 = vunpack.c.l.b16 %v4701
    %v4995 = vunpack.c.h.b16 %v4701
    %v4996 = vunpack.c.l.b16 %v4702
    %v4997 = vunpack.c.h.b16 %v4702
    %v4998 = vunpack.c.l.b16 %v4703
    %v4999 = vunpack.c.h.b16 %v4703
    %v5000 = vunpack.c.l.b16 %v4704
    %v5001 = vunpack.c.h.b16 %v4704
    %v5002 = vunpack.c.l.b16 %v4705
    %v5003 = vunpack.c.h.b16 %v4705
    %v5004 = vunpack.c.l.b16 %v4706
    %v5005 = vunpack.c.h.b16 %v4706
    %v5006 = vunpack.c.l.b16 %v4707
    %v5007 = vunpack.c.h.b16 %v4707
    %v5008 = vunpack.c.l.b16 %v4708
    %v5009 = vunpack.c.h.b16 %v4708
    %v5010 = vunpack.c.l.b16 %v4709
    %v5011 = vunpack.c.h.b16 %v4709
    %v5012 = vunpack.c.l.b16 %v4710
    %v5013 = vunpack.c.h.b16 %v4710
    %v5014 = vunpack.c.l.b16 %v4711
    %v5015 = vunpack.c.h.b16 %v4711
    %v5016 = vunpack.c.l.b16 %v4712
    %v5017 = vunpack.c.h.b16 %v4712
    %v5018 = vunpack.c.l.b16 %v4713
    %v5019 = vunpack.c.h.b16 %v4713
    %v5020 = vunpack.c.l.b16 %v4714
    %v5021 = vunpack.c.h.b16 %v4714
    %v5022 = vunpack.c.l.b16 %v4715
    %v5023 = vunpack.c.h.b16 %v4715
    %v5024 = vunpack.c.l.b16 %v4716
    %v5025 = vunpack.c.h.b16 %v4716
    %v5026 = vunpack.c.l.b16 %v4717
    %v5027 = vunpack.c.h.b16 %v4717
    %v5028 = vunpack.c.l.b16 %v4718
    %v5029 = vunpack.c.h.b16 %v4718
    %v5030 = vunpack.c.l.b16 %v4719
    %v5031 = vunpack.c.h.b16 %v4719
    %v5032 = vunpack.c.l.b16 %v4720
    %v5033 = vunpack.c.h.b16 %v4720
    %v5034 = vunpack.c.l.b16 %v4721
    %v5035 = vunpack.c.h.b16 %v4721
    %v5036 = vunpack.c.l.b16 %v4722
    %v5037 = vunpack.c.h.b16 %v4722
    %v5038 = vunpack.c.l.b16 %v4723
    %v5039 = vunpack.c.h.b16 %v4723
    %v5040 = vunpack.c.l.b16 %v4724
    %v5041 = vunpack.c.h.b16 %v4724
    %v5042 = vunpack.c.l.b16 %v4725
    %v5043 = vunpack.c.h.b16 %v4725
    %v5044 = vunpack.c.l.b16 %v4726
    %v5045 = vunpack.c.h.b16 %v4726
    %v5046 = vunpack.c.l.b16 %v4727
    %v5047 = vunpack.c.h.b16 %v4727
    %v5048 = vunpack.c.l.b16 %v4728
    %v5049 = vunpack.c.h.b16 %v4728
    %v5050 = vunpack.c.l.b16 %v4729
    %v5051 = vunpack.c.h.b16 %v4729
    %v5052 = vunpack.c.l.b16 %v4730
    %v5053 = vunpack.c.h.b16 %v4730
    %v5054 = vunpack.c.l.b16 %v4731
    %v5055 = vunpack.c.h.b16 %v4731
    %v5056 = vunpack.c.l.b16 %v4732
    %v5057 = vunpack.c.h.b16 %v4732
    %v5058 = vunpack.c.l.b16 %v4733
    %v5059 = vunpack.c.h.b16 %v4733
    %v5060 = vunpack.c.l.b16 %v4734
    %v5061 = vunpack.c.h.b16 %v4734
    %v5062 = vunpack.c.l.b16 %v4735
    %v5063 = vunpack.c.h.b16 %v4735
    %v5064 = vunpack.c.l.b16 %v4736
    %v5065 = vunpack.c.h.b16 %v4736
    %v5066 = vunpack.c.l.b16 %v4737
    %v5067 = vunpack.c.h.b16 %v4737
    %v5068 = vunpack.c.l.b16 %v4738
    %v5069 = vunpack.c.h.b16 %v4738
    %v5070 = vunpack.c.l.b16 %v4739
    %v5071 = vunpack.c.h.b16 %v4739
    %v5072 = vunpack.c.l.b16 %v4740
    %v5073 = vunpack.c.h.b16 %v4740
    %v5074 = vunpack.c.l.b16 %v4741
    %v5075 = vunpack.c.h.b16 %v4741
    %v5076 = vunpack.c.l.b16 %v4742
    %v5077 = vunpack.c.h.b16 %v4742
    %v5078 = vunpack.c.l.b16 %v4743
    %v5079 = vunpack.c.h.b16 %v4743
    %v5080 = vunpack.c.l.b16 %v4744
    %v5081 = vunpack.c.h.b16 %v4744
    %v5082 = vunpack.c.l.b16 %v4745
    %v5083 = vunpack.c.h.b16 %v4745
    %v5084 = vunpack.c.l.b16 %v4746
    %v5085 = vunpack.c.h.b16 %v4746
    %v5086 = vunpack.c.l.b16 %v4747
    %v5087 = vunpack.c.h.b16 %v4747
    %v5088 = vunpack.c.l.b16 %v4748
    %v5089 = vunpack.c.h.b16 %v4748
    %v5090 = vunpack.c.l.b16 %v4749
    %v5091 = vunpack.c.h.b16 %v4749
    %v5092 = vunpack.c.l.b16 %v4750
    %v5093 = vunpack.c.h.b16 %v4750
    %v5094 = vunpack.c.l.b16 %v4751
    %v5095 = vunpack.c.h.b16 %v4751
    %v5096 = vunpack.c.l.b16 %v4752
    %v5097 = vunpack.c.h.b16 %v4752
    %v5098 = vunpack.c.l.b16 %v4753
    %v5099 = vunpack.c.h.b16 %v4753
    %v5100 = vunpack.c.l.b16 %v4754
    %v5101 = vunpack.c.h.b16 %v4754
    %v5102 = vunpack.c.l.b16 %v4755
    %v5103 = vunpack.c.h.b16 %v4755
    %v5104 = vunpack.c.l.b16 %v4756
    %v5105 = vunpack.c.h.b16 %v4756
    %v5106 = vunpack.c.l.b16 %v4757
    %v5107 = vunpack.c.h.b16 %v4757
    %v5108 = vunpack.c.l.b16 %v4758
    %v5109 = vunpack.c.h.b16 %v4758
    %v5110 = vunpack.c.l.b16 %v4759
    %v5111 = vunpack.c.h.b16 %v4759
    %v5112 = vunpack.c.l.b16 %v4760
    %v5113 = vunpack.c.h.b16 %v4760
    %v5114 = vunpack.c.l.b16 %v4761
    %v5115 = vunpack.c.h.b16 %v4761
    %v5116 = vunpack.c.l.b16 %v4762
    %v5117 = vunpack.c.h.b16 %v4762
    %v5118 = vunpack.c.l.b16 %v4763
    %v5119 = vunpack.c.h.b16 %v4763
    %v5120 = vunpack.c.l.b16 %v4764
    %v5121 = vunpack.c.h.b16 %v4764
    %v5122 = vunpack.c.l.b16 %v4765
    %v5123 = vunpack.c.h.b16 %v4765
    %v5124 = vunpack.c.l.b16 %v4766
    %v5125 = vunpack.c.h.b16 %v4766
    %v5126 = vunpack.c.l.b16 %v4767
    %v5127 = vunpack.c.h.b16 %v4767
    %v5128 = vunpack.c.l.b16 %v4768
    %v5129 = vunpack.c.h.b16 %v4768
    %v5130 = vunpack.c.l.b16 %v4769
    %v5131 = vunpack.c.h.b16 %v4769
    %v5132 = vunpack.c.l.b16 %v4770
    %v5133 = vunpack.c.h.b16 %v4770
    %v5134 = vunpack.c.l.b16 %v4771
    %v5135 = vunpack.c.h.b16 %v4771
    %v5136 = vunpack.c.l.b16 %v4772
    %v5137 = vunpack.c.h.b16 %v4772
    %v5138 = vunpack.c.l.b16 %v4773
    %v5139 = vunpack.c.h.b16 %v4773
    %v5140 = vunpack.c.l.b16 %v4774
    %v5141 = vunpack.c.h.b16 %v4774
    %v5142 = vunpack.c.l.b16 %v4775
    %v5143 = vunpack.c.h.b16 %v4775
    %v5144 = vunpack.c.l.b16 %v4776
    %v5145 = vunpack.c.h.b16 %v4776
    %v5146 = vunpack.c.l.b16 %v4777
    %v5147 = vunpack.c.h.b16 %v4777
    %v5148 = vunpack.c.l.b16 %v4778
    %v5149 = vunpack.c.h.b16 %v4778
    %v5150 = vunpack.c.l.b16 %v4779
    %v5151 = vunpack.c.h.b16 %v4779
    %v5152 = vunpack.c.l.b16 %v4780
    %v5153 = vunpack.c.h.b16 %v4780
    %v5154 = vunpack.c.l.b16 %v4781
    %v5155 = vunpack.c.h.b16 %v4781
    %v5156 = vunpack.c.l.b16 %v4782
    %v5157 = vunpack.c.h.b16 %v4782
    %v5158 = vunpack.c.l.b16 %v4783
    %v5159 = vunpack.c.h.b16 %v4783
    %v5160 = vunpack.c.l.b16 %v4784
    %v5161 = vunpack.c.h.b16 %v4784
    %v5162 = vunpack.c.l.b16 %v4785
    %v5163 = vunpack.c.h.b16 %v4785
    %v5164 = vunpack.c.l.b16 %v4786
    %v5165 = vunpack.c.h.b16 %v4786
    %v5166 = vunpack.c.l.b16 %v4787
    %v5167 = vunpack.c.h.b16 %v4787
    %v5168 = vunpack.c.l.b16 %v4788
    %v5169 = vunpack.c.h.b16 %v4788
    %v5170 = vunpack.c.l.b16 %v4789
    %v5171 = vunpack.c.h.b16 %v4789
    %v5172 = vunpack.c.l.b16 %v4790
    %v5173 = vunpack.c.h.b16 %v4790
    %v5174 = vunpack.c.l.b16 %v4791
    %v5175 = vunpack.c.h.b16 %v4791
    %v5176 = vunpack.c.l.b16 %v4792
    %v5177 = vunpack.c.h.b16 %v4792
    %v5178 = vunpack.c.l.b16 %v4793
    %v5179 = vunpack.c.h.b16 %v4793
    %v5180 = vunpack.c.l.b16 %v4794
    %v5181 = vunpack.c.h.b16 %v4794
    %v5182 = vunpack.c.l.b16 %v4795
    %v5183 = vunpack.c.h.b16 %v4795
    %v5184 = vunpack.c.l.b16 %v4796
    %v5185 = vunpack.c.h.b16 %v4796
    %v5186 = vunpack.c.l.b16 %v4797
    %v5187 = vunpack.c.h.b16 %v4797
    %v5188 = vunpack.c.l.b16 %v4798
    %v5189 = vunpack.c.h.b16 %v4798
    %v5190 = vunpack.c.l.b16 %v4799
    %v5191 = vunpack.c.h.b16 %v4799
    %v5192 = vunpack.c.l.b16 %v4800
    %v5193 = vunpack.c.h.b16 %v4800
    %v5194 = vunpack.c.l.b16 %v4801
    %v5195 = vunpack.c.h.b16 %v4801
    %v5196 = vpack.c.b16 %v4944, %v4940
    %v5197 = vpack.c.b16 %v4945, %v4941
    %v5198 = vpack.c.b16 %v4946, %v4942
    %v5199 = vpack.c.b16 %v4947, %v4943
    %v5200 = vpack.c.b16 %v4952, %v4948
    %v5201 = vpack.c.b16 %v4953, %v4949
    %v5202 = vpack.c.b16 %v4954, %v4950
    %v5203 = vpack.c.b16 %v4955, %v4951
    %v5204 = vpack.c.b16 %v4960, %v4956
    %v5205 = vpack.c.b16 %v4961, %v4957
    %v5206 = vpack.c.b16 %v4962, %v4958
    %v5207 = vpack.c.b16 %v4963, %v4959
    %v5208 = vpack.c.b16 %v4968, %v4964
    %v5209 = vpack.c.b16 %v4969, %v4965
    %v5210 = vpack.c.b16 %v4970, %v4966
    %v5211 = vpack.c.b16 %v4971, %v4967
    %v5212 = vpack.c.b16 %v4976, %v4972
    %v5213 = vpack.c.b16 %v4977, %v4973
    %v5214 = vpack.c.b16 %v4978, %v4974
    %v5215 = vpack.c.b16 %v4979, %v4975
    %v5216 = vpack.c.b16 %v4984, %v4980
    %v5217 = vpack.c.b16 %v4985, %v4981
    %v5218 = vpack.c.b16 %v4986, %v4982
    %v5219 = vpack.c.b16 %v4987, %v4983
    %v5220 = vpack.c.b16 %v4992, %v4988
    %v5221 = vpack.c.b16 %v4993, %v4989
    %v5222 = vpack.c.b16 %v4994, %v4990
    %v5223 = vpack.c.b16 %v4995, %v4991
    %v5224 = vpack.c.b16 %v5000, %v4996
    %v5225 = vpack.c.b16 %v5001, %v4997
    %v5226 = vpack.c.b16 %v5002, %v4998
    %v5227 = vpack.c.b16 %v5003, %v4999
    %v5228 = vpack.c.b16 %v5008, %v5004
    %v5229 = vpack.c.b16 %v5009, %v5005
    %v5230 = vpack.c.b16 %v5010, %v5006
    %v5231 = vpack.c.b16 %v5011, %v5007
    %v5232 = vpack.c.b16 %v5016, %v5012
    %v5233 = vpack.c.b16 %v5017, %v5013
    %v5234 = vpack.c.b16 %v5018, %v5014
    %v5235 = vpack.c.b16 %v5019, %v5015
    %v5236 = vpack.c.b16 %v5024, %v5020
    %v5237 = vpack.c.b16 %v5025, %v5021
    %v5238 = vpack.c.b16 %v5026, %v5022
    %v5239 = vpack.c.b16 %v5027, %v5023
    %v5240 = vpack.c.b16 %v5032, %v5028
    %v5241 = vpack.c.b16 %v5033, %v5029
    %v5242 = vpack.c.b16 %v5034, %v5030
    %v5243 = vpack.c.b16 %v5035, %v5031
    %v5244 = vpack.c.b16 %v5040, %v5036
    %v5245 = vpack.c.b16 %v5041, %v5037
    %v5246 = vpack.c.b16 %v5042, %v5038
    %v5247 = vpack.c.b16 %v5043, %v5039
    %v5248 = vpack.c.b16 %v5048, %v5044
    %v5249 = vpack.c.b16 %v5049, %v5045
    %v5250 = vpack.c.b16 %v5050, %v5046
    %v5251 = vpack.c.b16 %v5051, %v5047
    %v5252 = vpack.c.b16 %v5056, %v5052
    %v5253 = vpack.c.b16 %v5057, %v5053
    %v5254 = vpack.c.b16 %v5058, %v5054
    %v5255 = vpack.c.b16 %v5059, %v5055
    %v5256 = vpack.c.b16 %v5064, %v5060
    %v5257 = vpack.c.b16 %v5065, %v5061
    %v5258 = vpack.c.b16 %v5066, %v5062
    %v5259 = vpack.c.b16 %v5067, %v5063
    %v5260 = vpack.c.b16 %v5072, %v5068
    %v5261 = vpack.c.b16 %v5073, %v5069
    %v5262 = vpack.c.b16 %v5074, %v5070
    %v5263 = vpack.c.b16 %v5075, %v5071
    %v5264 = vpack.c.b16 %v5080, %v5076
    %v5265 = vpack.c.b16 %v5081, %v5077
    %v5266 = vpack.c.b16 %v5082, %v5078
    %v5267 = vpack.c.b16 %v5083, %v5079
    %v5268 = vpack.c.b16 %v5088, %v5084
    %v5269 = vpack.c.b16 %v5089, %v5085
    %v5270 = vpack.c.b16 %v5090, %v5086
    %v5271 = vpack.c.b16 %v5091, %v5087
    %v5272 = vpack.c.b16 %v5096, %v5092
    %v5273 = vpack.c.b16 %v5097, %v5093
    %v5274 = vpack.c.b16 %v5098, %v5094
    %v5275 = vpack.c.b16 %v5099, %v5095
    %v5276 = vpack.c.b16 %v5104, %v5100
    %v5277 = vpack.c.b16 %v5105, %v5101
    %v5278 = vpack.c.b16 %v5106, %v5102
    %v5279 = vpack.c.b16 %v5107, %v5103
    %v5280 = vpack.c.b16 %v5112, %v5108
    %v5281 = vpack.c.b16 %v5113, %v5109
    %v5282 = vpack.c.b16 %v5114, %v5110
    %v5283 = vpack.c.b16 %v5115, %v5111
    %v5284 = vpack.c.b16 %v5120, %v5116
    %v5285 = vpack.c.b16 %v5121, %v5117
    %v5286 = vpack.c.b16 %v5122, %v5118
    %v5287 = vpack.c.b16 %v5123, %v5119
    %v5288 = vpack.c.b16 %v5128, %v5124
    %v5289 = vpack.c.b16 %v5129, %v5125
    %v5290 = vpack.c.b16 %v5130, %v5126
    %v5291 = vpack.c.b16 %v5131, %v5127
    %v5292 = vpack.c.b16 %v5136, %v5132
    %v5293 = vpack.c.b16 %v5137, %v5133
    %v5294 = vpack.c.b16 %v5138, %v5134
    %v5295 = vpack.c.b16 %v5139, %v5135
    %v5296 = vpack.c.b16 %v5144, %v5140
    %v5297 = vpack.c.b16 %v5145, %v5141
    %v5298 = vpack.c.b16 %v5146, %v5142
    %v5299 = vpack.c.b16 %v5147, %v5143
    %v5300 = vpack.c.b16 %v5152, %v5148
    %v5301 = vpack.c.b16 %v5153, %v5149
    %v5302 = vpack.c.b16 %v5154, %v5150
    %v5303 = vpack.c.b16 %v5155, %v5151
    %v5304 = vpack.c.b16 %v5160, %v5156
    %v5305 = vpack.c.b16 %v5161, %v5157
    %v5306 = vpack.c.b16 %v5162, %v5158
    %v5307 = vpack.c.b16 %v5163, %v5159
    %v5308 = vpack.c.b16 %v5168, %v5164
    %v5309 = vpack.c.b16 %v5169, %v5165
    %v5310 = vpack.c.b16 %v5170, %v5166
    %v5311 = vpack.c.b16 %v5171, %v5167
    %v5312 = vpack.c.b16 %v5176, %v5172
    %v5313 = vpack.c.b16 %v5177, %v5173
    %v5314 = vpack.c.b16 %v5178, %v5174
    %v5315 = vpack.c.b16 %v5179, %v5175
    %v5316 = vpack.c.b16 %v5184, %v5180
    %v5317 = vpack.c.b16 %v5185, %v5181
    %v5318 = vpack.c.b16 %v5186, %v5182
    %v5319 = vpack.c.b16 %v5187, %v5183
    %v5320 = vpack.c.b16 %v5192, %v5188
    %v5321 = vpack.c.b16 %v5193, %v5189
    %v5322 = vpack.c.b16 %v5194, %v5190
    %v5323 = vpack.c.b16 %v5195, %v5191
    %5452 = vmatpush.bf16.msra.mxu0 %v5224
    %5453 = vmatpush.bf16.msra.mxu0 %v5220
    %5454 = vmatpush.bf16.msra.mxu0 %v5216
    %5455 = vmatpush.bf16.msra.mxu0 %v5212
    %5456 = vmatpush.bf16.msra.mxu0 %v5208
    %5457 = vmatpush.bf16.msra.mxu0 %v5204
    %5458 = vmatpush.bf16.msra.mxu0 %v5200
    %5459 = vmatpush.bf16.msra.mxu0 %v5196
    %5460 = vmatmul.bf16.gmra.mxu0 %v4670
    %v5461 = vpop.f32.mrf.mxu0
    %v5462 = vadd.f32 %v4804, %v5461
    %v5463 = vpop.f32.mrf.mxu0
    %5464 = vdwg.mxu0
    %5465 = vmatpush.bf16.msra.mxu0 %v5256
    %5466 = vmatpush.bf16.msra.mxu0 %v5252
    %5467 = vmatpush.bf16.msra.mxu0 %v5248
    %5468 = vmatpush.bf16.msra.mxu0 %v5244
    %5469 = vmatpush.bf16.msra.mxu0 %v5240
    %5470 = vmatpush.bf16.msra.mxu0 %v5236
    %5471 = vmatpush.bf16.msra.mxu0 %v5232
    %5472 = vmatpush.bf16.msra.mxu0 %v5228
    %5473 = vmatmul.bf16.gmra.mxu0 %v4671
    %v5474 = vpop.f32.mrf.mxu0
    %v5475 = vadd.f32 %v5462, %v5474
    %v5476 = vpop.f32.mrf.mxu0
    %5477 = vdwg.mxu0
    %5478 = vmatpush.bf16.msra.mxu0 %v5288
    %5479 = vmatpush.bf16.msra.mxu0 %v5284
    %5480 = vmatpush.bf16.msra.mxu0 %v5280
    %5481 = vmatpush.bf16.msra.mxu0 %v5276
    %5482 = vmatpush.bf16.msra.mxu0 %v5272
    %5483 = vmatpush.bf16.msra.mxu0 %v5268
    %5484 = vmatpush.bf16.msra.mxu0 %v5264
    %5485 = vmatpush.bf16.msra.mxu0 %v5260
    %5486 = vmatmul.bf16.gmra.mxu0 %v4672
    %v5487 = vpop.f32.mrf.mxu0
    %v5488 = vadd.f32 %v5475, %v5487
    %v5489 = vpop.f32.mrf.mxu0
    %5490 = vdwg.mxu0
    %5491 = vmatpush.bf16.msra.mxu0 %v5320
    %5492 = vmatpush.bf16.msra.mxu0 %v5316
    %5493 = vmatpush.bf16.msra.mxu0 %v5312
    %5494 = vmatpush.bf16.msra.mxu0 %v5308
    %5495 = vmatpush.bf16.msra.mxu0 %v5304
    %5496 = vmatpush.bf16.msra.mxu0 %v5300
    %5497 = vmatpush.bf16.msra.mxu0 %v5296
    %5498 = vmatpush.bf16.msra.mxu0 %v5292
    %5499 = vmatmul.bf16.gmra.mxu0 %v4673
    %v5500 = vpop.f32.mrf.mxu0
    %v5501 = vadd.f32 %v5488, %v5500
    %v5502 = vpop.f32.mrf.mxu0
    %5503 = vdwg.mxu0
    %5504 = vmatpush.bf16.msra.mxu0 %v5225
    %5505 = vmatpush.bf16.msra.mxu0 %v5221
    %5506 = vmatpush.bf16.msra.mxu0 %v5217
    %5507 = vmatpush.bf16.msra.mxu0 %v5213
    %5508 = vmatpush.bf16.msra.mxu0 %v5209
    %5509 = vmatpush.bf16.msra.mxu0 %v5205
    %5510 = vmatpush.bf16.msra.mxu0 %v5201
    %5511 = vmatpush.bf16.msra.mxu0 %v5197
    %5512 = vmatmul.bf16.gmra.mxu0 %v4670
    %v5513 = vpop.f32.mrf.mxu0
    %v5514 = vadd.f32 %v4805, %v5513
    %v5515 = vpop.f32.mrf.mxu0
    %5516 = vdwg.mxu0
    %5517 = vmatpush.bf16.msra.mxu0 %v5257
    %5518 = vmatpush.bf16.msra.mxu0 %v5253
    %5519 = vmatpush.bf16.msra.mxu0 %v5249
    %5520 = vmatpush.bf16.msra.mxu0 %v5245
    %5521 = vmatpush.bf16.msra.mxu0 %v5241
    %5522 = vmatpush.bf16.msra.mxu0 %v5237
    %5523 = vmatpush.bf16.msra.mxu0 %v5233
    %5524 = vmatpush.bf16.msra.mxu0 %v5229
    %5525 = vmatmul.bf16.gmra.mxu0 %v4671
    %v5526 = vpop.f32.mrf.mxu0
    %v5527 = vadd.f32 %v5514, %v5526
    %v5528 = vpop.f32.mrf.mxu0
    %5529 = vdwg.mxu0
    %5530 = vmatpush.bf16.msra.mxu0 %v5289
    %5531 = vmatpush.bf16.msra.mxu0 %v5285
    %5532 = vmatpush.bf16.msra.mxu0 %v5281
    %5533 = vmatpush.bf16.msra.mxu0 %v5277
    %5534 = vmatpush.bf16.msra.mxu0 %v5273
    %5535 = vmatpush.bf16.msra.mxu0 %v5269
    %5536 = vmatpush.bf16.msra.mxu0 %v5265
    %5537 = vmatpush.bf16.msra.mxu0 %v5261
    %5538 = vmatmul.bf16.gmra.mxu0 %v4672
    %v5539 = vpop.f32.mrf.mxu0
    %v5540 = vadd.f32 %v5527, %v5539
    %v5541 = vpop.f32.mrf.mxu0
    %5542 = vdwg.mxu0
    %5543 = vmatpush.bf16.msra.mxu0 %v5321
    %5544 = vmatpush.bf16.msra.mxu0 %v5317
    %5545 = vmatpush.bf16.msra.mxu0 %v5313
    %5546 = vmatpush.bf16.msra.mxu0 %v5309
    %5547 = vmatpush.bf16.msra.mxu0 %v5305
    %5548 = vmatpush.bf16.msra.mxu0 %v5301
    %5549 = vmatpush.bf16.msra.mxu0 %v5297
    %5550 = vmatpush.bf16.msra.mxu0 %v5293
    %5551 = vmatmul.bf16.gmra.mxu0 %v4673
    %v5552 = vpop.f32.mrf.mxu0
    %v5553 = vadd.f32 %v5540, %v5552
    %v5554 = vpop.f32.mrf.mxu0
    %5555 = vdwg.mxu0
    %5556 = vmatpush.bf16.msra.mxu0 %v5226
    %5557 = vmatpush.bf16.msra.mxu0 %v5222
    %5558 = vmatpush.bf16.msra.mxu0 %v5218
    %5559 = vmatpush.bf16.msra.mxu0 %v5214
    %5560 = vmatpush.bf16.msra.mxu0 %v5210
    %5561 = vmatpush.bf16.msra.mxu0 %v5206
    %5562 = vmatpush.bf16.msra.mxu0 %v5202
    %5563 = vmatpush.bf16.msra.mxu0 %v5198
    %5564 = vmatmul.bf16.gmra.mxu0 %v4670
    %v5565 = vpop.f32.mrf.mxu0
    %v5566 = vadd.f32 %v4806, %v5565
    %v5567 = vpop.f32.mrf.mxu0
    %5568 = vdwg.mxu0
    %5569 = vmatpush.bf16.msra.mxu0 %v5258
    %5570 = vmatpush.bf16.msra.mxu0 %v5254
    %5571 = vmatpush.bf16.msra.mxu0 %v5250
    %5572 = vmatpush.bf16.msra.mxu0 %v5246
    %5573 = vmatpush.bf16.msra.mxu0 %v5242
    %5574 = vmatpush.bf16.msra.mxu0 %v5238
    %5575 = vmatpush.bf16.msra.mxu0 %v5234
    %5576 = vmatpush.bf16.msra.mxu0 %v5230
    %5577 = vmatmul.bf16.gmra.mxu0 %v4671
    %v5578 = vpop.f32.mrf.mxu0
    %v5579 = vadd.f32 %v5566, %v5578
    %v5580 = vpop.f32.mrf.mxu0
    %5581 = vdwg.mxu0
    %5582 = vmatpush.bf16.msra.mxu0 %v5290
    %5583 = vmatpush.bf16.msra.mxu0 %v5286
    %5584 = vmatpush.bf16.msra.mxu0 %v5282
    %5585 = vmatpush.bf16.msra.mxu0 %v5278
    %5586 = vmatpush.bf16.msra.mxu0 %v5274
    %5587 = vmatpush.bf16.msra.mxu0 %v5270
    %5588 = vmatpush.bf16.msra.mxu0 %v5266
    %5589 = vmatpush.bf16.msra.mxu0 %v5262
    %5590 = vmatmul.bf16.gmra.mxu0 %v4672
    %v5591 = vpop.f32.mrf.mxu0
    %v5592 = vadd.f32 %v5579, %v5591
    %v5593 = vpop.f32.mrf.mxu0
    %5594 = vdwg.mxu0
    %5595 = vmatpush.bf16.msra.mxu0 %v5322
    %5596 = vmatpush.bf16.msra.mxu0 %v5318
    %5597 = vmatpush.bf16.msra.mxu0 %v5314
    %5598 = vmatpush.bf16.msra.mxu0 %v5310
    %5599 = vmatpush.bf16.msra.mxu0 %v5306
    %5600 = vmatpush.bf16.msra.mxu0 %v5302
    %5601 = vmatpush.bf16.msra.mxu0 %v5298
    %5602 = vmatpush.bf16.msra.mxu0 %v5294
    %5603 = vmatmul.bf16.gmra.mxu0 %v4673
    %v5604 = vpop.f32.mrf.mxu0
    %v5605 = vadd.f32 %v5592, %v5604
    %v5606 = vpop.f32.mrf.mxu0
    %5607 = vdwg.mxu0
    %5608 = vmatpush.bf16.msra.mxu0 %v5227
    %5609 = vmatpush.bf16.msra.mxu0 %v5223
    %5610 = vmatpush.bf16.msra.mxu0 %v5219
    %5611 = vmatpush.bf16.msra.mxu0 %v5215
    %5612 = vmatpush.bf16.msra.mxu0 %v5211
    %5613 = vmatpush.bf16.msra.mxu0 %v5207
    %5614 = vmatpush.bf16.msra.mxu0 %v5203
    %5615 = vmatpush.bf16.msra.mxu0 %v5199
    %5616 = vmatmul.bf16.gmra.mxu0 %v4670
    %v5617 = vpop.f32.mrf.mxu0
    %v5618 = vadd.f32 %v4807, %v5617
    %v5619 = vpop.f32.mrf.mxu0
    %5620 = vdwg.mxu0
    %5621 = vmatpush.bf16.msra.mxu0 %v5259
    %5622 = vmatpush.bf16.msra.mxu0 %v5255
    %5623 = vmatpush.bf16.msra.mxu0 %v5251
    %5624 = vmatpush.bf16.msra.mxu0 %v5247
    %5625 = vmatpush.bf16.msra.mxu0 %v5243
    %5626 = vmatpush.bf16.msra.mxu0 %v5239
    %5627 = vmatpush.bf16.msra.mxu0 %v5235
    %5628 = vmatpush.bf16.msra.mxu0 %v5231
    %5629 = vmatmul.bf16.gmra.mxu0 %v4671
    %v5630 = vpop.f32.mrf.mxu0
    %v5631 = vadd.f32 %v5618, %v5630
    %v5632 = vpop.f32.mrf.mxu0
    %5633 = vdwg.mxu0
    %5634 = vmatpush.bf16.msra.mxu0 %v5291
    %5635 = vmatpush.bf16.msra.mxu0 %v5287
    %5636 = vmatpush.bf16.msra.mxu0 %v5283
    %5637 = vmatpush.bf16.msra.mxu0 %v5279
    %5638 = vmatpush.bf16.msra.mxu0 %v5275
    %5639 = vmatpush.bf16.msra.mxu0 %v5271
    %5640 = vmatpush.bf16.msra.mxu0 %v5267
    %5641 = vmatpush.bf16.msra.mxu0 %v5263
    %5642 = vmatmul.bf16.gmra.mxu0 %v4672
    %v5643 = vpop.f32.mrf.mxu0
    %v5644 = vadd.f32 %v5631, %v5643
    %v5645 = vpop.f32.mrf.mxu0
    %5646 = vdwg.mxu0
    %5647 = vmatpush.bf16.msra.mxu0 %v5323
    %5648 = vmatpush.bf16.msra.mxu0 %v5319
    %5649 = vmatpush.bf16.msra.mxu0 %v5315
    %5650 = vmatpush.bf16.msra.mxu0 %v5311
    %5651 = vmatpush.bf16.msra.mxu0 %v5307
    %5652 = vmatpush.bf16.msra.mxu0 %v5303
    %5653 = vmatpush.bf16.msra.mxu0 %v5299
    %5654 = vmatpush.bf16.msra.mxu0 %v5295
    %5655 = vmatmul.bf16.gmra.mxu0 %v4673
    %v5656 = vpop.f32.mrf.mxu0
    %v5657 = vadd.f32 %v5644, %v5656
    %v5658 = vpop.f32.mrf.mxu0
    %5659 = vdwg.mxu0
    %v5660 = vmax.f32 %v5501, 0.0
    %v5661 = vmax.f32 %v5553, 0.0
    %v5662 = vmax.f32 %v5605, 0.0
    %v5663 = vmax.f32 %v5657, 0.0
    %v5664 = vpack.c.bf16 %v5660, %v5660
    %v5665 = vpack.c.bf16 %v5661, %v5661
    %v5666 = vpack.c.bf16 %v5662, %v5662
    %v5667 = vpack.c.bf16 %v5663, %v5663
    %v5668 = vld [vmem:[#allocation9] sm:$0xff]
    %v5669 = vld [vmem:[#allocation9 + $0x8] sm:$0xff]
    %v5670 = vld [vmem:[#allocation9 + $0x10] sm:$0xff]
    %v5671 = vld [vmem:[#allocation9 + $0x18] sm:$0xff]
    %v5672 = vld [vmem:[#allocation9 + $0x20] sm:$0xff]
    %v5673 = vld [vmem:[#allocation9 + $0x28] sm:$0xff]
    %v5674 = vld [vmem:[#allocation9 + $0x30] sm:$0xff]
    %v5675 = vld [vmem:[#allocation9 + $0x38] sm:$0xff]
    %v5676 = vld [vmem:[#allocation9 + $0x40] sm:$0xff]
    %v5677 = vld [vmem:[#allocation9 + $0x48] sm:$0xff]
    %v5678 = vld [vmem:[#allocation9 + $0x50] sm:$0xff]
    %v5679 = vld [vmem:[#allocation9 + $0x58] sm:$0xff]
    %v5680 = vld [vmem:[#allocation9 + $0x60] sm:$0xff]
    %v5681 = vld [vmem:[#allocation9 + $0x68] sm:$0xff]
    %v5682 = vld [vmem:[#allocation9 + $0x70] sm:$0xff]
    %v5683 = vld [vmem:[#allocation9 + $0x78] sm:$0xff]
    %v5684 = vld [vmem:[#allocation9 + $0x80] sm:$0xff]
    %v5685 = vld [vmem:[#allocation9 + $0x88] sm:$0xff]
    %v5686 = vld [vmem:[#allocation9 + $0x90] sm:$0xff]
    %v5687 = vld [vmem:[#allocation9 + $0x98] sm:$0xff]
    %v5688 = vld [vmem:[#allocation9 + $0xa0] sm:$0xff]
    %v5689 = vld [vmem:[#allocation9 + $0xa8] sm:$0xff]
    %v5690 = vld [vmem:[#allocation9 + $0xb0] sm:$0xff]
    %v5691 = vld [vmem:[#allocation9 + $0xb8] sm:$0xff]
    %v5692 = vld [vmem:[#allocation9 + $0xc0] sm:$0xff]
    %v5693 = vld [vmem:[#allocation9 + $0xc8] sm:$0xff]
    %v5694 = vld [vmem:[#allocation9 + $0xd0] sm:$0xff]
    %v5695 = vld [vmem:[#allocation9 + $0xd8] sm:$0xff]
    %v5696 = vld [vmem:[#allocation9 + $0xe0] sm:$0xff]
    %v5697 = vld [vmem:[#allocation9 + $0xe8] sm:$0xff]
    %v5698 = vld [vmem:[#allocation9 + $0xf0] sm:$0xff]
    %v5699 = vld [vmem:[#allocation9 + $0xf8] sm:$0xff]
    %v5700 = vld [vmem:[#allocation9 + $0x100] sm:$0xff]
    %v5701 = vld [vmem:[#allocation9 + $0x108] sm:$0xff]
    %v5702 = vld [vmem:[#allocation9 + $0x110] sm:$0xff]
    %v5703 = vld [vmem:[#allocation9 + $0x118] sm:$0xff]
    %v5704 = vld [vmem:[#allocation9 + $0x120] sm:$0xff]
    %v5705 = vld [vmem:[#allocation9 + $0x128] sm:$0xff]
    %v5706 = vld [vmem:[#allocation9 + $0x130] sm:$0xff]
    %v5707 = vld [vmem:[#allocation9 + $0x138] sm:$0xff]
    %v5708 = vld [vmem:[#allocation9 + $0x140] sm:$0xff]
    %v5709 = vld [vmem:[#allocation9 + $0x148] sm:$0xff]
    %v5710 = vld [vmem:[#allocation9 + $0x150] sm:$0xff]
    %v5711 = vld [vmem:[#allocation9 + $0x158] sm:$0xff]
    %v5712 = vld [vmem:[#allocation9 + $0x160] sm:$0xff]
    %v5713 = vld [vmem:[#allocation9 + $0x168] sm:$0xff]
    %v5714 = vld [vmem:[#allocation9 + $0x170] sm:$0xff]
    %v5715 = vld [vmem:[#allocation9 + $0x178] sm:$0xff]
    %v5716 = vld [vmem:[#allocation9 + $0x180] sm:$0xff]
    %v5717 = vld [vmem:[#allocation9 + $0x188] sm:$0xff]
    %v5718 = vld [vmem:[#allocation9 + $0x190] sm:$0xff]
    %v5719 = vld [vmem:[#allocation9 + $0x198] sm:$0xff]
    %v5720 = vld [vmem:[#allocation9 + $0x1a0] sm:$0xff]
    %v5721 = vld [vmem:[#allocation9 + $0x1a8] sm:$0xff]
    %v5722 = vld [vmem:[#allocation9 + $0x1b0] sm:$0xff]
    %v5723 = vld [vmem:[#allocation9 + $0x1b8] sm:$0xff]
    %v5724 = vld [vmem:[#allocation9 + $0x1c0] sm:$0xff]
    %v5725 = vld [vmem:[#allocation9 + $0x1c8] sm:$0xff]
    %v5726 = vld [vmem:[#allocation9 + $0x1d0] sm:$0xff]
    %v5727 = vld [vmem:[#allocation9 + $0x1d8] sm:$0xff]
    %v5728 = vld [vmem:[#allocation9 + $0x1e0] sm:$0xff]
    %v5729 = vld [vmem:[#allocation9 + $0x1e8] sm:$0xff]
    %v5730 = vld [vmem:[#allocation9 + $0x1f0] sm:$0xff]
    %v5731 = vld [vmem:[#allocation9 + $0x1f8] sm:$0xff]
    %v5732 = vld [vmem:[#allocation9 + $0x200] sm:$0xff]
    %v5733 = vld [vmem:[#allocation9 + $0x208] sm:$0xff]
    %v5734 = vld [vmem:[#allocation9 + $0x210] sm:$0xff]
    %v5735 = vld [vmem:[#allocation9 + $0x218] sm:$0xff]
    %v5736 = vld [vmem:[#allocation9 + $0x220] sm:$0xff]
    %v5737 = vld [vmem:[#allocation9 + $0x228] sm:$0xff]
    %v5738 = vld [vmem:[#allocation9 + $0x230] sm:$0xff]
    %v5739 = vld [vmem:[#allocation9 + $0x238] sm:$0xff]
    %v5740 = vld [vmem:[#allocation9 + $0x240] sm:$0xff]
    %v5741 = vld [vmem:[#allocation9 + $0x248] sm:$0xff]
    %v5742 = vld [vmem:[#allocation9 + $0x250] sm:$0xff]
    %v5743 = vld [vmem:[#allocation9 + $0x258] sm:$0xff]
    %v5744 = vld [vmem:[#allocation9 + $0x260] sm:$0xff]
    %v5745 = vld [vmem:[#allocation9 + $0x268] sm:$0xff]
    %v5746 = vld [vmem:[#allocation9 + $0x270] sm:$0xff]
    %v5747 = vld [vmem:[#allocation9 + $0x278] sm:$0xff]
    %v5748 = vld [vmem:[#allocation9 + $0x280] sm:$0xff]
    %v5749 = vld [vmem:[#allocation9 + $0x288] sm:$0xff]
    %v5750 = vld [vmem:[#allocation9 + $0x290] sm:$0xff]
    %v5751 = vld [vmem:[#allocation9 + $0x298] sm:$0xff]
    %v5752 = vld [vmem:[#allocation9 + $0x2a0] sm:$0xff]
    %v5753 = vld [vmem:[#allocation9 + $0x2a8] sm:$0xff]
    %v5754 = vld [vmem:[#allocation9 + $0x2b0] sm:$0xff]
    %v5755 = vld [vmem:[#allocation9 + $0x2b8] sm:$0xff]
    %v5756 = vld [vmem:[#allocation9 + $0x2c0] sm:$0xff]
    %v5757 = vld [vmem:[#allocation9 + $0x2c8] sm:$0xff]
    %v5758 = vld [vmem:[#allocation9 + $0x2d0] sm:$0xff]
    %v5759 = vld [vmem:[#allocation9 + $0x2d8] sm:$0xff]
    %v5760 = vld [vmem:[#allocation9 + $0x2e0] sm:$0xff]
    %v5761 = vld [vmem:[#allocation9 + $0x2e8] sm:$0xff]
    %v5762 = vld [vmem:[#allocation9 + $0x2f0] sm:$0xff]
    %v5763 = vld [vmem:[#allocation9 + $0x2f8] sm:$0xff]
    %v5764 = vld [vmem:[#allocation9 + $0x300] sm:$0xff]
    %v5765 = vld [vmem:[#allocation9 + $0x308] sm:$0xff]
    %v5766 = vld [vmem:[#allocation9 + $0x310] sm:$0xff]
    %v5767 = vld [vmem:[#allocation9 + $0x318] sm:$0xff]
    %v5768 = vld [vmem:[#allocation9 + $0x320] sm:$0xff]
    %v5769 = vld [vmem:[#allocation9 + $0x328] sm:$0xff]
    %v5770 = vld [vmem:[#allocation9 + $0x330] sm:$0xff]
    %v5771 = vld [vmem:[#allocation9 + $0x338] sm:$0xff]
    %v5772 = vld [vmem:[#allocation9 + $0x340] sm:$0xff]
    %v5773 = vld [vmem:[#allocation9 + $0x348] sm:$0xff]
    %v5774 = vld [vmem:[#allocation9 + $0x350] sm:$0xff]
    %v5775 = vld [vmem:[#allocation9 + $0x358] sm:$0xff]
    %v5776 = vld [vmem:[#allocation9 + $0x360] sm:$0xff]
    %v5777 = vld [vmem:[#allocation9 + $0x368] sm:$0xff]
    %v5778 = vld [vmem:[#allocation9 + $0x370] sm:$0xff]
    %v5779 = vld [vmem:[#allocation9 + $0x378] sm:$0xff]
    %v5780 = vld [vmem:[#allocation9 + $0x380] sm:$0xff]
    %v5781 = vld [vmem:[#allocation9 + $0x388] sm:$0xff]
    %v5782 = vld [vmem:[#allocation9 + $0x390] sm:$0xff]
    %v5783 = vld [vmem:[#allocation9 + $0x398] sm:$0xff]
    %v5784 = vld [vmem:[#allocation9 + $0x3a0] sm:$0xff]
    %v5785 = vld [vmem:[#allocation9 + $0x3a8] sm:$0xff]
    %v5786 = vld [vmem:[#allocation9 + $0x3b0] sm:$0xff]
    %v5787 = vld [vmem:[#allocation9 + $0x3b8] sm:$0xff]
    %v5788 = vld [vmem:[#allocation9 + $0x3c0] sm:$0xff]
    %v5789 = vld [vmem:[#allocation9 + $0x3c8] sm:$0xff]
    %v5790 = vld [vmem:[#allocation9 + $0x3d0] sm:$0xff]
    %v5791 = vld [vmem:[#allocation9 + $0x3d8] sm:$0xff]
    %v5792 = vld [vmem:[#allocation9 + $0x3e0] sm:$0xff]
    %v5793 = vld [vmem:[#allocation9 + $0x3e8] sm:$0xff]
    %v5794 = vld [vmem:[#allocation9 + $0x3f0] sm:$0xff]
    %v5795 = vld [vmem:[#allocation9 + $0x3f8] sm:$0xff]
    %v5796 = vld [vmem:[%s67] sm:$0xf]
    %v5798 = vperm.slane %v5796, 0
    %v5799 = vperm.slane %v5796, 1
    %v5800 = vperm.slane %v5796, 2
    %v5801 = vperm.slane %v5796, 3
    %v5934 = vunpack.c.l.b16 %v5668
    %v5935 = vunpack.c.h.b16 %v5668
    %v5936 = vunpack.c.l.b16 %v5669
    %v5937 = vunpack.c.h.b16 %v5669
    %v5938 = vunpack.c.l.b16 %v5670
    %v5939 = vunpack.c.h.b16 %v5670
    %v5940 = vunpack.c.l.b16 %v5671
    %v5941 = vunpack.c.h.b16 %v5671
    %v5942 = vunpack.c.l.b16 %v5672
    %v5943 = vunpack.c.h.b16 %v5672
    %v5944 = vunpack.c.l.b16 %v5673
    %v5945 = vunpack.c.h.b16 %v5673
    %v5946 = vunpack.c.l.b16 %v5674
    %v5947 = vunpack.c.h.b16 %v5674
    %v5948 = vunpack.c.l.b16 %v5675
    %v5949 = vunpack.c.h.b16 %v5675
    %v5950 = vunpack.c.l.b16 %v5676
    %v5951 = vunpack.c.h.b16 %v5676
    %v5952 = vunpack.c.l.b16 %v5677
    %v5953 = vunpack.c.h.b16 %v5677
    %v5954 = vunpack.c.l.b16 %v5678
    %v5955 = vunpack.c.h.b16 %v5678
    %v5956 = vunpack.c.l.b16 %v5679
    %v5957 = vunpack.c.h.b16 %v5679
    %v5958 = vunpack.c.l.b16 %v5680
    %v5959 = vunpack.c.h.b16 %v5680
    %v5960 = vunpack.c.l.b16 %v5681
    %v5961 = vunpack.c.h.b16 %v5681
    %v5962 = vunpack.c.l.b16 %v5682
    %v5963 = vunpack.c.h.b16 %v5682
    %v5964 = vunpack.c.l.b16 %v5683
    %v5965 = vunpack.c.h.b16 %v5683
    %v5966 = vunpack.c.l.b16 %v5684
    %v5967 = vunpack.c.h.b16 %v5684
    %v5968 = vunpack.c.l.b16 %v5685
    %v5969 = vunpack.c.h.b16 %v5685
    %v5970 = vunpack.c.l.b16 %v5686
    %v5971 = vunpack.c.h.b16 %v5686
    %v5972 = vunpack.c.l.b16 %v5687
    %v5973 = vunpack.c.h.b16 %v5687
    %v5974 = vunpack.c.l.b16 %v5688
    %v5975 = vunpack.c.h.b16 %v5688
    %v5976 = vunpack.c.l.b16 %v5689
    %v5977 = vunpack.c.h.b16 %v5689
    %v5978 = vunpack.c.l.b16 %v5690
    %v5979 = vunpack.c.h.b16 %v5690
    %v5980 = vunpack.c.l.b16 %v5691
    %v5981 = vunpack.c.h.b16 %v5691
    %v5982 = vunpack.c.l.b16 %v5692
    %v5983 = vunpack.c.h.b16 %v5692
    %v5984 = vunpack.c.l.b16 %v5693
    %v5985 = vunpack.c.h.b16 %v5693
    %v5986 = vunpack.c.l.b16 %v5694
    %v5987 = vunpack.c.h.b16 %v5694
    %v5988 = vunpack.c.l.b16 %v5695
    %v5989 = vunpack.c.h.b16 %v5695
    %v5990 = vunpack.c.l.b16 %v5696
    %v5991 = vunpack.c.h.b16 %v5696
    %v5992 = vunpack.c.l.b16 %v5697
    %v5993 = vunpack.c.h.b16 %v5697
    %v5994 = vunpack.c.l.b16 %v5698
    %v5995 = vunpack.c.h.b16 %v5698
    %v5996 = vunpack.c.l.b16 %v5699
    %v5997 = vunpack.c.h.b16 %v5699
    %v5998 = vunpack.c.l.b16 %v5700
    %v5999 = vunpack.c.h.b16 %v5700
    %v6000 = vunpack.c.l.b16 %v5701
    %v6001 = vunpack.c.h.b16 %v5701
    %v6002 = vunpack.c.l.b16 %v5702
    %v6003 = vunpack.c.h.b16 %v5702
    %v6004 = vunpack.c.l.b16 %v5703
    %v6005 = vunpack.c.h.b16 %v5703
    %v6006 = vunpack.c.l.b16 %v5704
    %v6007 = vunpack.c.h.b16 %v5704
    %v6008 = vunpack.c.l.b16 %v5705
    %v6009 = vunpack.c.h.b16 %v5705
    %v6010 = vunpack.c.l.b16 %v5706
    %v6011 = vunpack.c.h.b16 %v5706
    %v6012 = vunpack.c.l.b16 %v5707
    %v6013 = vunpack.c.h.b16 %v5707
    %v6014 = vunpack.c.l.b16 %v5708
    %v6015 = vunpack.c.h.b16 %v5708
    %v6016 = vunpack.c.l.b16 %v5709
    %v6017 = vunpack.c.h.b16 %v5709
    %v6018 = vunpack.c.l.b16 %v5710
    %v6019 = vunpack.c.h.b16 %v5710
    %v6020 = vunpack.c.l.b16 %v5711
    %v6021 = vunpack.c.h.b16 %v5711
    %v6022 = vunpack.c.l.b16 %v5712
    %v6023 = vunpack.c.h.b16 %v5712
    %v6024 = vunpack.c.l.b16 %v5713
    %v6025 = vunpack.c.h.b16 %v5713
    %v6026 = vunpack.c.l.b16 %v5714
    %v6027 = vunpack.c.h.b16 %v5714
    %v6028 = vunpack.c.l.b16 %v5715
    %v6029 = vunpack.c.h.b16 %v5715
    %v6030 = vunpack.c.l.b16 %v5716
    %v6031 = vunpack.c.h.b16 %v5716
    %v6032 = vunpack.c.l.b16 %v5717
    %v6033 = vunpack.c.h.b16 %v5717
    %v6034 = vunpack.c.l.b16 %v5718
    %v6035 = vunpack.c.h.b16 %v5718
    %v6036 = vunpack.c.l.b16 %v5719
    %v6037 = vunpack.c.h.b16 %v5719
    %v6038 = vunpack.c.l.b16 %v5720
    %v6039 = vunpack.c.h.b16 %v5720
    %v6040 = vunpack.c.l.b16 %v5721
    %v6041 = vunpack.c.h.b16 %v5721
    %v6042 = vunpack.c.l.b16 %v5722
    %v6043 = vunpack.c.h.b16 %v5722
    %v6044 = vunpack.c.l.b16 %v5723
    %v6045 = vunpack.c.h.b16 %v5723
    %v6046 = vunpack.c.l.b16 %v5724
    %v6047 = vunpack.c.h.b16 %v5724
    %v6048 = vunpack.c.l.b16 %v5725
    %v6049 = vunpack.c.h.b16 %v5725
    %v6050 = vunpack.c.l.b16 %v5726
    %v6051 = vunpack.c.h.b16 %v5726
    %v6052 = vunpack.c.l.b16 %v5727
    %v6053 = vunpack.c.h.b16 %v5727
    %v6054 = vunpack.c.l.b16 %v5728
    %v6055 = vunpack.c.h.b16 %v5728
    %v6056 = vunpack.c.l.b16 %v5729
    %v6057 = vunpack.c.h.b16 %v5729
    %v6058 = vunpack.c.l.b16 %v5730
    %v6059 = vunpack.c.h.b16 %v5730
    %v6060 = vunpack.c.l.b16 %v5731
    %v6061 = vunpack.c.h.b16 %v5731
    %v6062 = vunpack.c.l.b16 %v5732
    %v6063 = vunpack.c.h.b16 %v5732
    %v6064 = vunpack.c.l.b16 %v5733
    %v6065 = vunpack.c.h.b16 %v5733
    %v6066 = vunpack.c.l.b16 %v5734
    %v6067 = vunpack.c.h.b16 %v5734
    %v6068 = vunpack.c.l.b16 %v5735
    %v6069 = vunpack.c.h.b16 %v5735
    %v6070 = vunpack.c.l.b16 %v5736
    %v6071 = vunpack.c.h.b16 %v5736
    %v6072 = vunpack.c.l.b16 %v5737
    %v6073 = vunpack.c.h.b16 %v5737
    %v6074 = vunpack.c.l.b16 %v5738
    %v6075 = vunpack.c.h.b16 %v5738
    %v6076 = vunpack.c.l.b16 %v5739
    %v6077 = vunpack.c.h.b16 %v5739
    %v6078 = vunpack.c.l.b16 %v5740
    %v6079 = vunpack.c.h.b16 %v5740
    %v6080 = vunpack.c.l.b16 %v5741
    %v6081 = vunpack.c.h.b16 %v5741
    %v6082 = vunpack.c.l.b16 %v5742
    %v6083 = vunpack.c.h.b16 %v5742
    %v6084 = vunpack.c.l.b16 %v5743
    %v6085 = vunpack.c.h.b16 %v5743
    %v6086 = vunpack.c.l.b16 %v5744
    %v6087 = vunpack.c.h.b16 %v5744
    %v6088 = vunpack.c.l.b16 %v5745
    %v6089 = vunpack.c.h.b16 %v5745
    %v6090 = vunpack.c.l.b16 %v5746
    %v6091 = vunpack.c.h.b16 %v5746
    %v6092 = vunpack.c.l.b16 %v5747
    %v6093 = vunpack.c.h.b16 %v5747
    %v6094 = vunpack.c.l.b16 %v5748
    %v6095 = vunpack.c.h.b16 %v5748
    %v6096 = vunpack.c.l.b16 %v5749
    %v6097 = vunpack.c.h.b16 %v5749
    %v6098 = vunpack.c.l.b16 %v5750
    %v6099 = vunpack.c.h.b16 %v5750
    %v6100 = vunpack.c.l.b16 %v5751
    %v6101 = vunpack.c.h.b16 %v5751
    %v6102 = vunpack.c.l.b16 %v5752
    %v6103 = vunpack.c.h.b16 %v5752
    %v6104 = vunpack.c.l.b16 %v5753
    %v6105 = vunpack.c.h.b16 %v5753
    %v6106 = vunpack.c.l.b16 %v5754
    %v6107 = vunpack.c.h.b16 %v5754
    %v6108 = vunpack.c.l.b16 %v5755
    %v6109 = vunpack.c.h.b16 %v5755
    %v6110 = vunpack.c.l.b16 %v5756
    %v6111 = vunpack.c.h.b16 %v5756
    %v6112 = vunpack.c.l.b16 %v5757
    %v6113 = vunpack.c.h.b16 %v5757
    %v6114 = vunpack.c.l.b16 %v5758
    %v6115 = vunpack.c.h.b16 %v5758
    %v6116 = vunpack.c.l.b16 %v5759
    %v6117 = vunpack.c.h.b16 %v5759
    %v6118 = vunpack.c.l.b16 %v5760
    %v6119 = vunpack.c.h.b16 %v5760
    %v6120 = vunpack.c.l.b16 %v5761
    %v6121 = vunpack.c.h.b16 %v5761
    %v6122 = vunpack.c.l.b16 %v5762
    %v6123 = vunpack.c.h.b16 %v5762
    %v6124 = vunpack.c.l.b16 %v5763
    %v6125 = vunpack.c.h.b16 %v5763
    %v6126 = vunpack.c.l.b16 %v5764
    %v6127 = vunpack.c.h.b16 %v5764
    %v6128 = vunpack.c.l.b16 %v5765
    %v6129 = vunpack.c.h.b16 %v5765
    %v6130 = vunpack.c.l.b16 %v5766
    %v6131 = vunpack.c.h.b16 %v5766
    %v6132 = vunpack.c.l.b16 %v5767
    %v6133 = vunpack.c.h.b16 %v5767
    %v6134 = vunpack.c.l.b16 %v5768
    %v6135 = vunpack.c.h.b16 %v5768
    %v6136 = vunpack.c.l.b16 %v5769
    %v6137 = vunpack.c.h.b16 %v5769
    %v6138 = vunpack.c.l.b16 %v5770
    %v6139 = vunpack.c.h.b16 %v5770
    %v6140 = vunpack.c.l.b16 %v5771
    %v6141 = vunpack.c.h.b16 %v5771
    %v6142 = vunpack.c.l.b16 %v5772
    %v6143 = vunpack.c.h.b16 %v5772
    %v6144 = vunpack.c.l.b16 %v5773
    %v6145 = vunpack.c.h.b16 %v5773
    %v6146 = vunpack.c.l.b16 %v5774
    %v6147 = vunpack.c.h.b16 %v5774
    %v6148 = vunpack.c.l.b16 %v5775
    %v6149 = vunpack.c.h.b16 %v5775
    %v6150 = vunpack.c.l.b16 %v5776
    %v6151 = vunpack.c.h.b16 %v5776
    %v6152 = vunpack.c.l.b16 %v5777
    %v6153 = vunpack.c.h.b16 %v5777
    %v6154 = vunpack.c.l.b16 %v5778
    %v6155 = vunpack.c.h.b16 %v5778
    %v6156 = vunpack.c.l.b16 %v5779
    %v6157 = vunpack.c.h.b16 %v5779
    %v6158 = vunpack.c.l.b16 %v5780
    %v6159 = vunpack.c.h.b16 %v5780
    %v6160 = vunpack.c.l.b16 %v5781
    %v6161 = vunpack.c.h.b16 %v5781
    %v6162 = vunpack.c.l.b16 %v5782
    %v6163 = vunpack.c.h.b16 %v5782
    %v6164 = vunpack.c.l.b16 %v5783
    %v6165 = vunpack.c.h.b16 %v5783
    %v6166 = vunpack.c.l.b16 %v5784
    %v6167 = vunpack.c.h.b16 %v5784
    %v6168 = vunpack.c.l.b16 %v5785
    %v6169 = vunpack.c.h.b16 %v5785
    %v6170 = vunpack.c.l.b16 %v5786
    %v6171 = vunpack.c.h.b16 %v5786
    %v6172 = vunpack.c.l.b16 %v5787
    %v6173 = vunpack.c.h.b16 %v5787
    %v6174 = vunpack.c.l.b16 %v5788
    %v6175 = vunpack.c.h.b16 %v5788
    %v6176 = vunpack.c.l.b16 %v5789
    %v6177 = vunpack.c.h.b16 %v5789
    %v6178 = vunpack.c.l.b16 %v5790
    %v6179 = vunpack.c.h.b16 %v5790
    %v6180 = vunpack.c.l.b16 %v5791
    %v6181 = vunpack.c.h.b16 %v5791
    %v6182 = vunpack.c.l.b16 %v5792
    %v6183 = vunpack.c.h.b16 %v5792
    %v6184 = vunpack.c.l.b16 %v5793
    %v6185 = vunpack.c.h.b16 %v5793
    %v6186 = vunpack.c.l.b16 %v5794
    %v6187 = vunpack.c.h.b16 %v5794
    %v6188 = vunpack.c.l.b16 %v5795
    %v6189 = vunpack.c.h.b16 %v5795
    %v6190 = vpack.c.b16 %v5938, %v5934
    %v6191 = vpack.c.b16 %v5939, %v5935
    %v6192 = vpack.c.b16 %v5940, %v5936
    %v6193 = vpack.c.b16 %v5941, %v5937
    %v6194 = vpack.c.b16 %v5946, %v5942
    %v6195 = vpack.c.b16 %v5947, %v5943
    %v6196 = vpack.c.b16 %v5948, %v5944
    %v6197 = vpack.c.b16 %v5949, %v5945
    %v6198 = vpack.c.b16 %v5954, %v5950
    %v6199 = vpack.c.b16 %v5955, %v5951
    %v6200 = vpack.c.b16 %v5956, %v5952
    %v6201 = vpack.c.b16 %v5957, %v5953
    %v6202 = vpack.c.b16 %v5962, %v5958
    %v6203 = vpack.c.b16 %v5963, %v5959
    %v6204 = vpack.c.b16 %v5964, %v5960
    %v6205 = vpack.c.b16 %v5965, %v5961
    %v6206 = vpack.c.b16 %v5970, %v5966
    %v6207 = vpack.c.b16 %v5971, %v5967
    %v6208 = vpack.c.b16 %v5972, %v5968
    %v6209 = vpack.c.b16 %v5973, %v5969
    %v6210 = vpack.c.b16 %v5978, %v5974
    %v6211 = vpack.c.b16 %v5979, %v5975
    %v6212 = vpack.c.b16 %v5980, %v5976
    %v6213 = vpack.c.b16 %v5981, %v5977
    %v6214 = vpack.c.b16 %v5986, %v5982
    %v6215 = vpack.c.b16 %v5987, %v5983
    %v6216 = vpack.c.b16 %v5988, %v5984
    %v6217 = vpack.c.b16 %v5989, %v5985
    %v6218 = vpack.c.b16 %v5994, %v5990
    %v6219 = vpack.c.b16 %v5995, %v5991
    %v6220 = vpack.c.b16 %v5996, %v5992
    %v6221 = vpack.c.b16 %v5997, %v5993
    %v6222 = vpack.c.b16 %v6002, %v5998
    %v6223 = vpack.c.b16 %v6003, %v5999
    %v6224 = vpack.c.b16 %v6004, %v6000
    %v6225 = vpack.c.b16 %v6005, %v6001
    %v6226 = vpack.c.b16 %v6010, %v6006
    %v6227 = vpack.c.b16 %v6011, %v6007
    %v6228 = vpack.c.b16 %v6012, %v6008
    %v6229 = vpack.c.b16 %v6013, %v6009
    %v6230 = vpack.c.b16 %v6018, %v6014
    %v6231 = vpack.c.b16 %v6019, %v6015
    %v6232 = vpack.c.b16 %v6020, %v6016
    %v6233 = vpack.c.b16 %v6021, %v6017
    %v6234 = vpack.c.b16 %v6026, %v6022
    %v6235 = vpack.c.b16 %v6027, %v6023
    %v6236 = vpack.c.b16 %v6028, %v6024
    %v6237 = vpack.c.b16 %v6029, %v6025
    %v6238 = vpack.c.b16 %v6034, %v6030
    %v6239 = vpack.c.b16 %v6035, %v6031
    %v6240 = vpack.c.b16 %v6036, %v6032
    %v6241 = vpack.c.b16 %v6037, %v6033
    %v6242 = vpack.c.b16 %v6042, %v6038
    %v6243 = vpack.c.b16 %v6043, %v6039
    %v6244 = vpack.c.b16 %v6044, %v6040
    %v6245 = vpack.c.b16 %v6045, %v6041
    %v6246 = vpack.c.b16 %v6050, %v6046
    %v6247 = vpack.c.b16 %v6051, %v6047
    %v6248 = vpack.c.b16 %v6052, %v6048
    %v6249 = vpack.c.b16 %v6053, %v6049
    %v6250 = vpack.c.b16 %v6058, %v6054
    %v6251 = vpack.c.b16 %v6059, %v6055
    %v6252 = vpack.c.b16 %v6060, %v6056
    %v6253 = vpack.c.b16 %v6061, %v6057
    %v6254 = vpack.c.b16 %v6066, %v6062
    %v6255 = vpack.c.b16 %v6067, %v6063
    %v6256 = vpack.c.b16 %v6068, %v6064
    %v6257 = vpack.c.b16 %v6069, %v6065
    %v6258 = vpack.c.b16 %v6074, %v6070
    %v6259 = vpack.c.b16 %v6075, %v6071
    %v6260 = vpack.c.b16 %v6076, %v6072
    %v6261 = vpack.c.b16 %v6077, %v6073
    %v6262 = vpack.c.b16 %v6082, %v6078
    %v6263 = vpack.c.b16 %v6083, %v6079
    %v6264 = vpack.c.b16 %v6084, %v6080
    %v6265 = vpack.c.b16 %v6085, %v6081
    %v6266 = vpack.c.b16 %v6090, %v6086
    %v6267 = vpack.c.b16 %v6091, %v6087
    %v6268 = vpack.c.b16 %v6092, %v6088
    %v6269 = vpack.c.b16 %v6093, %v6089
    %v6270 = vpack.c.b16 %v6098, %v6094
    %v6271 = vpack.c.b16 %v6099, %v6095
    %v6272 = vpack.c.b16 %v6100, %v6096
    %v6273 = vpack.c.b16 %v6101, %v6097
    %v6274 = vpack.c.b16 %v6106, %v6102
    %v6275 = vpack.c.b16 %v6107, %v6103
    %v6276 = vpack.c.b16 %v6108, %v6104
    %v6277 = vpack.c.b16 %v6109, %v6105
    %v6278 = vpack.c.b16 %v6114, %v6110
    %v6279 = vpack.c.b16 %v6115, %v6111
    %v6280 = vpack.c.b16 %v6116, %v6112
    %v6281 = vpack.c.b16 %v6117, %v6113
    %v6282 = vpack.c.b16 %v6122, %v6118
    %v6283 = vpack.c.b16 %v6123, %v6119
    %v6284 = vpack.c.b16 %v6124, %v6120
    %v6285 = vpack.c.b16 %v6125, %v6121
    %v6286 = vpack.c.b16 %v6130, %v6126
    %v6287 = vpack.c.b16 %v6131, %v6127
    %v6288 = vpack.c.b16 %v6132, %v6128
    %v6289 = vpack.c.b16 %v6133, %v6129
    %v6290 = vpack.c.b16 %v6138, %v6134
    %v6291 = vpack.c.b16 %v6139, %v6135
    %v6292 = vpack.c.b16 %v6140, %v6136
    %v6293 = vpack.c.b16 %v6141, %v6137
    %v6294 = vpack.c.b16 %v6146, %v6142
    %v6295 = vpack.c.b16 %v6147, %v6143
    %v6296 = vpack.c.b16 %v6148, %v6144
    %v6297 = vpack.c.b16 %v6149, %v6145
    %v6298 = vpack.c.b16 %v6154, %v6150
    %v6299 = vpack.c.b16 %v6155, %v6151
    %v6300 = vpack.c.b16 %v6156, %v6152
    %v6301 = vpack.c.b16 %v6157, %v6153
    %v6302 = vpack.c.b16 %v6162, %v6158
    %v6303 = vpack.c.b16 %v6163, %v6159
    %v6304 = vpack.c.b16 %v6164, %v6160
    %v6305 = vpack.c.b16 %v6165, %v6161
    %v6306 = vpack.c.b16 %v6170, %v6166
    %v6307 = vpack.c.b16 %v6171, %v6167
    %v6308 = vpack.c.b16 %v6172, %v6168
    %v6309 = vpack.c.b16 %v6173, %v6169
    %v6310 = vpack.c.b16 %v6178, %v6174
    %v6311 = vpack.c.b16 %v6179, %v6175
    %v6312 = vpack.c.b16 %v6180, %v6176
    %v6313 = vpack.c.b16 %v6181, %v6177
    %v6314 = vpack.c.b16 %v6186, %v6182
    %v6315 = vpack.c.b16 %v6187, %v6183
    %v6316 = vpack.c.b16 %v6188, %v6184
    %v6317 = vpack.c.b16 %v6189, %v6185
    %6446 = vmatpush.bf16.msra.mxu0 %v6218
    %6447 = vmatpush.bf16.msra.mxu0 %v6214
    %6448 = vmatpush.bf16.msra.mxu0 %v6210
    %6449 = vmatpush.bf16.msra.mxu0 %v6206
    %6450 = vmatpush.bf16.msra.mxu0 %v6202
    %6451 = vmatpush.bf16.msra.mxu0 %v6198
    %6452 = vmatpush.bf16.msra.mxu0 %v6194
    %6453 = vmatpush.bf16.msra.mxu0 %v6190
    %6454 = vmatmul.bf16.gmra.mxu0 %v5664
    %v6455 = vpop.f32.mrf.mxu0
    %v6456 = vadd.f32 %v5798, %v6455
    %v6457 = vpop.f32.mrf.mxu0
    %6458 = vdwg.mxu0
    %6459 = vmatpush.bf16.msra.mxu0 %v6250
    %6460 = vmatpush.bf16.msra.mxu0 %v6246
    %6461 = vmatpush.bf16.msra.mxu0 %v6242
    %6462 = vmatpush.bf16.msra.mxu0 %v6238
    %6463 = vmatpush.bf16.msra.mxu0 %v6234
    %6464 = vmatpush.bf16.msra.mxu0 %v6230
    %6465 = vmatpush.bf16.msra.mxu0 %v6226
    %6466 = vmatpush.bf16.msra.mxu0 %v6222
    %6467 = vmatmul.bf16.gmra.mxu0 %v5665
    %v6468 = vpop.f32.mrf.mxu0
    %v6469 = vadd.f32 %v6456, %v6468
    %v6470 = vpop.f32.mrf.mxu0
    %6471 = vdwg.mxu0
    %6472 = vmatpush.bf16.msra.mxu0 %v6282
    %6473 = vmatpush.bf16.msra.mxu0 %v6278
    %6474 = vmatpush.bf16.msra.mxu0 %v6274
    %6475 = vmatpush.bf16.msra.mxu0 %v6270
    %6476 = vmatpush.bf16.msra.mxu0 %v6266
    %6477 = vmatpush.bf16.msra.mxu0 %v6262
    %6478 = vmatpush.bf16.msra.mxu0 %v6258
    %6479 = vmatpush.bf16.msra.mxu0 %v6254
    %6480 = vmatmul.bf16.gmra.mxu0 %v5666
    %v6481 = vpop.f32.mrf.mxu0
    %v6482 = vadd.f32 %v6469, %v6481
    %v6483 = vpop.f32.mrf.mxu0
    %6484 = vdwg.mxu0
    %6485 = vmatpush.bf16.msra.mxu0 %v6314
    %6486 = vmatpush.bf16.msra.mxu0 %v6310
    %6487 = vmatpush.bf16.msra.mxu0 %v6306
    %6488 = vmatpush.bf16.msra.mxu0 %v6302
    %6489 = vmatpush.bf16.msra.mxu0 %v6298
    %6490 = vmatpush.bf16.msra.mxu0 %v6294
    %6491 = vmatpush.bf16.msra.mxu0 %v6290
    %6492 = vmatpush.bf16.msra.mxu0 %v6286
    %6493 = vmatmul.bf16.gmra.mxu0 %v5667
    %v6494 = vpop.f32.mrf.mxu0
    %v6495 = vadd.f32 %v6482, %v6494
    %v6496 = vpop.f32.mrf.mxu0
    %6497 = vdwg.mxu0
    %6498 = vmatpush.bf16.msra.mxu0 %v6219
    %6499 = vmatpush.bf16.msra.mxu0 %v6215
    %6500 = vmatpush.bf16.msra.mxu0 %v6211
    %6501 = vmatpush.bf16.msra.mxu0 %v6207
    %6502 = vmatpush.bf16.msra.mxu0 %v6203
    %6503 = vmatpush.bf16.msra.mxu0 %v6199
    %6504 = vmatpush.bf16.msra.mxu0 %v6195
    %6505 = vmatpush.bf16.msra.mxu0 %v6191
    %6506 = vmatmul.bf16.gmra.mxu0 %v5664
    %v6507 = vpop.f32.mrf.mxu0
    %v6508 = vadd.f32 %v5799, %v6507
    %v6509 = vpop.f32.mrf.mxu0
    %6510 = vdwg.mxu0
    %6511 = vmatpush.bf16.msra.mxu0 %v6251
    %6512 = vmatpush.bf16.msra.mxu0 %v6247
    %6513 = vmatpush.bf16.msra.mxu0 %v6243
    %6514 = vmatpush.bf16.msra.mxu0 %v6239
    %6515 = vmatpush.bf16.msra.mxu0 %v6235
    %6516 = vmatpush.bf16.msra.mxu0 %v6231
    %6517 = vmatpush.bf16.msra.mxu0 %v6227
    %6518 = vmatpush.bf16.msra.mxu0 %v6223
    %6519 = vmatmul.bf16.gmra.mxu0 %v5665
    %v6520 = vpop.f32.mrf.mxu0
    %v6521 = vadd.f32 %v6508, %v6520
    %v6522 = vpop.f32.mrf.mxu0
    %6523 = vdwg.mxu0
    %6524 = vmatpush.bf16.msra.mxu0 %v6283
    %6525 = vmatpush.bf16.msra.mxu0 %v6279
    %6526 = vmatpush.bf16.msra.mxu0 %v6275
    %6527 = vmatpush.bf16.msra.mxu0 %v6271
    %6528 = vmatpush.bf16.msra.mxu0 %v6267
    %6529 = vmatpush.bf16.msra.mxu0 %v6263
    %6530 = vmatpush.bf16.msra.mxu0 %v6259
    %6531 = vmatpush.bf16.msra.mxu0 %v6255
    %6532 = vmatmul.bf16.gmra.mxu0 %v5666
    %v6533 = vpop.f32.mrf.mxu0
    %v6534 = vadd.f32 %v6521, %v6533
    %v6535 = vpop.f32.mrf.mxu0
    %6536 = vdwg.mxu0
    %6537 = vmatpush.bf16.msra.mxu0 %v6315
    %6538 = vmatpush.bf16.msra.mxu0 %v6311
    %6539 = vmatpush.bf16.msra.mxu0 %v6307
    %6540 = vmatpush.bf16.msra.mxu0 %v6303
    %6541 = vmatpush.bf16.msra.mxu0 %v6299
    %6542 = vmatpush.bf16.msra.mxu0 %v6295
    %6543 = vmatpush.bf16.msra.mxu0 %v6291
    %6544 = vmatpush.bf16.msra.mxu0 %v6287
    %6545 = vmatmul.bf16.gmra.mxu0 %v5667
    %v6546 = vpop.f32.mrf.mxu0
    %v6547 = vadd.f32 %v6534, %v6546
    %v6548 = vpop.f32.mrf.mxu0
    %6549 = vdwg.mxu0
    %6550 = vmatpush.bf16.msra.mxu0 %v6220
    %6551 = vmatpush.bf16.msra.mxu0 %v6216
    %6552 = vmatpush.bf16.msra.mxu0 %v6212
    %6553 = vmatpush.bf16.msra.mxu0 %v6208
    %6554 = vmatpush.bf16.msra.mxu0 %v6204
    %6555 = vmatpush.bf16.msra.mxu0 %v6200
    %6556 = vmatpush.bf16.msra.mxu0 %v6196
    %6557 = vmatpush.bf16.msra.mxu0 %v6192
    %6558 = vmatmul.bf16.gmra.mxu0 %v5664
    %v6559 = vpop.f32.mrf.mxu0
    %v6560 = vadd.f32 %v5800, %v6559
    %v6561 = vpop.f32.mrf.mxu0
    %6562 = vdwg.mxu0
    %6563 = vmatpush.bf16.msra.mxu0 %v6252
    %6564 = vmatpush.bf16.msra.mxu0 %v6248
    %6565 = vmatpush.bf16.msra.mxu0 %v6244
    %6566 = vmatpush.bf16.msra.mxu0 %v6240
    %6567 = vmatpush.bf16.msra.mxu0 %v6236
    %6568 = vmatpush.bf16.msra.mxu0 %v6232
    %6569 = vmatpush.bf16.msra.mxu0 %v6228
    %6570 = vmatpush.bf16.msra.mxu0 %v6224
    %6571 = vmatmul.bf16.gmra.mxu0 %v5665
    %v6572 = vpop.f32.mrf.mxu0
    %v6573 = vadd.f32 %v6560, %v6572
    %v6574 = vpop.f32.mrf.mxu0
    %6575 = vdwg.mxu0
    %6576 = vmatpush.bf16.msra.mxu0 %v6284
    %6577 = vmatpush.bf16.msra.mxu0 %v6280
    %6578 = vmatpush.bf16.msra.mxu0 %v6276
    %6579 = vmatpush.bf16.msra.mxu0 %v6272
    %6580 = vmatpush.bf16.msra.mxu0 %v6268
    %6581 = vmatpush.bf16.msra.mxu0 %v6264
    %6582 = vmatpush.bf16.msra.mxu0 %v6260
    %6583 = vmatpush.bf16.msra.mxu0 %v6256
    %6584 = vmatmul.bf16.gmra.mxu0 %v5666
    %v6585 = vpop.f32.mrf.mxu0
    %v6586 = vadd.f32 %v6573, %v6585
    %v6587 = vpop.f32.mrf.mxu0
    %6588 = vdwg.mxu0
    %6589 = vmatpush.bf16.msra.mxu0 %v6316
    %6590 = vmatpush.bf16.msra.mxu0 %v6312
    %6591 = vmatpush.bf16.msra.mxu0 %v6308
    %6592 = vmatpush.bf16.msra.mxu0 %v6304
    %6593 = vmatpush.bf16.msra.mxu0 %v6300
    %6594 = vmatpush.bf16.msra.mxu0 %v6296
    %6595 = vmatpush.bf16.msra.mxu0 %v6292
    %6596 = vmatpush.bf16.msra.mxu0 %v6288
    %6597 = vmatmul.bf16.gmra.mxu0 %v5667
    %v6598 = vpop.f32.mrf.mxu0
    %v6599 = vadd.f32 %v6586, %v6598
    %v6600 = vpop.f32.mrf.mxu0
    %6601 = vdwg.mxu0
    %6602 = vmatpush.bf16.msra.mxu0 %v6221
    %6603 = vmatpush.bf16.msra.mxu0 %v6217
    %6604 = vmatpush.bf16.msra.mxu0 %v6213
    %6605 = vmatpush.bf16.msra.mxu0 %v6209
    %6606 = vmatpush.bf16.msra.mxu0 %v6205
    %6607 = vmatpush.bf16.msra.mxu0 %v6201
    %6608 = vmatpush.bf16.msra.mxu0 %v6197
    %6609 = vmatpush.bf16.msra.mxu0 %v6193
    %6610 = vmatmul.bf16.gmra.mxu0 %v5664
    %v6611 = vpop.f32.mrf.mxu0
    %v6612 = vadd.f32 %v5801, %v6611
    %v6613 = vpop.f32.mrf.mxu0
    %6614 = vdwg.mxu0
    %6615 = vmatpush.bf16.msra.mxu0 %v6253
    %6616 = vmatpush.bf16.msra.mxu0 %v6249
    %6617 = vmatpush.bf16.msra.mxu0 %v6245
    %6618 = vmatpush.bf16.msra.mxu0 %v6241
    %6619 = vmatpush.bf16.msra.mxu0 %v6237
    %6620 = vmatpush.bf16.msra.mxu0 %v6233
    %6621 = vmatpush.bf16.msra.mxu0 %v6229
    %6622 = vmatpush.bf16.msra.mxu0 %v6225
    %6623 = vmatmul.bf16.gmra.mxu0 %v5665
    %v6624 = vpop.f32.mrf.mxu0
    %v6625 = vadd.f32 %v6612, %v6624
    %v6626 = vpop.f32.mrf.mxu0
    %6627 = vdwg.mxu0
    %6628 = vmatpush.bf16.msra.mxu0 %v6285
    %6629 = vmatpush.bf16.msra.mxu0 %v6281
    %6630 = vmatpush.bf16.msra.mxu0 %v6277
    %6631 = vmatpush.bf16.msra.mxu0 %v6273
    %6632 = vmatpush.bf16.msra.mxu0 %v6269
    %6633 = vmatpush.bf16.msra.mxu0 %v6265
    %6634 = vmatpush.bf16.msra.mxu0 %v6261
    %6635 = vmatpush.bf16.msra.mxu0 %v6257
    %6636 = vmatmul.bf16.gmra.mxu0 %v5666
    %v6637 = vpop.f32.mrf.mxu0
    %v6638 = vadd.f32 %v6625, %v6637
    %v6639 = vpop.f32.mrf.mxu0
    %6640 = vdwg.mxu0
    %6641 = vmatpush.bf16.msra.mxu0 %v6317
    %6642 = vmatpush.bf16.msra.mxu0 %v6313
    %6643 = vmatpush.bf16.msra.mxu0 %v6309
    %6644 = vmatpush.bf16.msra.mxu0 %v6305
    %6645 = vmatpush.bf16.msra.mxu0 %v6301
    %6646 = vmatpush.bf16.msra.mxu0 %v6297
    %6647 = vmatpush.bf16.msra.mxu0 %v6293
    %6648 = vmatpush.bf16.msra.mxu0 %v6289
    %6649 = vmatmul.bf16.gmra.mxu0 %v5667
    %v6650 = vpop.f32.mrf.mxu0
    %v6651 = vadd.f32 %v6638, %v6650
    %v6652 = vpop.f32.mrf.mxu0
    %6653 = vdwg.mxu0
    %v6654 = vadd.f32 %v4666, %v6495
    %v6655 = vadd.f32 %v4667, %v6547
    %v6656 = vadd.f32 %v4668, %v6599
    %v6657 = vadd.f32 %v4669, %v6651
    %v6658 = vpack.c.bf16 %v6654, %v6654
    %v6659 = vpack.c.bf16 %v6655, %v6655
    %v6660 = vpack.c.bf16 %v6656, %v6656
    %v6661 = vpack.c.bf16 %v6657, %v6657
    %v6662 = vld [vmem:[#allocation10] sm:$0xff]
    %v6663 = vld [vmem:[#allocation10 + $0x8] sm:$0xff]
    %v6664 = vld [vmem:[#allocation10 + $0x10] sm:$0xff]
    %v6665 = vld [vmem:[#allocation10 + $0x18] sm:$0xff]
    %v6666 = vld [vmem:[#allocation10 + $0x20] sm:$0xff]
    %v6667 = vld [vmem:[#allocation10 + $0x28] sm:$0xff]
    %v6668 = vld [vmem:[#allocation10 + $0x30] sm:$0xff]
    %v6669 = vld [vmem:[#allocation10 + $0x38] sm:$0xff]
    %v6670 = vld [vmem:[#allocation10 + $0x40] sm:$0xff]
    %v6671 = vld [vmem:[#allocation10 + $0x48] sm:$0xff]
    %v6672 = vld [vmem:[#allocation10 + $0x50] sm:$0xff]
    %v6673 = vld [vmem:[#allocation10 + $0x58] sm:$0xff]
    %v6674 = vld [vmem:[#allocation10 + $0x60] sm:$0xff]
    %v6675 = vld [vmem:[#allocation10 + $0x68] sm:$0xff]
    %v6676 = vld [vmem:[#allocation10 + $0x70] sm:$0xff]
    %v6677 = vld [vmem:[#allocation10 + $0x78] sm:$0xff]
    %v6678 = vld [vmem:[#allocation10 + $0x80] sm:$0xff]
    %v6679 = vld [vmem:[#allocation10 + $0x88] sm:$0xff]
    %v6680 = vld [vmem:[#allocation10 + $0x90] sm:$0xff]
    %v6681 = vld [vmem:[#allocation10 + $0x98] sm:$0xff]
    %v6682 = vld [vmem:[#allocation10 + $0xa0] sm:$0xff]
    %v6683 = vld [vmem:[#allocation10 + $0xa8] sm:$0xff]
    %v6684 = vld [vmem:[#allocation10 + $0xb0] sm:$0xff]
    %v6685 = vld [vmem:[#allocation10 + $0xb8] sm:$0xff]
    %v6686 = vld [vmem:[#allocation10 + $0xc0] sm:$0xff]
    %v6687 = vld [vmem:[#allocation10 + $0xc8] sm:$0xff]
    %v6688 = vld [vmem:[#allocation10 + $0xd0] sm:$0xff]
    %v6689 = vld [vmem:[#allocation10 + $0xd8] sm:$0xff]
    %v6690 = vld [vmem:[#allocation10 + $0xe0] sm:$0xff]
    %v6691 = vld [vmem:[#allocation10 + $0xe8] sm:$0xff]
    %v6692 = vld [vmem:[#allocation10 + $0xf0] sm:$0xff]
    %v6693 = vld [vmem:[#allocation10 + $0xf8] sm:$0xff]
    %v6694 = vld [vmem:[#allocation10 + $0x100] sm:$0xff]
    %v6695 = vld [vmem:[#allocation10 + $0x108] sm:$0xff]
    %v6696 = vld [vmem:[#allocation10 + $0x110] sm:$0xff]
    %v6697 = vld [vmem:[#allocation10 + $0x118] sm:$0xff]
    %v6698 = vld [vmem:[#allocation10 + $0x120] sm:$0xff]
    %v6699 = vld [vmem:[#allocation10 + $0x128] sm:$0xff]
    %v6700 = vld [vmem:[#allocation10 + $0x130] sm:$0xff]
    %v6701 = vld [vmem:[#allocation10 + $0x138] sm:$0xff]
    %v6702 = vld [vmem:[#allocation10 + $0x140] sm:$0xff]
    %v6703 = vld [vmem:[#allocation10 + $0x148] sm:$0xff]
    %v6704 = vld [vmem:[#allocation10 + $0x150] sm:$0xff]
    %v6705 = vld [vmem:[#allocation10 + $0x158] sm:$0xff]
    %v6706 = vld [vmem:[#allocation10 + $0x160] sm:$0xff]
    %v6707 = vld [vmem:[#allocation10 + $0x168] sm:$0xff]
    %v6708 = vld [vmem:[#allocation10 + $0x170] sm:$0xff]
    %v6709 = vld [vmem:[#allocation10 + $0x178] sm:$0xff]
    %v6710 = vld [vmem:[#allocation10 + $0x180] sm:$0xff]
    %v6711 = vld [vmem:[#allocation10 + $0x188] sm:$0xff]
    %v6712 = vld [vmem:[#allocation10 + $0x190] sm:$0xff]
    %v6713 = vld [vmem:[#allocation10 + $0x198] sm:$0xff]
    %v6714 = vld [vmem:[#allocation10 + $0x1a0] sm:$0xff]
    %v6715 = vld [vmem:[#allocation10 + $0x1a8] sm:$0xff]
    %v6716 = vld [vmem:[#allocation10 + $0x1b0] sm:$0xff]
    %v6717 = vld [vmem:[#allocation10 + $0x1b8] sm:$0xff]
    %v6718 = vld [vmem:[#allocation10 + $0x1c0] sm:$0xff]
    %v6719 = vld [vmem:[#allocation10 + $0x1c8] sm:$0xff]
    %v6720 = vld [vmem:[#allocation10 + $0x1d0] sm:$0xff]
    %v6721 = vld [vmem:[#allocation10 + $0x1d8] sm:$0xff]
    %v6722 = vld [vmem:[#allocation10 + $0x1e0] sm:$0xff]
    %v6723 = vld [vmem:[#allocation10 + $0x1e8] sm:$0xff]
    %v6724 = vld [vmem:[#allocation10 + $0x1f0] sm:$0xff]
    %v6725 = vld [vmem:[#allocation10 + $0x1f8] sm:$0xff]
    %v6726 = vld [vmem:[#allocation10 + $0x200] sm:$0xff]
    %v6727 = vld [vmem:[#allocation10 + $0x208] sm:$0xff]
    %v6728 = vld [vmem:[#allocation10 + $0x210] sm:$0xff]
    %v6729 = vld [vmem:[#allocation10 + $0x218] sm:$0xff]
    %v6730 = vld [vmem:[#allocation10 + $0x220] sm:$0xff]
    %v6731 = vld [vmem:[#allocation10 + $0x228] sm:$0xff]
    %v6732 = vld [vmem:[#allocation10 + $0x230] sm:$0xff]
    %v6733 = vld [vmem:[#allocation10 + $0x238] sm:$0xff]
    %v6734 = vld [vmem:[#allocation10 + $0x240] sm:$0xff]
    %v6735 = vld [vmem:[#allocation10 + $0x248] sm:$0xff]
    %v6736 = vld [vmem:[#allocation10 + $0x250] sm:$0xff]
    %v6737 = vld [vmem:[#allocation10 + $0x258] sm:$0xff]
    %v6738 = vld [vmem:[#allocation10 + $0x260] sm:$0xff]
    %v6739 = vld [vmem:[#allocation10 + $0x268] sm:$0xff]
    %v6740 = vld [vmem:[#allocation10 + $0x270] sm:$0xff]
    %v6741 = vld [vmem:[#allocation10 + $0x278] sm:$0xff]
    %v6742 = vld [vmem:[#allocation10 + $0x280] sm:$0xff]
    %v6743 = vld [vmem:[#allocation10 + $0x288] sm:$0xff]
    %v6744 = vld [vmem:[#allocation10 + $0x290] sm:$0xff]
    %v6745 = vld [vmem:[#allocation10 + $0x298] sm:$0xff]
    %v6746 = vld [vmem:[#allocation10 + $0x2a0] sm:$0xff]
    %v6747 = vld [vmem:[#allocation10 + $0x2a8] sm:$0xff]
    %v6748 = vld [vmem:[#allocation10 + $0x2b0] sm:$0xff]
    %v6749 = vld [vmem:[#allocation10 + $0x2b8] sm:$0xff]
    %v6750 = vld [vmem:[#allocation10 + $0x2c0] sm:$0xff]
    %v6751 = vld [vmem:[#allocation10 + $0x2c8] sm:$0xff]
    %v6752 = vld [vmem:[#allocation10 + $0x2d0] sm:$0xff]
    %v6753 = vld [vmem:[#allocation10 + $0x2d8] sm:$0xff]
    %v6754 = vld [vmem:[#allocation10 + $0x2e0] sm:$0xff]
    %v6755 = vld [vmem:[#allocation10 + $0x2e8] sm:$0xff]
    %v6756 = vld [vmem:[#allocation10 + $0x2f0] sm:$0xff]
    %v6757 = vld [vmem:[#allocation10 + $0x2f8] sm:$0xff]
    %v6758 = vld [vmem:[#allocation10 + $0x300] sm:$0xff]
    %v6759 = vld [vmem:[#allocation10 + $0x308] sm:$0xff]
    %v6760 = vld [vmem:[#allocation10 + $0x310] sm:$0xff]
    %v6761 = vld [vmem:[#allocation10 + $0x318] sm:$0xff]
    %v6762 = vld [vmem:[#allocation10 + $0x320] sm:$0xff]
    %v6763 = vld [vmem:[#allocation10 + $0x328] sm:$0xff]
    %v6764 = vld [vmem:[#allocation10 + $0x330] sm:$0xff]
    %v6765 = vld [vmem:[#allocation10 + $0x338] sm:$0xff]
    %v6766 = vld [vmem:[#allocation10 + $0x340] sm:$0xff]
    %v6767 = vld [vmem:[#allocation10 + $0x348] sm:$0xff]
    %v6768 = vld [vmem:[#allocation10 + $0x350] sm:$0xff]
    %v6769 = vld [vmem:[#allocation10 + $0x358] sm:$0xff]
    %v6770 = vld [vmem:[#allocation10 + $0x360] sm:$0xff]
    %v6771 = vld [vmem:[#allocation10 + $0x368] sm:$0xff]
    %v6772 = vld [vmem:[#allocation10 + $0x370] sm:$0xff]
    %v6773 = vld [vmem:[#allocation10 + $0x378] sm:$0xff]
    %v6774 = vld [vmem:[#allocation10 + $0x380] sm:$0xff]
    %v6775 = vld [vmem:[#allocation10 + $0x388] sm:$0xff]
    %v6776 = vld [vmem:[#allocation10 + $0x390] sm:$0xff]
    %v6777 = vld [vmem:[#allocation10 + $0x398] sm:$0xff]
    %v6778 = vld [vmem:[#allocation10 + $0x3a0] sm:$0xff]
    %v6779 = vld [vmem:[#allocation10 + $0x3a8] sm:$0xff]
    %v6780 = vld [vmem:[#allocation10 + $0x3b0] sm:$0xff]
    %v6781 = vld [vmem:[#allocation10 + $0x3b8] sm:$0xff]
    %v6782 = vld [vmem:[#allocation10 + $0x3c0] sm:$0xff]
    %v6783 = vld [vmem:[#allocation10 + $0x3c8] sm:$0xff]
    %v6784 = vld [vmem:[#allocation10 + $0x3d0] sm:$0xff]
    %v6785 = vld [vmem:[#allocation10 + $0x3d8] sm:$0xff]
    %v6786 = vld [vmem:[#allocation10 + $0x3e0] sm:$0xff]
    %v6787 = vld [vmem:[#allocation10 + $0x3e8] sm:$0xff]
    %v6788 = vld [vmem:[#allocation10 + $0x3f0] sm:$0xff]
    %v6789 = vld [vmem:[#allocation10 + $0x3f8] sm:$0xff]
    %v6790 = vld [vmem:[#allocation43] sm:$0xf]
    %v6792 = vperm.slane %v6790, 0
    %v6793 = vperm.slane %v6790, 1
    %v6794 = vperm.slane %v6790, 2
    %v6795 = vperm.slane %v6790, 3
    %v6928 = vunpack.c.l.b16 %v6662
    %v6929 = vunpack.c.h.b16 %v6662
    %v6930 = vunpack.c.l.b16 %v6663
    %v6931 = vunpack.c.h.b16 %v6663
    %v6932 = vunpack.c.l.b16 %v6664
    %v6933 = vunpack.c.h.b16 %v6664
    %v6934 = vunpack.c.l.b16 %v6665
    %v6935 = vunpack.c.h.b16 %v6665
    %v6936 = vunpack.c.l.b16 %v6666
    %v6937 = vunpack.c.h.b16 %v6666
    %v6938 = vunpack.c.l.b16 %v6667
    %v6939 = vunpack.c.h.b16 %v6667
    %v6940 = vunpack.c.l.b16 %v6668
    %v6941 = vunpack.c.h.b16 %v6668
    %v6942 = vunpack.c.l.b16 %v6669
    %v6943 = vunpack.c.h.b16 %v6669
    %v6944 = vunpack.c.l.b16 %v6670
    %v6945 = vunpack.c.h.b16 %v6670
    %v6946 = vunpack.c.l.b16 %v6671
    %v6947 = vunpack.c.h.b16 %v6671
    %v6948 = vunpack.c.l.b16 %v6672
    %v6949 = vunpack.c.h.b16 %v6672
    %v6950 = vunpack.c.l.b16 %v6673
    %v6951 = vunpack.c.h.b16 %v6673
    %v6952 = vunpack.c.l.b16 %v6674
    %v6953 = vunpack.c.h.b16 %v6674
    %v6954 = vunpack.c.l.b16 %v6675
    %v6955 = vunpack.c.h.b16 %v6675
    %v6956 = vunpack.c.l.b16 %v6676
    %v6957 = vunpack.c.h.b16 %v6676
    %v6958 = vunpack.c.l.b16 %v6677
    %v6959 = vunpack.c.h.b16 %v6677
    %v6960 = vunpack.c.l.b16 %v6678
    %v6961 = vunpack.c.h.b16 %v6678
    %v6962 = vunpack.c.l.b16 %v6679
    %v6963 = vunpack.c.h.b16 %v6679
    %v6964 = vunpack.c.l.b16 %v6680
    %v6965 = vunpack.c.h.b16 %v6680
    %v6966 = vunpack.c.l.b16 %v6681
    %v6967 = vunpack.c.h.b16 %v6681
    %v6968 = vunpack.c.l.b16 %v6682
    %v6969 = vunpack.c.h.b16 %v6682
    %v6970 = vunpack.c.l.b16 %v6683
    %v6971 = vunpack.c.h.b16 %v6683
    %v6972 = vunpack.c.l.b16 %v6684
    %v6973 = vunpack.c.h.b16 %v6684
    %v6974 = vunpack.c.l.b16 %v6685
    %v6975 = vunpack.c.h.b16 %v6685
    %v6976 = vunpack.c.l.b16 %v6686
    %v6977 = vunpack.c.h.b16 %v6686
    %v6978 = vunpack.c.l.b16 %v6687
    %v6979 = vunpack.c.h.b16 %v6687
    %v6980 = vunpack.c.l.b16 %v6688
    %v6981 = vunpack.c.h.b16 %v6688
    %v6982 = vunpack.c.l.b16 %v6689
    %v6983 = vunpack.c.h.b16 %v6689
    %v6984 = vunpack.c.l.b16 %v6690
    %v6985 = vunpack.c.h.b16 %v6690
    %v6986 = vunpack.c.l.b16 %v6691
    %v6987 = vunpack.c.h.b16 %v6691
    %v6988 = vunpack.c.l.b16 %v6692
    %v6989 = vunpack.c.h.b16 %v6692
    %v6990 = vunpack.c.l.b16 %v6693
    %v6991 = vunpack.c.h.b16 %v6693
    %v6992 = vunpack.c.l.b16 %v6694
    %v6993 = vunpack.c.h.b16 %v6694
    %v6994 = vunpack.c.l.b16 %v6695
    %v6995 = vunpack.c.h.b16 %v6695
    %v6996 = vunpack.c.l.b16 %v6696
    %v6997 = vunpack.c.h.b16 %v6696
    %v6998 = vunpack.c.l.b16 %v6697
    %v6999 = vunpack.c.h.b16 %v6697
    %v7000 = vunpack.c.l.b16 %v6698
    %v7001 = vunpack.c.h.b16 %v6698
    %v7002 = vunpack.c.l.b16 %v6699
    %v7003 = vunpack.c.h.b16 %v6699
    %v7004 = vunpack.c.l.b16 %v6700
    %v7005 = vunpack.c.h.b16 %v6700
    %v7006 = vunpack.c.l.b16 %v6701
    %v7007 = vunpack.c.h.b16 %v6701
    %v7008 = vunpack.c.l.b16 %v6702
    %v7009 = vunpack.c.h.b16 %v6702
    %v7010 = vunpack.c.l.b16 %v6703
    %v7011 = vunpack.c.h.b16 %v6703
    %v7012 = vunpack.c.l.b16 %v6704
    %v7013 = vunpack.c.h.b16 %v6704
    %v7014 = vunpack.c.l.b16 %v6705
    %v7015 = vunpack.c.h.b16 %v6705
    %v7016 = vunpack.c.l.b16 %v6706
    %v7017 = vunpack.c.h.b16 %v6706
    %v7018 = vunpack.c.l.b16 %v6707
    %v7019 = vunpack.c.h.b16 %v6707
    %v7020 = vunpack.c.l.b16 %v6708
    %v7021 = vunpack.c.h.b16 %v6708
    %v7022 = vunpack.c.l.b16 %v6709
    %v7023 = vunpack.c.h.b16 %v6709
    %v7024 = vunpack.c.l.b16 %v6710
    %v7025 = vunpack.c.h.b16 %v6710
    %v7026 = vunpack.c.l.b16 %v6711
    %v7027 = vunpack.c.h.b16 %v6711
    %v7028 = vunpack.c.l.b16 %v6712
    %v7029 = vunpack.c.h.b16 %v6712
    %v7030 = vunpack.c.l.b16 %v6713
    %v7031 = vunpack.c.h.b16 %v6713
    %v7032 = vunpack.c.l.b16 %v6714
    %v7033 = vunpack.c.h.b16 %v6714
    %v7034 = vunpack.c.l.b16 %v6715
    %v7035 = vunpack.c.h.b16 %v6715
    %v7036 = vunpack.c.l.b16 %v6716
    %v7037 = vunpack.c.h.b16 %v6716
    %v7038 = vunpack.c.l.b16 %v6717
    %v7039 = vunpack.c.h.b16 %v6717
    %v7040 = vunpack.c.l.b16 %v6718
    %v7041 = vunpack.c.h.b16 %v6718
    %v7042 = vunpack.c.l.b16 %v6719
    %v7043 = vunpack.c.h.b16 %v6719
    %v7044 = vunpack.c.l.b16 %v6720
    %v7045 = vunpack.c.h.b16 %v6720
    %v7046 = vunpack.c.l.b16 %v6721
    %v7047 = vunpack.c.h.b16 %v6721
    %v7048 = vunpack.c.l.b16 %v6722
    %v7049 = vunpack.c.h.b16 %v6722
    %v7050 = vunpack.c.l.b16 %v6723
    %v7051 = vunpack.c.h.b16 %v6723
    %v7052 = vunpack.c.l.b16 %v6724
    %v7053 = vunpack.c.h.b16 %v6724
    %v7054 = vunpack.c.l.b16 %v6725
    %v7055 = vunpack.c.h.b16 %v6725
    %v7056 = vunpack.c.l.b16 %v6726
    %v7057 = vunpack.c.h.b16 %v6726
    %v7058 = vunpack.c.l.b16 %v6727
    %v7059 = vunpack.c.h.b16 %v6727
    %v7060 = vunpack.c.l.b16 %v6728
    %v7061 = vunpack.c.h.b16 %v6728
    %v7062 = vunpack.c.l.b16 %v6729
    %v7063 = vunpack.c.h.b16 %v6729
    %v7064 = vunpack.c.l.b16 %v6730
    %v7065 = vunpack.c.h.b16 %v6730
    %v7066 = vunpack.c.l.b16 %v6731
    %v7067 = vunpack.c.h.b16 %v6731
    %v7068 = vunpack.c.l.b16 %v6732
    %v7069 = vunpack.c.h.b16 %v6732
    %v7070 = vunpack.c.l.b16 %v6733
    %v7071 = vunpack.c.h.b16 %v6733
    %v7072 = vunpack.c.l.b16 %v6734
    %v7073 = vunpack.c.h.b16 %v6734
    %v7074 = vunpack.c.l.b16 %v6735
    %v7075 = vunpack.c.h.b16 %v6735
    %v7076 = vunpack.c.l.b16 %v6736
    %v7077 = vunpack.c.h.b16 %v6736
    %v7078 = vunpack.c.l.b16 %v6737
    %v7079 = vunpack.c.h.b16 %v6737
    %v7080 = vunpack.c.l.b16 %v6738
    %v7081 = vunpack.c.h.b16 %v6738
    %v7082 = vunpack.c.l.b16 %v6739
    %v7083 = vunpack.c.h.b16 %v6739
    %v7084 = vunpack.c.l.b16 %v6740
    %v7085 = vunpack.c.h.b16 %v6740
    %v7086 = vunpack.c.l.b16 %v6741
    %v7087 = vunpack.c.h.b16 %v6741
    %v7088 = vunpack.c.l.b16 %v6742
    %v7089 = vunpack.c.h.b16 %v6742
    %v7090 = vunpack.c.l.b16 %v6743
    %v7091 = vunpack.c.h.b16 %v6743
    %v7092 = vunpack.c.l.b16 %v6744
    %v7093 = vunpack.c.h.b16 %v6744
    %v7094 = vunpack.c.l.b16 %v6745
    %v7095 = vunpack.c.h.b16 %v6745
    %v7096 = vunpack.c.l.b16 %v6746
    %v7097 = vunpack.c.h.b16 %v6746
    %v7098 = vunpack.c.l.b16 %v6747
    %v7099 = vunpack.c.h.b16 %v6747
    %v7100 = vunpack.c.l.b16 %v6748
    %v7101 = vunpack.c.h.b16 %v6748
    %v7102 = vunpack.c.l.b16 %v6749
    %v7103 = vunpack.c.h.b16 %v6749
    %v7104 = vunpack.c.l.b16 %v6750
    %v7105 = vunpack.c.h.b16 %v6750
    %v7106 = vunpack.c.l.b16 %v6751
    %v7107 = vunpack.c.h.b16 %v6751
    %v7108 = vunpack.c.l.b16 %v6752
    %v7109 = vunpack.c.h.b16 %v6752
    %v7110 = vunpack.c.l.b16 %v6753
    %v7111 = vunpack.c.h.b16 %v6753
    %v7112 = vunpack.c.l.b16 %v6754
    %v7113 = vunpack.c.h.b16 %v6754
    %v7114 = vunpack.c.l.b16 %v6755
    %v7115 = vunpack.c.h.b16 %v6755
    %v7116 = vunpack.c.l.b16 %v6756
    %v7117 = vunpack.c.h.b16 %v6756
    %v7118 = vunpack.c.l.b16 %v6757
    %v7119 = vunpack.c.h.b16 %v6757
    %v7120 = vunpack.c.l.b16 %v6758
    %v7121 = vunpack.c.h.b16 %v6758
    %v7122 = vunpack.c.l.b16 %v6759
    %v7123 = vunpack.c.h.b16 %v6759
    %v7124 = vunpack.c.l.b16 %v6760
    %v7125 = vunpack.c.h.b16 %v6760
    %v7126 = vunpack.c.l.b16 %v6761
    %v7127 = vunpack.c.h.b16 %v6761
    %v7128 = vunpack.c.l.b16 %v6762
    %v7129 = vunpack.c.h.b16 %v6762
    %v7130 = vunpack.c.l.b16 %v6763
    %v7131 = vunpack.c.h.b16 %v6763
    %v7132 = vunpack.c.l.b16 %v6764
    %v7133 = vunpack.c.h.b16 %v6764
    %v7134 = vunpack.c.l.b16 %v6765
    %v7135 = vunpack.c.h.b16 %v6765
    %v7136 = vunpack.c.l.b16 %v6766
    %v7137 = vunpack.c.h.b16 %v6766
    %v7138 = vunpack.c.l.b16 %v6767
    %v7139 = vunpack.c.h.b16 %v6767
    %v7140 = vunpack.c.l.b16 %v6768
    %v7141 = vunpack.c.h.b16 %v6768
    %v7142 = vunpack.c.l.b16 %v6769
    %v7143 = vunpack.c.h.b16 %v6769
    %v7144 = vunpack.c.l.b16 %v6770
    %v7145 = vunpack.c.h.b16 %v6770
    %v7146 = vunpack.c.l.b16 %v6771
    %v7147 = vunpack.c.h.b16 %v6771
    %v7148 = vunpack.c.l.b16 %v6772
    %v7149 = vunpack.c.h.b16 %v6772
    %v7150 = vunpack.c.l.b16 %v6773
    %v7151 = vunpack.c.h.b16 %v6773
    %v7152 = vunpack.c.l.b16 %v6774
    %v7153 = vunpack.c.h.b16 %v6774
    %v7154 = vunpack.c.l.b16 %v6775
    %v7155 = vunpack.c.h.b16 %v6775
    %v7156 = vunpack.c.l.b16 %v6776
    %v7157 = vunpack.c.h.b16 %v6776
    %v7158 = vunpack.c.l.b16 %v6777
    %v7159 = vunpack.c.h.b16 %v6777
    %v7160 = vunpack.c.l.b16 %v6778
    %v7161 = vunpack.c.h.b16 %v6778
    %v7162 = vunpack.c.l.b16 %v6779
    %v7163 = vunpack.c.h.b16 %v6779
    %v7164 = vunpack.c.l.b16 %v6780
    %v7165 = vunpack.c.h.b16 %v6780
    %v7166 = vunpack.c.l.b16 %v6781
    %v7167 = vunpack.c.h.b16 %v6781
    %v7168 = vunpack.c.l.b16 %v6782
    %v7169 = vunpack.c.h.b16 %v6782
    %v7170 = vunpack.c.l.b16 %v6783
    %v7171 = vunpack.c.h.b16 %v6783
    %v7172 = vunpack.c.l.b16 %v6784
    %v7173 = vunpack.c.h.b16 %v6784
    %v7174 = vunpack.c.l.b16 %v6785
    %v7175 = vunpack.c.h.b16 %v6785
    %v7176 = vunpack.c.l.b16 %v6786
    %v7177 = vunpack.c.h.b16 %v6786
    %v7178 = vunpack.c.l.b16 %v6787
    %v7179 = vunpack.c.h.b16 %v6787
    %v7180 = vunpack.c.l.b16 %v6788
    %v7181 = vunpack.c.h.b16 %v6788
    %v7182 = vunpack.c.l.b16 %v6789
    %v7183 = vunpack.c.h.b16 %v6789
    %v7184 = vpack.c.b16 %v6932, %v6928
    %v7185 = vpack.c.b16 %v6933, %v6929
    %v7186 = vpack.c.b16 %v6934, %v6930
    %v7187 = vpack.c.b16 %v6935, %v6931
    %v7188 = vpack.c.b16 %v6940, %v6936
    %v7189 = vpack.c.b16 %v6941, %v6937
    %v7190 = vpack.c.b16 %v6942, %v6938
    %v7191 = vpack.c.b16 %v6943, %v6939
    %v7192 = vpack.c.b16 %v6948, %v6944
    %v7193 = vpack.c.b16 %v6949, %v6945
    %v7194 = vpack.c.b16 %v6950, %v6946
    %v7195 = vpack.c.b16 %v6951, %v6947
    %v7196 = vpack.c.b16 %v6956, %v6952
    %v7197 = vpack.c.b16 %v6957, %v6953
    %v7198 = vpack.c.b16 %v6958, %v6954
    %v7199 = vpack.c.b16 %v6959, %v6955
    %v7200 = vpack.c.b16 %v6964, %v6960
    %v7201 = vpack.c.b16 %v6965, %v6961
    %v7202 = vpack.c.b16 %v6966, %v6962
    %v7203 = vpack.c.b16 %v6967, %v6963
    %v7204 = vpack.c.b16 %v6972, %v6968
    %v7205 = vpack.c.b16 %v6973, %v6969
    %v7206 = vpack.c.b16 %v6974, %v6970
    %v7207 = vpack.c.b16 %v6975, %v6971
    %v7208 = vpack.c.b16 %v6980, %v6976
    %v7209 = vpack.c.b16 %v6981, %v6977
    %v7210 = vpack.c.b16 %v6982, %v6978
    %v7211 = vpack.c.b16 %v6983, %v6979
    %v7212 = vpack.c.b16 %v6988, %v6984
    %v7213 = vpack.c.b16 %v6989, %v6985
    %v7214 = vpack.c.b16 %v6990, %v6986
    %v7215 = vpack.c.b16 %v6991, %v6987
    %v7216 = vpack.c.b16 %v6996, %v6992
    %v7217 = vpack.c.b16 %v6997, %v6993
    %v7218 = vpack.c.b16 %v6998, %v6994
    %v7219 = vpack.c.b16 %v6999, %v6995
    %v7220 = vpack.c.b16 %v7004, %v7000
    %v7221 = vpack.c.b16 %v7005, %v7001
    %v7222 = vpack.c.b16 %v7006, %v7002
    %v7223 = vpack.c.b16 %v7007, %v7003
    %v7224 = vpack.c.b16 %v7012, %v7008
    %v7225 = vpack.c.b16 %v7013, %v7009
    %v7226 = vpack.c.b16 %v7014, %v7010
    %v7227 = vpack.c.b16 %v7015, %v7011
    %v7228 = vpack.c.b16 %v7020, %v7016
    %v7229 = vpack.c.b16 %v7021, %v7017
    %v7230 = vpack.c.b16 %v7022, %v7018
    %v7231 = vpack.c.b16 %v7023, %v7019
    %v7232 = vpack.c.b16 %v7028, %v7024
    %v7233 = vpack.c.b16 %v7029, %v7025
    %v7234 = vpack.c.b16 %v7030, %v7026
    %v7235 = vpack.c.b16 %v7031, %v7027
    %v7236 = vpack.c.b16 %v7036, %v7032
    %v7237 = vpack.c.b16 %v7037, %v7033
    %v7238 = vpack.c.b16 %v7038, %v7034
    %v7239 = vpack.c.b16 %v7039, %v7035
    %v7240 = vpack.c.b16 %v7044, %v7040
    %v7241 = vpack.c.b16 %v7045, %v7041
    %v7242 = vpack.c.b16 %v7046, %v7042
    %v7243 = vpack.c.b16 %v7047, %v7043
    %v7244 = vpack.c.b16 %v7052, %v7048
    %v7245 = vpack.c.b16 %v7053, %v7049
    %v7246 = vpack.c.b16 %v7054, %v7050
    %v7247 = vpack.c.b16 %v7055, %v7051
    %v7248 = vpack.c.b16 %v7060, %v7056
    %v7249 = vpack.c.b16 %v7061, %v7057
    %v7250 = vpack.c.b16 %v7062, %v7058
    %v7251 = vpack.c.b16 %v7063, %v7059
    %v7252 = vpack.c.b16 %v7068, %v7064
    %v7253 = vpack.c.b16 %v7069, %v7065
    %v7254 = vpack.c.b16 %v7070, %v7066
    %v7255 = vpack.c.b16 %v7071, %v7067
    %v7256 = vpack.c.b16 %v7076, %v7072
    %v7257 = vpack.c.b16 %v7077, %v7073
    %v7258 = vpack.c.b16 %v7078, %v7074
    %v7259 = vpack.c.b16 %v7079, %v7075
    %v7260 = vpack.c.b16 %v7084, %v7080
    %v7261 = vpack.c.b16 %v7085, %v7081
    %v7262 = vpack.c.b16 %v7086, %v7082
    %v7263 = vpack.c.b16 %v7087, %v7083
    %v7264 = vpack.c.b16 %v7092, %v7088
    %v7265 = vpack.c.b16 %v7093, %v7089
    %v7266 = vpack.c.b16 %v7094, %v7090
    %v7267 = vpack.c.b16 %v7095, %v7091
    %v7268 = vpack.c.b16 %v7100, %v7096
    %v7269 = vpack.c.b16 %v7101, %v7097
    %v7270 = vpack.c.b16 %v7102, %v7098
    %v7271 = vpack.c.b16 %v7103, %v7099
    %v7272 = vpack.c.b16 %v7108, %v7104
    %v7273 = vpack.c.b16 %v7109, %v7105
    %v7274 = vpack.c.b16 %v7110, %v7106
    %v7275 = vpack.c.b16 %v7111, %v7107
    %v7276 = vpack.c.b16 %v7116, %v7112
    %v7277 = vpack.c.b16 %v7117, %v7113
    %v7278 = vpack.c.b16 %v7118, %v7114
    %v7279 = vpack.c.b16 %v7119, %v7115
    %v7280 = vpack.c.b16 %v7124, %v7120
    %v7281 = vpack.c.b16 %v7125, %v7121
    %v7282 = vpack.c.b16 %v7126, %v7122
    %v7283 = vpack.c.b16 %v7127, %v7123
    %v7284 = vpack.c.b16 %v7132, %v7128
    %v7285 = vpack.c.b16 %v7133, %v7129
    %v7286 = vpack.c.b16 %v7134, %v7130
    %v7287 = vpack.c.b16 %v7135, %v7131
    %v7288 = vpack.c.b16 %v7140, %v7136
    %v7289 = vpack.c.b16 %v7141, %v7137
    %v7290 = vpack.c.b16 %v7142, %v7138
    %v7291 = vpack.c.b16 %v7143, %v7139
    %v7292 = vpack.c.b16 %v7148, %v7144
    %v7293 = vpack.c.b16 %v7149, %v7145
    %v7294 = vpack.c.b16 %v7150, %v7146
    %v7295 = vpack.c.b16 %v7151, %v7147
    %v7296 = vpack.c.b16 %v7156, %v7152
    %v7297 = vpack.c.b16 %v7157, %v7153
    %v7298 = vpack.c.b16 %v7158, %v7154
    %v7299 = vpack.c.b16 %v7159, %v7155
    %v7300 = vpack.c.b16 %v7164, %v7160
    %v7301 = vpack.c.b16 %v7165, %v7161
    %v7302 = vpack.c.b16 %v7166, %v7162
    %v7303 = vpack.c.b16 %v7167, %v7163
    %v7304 = vpack.c.b16 %v7172, %v7168
    %v7305 = vpack.c.b16 %v7173, %v7169
    %v7306 = vpack.c.b16 %v7174, %v7170
    %v7307 = vpack.c.b16 %v7175, %v7171
    %v7308 = vpack.c.b16 %v7180, %v7176
    %v7309 = vpack.c.b16 %v7181, %v7177
    %v7310 = vpack.c.b16 %v7182, %v7178
    %v7311 = vpack.c.b16 %v7183, %v7179
    %7440 = vmatpush.bf16.msra.mxu0 %v7212
    %7441 = vmatpush.bf16.msra.mxu0 %v7208
    %7442 = vmatpush.bf16.msra.mxu0 %v7204
    %7443 = vmatpush.bf16.msra.mxu0 %v7200
    %7444 = vmatpush.bf16.msra.mxu0 %v7196
    %7445 = vmatpush.bf16.msra.mxu0 %v7192
    %7446 = vmatpush.bf16.msra.mxu0 %v7188
    %7447 = vmatpush.bf16.msra.mxu0 %v7184
    %7448 = vmatmul.bf16.gmra.mxu0 %v6658
    %v7449 = vpop.f32.mrf.mxu0
    %v7450 = vadd.f32 %v6792, %v7449
    %v7451 = vpop.f32.mrf.mxu0
    %7452 = vdwg.mxu0
    %7453 = vmatpush.bf16.msra.mxu0 %v7244
    %7454 = vmatpush.bf16.msra.mxu0 %v7240
    %7455 = vmatpush.bf16.msra.mxu0 %v7236
    %7456 = vmatpush.bf16.msra.mxu0 %v7232
    %7457 = vmatpush.bf16.msra.mxu0 %v7228
    %7458 = vmatpush.bf16.msra.mxu0 %v7224
    %7459 = vmatpush.bf16.msra.mxu0 %v7220
    %7460 = vmatpush.bf16.msra.mxu0 %v7216
    %7461 = vmatmul.bf16.gmra.mxu0 %v6659
    %v7462 = vpop.f32.mrf.mxu0
    %v7463 = vadd.f32 %v7450, %v7462
    %v7464 = vpop.f32.mrf.mxu0
    %7465 = vdwg.mxu0
    %7466 = vmatpush.bf16.msra.mxu0 %v7276
    %7467 = vmatpush.bf16.msra.mxu0 %v7272
    %7468 = vmatpush.bf16.msra.mxu0 %v7268
    %7469 = vmatpush.bf16.msra.mxu0 %v7264
    %7470 = vmatpush.bf16.msra.mxu0 %v7260
    %7471 = vmatpush.bf16.msra.mxu0 %v7256
    %7472 = vmatpush.bf16.msra.mxu0 %v7252
    %7473 = vmatpush.bf16.msra.mxu0 %v7248
    %7474 = vmatmul.bf16.gmra.mxu0 %v6660
    %v7475 = vpop.f32.mrf.mxu0
    %v7476 = vadd.f32 %v7463, %v7475
    %v7477 = vpop.f32.mrf.mxu0
    %7478 = vdwg.mxu0
    %7479 = vmatpush.bf16.msra.mxu0 %v7308
    %7480 = vmatpush.bf16.msra.mxu0 %v7304
    %7481 = vmatpush.bf16.msra.mxu0 %v7300
    %7482 = vmatpush.bf16.msra.mxu0 %v7296
    %7483 = vmatpush.bf16.msra.mxu0 %v7292
    %7484 = vmatpush.bf16.msra.mxu0 %v7288
    %7485 = vmatpush.bf16.msra.mxu0 %v7284
    %7486 = vmatpush.bf16.msra.mxu0 %v7280
    %7487 = vmatmul.bf16.gmra.mxu0 %v6661
    %v7488 = vpop.f32.mrf.mxu0
    %v7489 = vadd.f32 %v7476, %v7488
    %v7490 = vpop.f32.mrf.mxu0
    %7491 = vdwg.mxu0
    %7492 = vmatpush.bf16.msra.mxu0 %v7213
    %7493 = vmatpush.bf16.msra.mxu0 %v7209
    %7494 = vmatpush.bf16.msra.mxu0 %v7205
    %7495 = vmatpush.bf16.msra.mxu0 %v7201
    %7496 = vmatpush.bf16.msra.mxu0 %v7197
    %7497 = vmatpush.bf16.msra.mxu0 %v7193
    %7498 = vmatpush.bf16.msra.mxu0 %v7189
    %7499 = vmatpush.bf16.msra.mxu0 %v7185
    %7500 = vmatmul.bf16.gmra.mxu0 %v6658
    %v7501 = vpop.f32.mrf.mxu0
    %v7502 = vadd.f32 %v6793, %v7501
    %v7503 = vpop.f32.mrf.mxu0
    %7504 = vdwg.mxu0
    %7505 = vmatpush.bf16.msra.mxu0 %v7245
    %7506 = vmatpush.bf16.msra.mxu0 %v7241
    %7507 = vmatpush.bf16.msra.mxu0 %v7237
    %7508 = vmatpush.bf16.msra.mxu0 %v7233
    %7509 = vmatpush.bf16.msra.mxu0 %v7229
    %7510 = vmatpush.bf16.msra.mxu0 %v7225
    %7511 = vmatpush.bf16.msra.mxu0 %v7221
    %7512 = vmatpush.bf16.msra.mxu0 %v7217
    %7513 = vmatmul.bf16.gmra.mxu0 %v6659
    %v7514 = vpop.f32.mrf.mxu0
    %v7515 = vadd.f32 %v7502, %v7514
    %v7516 = vpop.f32.mrf.mxu0
    %7517 = vdwg.mxu0
    %7518 = vmatpush.bf16.msra.mxu0 %v7277
    %7519 = vmatpush.bf16.msra.mxu0 %v7273
    %7520 = vmatpush.bf16.msra.mxu0 %v7269
    %7521 = vmatpush.bf16.msra.mxu0 %v7265
    %7522 = vmatpush.bf16.msra.mxu0 %v7261
    %7523 = vmatpush.bf16.msra.mxu0 %v7257
    %7524 = vmatpush.bf16.msra.mxu0 %v7253
    %7525 = vmatpush.bf16.msra.mxu0 %v7249
    %7526 = vmatmul.bf16.gmra.mxu0 %v6660
    %v7527 = vpop.f32.mrf.mxu0
    %v7528 = vadd.f32 %v7515, %v7527
    %v7529 = vpop.f32.mrf.mxu0
    %7530 = vdwg.mxu0
    %7531 = vmatpush.bf16.msra.mxu0 %v7309
    %7532 = vmatpush.bf16.msra.mxu0 %v7305
    %7533 = vmatpush.bf16.msra.mxu0 %v7301
    %7534 = vmatpush.bf16.msra.mxu0 %v7297
    %7535 = vmatpush.bf16.msra.mxu0 %v7293
    %7536 = vmatpush.bf16.msra.mxu0 %v7289
    %7537 = vmatpush.bf16.msra.mxu0 %v7285
    %7538 = vmatpush.bf16.msra.mxu0 %v7281
    %7539 = vmatmul.bf16.gmra.mxu0 %v6661
    %v7540 = vpop.f32.mrf.mxu0
    %v7541 = vadd.f32 %v7528, %v7540
    %v7542 = vpop.f32.mrf.mxu0
    %7543 = vdwg.mxu0
    %7544 = vmatpush.bf16.msra.mxu0 %v7214
    %7545 = vmatpush.bf16.msra.mxu0 %v7210
    %7546 = vmatpush.bf16.msra.mxu0 %v7206
    %7547 = vmatpush.bf16.msra.mxu0 %v7202
    %7548 = vmatpush.bf16.msra.mxu0 %v7198
    %7549 = vmatpush.bf16.msra.mxu0 %v7194
    %7550 = vmatpush.bf16.msra.mxu0 %v7190
    %7551 = vmatpush.bf16.msra.mxu0 %v7186
    %7552 = vmatmul.bf16.gmra.mxu0 %v6658
    %v7553 = vpop.f32.mrf.mxu0
    %v7554 = vadd.f32 %v6794, %v7553
    %v7555 = vpop.f32.mrf.mxu0
    %7556 = vdwg.mxu0
    %7557 = vmatpush.bf16.msra.mxu0 %v7246
    %7558 = vmatpush.bf16.msra.mxu0 %v7242
    %7559 = vmatpush.bf16.msra.mxu0 %v7238
    %7560 = vmatpush.bf16.msra.mxu0 %v7234
    %7561 = vmatpush.bf16.msra.mxu0 %v7230
    %7562 = vmatpush.bf16.msra.mxu0 %v7226
    %7563 = vmatpush.bf16.msra.mxu0 %v7222
    %7564 = vmatpush.bf16.msra.mxu0 %v7218
    %7565 = vmatmul.bf16.gmra.mxu0 %v6659
    %v7566 = vpop.f32.mrf.mxu0
    %v7567 = vadd.f32 %v7554, %v7566
    %v7568 = vpop.f32.mrf.mxu0
    %7569 = vdwg.mxu0
    %7570 = vmatpush.bf16.msra.mxu0 %v7278
    %7571 = vmatpush.bf16.msra.mxu0 %v7274
    %7572 = vmatpush.bf16.msra.mxu0 %v7270
    %7573 = vmatpush.bf16.msra.mxu0 %v7266
    %7574 = vmatpush.bf16.msra.mxu0 %v7262
    %7575 = vmatpush.bf16.msra.mxu0 %v7258
    %7576 = vmatpush.bf16.msra.mxu0 %v7254
    %7577 = vmatpush.bf16.msra.mxu0 %v7250
    %7578 = vmatmul.bf16.gmra.mxu0 %v6660
    %v7579 = vpop.f32.mrf.mxu0
    %v7580 = vadd.f32 %v7567, %v7579
    %v7581 = vpop.f32.mrf.mxu0
    %7582 = vdwg.mxu0
    %7583 = vmatpush.bf16.msra.mxu0 %v7310
    %7584 = vmatpush.bf16.msra.mxu0 %v7306
    %7585 = vmatpush.bf16.msra.mxu0 %v7302
    %7586 = vmatpush.bf16.msra.mxu0 %v7298
    %7587 = vmatpush.bf16.msra.mxu0 %v7294
    %7588 = vmatpush.bf16.msra.mxu0 %v7290
    %7589 = vmatpush.bf16.msra.mxu0 %v7286
    %7590 = vmatpush.bf16.msra.mxu0 %v7282
    %7591 = vmatmul.bf16.gmra.mxu0 %v6661
    %v7592 = vpop.f32.mrf.mxu0
    %v7593 = vadd.f32 %v7580, %v7592
    %v7594 = vpop.f32.mrf.mxu0
    %7595 = vdwg.mxu0
    %7596 = vmatpush.bf16.msra.mxu0 %v7215
    %7597 = vmatpush.bf16.msra.mxu0 %v7211
    %7598 = vmatpush.bf16.msra.mxu0 %v7207
    %7599 = vmatpush.bf16.msra.mxu0 %v7203
    %7600 = vmatpush.bf16.msra.mxu0 %v7199
    %7601 = vmatpush.bf16.msra.mxu0 %v7195
    %7602 = vmatpush.bf16.msra.mxu0 %v7191
    %7603 = vmatpush.bf16.msra.mxu0 %v7187
    %7604 = vmatmul.bf16.gmra.mxu0 %v6658
    %v7605 = vpop.f32.mrf.mxu0
    %v7606 = vadd.f32 %v6795, %v7605
    %v7607 = vpop.f32.mrf.mxu0
    %7608 = vdwg.mxu0
    %7609 = vmatpush.bf16.msra.mxu0 %v7247
    %7610 = vmatpush.bf16.msra.mxu0 %v7243
    %7611 = vmatpush.bf16.msra.mxu0 %v7239
    %7612 = vmatpush.bf16.msra.mxu0 %v7235
    %7613 = vmatpush.bf16.msra.mxu0 %v7231
    %7614 = vmatpush.bf16.msra.mxu0 %v7227
    %7615 = vmatpush.bf16.msra.mxu0 %v7223
    %7616 = vmatpush.bf16.msra.mxu0 %v7219
    %7617 = vmatmul.bf16.gmra.mxu0 %v6659
    %v7618 = vpop.f32.mrf.mxu0
    %v7619 = vadd.f32 %v7606, %v7618
    %v7620 = vpop.f32.mrf.mxu0
    %7621 = vdwg.mxu0
    %7622 = vmatpush.bf16.msra.mxu0 %v7279
    %7623 = vmatpush.bf16.msra.mxu0 %v7275
    %7624 = vmatpush.bf16.msra.mxu0 %v7271
    %7625 = vmatpush.bf16.msra.mxu0 %v7267
    %7626 = vmatpush.bf16.msra.mxu0 %v7263
    %7627 = vmatpush.bf16.msra.mxu0 %v7259
    %7628 = vmatpush.bf16.msra.mxu0 %v7255
    %7629 = vmatpush.bf16.msra.mxu0 %v7251
    %7630 = vmatmul.bf16.gmra.mxu0 %v6660
    %v7631 = vpop.f32.mrf.mxu0
    %v7632 = vadd.f32 %v7619, %v7631
    %v7633 = vpop.f32.mrf.mxu0
    %7634 = vdwg.mxu0
    %7635 = vmatpush.bf16.msra.mxu0 %v7311
    %7636 = vmatpush.bf16.msra.mxu0 %v7307
    %7637 = vmatpush.bf16.msra.mxu0 %v7303
    %7638 = vmatpush.bf16.msra.mxu0 %v7299
    %7639 = vmatpush.bf16.msra.mxu0 %v7295
    %7640 = vmatpush.bf16.msra.mxu0 %v7291
    %7641 = vmatpush.bf16.msra.mxu0 %v7287
    %7642 = vmatpush.bf16.msra.mxu0 %v7283
    %7643 = vmatmul.bf16.gmra.mxu0 %v6661
    %v7644 = vpop.f32.mrf.mxu0
    %v7645 = vadd.f32 %v7632, %v7644
    %v7646 = vpop.f32.mrf.mxu0
    %7647 = vdwg.mxu0
    %v7648 = vmax.f32 %v7489, 0.0
    %v7649 = vmax.f32 %v7541, 0.0
    %v7650 = vmax.f32 %v7593, 0.0
    %v7651 = vmax.f32 %v7645, 0.0
    %v7652 = vpack.c.bf16 %v7648, %v7648
    %v7653 = vpack.c.bf16 %v7649, %v7649
    %v7654 = vpack.c.bf16 %v7650, %v7650
    %v7655 = vpack.c.bf16 %v7651, %v7651
    %v7656 = vld [vmem:[#allocation12] sm:$0xff]
    %v7657 = vld [vmem:[#allocation12 + $0x8] sm:$0xff]
    %v7658 = vld [vmem:[#allocation12 + $0x10] sm:$0xff]
    %v7659 = vld [vmem:[#allocation12 + $0x18] sm:$0xff]
    %v7660 = vld [vmem:[#allocation12 + $0x20] sm:$0xff]
    %v7661 = vld [vmem:[#allocation12 + $0x28] sm:$0xff]
    %v7662 = vld [vmem:[#allocation12 + $0x30] sm:$0xff]
    %v7663 = vld [vmem:[#allocation12 + $0x38] sm:$0xff]
    %v7664 = vld [vmem:[#allocation12 + $0x40] sm:$0xff]
    %v7665 = vld [vmem:[#allocation12 + $0x48] sm:$0xff]
    %v7666 = vld [vmem:[#allocation12 + $0x50] sm:$0xff]
    %v7667 = vld [vmem:[#allocation12 + $0x58] sm:$0xff]
    %v7668 = vld [vmem:[#allocation12 + $0x60] sm:$0xff]
    %v7669 = vld [vmem:[#allocation12 + $0x68] sm:$0xff]
    %v7670 = vld [vmem:[#allocation12 + $0x70] sm:$0xff]
    %v7671 = vld [vmem:[#allocation12 + $0x78] sm:$0xff]
    %v7672 = vld [vmem:[#allocation12 + $0x80] sm:$0xff]
    %v7673 = vld [vmem:[#allocation12 + $0x88] sm:$0xff]
    %v7674 = vld [vmem:[#allocation12 + $0x90] sm:$0xff]
    %v7675 = vld [vmem:[#allocation12 + $0x98] sm:$0xff]
    %v7676 = vld [vmem:[#allocation12 + $0xa0] sm:$0xff]
    %v7677 = vld [vmem:[#allocation12 + $0xa8] sm:$0xff]
    %v7678 = vld [vmem:[#allocation12 + $0xb0] sm:$0xff]
    %v7679 = vld [vmem:[#allocation12 + $0xb8] sm:$0xff]
    %v7680 = vld [vmem:[#allocation12 + $0xc0] sm:$0xff]
    %v7681 = vld [vmem:[#allocation12 + $0xc8] sm:$0xff]
    %v7682 = vld [vmem:[#allocation12 + $0xd0] sm:$0xff]
    %v7683 = vld [vmem:[#allocation12 + $0xd8] sm:$0xff]
    %v7684 = vld [vmem:[#allocation12 + $0xe0] sm:$0xff]
    %v7685 = vld [vmem:[#allocation12 + $0xe8] sm:$0xff]
    %v7686 = vld [vmem:[#allocation12 + $0xf0] sm:$0xff]
    %v7687 = vld [vmem:[#allocation12 + $0xf8] sm:$0xff]
    %v7688 = vld [vmem:[#allocation12 + $0x100] sm:$0xff]
    %v7689 = vld [vmem:[#allocation12 + $0x108] sm:$0xff]
    %v7690 = vld [vmem:[#allocation12 + $0x110] sm:$0xff]
    %v7691 = vld [vmem:[#allocation12 + $0x118] sm:$0xff]
    %v7692 = vld [vmem:[#allocation12 + $0x120] sm:$0xff]
    %v7693 = vld [vmem:[#allocation12 + $0x128] sm:$0xff]
    %v7694 = vld [vmem:[#allocation12 + $0x130] sm:$0xff]
    %v7695 = vld [vmem:[#allocation12 + $0x138] sm:$0xff]
    %v7696 = vld [vmem:[#allocation12 + $0x140] sm:$0xff]
    %v7697 = vld [vmem:[#allocation12 + $0x148] sm:$0xff]
    %v7698 = vld [vmem:[#allocation12 + $0x150] sm:$0xff]
    %v7699 = vld [vmem:[#allocation12 + $0x158] sm:$0xff]
    %v7700 = vld [vmem:[#allocation12 + $0x160] sm:$0xff]
    %v7701 = vld [vmem:[#allocation12 + $0x168] sm:$0xff]
    %v7702 = vld [vmem:[#allocation12 + $0x170] sm:$0xff]
    %v7703 = vld [vmem:[#allocation12 + $0x178] sm:$0xff]
    %v7704 = vld [vmem:[#allocation12 + $0x180] sm:$0xff]
    %v7705 = vld [vmem:[#allocation12 + $0x188] sm:$0xff]
    %v7706 = vld [vmem:[#allocation12 + $0x190] sm:$0xff]
    %v7707 = vld [vmem:[#allocation12 + $0x198] sm:$0xff]
    %v7708 = vld [vmem:[#allocation12 + $0x1a0] sm:$0xff]
    %v7709 = vld [vmem:[#allocation12 + $0x1a8] sm:$0xff]
    %v7710 = vld [vmem:[#allocation12 + $0x1b0] sm:$0xff]
    %v7711 = vld [vmem:[#allocation12 + $0x1b8] sm:$0xff]
    %v7712 = vld [vmem:[#allocation12 + $0x1c0] sm:$0xff]
    %v7713 = vld [vmem:[#allocation12 + $0x1c8] sm:$0xff]
    %v7714 = vld [vmem:[#allocation12 + $0x1d0] sm:$0xff]
    %v7715 = vld [vmem:[#allocation12 + $0x1d8] sm:$0xff]
    %v7716 = vld [vmem:[#allocation12 + $0x1e0] sm:$0xff]
    %v7717 = vld [vmem:[#allocation12 + $0x1e8] sm:$0xff]
    %v7718 = vld [vmem:[#allocation12 + $0x1f0] sm:$0xff]
    %v7719 = vld [vmem:[#allocation12 + $0x1f8] sm:$0xff]
    %v7720 = vld [vmem:[#allocation12 + $0x200] sm:$0xff]
    %v7721 = vld [vmem:[#allocation12 + $0x208] sm:$0xff]
    %v7722 = vld [vmem:[#allocation12 + $0x210] sm:$0xff]
    %v7723 = vld [vmem:[#allocation12 + $0x218] sm:$0xff]
    %v7724 = vld [vmem:[#allocation12 + $0x220] sm:$0xff]
    %v7725 = vld [vmem:[#allocation12 + $0x228] sm:$0xff]
    %v7726 = vld [vmem:[#allocation12 + $0x230] sm:$0xff]
    %v7727 = vld [vmem:[#allocation12 + $0x238] sm:$0xff]
    %v7728 = vld [vmem:[#allocation12 + $0x240] sm:$0xff]
    %v7729 = vld [vmem:[#allocation12 + $0x248] sm:$0xff]
    %v7730 = vld [vmem:[#allocation12 + $0x250] sm:$0xff]
    %v7731 = vld [vmem:[#allocation12 + $0x258] sm:$0xff]
    %v7732 = vld [vmem:[#allocation12 + $0x260] sm:$0xff]
    %v7733 = vld [vmem:[#allocation12 + $0x268] sm:$0xff]
    %v7734 = vld [vmem:[#allocation12 + $0x270] sm:$0xff]
    %v7735 = vld [vmem:[#allocation12 + $0x278] sm:$0xff]
    %v7736 = vld [vmem:[#allocation12 + $0x280] sm:$0xff]
    %v7737 = vld [vmem:[#allocation12 + $0x288] sm:$0xff]
    %v7738 = vld [vmem:[#allocation12 + $0x290] sm:$0xff]
    %v7739 = vld [vmem:[#allocation12 + $0x298] sm:$0xff]
    %v7740 = vld [vmem:[#allocation12 + $0x2a0] sm:$0xff]
    %v7741 = vld [vmem:[#allocation12 + $0x2a8] sm:$0xff]
    %v7742 = vld [vmem:[#allocation12 + $0x2b0] sm:$0xff]
    %v7743 = vld [vmem:[#allocation12 + $0x2b8] sm:$0xff]
    %v7744 = vld [vmem:[#allocation12 + $0x2c0] sm:$0xff]
    %v7745 = vld [vmem:[#allocation12 + $0x2c8] sm:$0xff]
    %v7746 = vld [vmem:[#allocation12 + $0x2d0] sm:$0xff]
    %v7747 = vld [vmem:[#allocation12 + $0x2d8] sm:$0xff]
    %v7748 = vld [vmem:[#allocation12 + $0x2e0] sm:$0xff]
    %v7749 = vld [vmem:[#allocation12 + $0x2e8] sm:$0xff]
    %v7750 = vld [vmem:[#allocation12 + $0x2f0] sm:$0xff]
    %v7751 = vld [vmem:[#allocation12 + $0x2f8] sm:$0xff]
    %v7752 = vld [vmem:[#allocation12 + $0x300] sm:$0xff]
    %v7753 = vld [vmem:[#allocation12 + $0x308] sm:$0xff]
    %v7754 = vld [vmem:[#allocation12 + $0x310] sm:$0xff]
    %v7755 = vld [vmem:[#allocation12 + $0x318] sm:$0xff]
    %v7756 = vld [vmem:[#allocation12 + $0x320] sm:$0xff]
    %v7757 = vld [vmem:[#allocation12 + $0x328] sm:$0xff]
    %v7758 = vld [vmem:[#allocation12 + $0x330] sm:$0xff]
    %v7759 = vld [vmem:[#allocation12 + $0x338] sm:$0xff]
    %v7760 = vld [vmem:[#allocation12 + $0x340] sm:$0xff]
    %v7761 = vld [vmem:[#allocation12 + $0x348] sm:$0xff]
    %v7762 = vld [vmem:[#allocation12 + $0x350] sm:$0xff]
    %v7763 = vld [vmem:[#allocation12 + $0x358] sm:$0xff]
    %v7764 = vld [vmem:[#allocation12 + $0x360] sm:$0xff]
    %v7765 = vld [vmem:[#allocation12 + $0x368] sm:$0xff]
    %v7766 = vld [vmem:[#allocation12 + $0x370] sm:$0xff]
    %v7767 = vld [vmem:[#allocation12 + $0x378] sm:$0xff]
    %v7768 = vld [vmem:[#allocation12 + $0x380] sm:$0xff]
    %v7769 = vld [vmem:[#allocation12 + $0x388] sm:$0xff]
    %v7770 = vld [vmem:[#allocation12 + $0x390] sm:$0xff]
    %v7771 = vld [vmem:[#allocation12 + $0x398] sm:$0xff]
    %v7772 = vld [vmem:[#allocation12 + $0x3a0] sm:$0xff]
    %v7773 = vld [vmem:[#allocation12 + $0x3a8] sm:$0xff]
    %v7774 = vld [vmem:[#allocation12 + $0x3b0] sm:$0xff]
    %v7775 = vld [vmem:[#allocation12 + $0x3b8] sm:$0xff]
    %v7776 = vld [vmem:[#allocation12 + $0x3c0] sm:$0xff]
    %v7777 = vld [vmem:[#allocation12 + $0x3c8] sm:$0xff]
    %v7778 = vld [vmem:[#allocation12 + $0x3d0] sm:$0xff]
    %v7779 = vld [vmem:[#allocation12 + $0x3d8] sm:$0xff]
    %v7780 = vld [vmem:[#allocation12 + $0x3e0] sm:$0xff]
    %v7781 = vld [vmem:[#allocation12 + $0x3e8] sm:$0xff]
    %v7782 = vld [vmem:[#allocation12 + $0x3f0] sm:$0xff]
    %v7783 = vld [vmem:[#allocation12 + $0x3f8] sm:$0xff]
    %v7784 = vld [vmem:[#allocation45] sm:$0xf]
    %v7786 = vperm.slane %v7784, 0
    %v7787 = vperm.slane %v7784, 1
    %v7788 = vperm.slane %v7784, 2
    %v7789 = vperm.slane %v7784, 3
    %v7922 = vunpack.c.l.b16 %v7656
    %v7923 = vunpack.c.h.b16 %v7656
    %v7924 = vunpack.c.l.b16 %v7657
    %v7925 = vunpack.c.h.b16 %v7657
    %v7926 = vunpack.c.l.b16 %v7658
    %v7927 = vunpack.c.h.b16 %v7658
    %v7928 = vunpack.c.l.b16 %v7659
    %v7929 = vunpack.c.h.b16 %v7659
    %v7930 = vunpack.c.l.b16 %v7660
    %v7931 = vunpack.c.h.b16 %v7660
    %v7932 = vunpack.c.l.b16 %v7661
    %v7933 = vunpack.c.h.b16 %v7661
    %v7934 = vunpack.c.l.b16 %v7662
    %v7935 = vunpack.c.h.b16 %v7662
    %v7936 = vunpack.c.l.b16 %v7663
    %v7937 = vunpack.c.h.b16 %v7663
    %v7938 = vunpack.c.l.b16 %v7664
    %v7939 = vunpack.c.h.b16 %v7664
    %v7940 = vunpack.c.l.b16 %v7665
    %v7941 = vunpack.c.h.b16 %v7665
    %v7942 = vunpack.c.l.b16 %v7666
    %v7943 = vunpack.c.h.b16 %v7666
    %v7944 = vunpack.c.l.b16 %v7667
    %v7945 = vunpack.c.h.b16 %v7667
    %v7946 = vunpack.c.l.b16 %v7668
    %v7947 = vunpack.c.h.b16 %v7668
    %v7948 = vunpack.c.l.b16 %v7669
    %v7949 = vunpack.c.h.b16 %v7669
    %v7950 = vunpack.c.l.b16 %v7670
    %v7951 = vunpack.c.h.b16 %v7670
    %v7952 = vunpack.c.l.b16 %v7671
    %v7953 = vunpack.c.h.b16 %v7671
    %v7954 = vunpack.c.l.b16 %v7672
    %v7955 = vunpack.c.h.b16 %v7672
    %v7956 = vunpack.c.l.b16 %v7673
    %v7957 = vunpack.c.h.b16 %v7673
    %v7958 = vunpack.c.l.b16 %v7674
    %v7959 = vunpack.c.h.b16 %v7674
    %v7960 = vunpack.c.l.b16 %v7675
    %v7961 = vunpack.c.h.b16 %v7675
    %v7962 = vunpack.c.l.b16 %v7676
    %v7963 = vunpack.c.h.b16 %v7676
    %v7964 = vunpack.c.l.b16 %v7677
    %v7965 = vunpack.c.h.b16 %v7677
    %v7966 = vunpack.c.l.b16 %v7678
    %v7967 = vunpack.c.h.b16 %v7678
    %v7968 = vunpack.c.l.b16 %v7679
    %v7969 = vunpack.c.h.b16 %v7679
    %v7970 = vunpack.c.l.b16 %v7680
    %v7971 = vunpack.c.h.b16 %v7680
    %v7972 = vunpack.c.l.b16 %v7681
    %v7973 = vunpack.c.h.b16 %v7681
    %v7974 = vunpack.c.l.b16 %v7682
    %v7975 = vunpack.c.h.b16 %v7682
    %v7976 = vunpack.c.l.b16 %v7683
    %v7977 = vunpack.c.h.b16 %v7683
    %v7978 = vunpack.c.l.b16 %v7684
    %v7979 = vunpack.c.h.b16 %v7684
    %v7980 = vunpack.c.l.b16 %v7685
    %v7981 = vunpack.c.h.b16 %v7685
    %v7982 = vunpack.c.l.b16 %v7686
    %v7983 = vunpack.c.h.b16 %v7686
    %v7984 = vunpack.c.l.b16 %v7687
    %v7985 = vunpack.c.h.b16 %v7687
    %v7986 = vunpack.c.l.b16 %v7688
    %v7987 = vunpack.c.h.b16 %v7688
    %v7988 = vunpack.c.l.b16 %v7689
    %v7989 = vunpack.c.h.b16 %v7689
    %v7990 = vunpack.c.l.b16 %v7690
    %v7991 = vunpack.c.h.b16 %v7690
    %v7992 = vunpack.c.l.b16 %v7691
    %v7993 = vunpack.c.h.b16 %v7691
    %v7994 = vunpack.c.l.b16 %v7692
    %v7995 = vunpack.c.h.b16 %v7692
    %v7996 = vunpack.c.l.b16 %v7693
    %v7997 = vunpack.c.h.b16 %v7693
    %v7998 = vunpack.c.l.b16 %v7694
    %v7999 = vunpack.c.h.b16 %v7694
    %v8000 = vunpack.c.l.b16 %v7695
    %v8001 = vunpack.c.h.b16 %v7695
    %v8002 = vunpack.c.l.b16 %v7696
    %v8003 = vunpack.c.h.b16 %v7696
    %v8004 = vunpack.c.l.b16 %v7697
    %v8005 = vunpack.c.h.b16 %v7697
    %v8006 = vunpack.c.l.b16 %v7698
    %v8007 = vunpack.c.h.b16 %v7698
    %v8008 = vunpack.c.l.b16 %v7699
    %v8009 = vunpack.c.h.b16 %v7699
    %v8010 = vunpack.c.l.b16 %v7700
    %v8011 = vunpack.c.h.b16 %v7700
    %v8012 = vunpack.c.l.b16 %v7701
    %v8013 = vunpack.c.h.b16 %v7701
    %v8014 = vunpack.c.l.b16 %v7702
    %v8015 = vunpack.c.h.b16 %v7702
    %v8016 = vunpack.c.l.b16 %v7703
    %v8017 = vunpack.c.h.b16 %v7703
    %v8018 = vunpack.c.l.b16 %v7704
    %v8019 = vunpack.c.h.b16 %v7704
    %v8020 = vunpack.c.l.b16 %v7705
    %v8021 = vunpack.c.h.b16 %v7705
    %v8022 = vunpack.c.l.b16 %v7706
    %v8023 = vunpack.c.h.b16 %v7706
    %v8024 = vunpack.c.l.b16 %v7707
    %v8025 = vunpack.c.h.b16 %v7707
    %v8026 = vunpack.c.l.b16 %v7708
    %v8027 = vunpack.c.h.b16 %v7708
    %v8028 = vunpack.c.l.b16 %v7709
    %v8029 = vunpack.c.h.b16 %v7709
    %v8030 = vunpack.c.l.b16 %v7710
    %v8031 = vunpack.c.h.b16 %v7710
    %v8032 = vunpack.c.l.b16 %v7711
    %v8033 = vunpack.c.h.b16 %v7711
    %v8034 = vunpack.c.l.b16 %v7712
    %v8035 = vunpack.c.h.b16 %v7712
    %v8036 = vunpack.c.l.b16 %v7713
    %v8037 = vunpack.c.h.b16 %v7713
    %v8038 = vunpack.c.l.b16 %v7714
    %v8039 = vunpack.c.h.b16 %v7714
    %v8040 = vunpack.c.l.b16 %v7715
    %v8041 = vunpack.c.h.b16 %v7715
    %v8042 = vunpack.c.l.b16 %v7716
    %v8043 = vunpack.c.h.b16 %v7716
    %v8044 = vunpack.c.l.b16 %v7717
    %v8045 = vunpack.c.h.b16 %v7717
    %v8046 = vunpack.c.l.b16 %v7718
    %v8047 = vunpack.c.h.b16 %v7718
    %v8048 = vunpack.c.l.b16 %v7719
    %v8049 = vunpack.c.h.b16 %v7719
    %v8050 = vunpack.c.l.b16 %v7720
    %v8051 = vunpack.c.h.b16 %v7720
    %v8052 = vunpack.c.l.b16 %v7721
    %v8053 = vunpack.c.h.b16 %v7721
    %v8054 = vunpack.c.l.b16 %v7722
    %v8055 = vunpack.c.h.b16 %v7722
    %v8056 = vunpack.c.l.b16 %v7723
    %v8057 = vunpack.c.h.b16 %v7723
    %v8058 = vunpack.c.l.b16 %v7724
    %v8059 = vunpack.c.h.b16 %v7724
    %v8060 = vunpack.c.l.b16 %v7725
    %v8061 = vunpack.c.h.b16 %v7725
    %v8062 = vunpack.c.l.b16 %v7726
    %v8063 = vunpack.c.h.b16 %v7726
    %v8064 = vunpack.c.l.b16 %v7727
    %v8065 = vunpack.c.h.b16 %v7727
    %v8066 = vunpack.c.l.b16 %v7728
    %v8067 = vunpack.c.h.b16 %v7728
    %v8068 = vunpack.c.l.b16 %v7729
    %v8069 = vunpack.c.h.b16 %v7729
    %v8070 = vunpack.c.l.b16 %v7730
    %v8071 = vunpack.c.h.b16 %v7730
    %v8072 = vunpack.c.l.b16 %v7731
    %v8073 = vunpack.c.h.b16 %v7731
    %v8074 = vunpack.c.l.b16 %v7732
    %v8075 = vunpack.c.h.b16 %v7732
    %v8076 = vunpack.c.l.b16 %v7733
    %v8077 = vunpack.c.h.b16 %v7733
    %v8078 = vunpack.c.l.b16 %v7734
    %v8079 = vunpack.c.h.b16 %v7734
    %v8080 = vunpack.c.l.b16 %v7735
    %v8081 = vunpack.c.h.b16 %v7735
    %v8082 = vunpack.c.l.b16 %v7736
    %v8083 = vunpack.c.h.b16 %v7736
    %v8084 = vunpack.c.l.b16 %v7737
    %v8085 = vunpack.c.h.b16 %v7737
    %v8086 = vunpack.c.l.b16 %v7738
    %v8087 = vunpack.c.h.b16 %v7738
    %v8088 = vunpack.c.l.b16 %v7739
    %v8089 = vunpack.c.h.b16 %v7739
    %v8090 = vunpack.c.l.b16 %v7740
    %v8091 = vunpack.c.h.b16 %v7740
    %v8092 = vunpack.c.l.b16 %v7741
    %v8093 = vunpack.c.h.b16 %v7741
    %v8094 = vunpack.c.l.b16 %v7742
    %v8095 = vunpack.c.h.b16 %v7742
    %v8096 = vunpack.c.l.b16 %v7743
    %v8097 = vunpack.c.h.b16 %v7743
    %v8098 = vunpack.c.l.b16 %v7744
    %v8099 = vunpack.c.h.b16 %v7744
    %v8100 = vunpack.c.l.b16 %v7745
    %v8101 = vunpack.c.h.b16 %v7745
    %v8102 = vunpack.c.l.b16 %v7746
    %v8103 = vunpack.c.h.b16 %v7746
    %v8104 = vunpack.c.l.b16 %v7747
    %v8105 = vunpack.c.h.b16 %v7747
    %v8106 = vunpack.c.l.b16 %v7748
    %v8107 = vunpack.c.h.b16 %v7748
    %v8108 = vunpack.c.l.b16 %v7749
    %v8109 = vunpack.c.h.b16 %v7749
    %v8110 = vunpack.c.l.b16 %v7750
    %v8111 = vunpack.c.h.b16 %v7750
    %v8112 = vunpack.c.l.b16 %v7751
    %v8113 = vunpack.c.h.b16 %v7751
    %v8114 = vunpack.c.l.b16 %v7752
    %v8115 = vunpack.c.h.b16 %v7752
    %v8116 = vunpack.c.l.b16 %v7753
    %v8117 = vunpack.c.h.b16 %v7753
    %v8118 = vunpack.c.l.b16 %v7754
    %v8119 = vunpack.c.h.b16 %v7754
    %v8120 = vunpack.c.l.b16 %v7755
    %v8121 = vunpack.c.h.b16 %v7755
    %v8122 = vunpack.c.l.b16 %v7756
    %v8123 = vunpack.c.h.b16 %v7756
    %v8124 = vunpack.c.l.b16 %v7757
    %v8125 = vunpack.c.h.b16 %v7757
    %v8126 = vunpack.c.l.b16 %v7758
    %v8127 = vunpack.c.h.b16 %v7758
    %v8128 = vunpack.c.l.b16 %v7759
    %v8129 = vunpack.c.h.b16 %v7759
    %v8130 = vunpack.c.l.b16 %v7760
    %v8131 = vunpack.c.h.b16 %v7760
    %v8132 = vunpack.c.l.b16 %v7761
    %v8133 = vunpack.c.h.b16 %v7761
    %v8134 = vunpack.c.l.b16 %v7762
    %v8135 = vunpack.c.h.b16 %v7762
    %v8136 = vunpack.c.l.b16 %v7763
    %v8137 = vunpack.c.h.b16 %v7763
    %v8138 = vunpack.c.l.b16 %v7764
    %v8139 = vunpack.c.h.b16 %v7764
    %v8140 = vunpack.c.l.b16 %v7765
    %v8141 = vunpack.c.h.b16 %v7765
    %v8142 = vunpack.c.l.b16 %v7766
    %v8143 = vunpack.c.h.b16 %v7766
    %v8144 = vunpack.c.l.b16 %v7767
    %v8145 = vunpack.c.h.b16 %v7767
    %v8146 = vunpack.c.l.b16 %v7768
    %v8147 = vunpack.c.h.b16 %v7768
    %v8148 = vunpack.c.l.b16 %v7769
    %v8149 = vunpack.c.h.b16 %v7769
    %v8150 = vunpack.c.l.b16 %v7770
    %v8151 = vunpack.c.h.b16 %v7770
    %v8152 = vunpack.c.l.b16 %v7771
    %v8153 = vunpack.c.h.b16 %v7771
    %v8154 = vunpack.c.l.b16 %v7772
    %v8155 = vunpack.c.h.b16 %v7772
    %v8156 = vunpack.c.l.b16 %v7773
    %v8157 = vunpack.c.h.b16 %v7773
    %v8158 = vunpack.c.l.b16 %v7774
    %v8159 = vunpack.c.h.b16 %v7774
    %v8160 = vunpack.c.l.b16 %v7775
    %v8161 = vunpack.c.h.b16 %v7775
    %v8162 = vunpack.c.l.b16 %v7776
    %v8163 = vunpack.c.h.b16 %v7776
    %v8164 = vunpack.c.l.b16 %v7777
    %v8165 = vunpack.c.h.b16 %v7777
    %v8166 = vunpack.c.l.b16 %v7778
    %v8167 = vunpack.c.h.b16 %v7778
    %v8168 = vunpack.c.l.b16 %v7779
    %v8169 = vunpack.c.h.b16 %v7779
    %v8170 = vunpack.c.l.b16 %v7780
    %v8171 = vunpack.c.h.b16 %v7780
    %v8172 = vunpack.c.l.b16 %v7781
    %v8173 = vunpack.c.h.b16 %v7781
    %v8174 = vunpack.c.l.b16 %v7782
    %v8175 = vunpack.c.h.b16 %v7782
    %v8176 = vunpack.c.l.b16 %v7783
    %v8177 = vunpack.c.h.b16 %v7783
    %v8178 = vpack.c.b16 %v7926, %v7922
    %v8179 = vpack.c.b16 %v7927, %v7923
    %v8180 = vpack.c.b16 %v7928, %v7924
    %v8181 = vpack.c.b16 %v7929, %v7925
    %v8182 = vpack.c.b16 %v7934, %v7930
    %v8183 = vpack.c.b16 %v7935, %v7931
    %v8184 = vpack.c.b16 %v7936, %v7932
    %v8185 = vpack.c.b16 %v7937, %v7933
    %v8186 = vpack.c.b16 %v7942, %v7938
    %v8187 = vpack.c.b16 %v7943, %v7939
    %v8188 = vpack.c.b16 %v7944, %v7940
    %v8189 = vpack.c.b16 %v7945, %v7941
    %v8190 = vpack.c.b16 %v7950, %v7946
    %v8191 = vpack.c.b16 %v7951, %v7947
    %v8192 = vpack.c.b16 %v7952, %v7948
    %v8193 = vpack.c.b16 %v7953, %v7949
    %v8194 = vpack.c.b16 %v7958, %v7954
    %v8195 = vpack.c.b16 %v7959, %v7955
    %v8196 = vpack.c.b16 %v7960, %v7956
    %v8197 = vpack.c.b16 %v7961, %v7957
    %v8198 = vpack.c.b16 %v7966, %v7962
    %v8199 = vpack.c.b16 %v7967, %v7963
    %v8200 = vpack.c.b16 %v7968, %v7964
    %v8201 = vpack.c.b16 %v7969, %v7965
    %v8202 = vpack.c.b16 %v7974, %v7970
    %v8203 = vpack.c.b16 %v7975, %v7971
    %v8204 = vpack.c.b16 %v7976, %v7972
    %v8205 = vpack.c.b16 %v7977, %v7973
    %v8206 = vpack.c.b16 %v7982, %v7978
    %v8207 = vpack.c.b16 %v7983, %v7979
    %v8208 = vpack.c.b16 %v7984, %v7980
    %v8209 = vpack.c.b16 %v7985, %v7981
    %v8210 = vpack.c.b16 %v7990, %v7986
    %v8211 = vpack.c.b16 %v7991, %v7987
    %v8212 = vpack.c.b16 %v7992, %v7988
    %v8213 = vpack.c.b16 %v7993, %v7989
    %v8214 = vpack.c.b16 %v7998, %v7994
    %v8215 = vpack.c.b16 %v7999, %v7995
    %v8216 = vpack.c.b16 %v8000, %v7996
    %v8217 = vpack.c.b16 %v8001, %v7997
    %v8218 = vpack.c.b16 %v8006, %v8002
    %v8219 = vpack.c.b16 %v8007, %v8003
    %v8220 = vpack.c.b16 %v8008, %v8004
    %v8221 = vpack.c.b16 %v8009, %v8005
    %v8222 = vpack.c.b16 %v8014, %v8010
    %v8223 = vpack.c.b16 %v8015, %v8011
    %v8224 = vpack.c.b16 %v8016, %v8012
    %v8225 = vpack.c.b16 %v8017, %v8013
    %v8226 = vpack.c.b16 %v8022, %v8018
    %v8227 = vpack.c.b16 %v8023, %v8019
    %v8228 = vpack.c.b16 %v8024, %v8020
    %v8229 = vpack.c.b16 %v8025, %v8021
    %v8230 = vpack.c.b16 %v8030, %v8026
    %v8231 = vpack.c.b16 %v8031, %v8027
    %v8232 = vpack.c.b16 %v8032, %v8028
    %v8233 = vpack.c.b16 %v8033, %v8029
    %v8234 = vpack.c.b16 %v8038, %v8034
    %v8235 = vpack.c.b16 %v8039, %v8035
    %v8236 = vpack.c.b16 %v8040, %v8036
    %v8237 = vpack.c.b16 %v8041, %v8037
    %v8238 = vpack.c.b16 %v8046, %v8042
    %v8239 = vpack.c.b16 %v8047, %v8043
    %v8240 = vpack.c.b16 %v8048, %v8044
    %v8241 = vpack.c.b16 %v8049, %v8045
    %v8242 = vpack.c.b16 %v8054, %v8050
    %v8243 = vpack.c.b16 %v8055, %v8051
    %v8244 = vpack.c.b16 %v8056, %v8052
    %v8245 = vpack.c.b16 %v8057, %v8053
    %v8246 = vpack.c.b16 %v8062, %v8058
    %v8247 = vpack.c.b16 %v8063, %v8059
    %v8248 = vpack.c.b16 %v8064, %v8060
    %v8249 = vpack.c.b16 %v8065, %v8061
    %v8250 = vpack.c.b16 %v8070, %v8066
    %v8251 = vpack.c.b16 %v8071, %v8067
    %v8252 = vpack.c.b16 %v8072, %v8068
    %v8253 = vpack.c.b16 %v8073, %v8069
    %v8254 = vpack.c.b16 %v8078, %v8074
    %v8255 = vpack.c.b16 %v8079, %v8075
    %v8256 = vpack.c.b16 %v8080, %v8076
    %v8257 = vpack.c.b16 %v8081, %v8077
    %v8258 = vpack.c.b16 %v8086, %v8082
    %v8259 = vpack.c.b16 %v8087, %v8083
    %v8260 = vpack.c.b16 %v8088, %v8084
    %v8261 = vpack.c.b16 %v8089, %v8085
    %v8262 = vpack.c.b16 %v8094, %v8090
    %v8263 = vpack.c.b16 %v8095, %v8091
    %v8264 = vpack.c.b16 %v8096, %v8092
    %v8265 = vpack.c.b16 %v8097, %v8093
    %v8266 = vpack.c.b16 %v8102, %v8098
    %v8267 = vpack.c.b16 %v8103, %v8099
    %v8268 = vpack.c.b16 %v8104, %v8100
    %v8269 = vpack.c.b16 %v8105, %v8101
    %v8270 = vpack.c.b16 %v8110, %v8106
    %v8271 = vpack.c.b16 %v8111, %v8107
    %v8272 = vpack.c.b16 %v8112, %v8108
    %v8273 = vpack.c.b16 %v8113, %v8109
    %v8274 = vpack.c.b16 %v8118, %v8114
    %v8275 = vpack.c.b16 %v8119, %v8115
    %v8276 = vpack.c.b16 %v8120, %v8116
    %v8277 = vpack.c.b16 %v8121, %v8117
    %v8278 = vpack.c.b16 %v8126, %v8122
    %v8279 = vpack.c.b16 %v8127, %v8123
    %v8280 = vpack.c.b16 %v8128, %v8124
    %v8281 = vpack.c.b16 %v8129, %v8125
    %v8282 = vpack.c.b16 %v8134, %v8130
    %v8283 = vpack.c.b16 %v8135, %v8131
    %v8284 = vpack.c.b16 %v8136, %v8132
    %v8285 = vpack.c.b16 %v8137, %v8133
    %v8286 = vpack.c.b16 %v8142, %v8138
    %v8287 = vpack.c.b16 %v8143, %v8139
    %v8288 = vpack.c.b16 %v8144, %v8140
    %v8289 = vpack.c.b16 %v8145, %v8141
    %v8290 = vpack.c.b16 %v8150, %v8146
    %v8291 = vpack.c.b16 %v8151, %v8147
    %v8292 = vpack.c.b16 %v8152, %v8148
    %v8293 = vpack.c.b16 %v8153, %v8149
    %v8294 = vpack.c.b16 %v8158, %v8154
    %v8295 = vpack.c.b16 %v8159, %v8155
    %v8296 = vpack.c.b16 %v8160, %v8156
    %v8297 = vpack.c.b16 %v8161, %v8157
    %v8298 = vpack.c.b16 %v8166, %v8162
    %v8299 = vpack.c.b16 %v8167, %v8163
    %v8300 = vpack.c.b16 %v8168, %v8164
    %v8301 = vpack.c.b16 %v8169, %v8165
    %v8302 = vpack.c.b16 %v8174, %v8170
    %v8303 = vpack.c.b16 %v8175, %v8171
    %v8304 = vpack.c.b16 %v8176, %v8172
    %v8305 = vpack.c.b16 %v8177, %v8173
    %8434 = vmatpush.bf16.msra.mxu0 %v8206
    %8435 = vmatpush.bf16.msra.mxu0 %v8202
    %8436 = vmatpush.bf16.msra.mxu0 %v8198
    %8437 = vmatpush.bf16.msra.mxu0 %v8194
    %8438 = vmatpush.bf16.msra.mxu0 %v8190
    %8439 = vmatpush.bf16.msra.mxu0 %v8186
    %8440 = vmatpush.bf16.msra.mxu0 %v8182
    %8441 = vmatpush.bf16.msra.mxu0 %v8178
    %8442 = vmatmul.bf16.gmra.mxu0 %v7652
    %v8443 = vpop.f32.mrf.mxu0
    %v8444 = vadd.f32 %v7786, %v8443
    %v8445 = vpop.f32.mrf.mxu0
    %8446 = vdwg.mxu0
    %8447 = vmatpush.bf16.msra.mxu0 %v8238
    %8448 = vmatpush.bf16.msra.mxu0 %v8234
    %8449 = vmatpush.bf16.msra.mxu0 %v8230
    %8450 = vmatpush.bf16.msra.mxu0 %v8226
    %8451 = vmatpush.bf16.msra.mxu0 %v8222
    %8452 = vmatpush.bf16.msra.mxu0 %v8218
    %8453 = vmatpush.bf16.msra.mxu0 %v8214
    %8454 = vmatpush.bf16.msra.mxu0 %v8210
    %8455 = vmatmul.bf16.gmra.mxu0 %v7653
    %v8456 = vpop.f32.mrf.mxu0
    %v8457 = vadd.f32 %v8444, %v8456
    %v8458 = vpop.f32.mrf.mxu0
    %8459 = vdwg.mxu0
    %8460 = vmatpush.bf16.msra.mxu0 %v8270
    %8461 = vmatpush.bf16.msra.mxu0 %v8266
    %8462 = vmatpush.bf16.msra.mxu0 %v8262
    %8463 = vmatpush.bf16.msra.mxu0 %v8258
    %8464 = vmatpush.bf16.msra.mxu0 %v8254
    %8465 = vmatpush.bf16.msra.mxu0 %v8250
    %8466 = vmatpush.bf16.msra.mxu0 %v8246
    %8467 = vmatpush.bf16.msra.mxu0 %v8242
    %8468 = vmatmul.bf16.gmra.mxu0 %v7654
    %v8469 = vpop.f32.mrf.mxu0
    %v8470 = vadd.f32 %v8457, %v8469
    %v8471 = vpop.f32.mrf.mxu0
    %8472 = vdwg.mxu0
    %8473 = vmatpush.bf16.msra.mxu0 %v8302
    %8474 = vmatpush.bf16.msra.mxu0 %v8298
    %8475 = vmatpush.bf16.msra.mxu0 %v8294
    %8476 = vmatpush.bf16.msra.mxu0 %v8290
    %8477 = vmatpush.bf16.msra.mxu0 %v8286
    %8478 = vmatpush.bf16.msra.mxu0 %v8282
    %8479 = vmatpush.bf16.msra.mxu0 %v8278
    %8480 = vmatpush.bf16.msra.mxu0 %v8274
    %8481 = vmatmul.bf16.gmra.mxu0 %v7655
    %v8482 = vpop.f32.mrf.mxu0
    %v8483 = vadd.f32 %v8470, %v8482
    %v8484 = vpop.f32.mrf.mxu0
    %8485 = vdwg.mxu0
    %8486 = vmatpush.bf16.msra.mxu0 %v8207
    %8487 = vmatpush.bf16.msra.mxu0 %v8203
    %8488 = vmatpush.bf16.msra.mxu0 %v8199
    %8489 = vmatpush.bf16.msra.mxu0 %v8195
    %8490 = vmatpush.bf16.msra.mxu0 %v8191
    %8491 = vmatpush.bf16.msra.mxu0 %v8187
    %8492 = vmatpush.bf16.msra.mxu0 %v8183
    %8493 = vmatpush.bf16.msra.mxu0 %v8179
    %8494 = vmatmul.bf16.gmra.mxu0 %v7652
    %v8495 = vpop.f32.mrf.mxu0
    %v8496 = vadd.f32 %v7787, %v8495
    %v8497 = vpop.f32.mrf.mxu0
    %8498 = vdwg.mxu0
    %8499 = vmatpush.bf16.msra.mxu0 %v8239
    %8500 = vmatpush.bf16.msra.mxu0 %v8235
    %8501 = vmatpush.bf16.msra.mxu0 %v8231
    %8502 = vmatpush.bf16.msra.mxu0 %v8227
    %8503 = vmatpush.bf16.msra.mxu0 %v8223
    %8504 = vmatpush.bf16.msra.mxu0 %v8219
    %8505 = vmatpush.bf16.msra.mxu0 %v8215
    %8506 = vmatpush.bf16.msra.mxu0 %v8211
    %8507 = vmatmul.bf16.gmra.mxu0 %v7653
    %v8508 = vpop.f32.mrf.mxu0
    %v8509 = vadd.f32 %v8496, %v8508
    %v8510 = vpop.f32.mrf.mxu0
    %8511 = vdwg.mxu0
    %8512 = vmatpush.bf16.msra.mxu0 %v8271
    %8513 = vmatpush.bf16.msra.mxu0 %v8267
    %8514 = vmatpush.bf16.msra.mxu0 %v8263
    %8515 = vmatpush.bf16.msra.mxu0 %v8259
    %8516 = vmatpush.bf16.msra.mxu0 %v8255
    %8517 = vmatpush.bf16.msra.mxu0 %v8251
    %8518 = vmatpush.bf16.msra.mxu0 %v8247
    %8519 = vmatpush.bf16.msra.mxu0 %v8243
    %8520 = vmatmul.bf16.gmra.mxu0 %v7654
    %v8521 = vpop.f32.mrf.mxu0
    %v8522 = vadd.f32 %v8509, %v8521
    %v8523 = vpop.f32.mrf.mxu0
    %8524 = vdwg.mxu0
    %8525 = vmatpush.bf16.msra.mxu0 %v8303
    %8526 = vmatpush.bf16.msra.mxu0 %v8299
    %8527 = vmatpush.bf16.msra.mxu0 %v8295
    %8528 = vmatpush.bf16.msra.mxu0 %v8291
    %8529 = vmatpush.bf16.msra.mxu0 %v8287
    %8530 = vmatpush.bf16.msra.mxu0 %v8283
    %8531 = vmatpush.bf16.msra.mxu0 %v8279
    %8532 = vmatpush.bf16.msra.mxu0 %v8275
    %8533 = vmatmul.bf16.gmra.mxu0 %v7655
    %v8534 = vpop.f32.mrf.mxu0
    %v8535 = vadd.f32 %v8522, %v8534
    %v8536 = vpop.f32.mrf.mxu0
    %8537 = vdwg.mxu0
    %8538 = vmatpush.bf16.msra.mxu0 %v8208
    %8539 = vmatpush.bf16.msra.mxu0 %v8204
    %8540 = vmatpush.bf16.msra.mxu0 %v8200
    %8541 = vmatpush.bf16.msra.mxu0 %v8196
    %8542 = vmatpush.bf16.msra.mxu0 %v8192
    %8543 = vmatpush.bf16.msra.mxu0 %v8188
    %8544 = vmatpush.bf16.msra.mxu0 %v8184
    %8545 = vmatpush.bf16.msra.mxu0 %v8180
    %8546 = vmatmul.bf16.gmra.mxu0 %v7652
    %v8547 = vpop.f32.mrf.mxu0
    %v8548 = vadd.f32 %v7788, %v8547
    %v8549 = vpop.f32.mrf.mxu0
    %8550 = vdwg.mxu0
    %8551 = vmatpush.bf16.msra.mxu0 %v8240
    %8552 = vmatpush.bf16.msra.mxu0 %v8236
    %8553 = vmatpush.bf16.msra.mxu0 %v8232
    %8554 = vmatpush.bf16.msra.mxu0 %v8228
    %8555 = vmatpush.bf16.msra.mxu0 %v8224
    %8556 = vmatpush.bf16.msra.mxu0 %v8220
    %8557 = vmatpush.bf16.msra.mxu0 %v8216
    %8558 = vmatpush.bf16.msra.mxu0 %v8212
    %8559 = vmatmul.bf16.gmra.mxu0 %v7653
    %v8560 = vpop.f32.mrf.mxu0
    %v8561 = vadd.f32 %v8548, %v8560
    %v8562 = vpop.f32.mrf.mxu0
    %8563 = vdwg.mxu0
    %8564 = vmatpush.bf16.msra.mxu0 %v8272
    %8565 = vmatpush.bf16.msra.mxu0 %v8268
    %8566 = vmatpush.bf16.msra.mxu0 %v8264
    %8567 = vmatpush.bf16.msra.mxu0 %v8260
    %8568 = vmatpush.bf16.msra.mxu0 %v8256
    %8569 = vmatpush.bf16.msra.mxu0 %v8252
    %8570 = vmatpush.bf16.msra.mxu0 %v8248
    %8571 = vmatpush.bf16.msra.mxu0 %v8244
    %8572 = vmatmul.bf16.gmra.mxu0 %v7654
    %v8573 = vpop.f32.mrf.mxu0
    %v8574 = vadd.f32 %v8561, %v8573
    %v8575 = vpop.f32.mrf.mxu0
    %8576 = vdwg.mxu0
    %8577 = vmatpush.bf16.msra.mxu0 %v8304
    %8578 = vmatpush.bf16.msra.mxu0 %v8300
    %8579 = vmatpush.bf16.msra.mxu0 %v8296
    %8580 = vmatpush.bf16.msra.mxu0 %v8292
    %8581 = vmatpush.bf16.msra.mxu0 %v8288
    %8582 = vmatpush.bf16.msra.mxu0 %v8284
    %8583 = vmatpush.bf16.msra.mxu0 %v8280
    %8584 = vmatpush.bf16.msra.mxu0 %v8276
    %8585 = vmatmul.bf16.gmra.mxu0 %v7655
    %v8586 = vpop.f32.mrf.mxu0
    %v8587 = vadd.f32 %v8574, %v8586
    %v8588 = vpop.f32.mrf.mxu0
    %8589 = vdwg.mxu0
    %8590 = vmatpush.bf16.msra.mxu0 %v8209
    %8591 = vmatpush.bf16.msra.mxu0 %v8205
    %8592 = vmatpush.bf16.msra.mxu0 %v8201
    %8593 = vmatpush.bf16.msra.mxu0 %v8197
    %8594 = vmatpush.bf16.msra.mxu0 %v8193
    %8595 = vmatpush.bf16.msra.mxu0 %v8189
    %8596 = vmatpush.bf16.msra.mxu0 %v8185
    %8597 = vmatpush.bf16.msra.mxu0 %v8181
    %8598 = vmatmul.bf16.gmra.mxu0 %v7652
    %v8599 = vpop.f32.mrf.mxu0
    %v8600 = vadd.f32 %v7789, %v8599
    %v8601 = vpop.f32.mrf.mxu0
    %8602 = vdwg.mxu0
    %8603 = vmatpush.bf16.msra.mxu0 %v8241
    %8604 = vmatpush.bf16.msra.mxu0 %v8237
    %8605 = vmatpush.bf16.msra.mxu0 %v8233
    %8606 = vmatpush.bf16.msra.mxu0 %v8229
    %8607 = vmatpush.bf16.msra.mxu0 %v8225
    %8608 = vmatpush.bf16.msra.mxu0 %v8221
    %8609 = vmatpush.bf16.msra.mxu0 %v8217
    %8610 = vmatpush.bf16.msra.mxu0 %v8213
    %8611 = vmatmul.bf16.gmra.mxu0 %v7653
    %v8612 = vpop.f32.mrf.mxu0
    %v8613 = vadd.f32 %v8600, %v8612
    %v8614 = vpop.f32.mrf.mxu0
    %8615 = vdwg.mxu0
    %8616 = vmatpush.bf16.msra.mxu0 %v8273
    %8617 = vmatpush.bf16.msra.mxu0 %v8269
    %8618 = vmatpush.bf16.msra.mxu0 %v8265
    %8619 = vmatpush.bf16.msra.mxu0 %v8261
    %8620 = vmatpush.bf16.msra.mxu0 %v8257
    %8621 = vmatpush.bf16.msra.mxu0 %v8253
    %8622 = vmatpush.bf16.msra.mxu0 %v8249
    %8623 = vmatpush.bf16.msra.mxu0 %v8245
    %8624 = vmatmul.bf16.gmra.mxu0 %v7654
    %v8625 = vpop.f32.mrf.mxu0
    %v8626 = vadd.f32 %v8613, %v8625
    %v8627 = vpop.f32.mrf.mxu0
    %8628 = vdwg.mxu0
    %8629 = vmatpush.bf16.msra.mxu0 %v8305
    %8630 = vmatpush.bf16.msra.mxu0 %v8301
    %8631 = vmatpush.bf16.msra.mxu0 %v8297
    %8632 = vmatpush.bf16.msra.mxu0 %v8293
    %8633 = vmatpush.bf16.msra.mxu0 %v8289
    %8634 = vmatpush.bf16.msra.mxu0 %v8285
    %8635 = vmatpush.bf16.msra.mxu0 %v8281
    %8636 = vmatpush.bf16.msra.mxu0 %v8277
    %8637 = vmatmul.bf16.gmra.mxu0 %v7655
    %v8638 = vpop.f32.mrf.mxu0
    %v8639 = vadd.f32 %v8626, %v8638
    %v8640 = vpop.f32.mrf.mxu0
    %8641 = vdwg.mxu0
    %v8642 = vadd.f32 %v6654, %v8483
    %v8643 = vadd.f32 %v6655, %v8535
    %v8644 = vadd.f32 %v6656, %v8587
    %v8645 = vadd.f32 %v6657, %v8639
    %v8646 = vpack.c.bf16 %v8642, %v8642
    %v8647 = vpack.c.bf16 %v8643, %v8643
    %v8648 = vpack.c.bf16 %v8644, %v8644
    %v8649 = vpack.c.bf16 %v8645, %v8645
    %v8650 = vld [vmem:[#allocation13] sm:$0xff]
    %v8651 = vld [vmem:[#allocation13 + $0x8] sm:$0xff]
    %v8652 = vld [vmem:[#allocation13 + $0x10] sm:$0xff]
    %v8653 = vld [vmem:[#allocation13 + $0x18] sm:$0xff]
    %v8654 = vld [vmem:[#allocation13 + $0x20] sm:$0xff]
    %v8655 = vld [vmem:[#allocation13 + $0x28] sm:$0xff]
    %v8656 = vld [vmem:[#allocation13 + $0x30] sm:$0xff]
    %v8657 = vld [vmem:[#allocation13 + $0x38] sm:$0xff]
    %v8658 = vld [vmem:[#allocation13 + $0x40] sm:$0xff]
    %v8659 = vld [vmem:[#allocation13 + $0x48] sm:$0xff]
    %v8660 = vld [vmem:[#allocation13 + $0x50] sm:$0xff]
    %v8661 = vld [vmem:[#allocation13 + $0x58] sm:$0xff]
    %v8662 = vld [vmem:[#allocation13 + $0x60] sm:$0xff]
    %v8663 = vld [vmem:[#allocation13 + $0x68] sm:$0xff]
    %v8664 = vld [vmem:[#allocation13 + $0x70] sm:$0xff]
    %v8665 = vld [vmem:[#allocation13 + $0x78] sm:$0xff]
    %v8666 = vld [vmem:[#allocation13 + $0x80] sm:$0xff]
    %v8667 = vld [vmem:[#allocation13 + $0x88] sm:$0xff]
    %v8668 = vld [vmem:[#allocation13 + $0x90] sm:$0xff]
    %v8669 = vld [vmem:[#allocation13 + $0x98] sm:$0xff]
    %v8670 = vld [vmem:[#allocation13 + $0xa0] sm:$0xff]
    %v8671 = vld [vmem:[#allocation13 + $0xa8] sm:$0xff]
    %v8672 = vld [vmem:[#allocation13 + $0xb0] sm:$0xff]
    %v8673 = vld [vmem:[#allocation13 + $0xb8] sm:$0xff]
    %v8674 = vld [vmem:[#allocation13 + $0xc0] sm:$0xff]
    %v8675 = vld [vmem:[#allocation13 + $0xc8] sm:$0xff]
    %v8676 = vld [vmem:[#allocation13 + $0xd0] sm:$0xff]
    %v8677 = vld [vmem:[#allocation13 + $0xd8] sm:$0xff]
    %v8678 = vld [vmem:[#allocation13 + $0xe0] sm:$0xff]
    %v8679 = vld [vmem:[#allocation13 + $0xe8] sm:$0xff]
    %v8680 = vld [vmem:[#allocation13 + $0xf0] sm:$0xff]
    %v8681 = vld [vmem:[#allocation13 + $0xf8] sm:$0xff]
    %v8682 = vld [vmem:[#allocation13 + $0x100] sm:$0xff]
    %v8683 = vld [vmem:[#allocation13 + $0x108] sm:$0xff]
    %v8684 = vld [vmem:[#allocation13 + $0x110] sm:$0xff]
    %v8685 = vld [vmem:[#allocation13 + $0x118] sm:$0xff]
    %v8686 = vld [vmem:[#allocation13 + $0x120] sm:$0xff]
    %v8687 = vld [vmem:[#allocation13 + $0x128] sm:$0xff]
    %v8688 = vld [vmem:[#allocation13 + $0x130] sm:$0xff]
    %v8689 = vld [vmem:[#allocation13 + $0x138] sm:$0xff]
    %v8690 = vld [vmem:[#allocation13 + $0x140] sm:$0xff]
    %v8691 = vld [vmem:[#allocation13 + $0x148] sm:$0xff]
    %v8692 = vld [vmem:[#allocation13 + $0x150] sm:$0xff]
    %v8693 = vld [vmem:[#allocation13 + $0x158] sm:$0xff]
    %v8694 = vld [vmem:[#allocation13 + $0x160] sm:$0xff]
    %v8695 = vld [vmem:[#allocation13 + $0x168] sm:$0xff]
    %v8696 = vld [vmem:[#allocation13 + $0x170] sm:$0xff]
    %v8697 = vld [vmem:[#allocation13 + $0x178] sm:$0xff]
    %v8698 = vld [vmem:[#allocation13 + $0x180] sm:$0xff]
    %v8699 = vld [vmem:[#allocation13 + $0x188] sm:$0xff]
    %v8700 = vld [vmem:[#allocation13 + $0x190] sm:$0xff]
    %v8701 = vld [vmem:[#allocation13 + $0x198] sm:$0xff]
    %v8702 = vld [vmem:[#allocation13 + $0x1a0] sm:$0xff]
    %v8703 = vld [vmem:[#allocation13 + $0x1a8] sm:$0xff]
    %v8704 = vld [vmem:[#allocation13 + $0x1b0] sm:$0xff]
    %v8705 = vld [vmem:[#allocation13 + $0x1b8] sm:$0xff]
    %v8706 = vld [vmem:[#allocation13 + $0x1c0] sm:$0xff]
    %v8707 = vld [vmem:[#allocation13 + $0x1c8] sm:$0xff]
    %v8708 = vld [vmem:[#allocation13 + $0x1d0] sm:$0xff]
    %v8709 = vld [vmem:[#allocation13 + $0x1d8] sm:$0xff]
    %v8710 = vld [vmem:[#allocation13 + $0x1e0] sm:$0xff]
    %v8711 = vld [vmem:[#allocation13 + $0x1e8] sm:$0xff]
    %v8712 = vld [vmem:[#allocation13 + $0x1f0] sm:$0xff]
    %v8713 = vld [vmem:[#allocation13 + $0x1f8] sm:$0xff]
    %v8714 = vld [vmem:[#allocation13 + $0x200] sm:$0xff]
    %v8715 = vld [vmem:[#allocation13 + $0x208] sm:$0xff]
    %v8716 = vld [vmem:[#allocation13 + $0x210] sm:$0xff]
    %v8717 = vld [vmem:[#allocation13 + $0x218] sm:$0xff]
    %v8718 = vld [vmem:[#allocation13 + $0x220] sm:$0xff]
    %v8719 = vld [vmem:[#allocation13 + $0x228] sm:$0xff]
    %v8720 = vld [vmem:[#allocation13 + $0x230] sm:$0xff]
    %v8721 = vld [vmem:[#allocation13 + $0x238] sm:$0xff]
    %v8722 = vld [vmem:[#allocation13 + $0x240] sm:$0xff]
    %v8723 = vld [vmem:[#allocation13 + $0x248] sm:$0xff]
    %v8724 = vld [vmem:[#allocation13 + $0x250] sm:$0xff]
    %v8725 = vld [vmem:[#allocation13 + $0x258] sm:$0xff]
    %v8726 = vld [vmem:[#allocation13 + $0x260] sm:$0xff]
    %v8727 = vld [vmem:[#allocation13 + $0x268] sm:$0xff]
    %v8728 = vld [vmem:[#allocation13 + $0x270] sm:$0xff]
    %v8729 = vld [vmem:[#allocation13 + $0x278] sm:$0xff]
    %v8730 = vld [vmem:[#allocation13 + $0x280] sm:$0xff]
    %v8731 = vld [vmem:[#allocation13 + $0x288] sm:$0xff]
    %v8732 = vld [vmem:[#allocation13 + $0x290] sm:$0xff]
    %v8733 = vld [vmem:[#allocation13 + $0x298] sm:$0xff]
    %v8734 = vld [vmem:[#allocation13 + $0x2a0] sm:$0xff]
    %v8735 = vld [vmem:[#allocation13 + $0x2a8] sm:$0xff]
    %v8736 = vld [vmem:[#allocation13 + $0x2b0] sm:$0xff]
    %v8737 = vld [vmem:[#allocation13 + $0x2b8] sm:$0xff]
    %v8738 = vld [vmem:[#allocation13 + $0x2c0] sm:$0xff]
    %v8739 = vld [vmem:[#allocation13 + $0x2c8] sm:$0xff]
    %v8740 = vld [vmem:[#allocation13 + $0x2d0] sm:$0xff]
    %v8741 = vld [vmem:[#allocation13 + $0x2d8] sm:$0xff]
    %v8742 = vld [vmem:[#allocation13 + $0x2e0] sm:$0xff]
    %v8743 = vld [vmem:[#allocation13 + $0x2e8] sm:$0xff]
    %v8744 = vld [vmem:[#allocation13 + $0x2f0] sm:$0xff]
    %v8745 = vld [vmem:[#allocation13 + $0x2f8] sm:$0xff]
    %v8746 = vld [vmem:[#allocation13 + $0x300] sm:$0xff]
    %v8747 = vld [vmem:[#allocation13 + $0x308] sm:$0xff]
    %v8748 = vld [vmem:[#allocation13 + $0x310] sm:$0xff]
    %v8749 = vld [vmem:[#allocation13 + $0x318] sm:$0xff]
    %v8750 = vld [vmem:[#allocation13 + $0x320] sm:$0xff]
    %v8751 = vld [vmem:[#allocation13 + $0x328] sm:$0xff]
    %v8752 = vld [vmem:[#allocation13 + $0x330] sm:$0xff]
    %v8753 = vld [vmem:[#allocation13 + $0x338] sm:$0xff]
    %v8754 = vld [vmem:[#allocation13 + $0x340] sm:$0xff]
    %v8755 = vld [vmem:[#allocation13 + $0x348] sm:$0xff]
    %v8756 = vld [vmem:[#allocation13 + $0x350] sm:$0xff]
    %v8757 = vld [vmem:[#allocation13 + $0x358] sm:$0xff]
    %v8758 = vld [vmem:[#allocation13 + $0x360] sm:$0xff]
    %v8759 = vld [vmem:[#allocation13 + $0x368] sm:$0xff]
    %v8760 = vld [vmem:[#allocation13 + $0x370] sm:$0xff]
    %v8761 = vld [vmem:[#allocation13 + $0x378] sm:$0xff]
    %v8762 = vld [vmem:[#allocation13 + $0x380] sm:$0xff]
    %v8763 = vld [vmem:[#allocation13 + $0x388] sm:$0xff]
    %v8764 = vld [vmem:[#allocation13 + $0x390] sm:$0xff]
    %v8765 = vld [vmem:[#allocation13 + $0x398] sm:$0xff]
    %v8766 = vld [vmem:[#allocation13 + $0x3a0] sm:$0xff]
    %v8767 = vld [vmem:[#allocation13 + $0x3a8] sm:$0xff]
    %v8768 = vld [vmem:[#allocation13 + $0x3b0] sm:$0xff]
    %v8769 = vld [vmem:[#allocation13 + $0x3b8] sm:$0xff]
    %v8770 = vld [vmem:[#allocation13 + $0x3c0] sm:$0xff]
    %v8771 = vld [vmem:[#allocation13 + $0x3c8] sm:$0xff]
    %v8772 = vld [vmem:[#allocation13 + $0x3d0] sm:$0xff]
    %v8773 = vld [vmem:[#allocation13 + $0x3d8] sm:$0xff]
    %v8774 = vld [vmem:[#allocation13 + $0x3e0] sm:$0xff]
    %v8775 = vld [vmem:[#allocation13 + $0x3e8] sm:$0xff]
    %v8776 = vld [vmem:[#allocation13 + $0x3f0] sm:$0xff]
    %v8777 = vld [vmem:[#allocation13 + $0x3f8] sm:$0xff]
    %v8778 = vld [vmem:[#allocation46] sm:$0xf]
    %v8780 = vperm.slane %v8778, 0
    %v8781 = vperm.slane %v8778, 1
    %v8782 = vperm.slane %v8778, 2
    %v8783 = vperm.slane %v8778, 3
    %v8916 = vunpack.c.l.b16 %v8650
    %v8917 = vunpack.c.h.b16 %v8650
    %v8918 = vunpack.c.l.b16 %v8651
    %v8919 = vunpack.c.h.b16 %v8651
    %v8920 = vunpack.c.l.b16 %v8652
    %v8921 = vunpack.c.h.b16 %v8652
    %v8922 = vunpack.c.l.b16 %v8653
    %v8923 = vunpack.c.h.b16 %v8653
    %v8924 = vunpack.c.l.b16 %v8654
    %v8925 = vunpack.c.h.b16 %v8654
    %v8926 = vunpack.c.l.b16 %v8655
    %v8927 = vunpack.c.h.b16 %v8655
    %v8928 = vunpack.c.l.b16 %v8656
    %v8929 = vunpack.c.h.b16 %v8656
    %v8930 = vunpack.c.l.b16 %v8657
    %v8931 = vunpack.c.h.b16 %v8657
    %v8932 = vunpack.c.l.b16 %v8658
    %v8933 = vunpack.c.h.b16 %v8658
    %v8934 = vunpack.c.l.b16 %v8659
    %v8935 = vunpack.c.h.b16 %v8659
    %v8936 = vunpack.c.l.b16 %v8660
    %v8937 = vunpack.c.h.b16 %v8660
    %v8938 = vunpack.c.l.b16 %v8661
    %v8939 = vunpack.c.h.b16 %v8661
    %v8940 = vunpack.c.l.b16 %v8662
    %v8941 = vunpack.c.h.b16 %v8662
    %v8942 = vunpack.c.l.b16 %v8663
    %v8943 = vunpack.c.h.b16 %v8663
    %v8944 = vunpack.c.l.b16 %v8664
    %v8945 = vunpack.c.h.b16 %v8664
    %v8946 = vunpack.c.l.b16 %v8665
    %v8947 = vunpack.c.h.b16 %v8665
    %v8948 = vunpack.c.l.b16 %v8666
    %v8949 = vunpack.c.h.b16 %v8666
    %v8950 = vunpack.c.l.b16 %v8667
    %v8951 = vunpack.c.h.b16 %v8667
    %v8952 = vunpack.c.l.b16 %v8668
    %v8953 = vunpack.c.h.b16 %v8668
    %v8954 = vunpack.c.l.b16 %v8669
    %v8955 = vunpack.c.h.b16 %v8669
    %v8956 = vunpack.c.l.b16 %v8670
    %v8957 = vunpack.c.h.b16 %v8670
    %v8958 = vunpack.c.l.b16 %v8671
    %v8959 = vunpack.c.h.b16 %v8671
    %v8960 = vunpack.c.l.b16 %v8672
    %v8961 = vunpack.c.h.b16 %v8672
    %v8962 = vunpack.c.l.b16 %v8673
    %v8963 = vunpack.c.h.b16 %v8673
    %v8964 = vunpack.c.l.b16 %v8674
    %v8965 = vunpack.c.h.b16 %v8674
    %v8966 = vunpack.c.l.b16 %v8675
    %v8967 = vunpack.c.h.b16 %v8675
    %v8968 = vunpack.c.l.b16 %v8676
    %v8969 = vunpack.c.h.b16 %v8676
    %v8970 = vunpack.c.l.b16 %v8677
    %v8971 = vunpack.c.h.b16 %v8677
    %v8972 = vunpack.c.l.b16 %v8678
    %v8973 = vunpack.c.h.b16 %v8678
    %v8974 = vunpack.c.l.b16 %v8679
    %v8975 = vunpack.c.h.b16 %v8679
    %v8976 = vunpack.c.l.b16 %v8680
    %v8977 = vunpack.c.h.b16 %v8680
    %v8978 = vunpack.c.l.b16 %v8681
    %v8979 = vunpack.c.h.b16 %v8681
    %v8980 = vunpack.c.l.b16 %v8682
    %v8981 = vunpack.c.h.b16 %v8682
    %v8982 = vunpack.c.l.b16 %v8683
    %v8983 = vunpack.c.h.b16 %v8683
    %v8984 = vunpack.c.l.b16 %v8684
    %v8985 = vunpack.c.h.b16 %v8684
    %v8986 = vunpack.c.l.b16 %v8685
    %v8987 = vunpack.c.h.b16 %v8685
    %v8988 = vunpack.c.l.b16 %v8686
    %v8989 = vunpack.c.h.b16 %v8686
    %v8990 = vunpack.c.l.b16 %v8687
    %v8991 = vunpack.c.h.b16 %v8687
    %v8992 = vunpack.c.l.b16 %v8688
    %v8993 = vunpack.c.h.b16 %v8688
    %v8994 = vunpack.c.l.b16 %v8689
    %v8995 = vunpack.c.h.b16 %v8689
    %v8996 = vunpack.c.l.b16 %v8690
    %v8997 = vunpack.c.h.b16 %v8690
    %v8998 = vunpack.c.l.b16 %v8691
    %v8999 = vunpack.c.h.b16 %v8691
    %v9000 = vunpack.c.l.b16 %v8692
    %v9001 = vunpack.c.h.b16 %v8692
    %v9002 = vunpack.c.l.b16 %v8693
    %v9003 = vunpack.c.h.b16 %v8693
    %v9004 = vunpack.c.l.b16 %v8694
    %v9005 = vunpack.c.h.b16 %v8694
    %v9006 = vunpack.c.l.b16 %v8695
    %v9007 = vunpack.c.h.b16 %v8695
    %v9008 = vunpack.c.l.b16 %v8696
    %v9009 = vunpack.c.h.b16 %v8696
    %v9010 = vunpack.c.l.b16 %v8697
    %v9011 = vunpack.c.h.b16 %v8697
    %v9012 = vunpack.c.l.b16 %v8698
    %v9013 = vunpack.c.h.b16 %v8698
    %v9014 = vunpack.c.l.b16 %v8699
    %v9015 = vunpack.c.h.b16 %v8699
    %v9016 = vunpack.c.l.b16 %v8700
    %v9017 = vunpack.c.h.b16 %v8700
    %v9018 = vunpack.c.l.b16 %v8701
    %v9019 = vunpack.c.h.b16 %v8701
    %v9020 = vunpack.c.l.b16 %v8702
    %v9021 = vunpack.c.h.b16 %v8702
    %v9022 = vunpack.c.l.b16 %v8703
    %v9023 = vunpack.c.h.b16 %v8703
    %v9024 = vunpack.c.l.b16 %v8704
    %v9025 = vunpack.c.h.b16 %v8704
    %v9026 = vunpack.c.l.b16 %v8705
    %v9027 = vunpack.c.h.b16 %v8705
    %v9028 = vunpack.c.l.b16 %v8706
    %v9029 = vunpack.c.h.b16 %v8706
    %v9030 = vunpack.c.l.b16 %v8707
    %v9031 = vunpack.c.h.b16 %v8707
    %v9032 = vunpack.c.l.b16 %v8708
    %v9033 = vunpack.c.h.b16 %v8708
    %v9034 = vunpack.c.l.b16 %v8709
    %v9035 = vunpack.c.h.b16 %v8709
    %v9036 = vunpack.c.l.b16 %v8710
    %v9037 = vunpack.c.h.b16 %v8710
    %v9038 = vunpack.c.l.b16 %v8711
    %v9039 = vunpack.c.h.b16 %v8711
    %v9040 = vunpack.c.l.b16 %v8712
    %v9041 = vunpack.c.h.b16 %v8712
    %v9042 = vunpack.c.l.b16 %v8713
    %v9043 = vunpack.c.h.b16 %v8713
    %v9044 = vunpack.c.l.b16 %v8714
    %v9045 = vunpack.c.h.b16 %v8714
    %v9046 = vunpack.c.l.b16 %v8715
    %v9047 = vunpack.c.h.b16 %v8715
    %v9048 = vunpack.c.l.b16 %v8716
    %v9049 = vunpack.c.h.b16 %v8716
    %v9050 = vunpack.c.l.b16 %v8717
    %v9051 = vunpack.c.h.b16 %v8717
    %v9052 = vunpack.c.l.b16 %v8718
    %v9053 = vunpack.c.h.b16 %v8718
    %v9054 = vunpack.c.l.b16 %v8719
    %v9055 = vunpack.c.h.b16 %v8719
    %v9056 = vunpack.c.l.b16 %v8720
    %v9057 = vunpack.c.h.b16 %v8720
    %v9058 = vunpack.c.l.b16 %v8721
    %v9059 = vunpack.c.h.b16 %v8721
    %v9060 = vunpack.c.l.b16 %v8722
    %v9061 = vunpack.c.h.b16 %v8722
    %v9062 = vunpack.c.l.b16 %v8723
    %v9063 = vunpack.c.h.b16 %v8723
    %v9064 = vunpack.c.l.b16 %v8724
    %v9065 = vunpack.c.h.b16 %v8724
    %v9066 = vunpack.c.l.b16 %v8725
    %v9067 = vunpack.c.h.b16 %v8725
    %v9068 = vunpack.c.l.b16 %v8726
    %v9069 = vunpack.c.h.b16 %v8726
    %v9070 = vunpack.c.l.b16 %v8727
    %v9071 = vunpack.c.h.b16 %v8727
    %v9072 = vunpack.c.l.b16 %v8728
    %v9073 = vunpack.c.h.b16 %v8728
    %v9074 = vunpack.c.l.b16 %v8729
    %v9075 = vunpack.c.h.b16 %v8729
    %v9076 = vunpack.c.l.b16 %v8730
    %v9077 = vunpack.c.h.b16 %v8730
    %v9078 = vunpack.c.l.b16 %v8731
    %v9079 = vunpack.c.h.b16 %v8731
    %v9080 = vunpack.c.l.b16 %v8732
    %v9081 = vunpack.c.h.b16 %v8732
    %v9082 = vunpack.c.l.b16 %v8733
    %v9083 = vunpack.c.h.b16 %v8733
    %v9084 = vunpack.c.l.b16 %v8734
    %v9085 = vunpack.c.h.b16 %v8734
    %v9086 = vunpack.c.l.b16 %v8735
    %v9087 = vunpack.c.h.b16 %v8735
    %v9088 = vunpack.c.l.b16 %v8736
    %v9089 = vunpack.c.h.b16 %v8736
    %v9090 = vunpack.c.l.b16 %v8737
    %v9091 = vunpack.c.h.b16 %v8737
    %v9092 = vunpack.c.l.b16 %v8738
    %v9093 = vunpack.c.h.b16 %v8738
    %v9094 = vunpack.c.l.b16 %v8739
    %v9095 = vunpack.c.h.b16 %v8739
    %v9096 = vunpack.c.l.b16 %v8740
    %v9097 = vunpack.c.h.b16 %v8740
    %v9098 = vunpack.c.l.b16 %v8741
    %v9099 = vunpack.c.h.b16 %v8741
    %v9100 = vunpack.c.l.b16 %v8742
    %v9101 = vunpack.c.h.b16 %v8742
    %v9102 = vunpack.c.l.b16 %v8743
    %v9103 = vunpack.c.h.b16 %v8743
    %v9104 = vunpack.c.l.b16 %v8744
    %v9105 = vunpack.c.h.b16 %v8744
    %v9106 = vunpack.c.l.b16 %v8745
    %v9107 = vunpack.c.h.b16 %v8745
    %v9108 = vunpack.c.l.b16 %v8746
    %v9109 = vunpack.c.h.b16 %v8746
    %v9110 = vunpack.c.l.b16 %v8747
    %v9111 = vunpack.c.h.b16 %v8747
    %v9112 = vunpack.c.l.b16 %v8748
    %v9113 = vunpack.c.h.b16 %v8748
    %v9114 = vunpack.c.l.b16 %v8749
    %v9115 = vunpack.c.h.b16 %v8749
    %v9116 = vunpack.c.l.b16 %v8750
    %v9117 = vunpack.c.h.b16 %v8750
    %v9118 = vunpack.c.l.b16 %v8751
    %v9119 = vunpack.c.h.b16 %v8751
    %v9120 = vunpack.c.l.b16 %v8752
    %v9121 = vunpack.c.h.b16 %v8752
    %v9122 = vunpack.c.l.b16 %v8753
    %v9123 = vunpack.c.h.b16 %v8753
    %v9124 = vunpack.c.l.b16 %v8754
    %v9125 = vunpack.c.h.b16 %v8754
    %v9126 = vunpack.c.l.b16 %v8755
    %v9127 = vunpack.c.h.b16 %v8755
    %v9128 = vunpack.c.l.b16 %v8756
    %v9129 = vunpack.c.h.b16 %v8756
    %v9130 = vunpack.c.l.b16 %v8757
    %v9131 = vunpack.c.h.b16 %v8757
    %v9132 = vunpack.c.l.b16 %v8758
    %v9133 = vunpack.c.h.b16 %v8758
    %v9134 = vunpack.c.l.b16 %v8759
    %v9135 = vunpack.c.h.b16 %v8759
    %v9136 = vunpack.c.l.b16 %v8760
    %v9137 = vunpack.c.h.b16 %v8760
    %v9138 = vunpack.c.l.b16 %v8761
    %v9139 = vunpack.c.h.b16 %v8761
    %v9140 = vunpack.c.l.b16 %v8762
    %v9141 = vunpack.c.h.b16 %v8762
    %v9142 = vunpack.c.l.b16 %v8763
    %v9143 = vunpack.c.h.b16 %v8763
    %v9144 = vunpack.c.l.b16 %v8764
    %v9145 = vunpack.c.h.b16 %v8764
    %v9146 = vunpack.c.l.b16 %v8765
    %v9147 = vunpack.c.h.b16 %v8765
    %v9148 = vunpack.c.l.b16 %v8766
    %v9149 = vunpack.c.h.b16 %v8766
    %v9150 = vunpack.c.l.b16 %v8767
    %v9151 = vunpack.c.h.b16 %v8767
    %v9152 = vunpack.c.l.b16 %v8768
    %v9153 = vunpack.c.h.b16 %v8768
    %v9154 = vunpack.c.l.b16 %v8769
    %v9155 = vunpack.c.h.b16 %v8769
    %v9156 = vunpack.c.l.b16 %v8770
    %v9157 = vunpack.c.h.b16 %v8770
    %v9158 = vunpack.c.l.b16 %v8771
    %v9159 = vunpack.c.h.b16 %v8771
    %v9160 = vunpack.c.l.b16 %v8772
    %v9161 = vunpack.c.h.b16 %v8772
    %v9162 = vunpack.c.l.b16 %v8773
    %v9163 = vunpack.c.h.b16 %v8773
    %v9164 = vunpack.c.l.b16 %v8774
    %v9165 = vunpack.c.h.b16 %v8774
    %v9166 = vunpack.c.l.b16 %v8775
    %v9167 = vunpack.c.h.b16 %v8775
    %v9168 = vunpack.c.l.b16 %v8776
    %v9169 = vunpack.c.h.b16 %v8776
    %v9170 = vunpack.c.l.b16 %v8777
    %v9171 = vunpack.c.h.b16 %v8777
    %v9172 = vpack.c.b16 %v8920, %v8916
    %v9173 = vpack.c.b16 %v8921, %v8917
    %v9174 = vpack.c.b16 %v8922, %v8918
    %v9175 = vpack.c.b16 %v8923, %v8919
    %v9176 = vpack.c.b16 %v8928, %v8924
    %v9177 = vpack.c.b16 %v8929, %v8925
    %v9178 = vpack.c.b16 %v8930, %v8926
    %v9179 = vpack.c.b16 %v8931, %v8927
    %v9180 = vpack.c.b16 %v8936, %v8932
    %v9181 = vpack.c.b16 %v8937, %v8933
    %v9182 = vpack.c.b16 %v8938, %v8934
    %v9183 = vpack.c.b16 %v8939, %v8935
    %v9184 = vpack.c.b16 %v8944, %v8940
    %v9185 = vpack.c.b16 %v8945, %v8941
    %v9186 = vpack.c.b16 %v8946, %v8942
    %v9187 = vpack.c.b16 %v8947, %v8943
    %v9188 = vpack.c.b16 %v8952, %v8948
    %v9189 = vpack.c.b16 %v8953, %v8949
    %v9190 = vpack.c.b16 %v8954, %v8950
    %v9191 = vpack.c.b16 %v8955, %v8951
    %v9192 = vpack.c.b16 %v8960, %v8956
    %v9193 = vpack.c.b16 %v8961, %v8957
    %v9194 = vpack.c.b16 %v8962, %v8958
    %v9195 = vpack.c.b16 %v8963, %v8959
    %v9196 = vpack.c.b16 %v8968, %v8964
    %v9197 = vpack.c.b16 %v8969, %v8965
    %v9198 = vpack.c.b16 %v8970, %v8966
    %v9199 = vpack.c.b16 %v8971, %v8967
    %v9200 = vpack.c.b16 %v8976, %v8972
    %v9201 = vpack.c.b16 %v8977, %v8973
    %v9202 = vpack.c.b16 %v8978, %v8974
    %v9203 = vpack.c.b16 %v8979, %v8975
    %v9204 = vpack.c.b16 %v8984, %v8980
    %v9205 = vpack.c.b16 %v8985, %v8981
    %v9206 = vpack.c.b16 %v8986, %v8982
    %v9207 = vpack.c.b16 %v8987, %v8983
    %v9208 = vpack.c.b16 %v8992, %v8988
    %v9209 = vpack.c.b16 %v8993, %v8989
    %v9210 = vpack.c.b16 %v8994, %v8990
    %v9211 = vpack.c.b16 %v8995, %v8991
    %v9212 = vpack.c.b16 %v9000, %v8996
    %v9213 = vpack.c.b16 %v9001, %v8997
    %v9214 = vpack.c.b16 %v9002, %v8998
    %v9215 = vpack.c.b16 %v9003, %v8999
    %v9216 = vpack.c.b16 %v9008, %v9004
    %v9217 = vpack.c.b16 %v9009, %v9005
    %v9218 = vpack.c.b16 %v9010, %v9006
    %v9219 = vpack.c.b16 %v9011, %v9007
    %v9220 = vpack.c.b16 %v9016, %v9012
    %v9221 = vpack.c.b16 %v9017, %v9013
    %v9222 = vpack.c.b16 %v9018, %v9014
    %v9223 = vpack.c.b16 %v9019, %v9015
    %v9224 = vpack.c.b16 %v9024, %v9020
    %v9225 = vpack.c.b16 %v9025, %v9021
    %v9226 = vpack.c.b16 %v9026, %v9022
    %v9227 = vpack.c.b16 %v9027, %v9023
    %v9228 = vpack.c.b16 %v9032, %v9028
    %v9229 = vpack.c.b16 %v9033, %v9029
    %v9230 = vpack.c.b16 %v9034, %v9030
    %v9231 = vpack.c.b16 %v9035, %v9031
    %v9232 = vpack.c.b16 %v9040, %v9036
    %v9233 = vpack.c.b16 %v9041, %v9037
    %v9234 = vpack.c.b16 %v9042, %v9038
    %v9235 = vpack.c.b16 %v9043, %v9039
    %v9236 = vpack.c.b16 %v9048, %v9044
    %v9237 = vpack.c.b16 %v9049, %v9045
    %v9238 = vpack.c.b16 %v9050, %v9046
    %v9239 = vpack.c.b16 %v9051, %v9047
    %v9240 = vpack.c.b16 %v9056, %v9052
    %v9241 = vpack.c.b16 %v9057, %v9053
    %v9242 = vpack.c.b16 %v9058, %v9054
    %v9243 = vpack.c.b16 %v9059, %v9055
    %v9244 = vpack.c.b16 %v9064, %v9060
    %v9245 = vpack.c.b16 %v9065, %v9061
    %v9246 = vpack.c.b16 %v9066, %v9062
    %v9247 = vpack.c.b16 %v9067, %v9063
    %v9248 = vpack.c.b16 %v9072, %v9068
    %v9249 = vpack.c.b16 %v9073, %v9069
    %v9250 = vpack.c.b16 %v9074, %v9070
    %v9251 = vpack.c.b16 %v9075, %v9071
    %v9252 = vpack.c.b16 %v9080, %v9076
    %v9253 = vpack.c.b16 %v9081, %v9077
    %v9254 = vpack.c.b16 %v9082, %v9078
    %v9255 = vpack.c.b16 %v9083, %v9079
    %v9256 = vpack.c.b16 %v9088, %v9084
    %v9257 = vpack.c.b16 %v9089, %v9085
    %v9258 = vpack.c.b16 %v9090, %v9086
    %v9259 = vpack.c.b16 %v9091, %v9087
    %v9260 = vpack.c.b16 %v9096, %v9092
    %v9261 = vpack.c.b16 %v9097, %v9093
    %v9262 = vpack.c.b16 %v9098, %v9094
    %v9263 = vpack.c.b16 %v9099, %v9095
    %v9264 = vpack.c.b16 %v9104, %v9100
    %v9265 = vpack.c.b16 %v9105, %v9101
    %v9266 = vpack.c.b16 %v9106, %v9102
    %v9267 = vpack.c.b16 %v9107, %v9103
    %v9268 = vpack.c.b16 %v9112, %v9108
    %v9269 = vpack.c.b16 %v9113, %v9109
    %v9270 = vpack.c.b16 %v9114, %v9110
    %v9271 = vpack.c.b16 %v9115, %v9111
    %v9272 = vpack.c.b16 %v9120, %v9116
    %v9273 = vpack.c.b16 %v9121, %v9117
    %v9274 = vpack.c.b16 %v9122, %v9118
    %v9275 = vpack.c.b16 %v9123, %v9119
    %v9276 = vpack.c.b16 %v9128, %v9124
    %v9277 = vpack.c.b16 %v9129, %v9125
    %v9278 = vpack.c.b16 %v9130, %v9126
    %v9279 = vpack.c.b16 %v9131, %v9127
    %v9280 = vpack.c.b16 %v9136, %v9132
    %v9281 = vpack.c.b16 %v9137, %v9133
    %v9282 = vpack.c.b16 %v9138, %v9134
    %v9283 = vpack.c.b16 %v9139, %v9135
    %v9284 = vpack.c.b16 %v9144, %v9140
    %v9285 = vpack.c.b16 %v9145, %v9141
    %v9286 = vpack.c.b16 %v9146, %v9142
    %v9287 = vpack.c.b16 %v9147, %v9143
    %v9288 = vpack.c.b16 %v9152, %v9148
    %v9289 = vpack.c.b16 %v9153, %v9149
    %v9290 = vpack.c.b16 %v9154, %v9150
    %v9291 = vpack.c.b16 %v9155, %v9151
    %v9292 = vpack.c.b16 %v9160, %v9156
    %v9293 = vpack.c.b16 %v9161, %v9157
    %v9294 = vpack.c.b16 %v9162, %v9158
    %v9295 = vpack.c.b16 %v9163, %v9159
    %v9296 = vpack.c.b16 %v9168, %v9164
    %v9297 = vpack.c.b16 %v9169, %v9165
    %v9298 = vpack.c.b16 %v9170, %v9166
    %v9299 = vpack.c.b16 %v9171, %v9167
    %9428 = vmatpush.bf16.msra.mxu0 %v9200
    %9429 = vmatpush.bf16.msra.mxu0 %v9196
    %9430 = vmatpush.bf16.msra.mxu0 %v9192
    %9431 = vmatpush.bf16.msra.mxu0 %v9188
    %9432 = vmatpush.bf16.msra.mxu0 %v9184
    %9433 = vmatpush.bf16.msra.mxu0 %v9180
    %9434 = vmatpush.bf16.msra.mxu0 %v9176
    %9435 = vmatpush.bf16.msra.mxu0 %v9172
    %9436 = vmatmul.bf16.gmra.mxu0 %v8646
    %v9437 = vpop.f32.mrf.mxu0
    %v9438 = vadd.f32 %v8780, %v9437
    %v9439 = vpop.f32.mrf.mxu0
    %9440 = vdwg.mxu0
    %9441 = vmatpush.bf16.msra.mxu0 %v9232
    %9442 = vmatpush.bf16.msra.mxu0 %v9228
    %9443 = vmatpush.bf16.msra.mxu0 %v9224
    %9444 = vmatpush.bf16.msra.mxu0 %v9220
    %9445 = vmatpush.bf16.msra.mxu0 %v9216
    %9446 = vmatpush.bf16.msra.mxu0 %v9212
    %9447 = vmatpush.bf16.msra.mxu0 %v9208
    %9448 = vmatpush.bf16.msra.mxu0 %v9204
    %9449 = vmatmul.bf16.gmra.mxu0 %v8647
    %v9450 = vpop.f32.mrf.mxu0
    %v9451 = vadd.f32 %v9438, %v9450
    %v9452 = vpop.f32.mrf.mxu0
    %9453 = vdwg.mxu0
    %9454 = vmatpush.bf16.msra.mxu0 %v9264
    %9455 = vmatpush.bf16.msra.mxu0 %v9260
    %9456 = vmatpush.bf16.msra.mxu0 %v9256
    %9457 = vmatpush.bf16.msra.mxu0 %v9252
    %9458 = vmatpush.bf16.msra.mxu0 %v9248
    %9459 = vmatpush.bf16.msra.mxu0 %v9244
    %9460 = vmatpush.bf16.msra.mxu0 %v9240
    %9461 = vmatpush.bf16.msra.mxu0 %v9236
    %9462 = vmatmul.bf16.gmra.mxu0 %v8648
    %v9463 = vpop.f32.mrf.mxu0
    %v9464 = vadd.f32 %v9451, %v9463
    %v9465 = vpop.f32.mrf.mxu0
    %9466 = vdwg.mxu0
    %9467 = vmatpush.bf16.msra.mxu0 %v9296
    %9468 = vmatpush.bf16.msra.mxu0 %v9292
    %9469 = vmatpush.bf16.msra.mxu0 %v9288
    %9470 = vmatpush.bf16.msra.mxu0 %v9284
    %9471 = vmatpush.bf16.msra.mxu0 %v9280
    %9472 = vmatpush.bf16.msra.mxu0 %v9276
    %9473 = vmatpush.bf16.msra.mxu0 %v9272
    %9474 = vmatpush.bf16.msra.mxu0 %v9268
    %9475 = vmatmul.bf16.gmra.mxu0 %v8649
    %v9476 = vpop.f32.mrf.mxu0
    %v9477 = vadd.f32 %v9464, %v9476
    %v9478 = vpop.f32.mrf.mxu0
    %9479 = vdwg.mxu0
    %9480 = vmatpush.bf16.msra.mxu0 %v9201
    %9481 = vmatpush.bf16.msra.mxu0 %v9197
    %9482 = vmatpush.bf16.msra.mxu0 %v9193
    %9483 = vmatpush.bf16.msra.mxu0 %v9189
    %9484 = vmatpush.bf16.msra.mxu0 %v9185
    %9485 = vmatpush.bf16.msra.mxu0 %v9181
    %9486 = vmatpush.bf16.msra.mxu0 %v9177
    %9487 = vmatpush.bf16.msra.mxu0 %v9173
    %9488 = vmatmul.bf16.gmra.mxu0 %v8646
    %v9489 = vpop.f32.mrf.mxu0
    %v9490 = vadd.f32 %v8781, %v9489
    %v9491 = vpop.f32.mrf.mxu0
    %9492 = vdwg.mxu0
    %9493 = vmatpush.bf16.msra.mxu0 %v9233
    %9494 = vmatpush.bf16.msra.mxu0 %v9229
    %9495 = vmatpush.bf16.msra.mxu0 %v9225
    %9496 = vmatpush.bf16.msra.mxu0 %v9221
    %9497 = vmatpush.bf16.msra.mxu0 %v9217
    %9498 = vmatpush.bf16.msra.mxu0 %v9213
    %9499 = vmatpush.bf16.msra.mxu0 %v9209
    %9500 = vmatpush.bf16.msra.mxu0 %v9205
    %9501 = vmatmul.bf16.gmra.mxu0 %v8647
    %v9502 = vpop.f32.mrf.mxu0
    %v9503 = vadd.f32 %v9490, %v9502
    %v9504 = vpop.f32.mrf.mxu0
    %9505 = vdwg.mxu0
    %9506 = vmatpush.bf16.msra.mxu0 %v9265
    %9507 = vmatpush.bf16.msra.mxu0 %v9261
    %9508 = vmatpush.bf16.msra.mxu0 %v9257
    %9509 = vmatpush.bf16.msra.mxu0 %v9253
    %9510 = vmatpush.bf16.msra.mxu0 %v9249
    %9511 = vmatpush.bf16.msra.mxu0 %v9245
    %9512 = vmatpush.bf16.msra.mxu0 %v9241
    %9513 = vmatpush.bf16.msra.mxu0 %v9237
    %9514 = vmatmul.bf16.gmra.mxu0 %v8648
    %v9515 = vpop.f32.mrf.mxu0
    %v9516 = vadd.f32 %v9503, %v9515
    %v9517 = vpop.f32.mrf.mxu0
    %9518 = vdwg.mxu0
    %9519 = vmatpush.bf16.msra.mxu0 %v9297
    %9520 = vmatpush.bf16.msra.mxu0 %v9293
    %9521 = vmatpush.bf16.msra.mxu0 %v9289
    %9522 = vmatpush.bf16.msra.mxu0 %v9285
    %9523 = vmatpush.bf16.msra.mxu0 %v9281
    %9524 = vmatpush.bf16.msra.mxu0 %v9277
    %9525 = vmatpush.bf16.msra.mxu0 %v9273
    %9526 = vmatpush.bf16.msra.mxu0 %v9269
    %9527 = vmatmul.bf16.gmra.mxu0 %v8649
    %v9528 = vpop.f32.mrf.mxu0
    %v9529 = vadd.f32 %v9516, %v9528
    %v9530 = vpop.f32.mrf.mxu0
    %9531 = vdwg.mxu0
    %9532 = vmatpush.bf16.msra.mxu0 %v9202
    %9533 = vmatpush.bf16.msra.mxu0 %v9198
    %9534 = vmatpush.bf16.msra.mxu0 %v9194
    %9535 = vmatpush.bf16.msra.mxu0 %v9190
    %9536 = vmatpush.bf16.msra.mxu0 %v9186
    %9537 = vmatpush.bf16.msra.mxu0 %v9182
    %9538 = vmatpush.bf16.msra.mxu0 %v9178
    %9539 = vmatpush.bf16.msra.mxu0 %v9174
    %9540 = vmatmul.bf16.gmra.mxu0 %v8646
    %v9541 = vpop.f32.mrf.mxu0
    %v9542 = vadd.f32 %v8782, %v9541
    %v9543 = vpop.f32.mrf.mxu0
    %9544 = vdwg.mxu0
    %9545 = vmatpush.bf16.msra.mxu0 %v9234
    %9546 = vmatpush.bf16.msra.mxu0 %v9230
    %9547 = vmatpush.bf16.msra.mxu0 %v9226
    %9548 = vmatpush.bf16.msra.mxu0 %v9222
    %9549 = vmatpush.bf16.msra.mxu0 %v9218
    %9550 = vmatpush.bf16.msra.mxu0 %v9214
    %9551 = vmatpush.bf16.msra.mxu0 %v9210
    %9552 = vmatpush.bf16.msra.mxu0 %v9206
    %9553 = vmatmul.bf16.gmra.mxu0 %v8647
    %v9554 = vpop.f32.mrf.mxu0
    %v9555 = vadd.f32 %v9542, %v9554
    %v9556 = vpop.f32.mrf.mxu0
    %9557 = vdwg.mxu0
    %9558 = vmatpush.bf16.msra.mxu0 %v9266
    %9559 = vmatpush.bf16.msra.mxu0 %v9262
    %9560 = vmatpush.bf16.msra.mxu0 %v9258
    %9561 = vmatpush.bf16.msra.mxu0 %v9254
    %9562 = vmatpush.bf16.msra.mxu0 %v9250
    %9563 = vmatpush.bf16.msra.mxu0 %v9246
    %9564 = vmatpush.bf16.msra.mxu0 %v9242
    %9565 = vmatpush.bf16.msra.mxu0 %v9238
    %9566 = vmatmul.bf16.gmra.mxu0 %v8648
    %v9567 = vpop.f32.mrf.mxu0
    %v9568 = vadd.f32 %v9555, %v9567
    %v9569 = vpop.f32.mrf.mxu0
    %9570 = vdwg.mxu0
    %9571 = vmatpush.bf16.msra.mxu0 %v9298
    %9572 = vmatpush.bf16.msra.mxu0 %v9294
    %9573 = vmatpush.bf16.msra.mxu0 %v9290
    %9574 = vmatpush.bf16.msra.mxu0 %v9286
    %9575 = vmatpush.bf16.msra.mxu0 %v9282
    %9576 = vmatpush.bf16.msra.mxu0 %v9278
    %9577 = vmatpush.bf16.msra.mxu0 %v9274
    %9578 = vmatpush.bf16.msra.mxu0 %v9270
    %9579 = vmatmul.bf16.gmra.mxu0 %v8649
    %v9580 = vpop.f32.mrf.mxu0
    %v9581 = vadd.f32 %v9568, %v9580
    %v9582 = vpop.f32.mrf.mxu0
    %9583 = vdwg.mxu0
    %9584 = vmatpush.bf16.msra.mxu0 %v9203
    %9585 = vmatpush.bf16.msra.mxu0 %v9199
    %9586 = vmatpush.bf16.msra.mxu0 %v9195
    %9587 = vmatpush.bf16.msra.mxu0 %v9191
    %9588 = vmatpush.bf16.msra.mxu0 %v9187
    %9589 = vmatpush.bf16.msra.mxu0 %v9183
    %9590 = vmatpush.bf16.msra.mxu0 %v9179
    %9591 = vmatpush.bf16.msra.mxu0 %v9175
    %9592 = vmatmul.bf16.gmra.mxu0 %v8646
    %v9593 = vpop.f32.mrf.mxu0
    %v9594 = vadd.f32 %v8783, %v9593
    %v9595 = vpop.f32.mrf.mxu0
    %9596 = vdwg.mxu0
    %9597 = vmatpush.bf16.msra.mxu0 %v9235
    %9598 = vmatpush.bf16.msra.mxu0 %v9231
    %9599 = vmatpush.bf16.msra.mxu0 %v9227
    %9600 = vmatpush.bf16.msra.mxu0 %v9223
    %9601 = vmatpush.bf16.msra.mxu0 %v9219
    %9602 = vmatpush.bf16.msra.mxu0 %v9215
    %9603 = vmatpush.bf16.msra.mxu0 %v9211
    %9604 = vmatpush.bf16.msra.mxu0 %v9207
    %9605 = vmatmul.bf16.gmra.mxu0 %v8647
    %v9606 = vpop.f32.mrf.mxu0
    %v9607 = vadd.f32 %v9594, %v9606
    %v9608 = vpop.f32.mrf.mxu0
    %9609 = vdwg.mxu0
    %9610 = vmatpush.bf16.msra.mxu0 %v9267
    %9611 = vmatpush.bf16.msra.mxu0 %v9263
    %9612 = vmatpush.bf16.msra.mxu0 %v9259
    %9613 = vmatpush.bf16.msra.mxu0 %v9255
    %9614 = vmatpush.bf16.msra.mxu0 %v9251
    %9615 = vmatpush.bf16.msra.mxu0 %v9247
    %9616 = vmatpush.bf16.msra.mxu0 %v9243
    %9617 = vmatpush.bf16.msra.mxu0 %v9239
    %9618 = vmatmul.bf16.gmra.mxu0 %v8648
    %v9619 = vpop.f32.mrf.mxu0
    %v9620 = vadd.f32 %v9607, %v9619
    %v9621 = vpop.f32.mrf.mxu0
    %9622 = vdwg.mxu0
    %9623 = vmatpush.bf16.msra.mxu0 %v9299
    %9624 = vmatpush.bf16.msra.mxu0 %v9295
    %9625 = vmatpush.bf16.msra.mxu0 %v9291
    %9626 = vmatpush.bf16.msra.mxu0 %v9287
    %9627 = vmatpush.bf16.msra.mxu0 %v9283
    %9628 = vmatpush.bf16.msra.mxu0 %v9279
    %9629 = vmatpush.bf16.msra.mxu0 %v9275
    %9630 = vmatpush.bf16.msra.mxu0 %v9271
    %9631 = vmatmul.bf16.gmra.mxu0 %v8649
    %v9632 = vpop.f32.mrf.mxu0
    %v9633 = vadd.f32 %v9620, %v9632
    %v9634 = vpop.f32.mrf.mxu0
    %9635 = vdwg.mxu0
    %v9636 = vmax.f32 %v9477, 0.0
    %v9637 = vmax.f32 %v9529, 0.0
    %v9638 = vmax.f32 %v9581, 0.0
    %v9639 = vmax.f32 %v9633, 0.0
    %v9640 = vpack.c.bf16 %v9636, %v9636
    %v9641 = vpack.c.bf16 %v9637, %v9637
    %v9642 = vpack.c.bf16 %v9638, %v9638
    %v9643 = vpack.c.bf16 %v9639, %v9639
    %v9644 = vld [vmem:[#allocation15] sm:$0xff]
    %v9645 = vld [vmem:[#allocation15 + $0x8] sm:$0xff]
    %v9646 = vld [vmem:[#allocation15 + $0x10] sm:$0xff]
    %v9647 = vld [vmem:[#allocation15 + $0x18] sm:$0xff]
    %v9648 = vld [vmem:[#allocation15 + $0x20] sm:$0xff]
    %v9649 = vld [vmem:[#allocation15 + $0x28] sm:$0xff]
    %v9650 = vld [vmem:[#allocation15 + $0x30] sm:$0xff]
    %v9651 = vld [vmem:[#allocation15 + $0x38] sm:$0xff]
    %v9652 = vld [vmem:[#allocation15 + $0x40] sm:$0xff]
    %v9653 = vld [vmem:[#allocation15 + $0x48] sm:$0xff]
    %v9654 = vld [vmem:[#allocation15 + $0x50] sm:$0xff]
    %v9655 = vld [vmem:[#allocation15 + $0x58] sm:$0xff]
    %v9656 = vld [vmem:[#allocation15 + $0x60] sm:$0xff]
    %v9657 = vld [vmem:[#allocation15 + $0x68] sm:$0xff]
    %v9658 = vld [vmem:[#allocation15 + $0x70] sm:$0xff]
    %v9659 = vld [vmem:[#allocation15 + $0x78] sm:$0xff]
    %v9660 = vld [vmem:[#allocation15 + $0x80] sm:$0xff]
    %v9661 = vld [vmem:[#allocation15 + $0x88] sm:$0xff]
    %v9662 = vld [vmem:[#allocation15 + $0x90] sm:$0xff]
    %v9663 = vld [vmem:[#allocation15 + $0x98] sm:$0xff]
    %v9664 = vld [vmem:[#allocation15 + $0xa0] sm:$0xff]
    %v9665 = vld [vmem:[#allocation15 + $0xa8] sm:$0xff]
    %v9666 = vld [vmem:[#allocation15 + $0xb0] sm:$0xff]
    %v9667 = vld [vmem:[#allocation15 + $0xb8] sm:$0xff]
    %v9668 = vld [vmem:[#allocation15 + $0xc0] sm:$0xff]
    %v9669 = vld [vmem:[#allocation15 + $0xc8] sm:$0xff]
    %v9670 = vld [vmem:[#allocation15 + $0xd0] sm:$0xff]
    %v9671 = vld [vmem:[#allocation15 + $0xd8] sm:$0xff]
    %v9672 = vld [vmem:[#allocation15 + $0xe0] sm:$0xff]
    %v9673 = vld [vmem:[#allocation15 + $0xe8] sm:$0xff]
    %v9674 = vld [vmem:[#allocation15 + $0xf0] sm:$0xff]
    %v9675 = vld [vmem:[#allocation15 + $0xf8] sm:$0xff]
    %v9676 = vld [vmem:[#allocation15 + $0x100] sm:$0xff]
    %v9677 = vld [vmem:[#allocation15 + $0x108] sm:$0xff]
    %v9678 = vld [vmem:[#allocation15 + $0x110] sm:$0xff]
    %v9679 = vld [vmem:[#allocation15 + $0x118] sm:$0xff]
    %v9680 = vld [vmem:[#allocation15 + $0x120] sm:$0xff]
    %v9681 = vld [vmem:[#allocation15 + $0x128] sm:$0xff]
    %v9682 = vld [vmem:[#allocation15 + $0x130] sm:$0xff]
    %v9683 = vld [vmem:[#allocation15 + $0x138] sm:$0xff]
    %v9684 = vld [vmem:[#allocation15 + $0x140] sm:$0xff]
    %v9685 = vld [vmem:[#allocation15 + $0x148] sm:$0xff]
    %v9686 = vld [vmem:[#allocation15 + $0x150] sm:$0xff]
    %v9687 = vld [vmem:[#allocation15 + $0x158] sm:$0xff]
    %v9688 = vld [vmem:[#allocation15 + $0x160] sm:$0xff]
    %v9689 = vld [vmem:[#allocation15 + $0x168] sm:$0xff]
    %v9690 = vld [vmem:[#allocation15 + $0x170] sm:$0xff]
    %v9691 = vld [vmem:[#allocation15 + $0x178] sm:$0xff]
    %v9692 = vld [vmem:[#allocation15 + $0x180] sm:$0xff]
    %v9693 = vld [vmem:[#allocation15 + $0x188] sm:$0xff]
    %v9694 = vld [vmem:[#allocation15 + $0x190] sm:$0xff]
    %v9695 = vld [vmem:[#allocation15 + $0x198] sm:$0xff]
    %v9696 = vld [vmem:[#allocation15 + $0x1a0] sm:$0xff]
    %v9697 = vld [vmem:[#allocation15 + $0x1a8] sm:$0xff]
    %v9698 = vld [vmem:[#allocation15 + $0x1b0] sm:$0xff]
    %v9699 = vld [vmem:[#allocation15 + $0x1b8] sm:$0xff]
    %v9700 = vld [vmem:[#allocation15 + $0x1c0] sm:$0xff]
    %v9701 = vld [vmem:[#allocation15 + $0x1c8] sm:$0xff]
    %v9702 = vld [vmem:[#allocation15 + $0x1d0] sm:$0xff]
    %v9703 = vld [vmem:[#allocation15 + $0x1d8] sm:$0xff]
    %v9704 = vld [vmem:[#allocation15 + $0x1e0] sm:$0xff]
    %v9705 = vld [vmem:[#allocation15 + $0x1e8] sm:$0xff]
    %v9706 = vld [vmem:[#allocation15 + $0x1f0] sm:$0xff]
    %v9707 = vld [vmem:[#allocation15 + $0x1f8] sm:$0xff]
    %v9708 = vld [vmem:[#allocation15 + $0x200] sm:$0xff]
    %v9709 = vld [vmem:[#allocation15 + $0x208] sm:$0xff]
    %v9710 = vld [vmem:[#allocation15 + $0x210] sm:$0xff]
    %v9711 = vld [vmem:[#allocation15 + $0x218] sm:$0xff]
    %v9712 = vld [vmem:[#allocation15 + $0x220] sm:$0xff]
    %v9713 = vld [vmem:[#allocation15 + $0x228] sm:$0xff]
    %v9714 = vld [vmem:[#allocation15 + $0x230] sm:$0xff]
    %v9715 = vld [vmem:[#allocation15 + $0x238] sm:$0xff]
    %v9716 = vld [vmem:[#allocation15 + $0x240] sm:$0xff]
    %v9717 = vld [vmem:[#allocation15 + $0x248] sm:$0xff]
    %v9718 = vld [vmem:[#allocation15 + $0x250] sm:$0xff]
    %v9719 = vld [vmem:[#allocation15 + $0x258] sm:$0xff]
    %v9720 = vld [vmem:[#allocation15 + $0x260] sm:$0xff]
    %v9721 = vld [vmem:[#allocation15 + $0x268] sm:$0xff]
    %v9722 = vld [vmem:[#allocation15 + $0x270] sm:$0xff]
    %v9723 = vld [vmem:[#allocation15 + $0x278] sm:$0xff]
    %v9724 = vld [vmem:[#allocation15 + $0x280] sm:$0xff]
    %v9725 = vld [vmem:[#allocation15 + $0x288] sm:$0xff]
    %v9726 = vld [vmem:[#allocation15 + $0x290] sm:$0xff]
    %v9727 = vld [vmem:[#allocation15 + $0x298] sm:$0xff]
    %v9728 = vld [vmem:[#allocation15 + $0x2a0] sm:$0xff]
    %v9729 = vld [vmem:[#allocation15 + $0x2a8] sm:$0xff]
    %v9730 = vld [vmem:[#allocation15 + $0x2b0] sm:$0xff]
    %v9731 = vld [vmem:[#allocation15 + $0x2b8] sm:$0xff]
    %v9732 = vld [vmem:[#allocation15 + $0x2c0] sm:$0xff]
    %v9733 = vld [vmem:[#allocation15 + $0x2c8] sm:$0xff]
    %v9734 = vld [vmem:[#allocation15 + $0x2d0] sm:$0xff]
    %v9735 = vld [vmem:[#allocation15 + $0x2d8] sm:$0xff]
    %v9736 = vld [vmem:[#allocation15 + $0x2e0] sm:$0xff]
    %v9737 = vld [vmem:[#allocation15 + $0x2e8] sm:$0xff]
    %v9738 = vld [vmem:[#allocation15 + $0x2f0] sm:$0xff]
    %v9739 = vld [vmem:[#allocation15 + $0x2f8] sm:$0xff]
    %v9740 = vld [vmem:[#allocation15 + $0x300] sm:$0xff]
    %v9741 = vld [vmem:[#allocation15 + $0x308] sm:$0xff]
    %v9742 = vld [vmem:[#allocation15 + $0x310] sm:$0xff]
    %v9743 = vld [vmem:[#allocation15 + $0x318] sm:$0xff]
    %v9744 = vld [vmem:[#allocation15 + $0x320] sm:$0xff]
    %v9745 = vld [vmem:[#allocation15 + $0x328] sm:$0xff]
    %v9746 = vld [vmem:[#allocation15 + $0x330] sm:$0xff]
    %v9747 = vld [vmem:[#allocation15 + $0x338] sm:$0xff]
    %v9748 = vld [vmem:[#allocation15 + $0x340] sm:$0xff]
    %v9749 = vld [vmem:[#allocation15 + $0x348] sm:$0xff]
    %v9750 = vld [vmem:[#allocation15 + $0x350] sm:$0xff]
    %v9751 = vld [vmem:[#allocation15 + $0x358] sm:$0xff]
    %v9752 = vld [vmem:[#allocation15 + $0x360] sm:$0xff]
    %v9753 = vld [vmem:[#allocation15 + $0x368] sm:$0xff]
    %v9754 = vld [vmem:[#allocation15 + $0x370] sm:$0xff]
    %v9755 = vld [vmem:[#allocation15 + $0x378] sm:$0xff]
    %v9756 = vld [vmem:[#allocation15 + $0x380] sm:$0xff]
    %v9757 = vld [vmem:[#allocation15 + $0x388] sm:$0xff]
    %v9758 = vld [vmem:[#allocation15 + $0x390] sm:$0xff]
    %v9759 = vld [vmem:[#allocation15 + $0x398] sm:$0xff]
    %v9760 = vld [vmem:[#allocation15 + $0x3a0] sm:$0xff]
    %v9761 = vld [vmem:[#allocation15 + $0x3a8] sm:$0xff]
    %v9762 = vld [vmem:[#allocation15 + $0x3b0] sm:$0xff]
    %v9763 = vld [vmem:[#allocation15 + $0x3b8] sm:$0xff]
    %v9764 = vld [vmem:[#allocation15 + $0x3c0] sm:$0xff]
    %v9765 = vld [vmem:[#allocation15 + $0x3c8] sm:$0xff]
    %v9766 = vld [vmem:[#allocation15 + $0x3d0] sm:$0xff]
    %v9767 = vld [vmem:[#allocation15 + $0x3d8] sm:$0xff]
    %v9768 = vld [vmem:[#allocation15 + $0x3e0] sm:$0xff]
    %v9769 = vld [vmem:[#allocation15 + $0x3e8] sm:$0xff]
    %v9770 = vld [vmem:[#allocation15 + $0x3f0] sm:$0xff]
    %v9771 = vld [vmem:[#allocation15 + $0x3f8] sm:$0xff]
    %v9772 = vld [vmem:[%s75] sm:$0xf]
    %v9774 = vperm.slane %v9772, 0
    %v9775 = vperm.slane %v9772, 1
    %v9776 = vperm.slane %v9772, 2
    %v9777 = vperm.slane %v9772, 3
    %v9910 = vunpack.c.l.b16 %v9644
    %v9911 = vunpack.c.h.b16 %v9644
    %v9912 = vunpack.c.l.b16 %v9645
    %v9913 = vunpack.c.h.b16 %v9645
    %v9914 = vunpack.c.l.b16 %v9646
    %v9915 = vunpack.c.h.b16 %v9646
    %v9916 = vunpack.c.l.b16 %v9647
    %v9917 = vunpack.c.h.b16 %v9647
    %v9918 = vunpack.c.l.b16 %v9648
    %v9919 = vunpack.c.h.b16 %v9648
    %v9920 = vunpack.c.l.b16 %v9649
    %v9921 = vunpack.c.h.b16 %v9649
    %v9922 = vunpack.c.l.b16 %v9650
    %v9923 = vunpack.c.h.b16 %v9650
    %v9924 = vunpack.c.l.b16 %v9651
    %v9925 = vunpack.c.h.b16 %v9651
    %v9926 = vunpack.c.l.b16 %v9652
    %v9927 = vunpack.c.h.b16 %v9652
    %v9928 = vunpack.c.l.b16 %v9653
    %v9929 = vunpack.c.h.b16 %v9653
    %v9930 = vunpack.c.l.b16 %v9654
    %v9931 = vunpack.c.h.b16 %v9654
    %v9932 = vunpack.c.l.b16 %v9655
    %v9933 = vunpack.c.h.b16 %v9655
    %v9934 = vunpack.c.l.b16 %v9656
    %v9935 = vunpack.c.h.b16 %v9656
    %v9936 = vunpack.c.l.b16 %v9657
    %v9937 = vunpack.c.h.b16 %v9657
    %v9938 = vunpack.c.l.b16 %v9658
    %v9939 = vunpack.c.h.b16 %v9658
    %v9940 = vunpack.c.l.b16 %v9659
    %v9941 = vunpack.c.h.b16 %v9659
    %v9942 = vunpack.c.l.b16 %v9660
    %v9943 = vunpack.c.h.b16 %v9660
    %v9944 = vunpack.c.l.b16 %v9661
    %v9945 = vunpack.c.h.b16 %v9661
    %v9946 = vunpack.c.l.b16 %v9662
    %v9947 = vunpack.c.h.b16 %v9662
    %v9948 = vunpack.c.l.b16 %v9663
    %v9949 = vunpack.c.h.b16 %v9663
    %v9950 = vunpack.c.l.b16 %v9664
    %v9951 = vunpack.c.h.b16 %v9664
    %v9952 = vunpack.c.l.b16 %v9665
    %v9953 = vunpack.c.h.b16 %v9665
    %v9954 = vunpack.c.l.b16 %v9666
    %v9955 = vunpack.c.h.b16 %v9666
    %v9956 = vunpack.c.l.b16 %v9667
    %v9957 = vunpack.c.h.b16 %v9667
    %v9958 = vunpack.c.l.b16 %v9668
    %v9959 = vunpack.c.h.b16 %v9668
    %v9960 = vunpack.c.l.b16 %v9669
    %v9961 = vunpack.c.h.b16 %v9669
    %v9962 = vunpack.c.l.b16 %v9670
    %v9963 = vunpack.c.h.b16 %v9670
    %v9964 = vunpack.c.l.b16 %v9671
    %v9965 = vunpack.c.h.b16 %v9671
    %v9966 = vunpack.c.l.b16 %v9672
    %v9967 = vunpack.c.h.b16 %v9672
    %v9968 = vunpack.c.l.b16 %v9673
    %v9969 = vunpack.c.h.b16 %v9673
    %v9970 = vunpack.c.l.b16 %v9674
    %v9971 = vunpack.c.h.b16 %v9674
    %v9972 = vunpack.c.l.b16 %v9675
    %v9973 = vunpack.c.h.b16 %v9675
    %v9974 = vunpack.c.l.b16 %v9676
    %v9975 = vunpack.c.h.b16 %v9676
    %v9976 = vunpack.c.l.b16 %v9677
    %v9977 = vunpack.c.h.b16 %v9677
    %v9978 = vunpack.c.l.b16 %v9678
    %v9979 = vunpack.c.h.b16 %v9678
    %v9980 = vunpack.c.l.b16 %v9679
    %v9981 = vunpack.c.h.b16 %v9679
    %v9982 = vunpack.c.l.b16 %v9680
    %v9983 = vunpack.c.h.b16 %v9680
    %v9984 = vunpack.c.l.b16 %v9681
    %v9985 = vunpack.c.h.b16 %v9681
    %v9986 = vunpack.c.l.b16 %v9682
    %v9987 = vunpack.c.h.b16 %v9682
    %v9988 = vunpack.c.l.b16 %v9683
    %v9989 = vunpack.c.h.b16 %v9683
    %v9990 = vunpack.c.l.b16 %v9684
    %v9991 = vunpack.c.h.b16 %v9684
    %v9992 = vunpack.c.l.b16 %v9685
    %v9993 = vunpack.c.h.b16 %v9685
    %v9994 = vunpack.c.l.b16 %v9686
    %v9995 = vunpack.c.h.b16 %v9686
    %v9996 = vunpack.c.l.b16 %v9687
    %v9997 = vunpack.c.h.b16 %v9687
    %v9998 = vunpack.c.l.b16 %v9688
    %v9999 = vunpack.c.h.b16 %v9688
    %v10000 = vunpack.c.l.b16 %v9689
    %v10001 = vunpack.c.h.b16 %v9689
    %v10002 = vunpack.c.l.b16 %v9690
    %v10003 = vunpack.c.h.b16 %v9690
    %v10004 = vunpack.c.l.b16 %v9691
    %v10005 = vunpack.c.h.b16 %v9691
    %v10006 = vunpack.c.l.b16 %v9692
    %v10007 = vunpack.c.h.b16 %v9692
    %v10008 = vunpack.c.l.b16 %v9693
    %v10009 = vunpack.c.h.b16 %v9693
    %v10010 = vunpack.c.l.b16 %v9694
    %v10011 = vunpack.c.h.b16 %v9694
    %v10012 = vunpack.c.l.b16 %v9695
    %v10013 = vunpack.c.h.b16 %v9695
    %v10014 = vunpack.c.l.b16 %v9696
    %v10015 = vunpack.c.h.b16 %v9696
    %v10016 = vunpack.c.l.b16 %v9697
    %v10017 = vunpack.c.h.b16 %v9697
    %v10018 = vunpack.c.l.b16 %v9698
    %v10019 = vunpack.c.h.b16 %v9698
    %v10020 = vunpack.c.l.b16 %v9699
    %v10021 = vunpack.c.h.b16 %v9699
    %v10022 = vunpack.c.l.b16 %v9700
    %v10023 = vunpack.c.h.b16 %v9700
    %v10024 = vunpack.c.l.b16 %v9701
    %v10025 = vunpack.c.h.b16 %v9701
    %v10026 = vunpack.c.l.b16 %v9702
    %v10027 = vunpack.c.h.b16 %v9702
    %v10028 = vunpack.c.l.b16 %v9703
    %v10029 = vunpack.c.h.b16 %v9703
    %v10030 = vunpack.c.l.b16 %v9704
    %v10031 = vunpack.c.h.b16 %v9704
    %v10032 = vunpack.c.l.b16 %v9705
    %v10033 = vunpack.c.h.b16 %v9705
    %v10034 = vunpack.c.l.b16 %v9706
    %v10035 = vunpack.c.h.b16 %v9706
    %v10036 = vunpack.c.l.b16 %v9707
    %v10037 = vunpack.c.h.b16 %v9707
    %v10038 = vunpack.c.l.b16 %v9708
    %v10039 = vunpack.c.h.b16 %v9708
    %v10040 = vunpack.c.l.b16 %v9709
    %v10041 = vunpack.c.h.b16 %v9709
    %v10042 = vunpack.c.l.b16 %v9710
    %v10043 = vunpack.c.h.b16 %v9710
    %v10044 = vunpack.c.l.b16 %v9711
    %v10045 = vunpack.c.h.b16 %v9711
    %v10046 = vunpack.c.l.b16 %v9712
    %v10047 = vunpack.c.h.b16 %v9712
    %v10048 = vunpack.c.l.b16 %v9713
    %v10049 = vunpack.c.h.b16 %v9713
    %v10050 = vunpack.c.l.b16 %v9714
    %v10051 = vunpack.c.h.b16 %v9714
    %v10052 = vunpack.c.l.b16 %v9715
    %v10053 = vunpack.c.h.b16 %v9715
    %v10054 = vunpack.c.l.b16 %v9716
    %v10055 = vunpack.c.h.b16 %v9716
    %v10056 = vunpack.c.l.b16 %v9717
    %v10057 = vunpack.c.h.b16 %v9717
    %v10058 = vunpack.c.l.b16 %v9718
    %v10059 = vunpack.c.h.b16 %v9718
    %v10060 = vunpack.c.l.b16 %v9719
    %v10061 = vunpack.c.h.b16 %v9719
    %v10062 = vunpack.c.l.b16 %v9720
    %v10063 = vunpack.c.h.b16 %v9720
    %v10064 = vunpack.c.l.b16 %v9721
    %v10065 = vunpack.c.h.b16 %v9721
    %v10066 = vunpack.c.l.b16 %v9722
    %v10067 = vunpack.c.h.b16 %v9722
    %v10068 = vunpack.c.l.b16 %v9723
    %v10069 = vunpack.c.h.b16 %v9723
    %v10070 = vunpack.c.l.b16 %v9724
    %v10071 = vunpack.c.h.b16 %v9724
    %v10072 = vunpack.c.l.b16 %v9725
    %v10073 = vunpack.c.h.b16 %v9725
    %v10074 = vunpack.c.l.b16 %v9726
    %v10075 = vunpack.c.h.b16 %v9726
    %v10076 = vunpack.c.l.b16 %v9727
    %v10077 = vunpack.c.h.b16 %v9727
    %v10078 = vunpack.c.l.b16 %v9728
    %v10079 = vunpack.c.h.b16 %v9728
    %v10080 = vunpack.c.l.b16 %v9729
    %v10081 = vunpack.c.h.b16 %v9729
    %v10082 = vunpack.c.l.b16 %v9730
    %v10083 = vunpack.c.h.b16 %v9730
    %v10084 = vunpack.c.l.b16 %v9731
    %v10085 = vunpack.c.h.b16 %v9731
    %v10086 = vunpack.c.l.b16 %v9732
    %v10087 = vunpack.c.h.b16 %v9732
    %v10088 = vunpack.c.l.b16 %v9733
    %v10089 = vunpack.c.h.b16 %v9733
    %v10090 = vunpack.c.l.b16 %v9734
    %v10091 = vunpack.c.h.b16 %v9734
    %v10092 = vunpack.c.l.b16 %v9735
    %v10093 = vunpack.c.h.b16 %v9735
    %v10094 = vunpack.c.l.b16 %v9736
    %v10095 = vunpack.c.h.b16 %v9736
    %v10096 = vunpack.c.l.b16 %v9737
    %v10097 = vunpack.c.h.b16 %v9737
    %v10098 = vunpack.c.l.b16 %v9738
    %v10099 = vunpack.c.h.b16 %v9738
    %v10100 = vunpack.c.l.b16 %v9739
    %v10101 = vunpack.c.h.b16 %v9739
    %v10102 = vunpack.c.l.b16 %v9740
    %v10103 = vunpack.c.h.b16 %v9740
    %v10104 = vunpack.c.l.b16 %v9741
    %v10105 = vunpack.c.h.b16 %v9741
    %v10106 = vunpack.c.l.b16 %v9742
    %v10107 = vunpack.c.h.b16 %v9742
    %v10108 = vunpack.c.l.b16 %v9743
    %v10109 = vunpack.c.h.b16 %v9743
    %v10110 = vunpack.c.l.b16 %v9744
    %v10111 = vunpack.c.h.b16 %v9744
    %v10112 = vunpack.c.l.b16 %v9745
    %v10113 = vunpack.c.h.b16 %v9745
    %v10114 = vunpack.c.l.b16 %v9746
    %v10115 = vunpack.c.h.b16 %v9746
    %v10116 = vunpack.c.l.b16 %v9747
    %v10117 = vunpack.c.h.b16 %v9747
    %v10118 = vunpack.c.l.b16 %v9748
    %v10119 = vunpack.c.h.b16 %v9748
    %v10120 = vunpack.c.l.b16 %v9749
    %v10121 = vunpack.c.h.b16 %v9749
    %v10122 = vunpack.c.l.b16 %v9750
    %v10123 = vunpack.c.h.b16 %v9750
    %v10124 = vunpack.c.l.b16 %v9751
    %v10125 = vunpack.c.h.b16 %v9751
    %v10126 = vunpack.c.l.b16 %v9752
    %v10127 = vunpack.c.h.b16 %v9752
    %v10128 = vunpack.c.l.b16 %v9753
    %v10129 = vunpack.c.h.b16 %v9753
    %v10130 = vunpack.c.l.b16 %v9754
    %v10131 = vunpack.c.h.b16 %v9754
    %v10132 = vunpack.c.l.b16 %v9755
    %v10133 = vunpack.c.h.b16 %v9755
    %v10134 = vunpack.c.l.b16 %v9756
    %v10135 = vunpack.c.h.b16 %v9756
    %v10136 = vunpack.c.l.b16 %v9757
    %v10137 = vunpack.c.h.b16 %v9757
    %v10138 = vunpack.c.l.b16 %v9758
    %v10139 = vunpack.c.h.b16 %v9758
    %v10140 = vunpack.c.l.b16 %v9759
    %v10141 = vunpack.c.h.b16 %v9759
    %v10142 = vunpack.c.l.b16 %v9760
    %v10143 = vunpack.c.h.b16 %v9760
    %v10144 = vunpack.c.l.b16 %v9761
    %v10145 = vunpack.c.h.b16 %v9761
    %v10146 = vunpack.c.l.b16 %v9762
    %v10147 = vunpack.c.h.b16 %v9762
    %v10148 = vunpack.c.l.b16 %v9763
    %v10149 = vunpack.c.h.b16 %v9763
    %v10150 = vunpack.c.l.b16 %v9764
    %v10151 = vunpack.c.h.b16 %v9764
    %v10152 = vunpack.c.l.b16 %v9765
    %v10153 = vunpack.c.h.b16 %v9765
    %v10154 = vunpack.c.l.b16 %v9766
    %v10155 = vunpack.c.h.b16 %v9766
    %v10156 = vunpack.c.l.b16 %v9767
    %v10157 = vunpack.c.h.b16 %v9767
    %v10158 = vunpack.c.l.b16 %v9768
    %v10159 = vunpack.c.h.b16 %v9768
    %v10160 = vunpack.c.l.b16 %v9769
    %v10161 = vunpack.c.h.b16 %v9769
    %v10162 = vunpack.c.l.b16 %v9770
    %v10163 = vunpack.c.h.b16 %v9770
    %v10164 = vunpack.c.l.b16 %v9771
    %v10165 = vunpack.c.h.b16 %v9771
    %v10166 = vpack.c.b16 %v9914, %v9910
    %v10167 = vpack.c.b16 %v9915, %v9911
    %v10168 = vpack.c.b16 %v9916, %v9912
    %v10169 = vpack.c.b16 %v9917, %v9913
    %v10170 = vpack.c.b16 %v9922, %v9918
    %v10171 = vpack.c.b16 %v9923, %v9919
    %v10172 = vpack.c.b16 %v9924, %v9920
    %v10173 = vpack.c.b16 %v9925, %v9921
    %v10174 = vpack.c.b16 %v9930, %v9926
    %v10175 = vpack.c.b16 %v9931, %v9927
    %v10176 = vpack.c.b16 %v9932, %v9928
    %v10177 = vpack.c.b16 %v9933, %v9929
    %v10178 = vpack.c.b16 %v9938, %v9934
    %v10179 = vpack.c.b16 %v9939, %v9935
    %v10180 = vpack.c.b16 %v9940, %v9936
    %v10181 = vpack.c.b16 %v9941, %v9937
    %v10182 = vpack.c.b16 %v9946, %v9942
    %v10183 = vpack.c.b16 %v9947, %v9943
    %v10184 = vpack.c.b16 %v9948, %v9944
    %v10185 = vpack.c.b16 %v9949, %v9945
    %v10186 = vpack.c.b16 %v9954, %v9950
    %v10187 = vpack.c.b16 %v9955, %v9951
    %v10188 = vpack.c.b16 %v9956, %v9952
    %v10189 = vpack.c.b16 %v9957, %v9953
    %v10190 = vpack.c.b16 %v9962, %v9958
    %v10191 = vpack.c.b16 %v9963, %v9959
    %v10192 = vpack.c.b16 %v9964, %v9960
    %v10193 = vpack.c.b16 %v9965, %v9961
    %v10194 = vpack.c.b16 %v9970, %v9966
    %v10195 = vpack.c.b16 %v9971, %v9967
    %v10196 = vpack.c.b16 %v9972, %v9968
    %v10197 = vpack.c.b16 %v9973, %v9969
    %v10198 = vpack.c.b16 %v9978, %v9974
    %v10199 = vpack.c.b16 %v9979, %v9975
    %v10200 = vpack.c.b16 %v9980, %v9976
    %v10201 = vpack.c.b16 %v9981, %v9977
    %v10202 = vpack.c.b16 %v9986, %v9982
    %v10203 = vpack.c.b16 %v9987, %v9983
    %v10204 = vpack.c.b16 %v9988, %v9984
    %v10205 = vpack.c.b16 %v9989, %v9985
    %v10206 = vpack.c.b16 %v9994, %v9990
    %v10207 = vpack.c.b16 %v9995, %v9991
    %v10208 = vpack.c.b16 %v9996, %v9992
    %v10209 = vpack.c.b16 %v9997, %v9993
    %v10210 = vpack.c.b16 %v10002, %v9998
    %v10211 = vpack.c.b16 %v10003, %v9999
    %v10212 = vpack.c.b16 %v10004, %v10000
    %v10213 = vpack.c.b16 %v10005, %v10001
    %v10214 = vpack.c.b16 %v10010, %v10006
    %v10215 = vpack.c.b16 %v10011, %v10007
    %v10216 = vpack.c.b16 %v10012, %v10008
    %v10217 = vpack.c.b16 %v10013, %v10009
    %v10218 = vpack.c.b16 %v10018, %v10014
    %v10219 = vpack.c.b16 %v10019, %v10015
    %v10220 = vpack.c.b16 %v10020, %v10016
    %v10221 = vpack.c.b16 %v10021, %v10017
    %v10222 = vpack.c.b16 %v10026, %v10022
    %v10223 = vpack.c.b16 %v10027, %v10023
    %v10224 = vpack.c.b16 %v10028, %v10024
    %v10225 = vpack.c.b16 %v10029, %v10025
    %v10226 = vpack.c.b16 %v10034, %v10030
    %v10227 = vpack.c.b16 %v10035, %v10031
    %v10228 = vpack.c.b16 %v10036, %v10032
    %v10229 = vpack.c.b16 %v10037, %v10033
    %v10230 = vpack.c.b16 %v10042, %v10038
    %v10231 = vpack.c.b16 %v10043, %v10039
    %v10232 = vpack.c.b16 %v10044, %v10040
    %v10233 = vpack.c.b16 %v10045, %v10041
    %v10234 = vpack.c.b16 %v10050, %v10046
    %v10235 = vpack.c.b16 %v10051, %v10047
    %v10236 = vpack.c.b16 %v10052, %v10048
    %v10237 = vpack.c.b16 %v10053, %v10049
    %v10238 = vpack.c.b16 %v10058, %v10054
    %v10239 = vpack.c.b16 %v10059, %v10055
    %v10240 = vpack.c.b16 %v10060, %v10056
    %v10241 = vpack.c.b16 %v10061, %v10057
    %v10242 = vpack.c.b16 %v10066, %v10062
    %v10243 = vpack.c.b16 %v10067, %v10063
    %v10244 = vpack.c.b16 %v10068, %v10064
    %v10245 = vpack.c.b16 %v10069, %v10065
    %v10246 = vpack.c.b16 %v10074, %v10070
    %v10247 = vpack.c.b16 %v10075, %v10071
    %v10248 = vpack.c.b16 %v10076, %v10072
    %v10249 = vpack.c.b16 %v10077, %v10073
    %v10250 = vpack.c.b16 %v10082, %v10078
    %v10251 = vpack.c.b16 %v10083, %v10079
    %v10252 = vpack.c.b16 %v10084, %v10080
    %v10253 = vpack.c.b16 %v10085, %v10081
    %v10254 = vpack.c.b16 %v10090, %v10086
    %v10255 = vpack.c.b16 %v10091, %v10087
    %v10256 = vpack.c.b16 %v10092, %v10088
    %v10257 = vpack.c.b16 %v10093, %v10089
    %v10258 = vpack.c.b16 %v10098, %v10094
    %v10259 = vpack.c.b16 %v10099, %v10095
    %v10260 = vpack.c.b16 %v10100, %v10096
    %v10261 = vpack.c.b16 %v10101, %v10097
    %v10262 = vpack.c.b16 %v10106, %v10102
    %v10263 = vpack.c.b16 %v10107, %v10103
    %v10264 = vpack.c.b16 %v10108, %v10104
    %v10265 = vpack.c.b16 %v10109, %v10105
    %v10266 = vpack.c.b16 %v10114, %v10110
    %v10267 = vpack.c.b16 %v10115, %v10111
    %v10268 = vpack.c.b16 %v10116, %v10112
    %v10269 = vpack.c.b16 %v10117, %v10113
    %v10270 = vpack.c.b16 %v10122, %v10118
    %v10271 = vpack.c.b16 %v10123, %v10119
    %v10272 = vpack.c.b16 %v10124, %v10120
    %v10273 = vpack.c.b16 %v10125, %v10121
    %v10274 = vpack.c.b16 %v10130, %v10126
    %v10275 = vpack.c.b16 %v10131, %v10127
    %v10276 = vpack.c.b16 %v10132, %v10128
    %v10277 = vpack.c.b16 %v10133, %v10129
    %v10278 = vpack.c.b16 %v10138, %v10134
    %v10279 = vpack.c.b16 %v10139, %v10135
    %v10280 = vpack.c.b16 %v10140, %v10136
    %v10281 = vpack.c.b16 %v10141, %v10137
    %v10282 = vpack.c.b16 %v10146, %v10142
    %v10283 = vpack.c.b16 %v10147, %v10143
    %v10284 = vpack.c.b16 %v10148, %v10144
    %v10285 = vpack.c.b16 %v10149, %v10145
    %v10286 = vpack.c.b16 %v10154, %v10150
    %v10287 = vpack.c.b16 %v10155, %v10151
    %v10288 = vpack.c.b16 %v10156, %v10152
    %v10289 = vpack.c.b16 %v10157, %v10153
    %v10290 = vpack.c.b16 %v10162, %v10158
    %v10291 = vpack.c.b16 %v10163, %v10159
    %v10292 = vpack.c.b16 %v10164, %v10160
    %v10293 = vpack.c.b16 %v10165, %v10161
    %10422 = vmatpush.bf16.msra.mxu0 %v10194
    %10423 = vmatpush.bf16.msra.mxu0 %v10190
    %10424 = vmatpush.bf16.msra.mxu0 %v10186
    %10425 = vmatpush.bf16.msra.mxu0 %v10182
    %10426 = vmatpush.bf16.msra.mxu0 %v10178
    %10427 = vmatpush.bf16.msra.mxu0 %v10174
    %10428 = vmatpush.bf16.msra.mxu0 %v10170
    %10429 = vmatpush.bf16.msra.mxu0 %v10166
    %10430 = vmatmul.bf16.gmra.mxu0 %v9640
    %v10431 = vpop.f32.mrf.mxu0
    %v10432 = vadd.f32 %v9774, %v10431
    %v10433 = vpop.f32.mrf.mxu0
    %10434 = vdwg.mxu0
    %10435 = vmatpush.bf16.msra.mxu0 %v10226
    %10436 = vmatpush.bf16.msra.mxu0 %v10222
    %10437 = vmatpush.bf16.msra.mxu0 %v10218
    %10438 = vmatpush.bf16.msra.mxu0 %v10214
    %10439 = vmatpush.bf16.msra.mxu0 %v10210
    %10440 = vmatpush.bf16.msra.mxu0 %v10206
    %10441 = vmatpush.bf16.msra.mxu0 %v10202
    %10442 = vmatpush.bf16.msra.mxu0 %v10198
    %10443 = vmatmul.bf16.gmra.mxu0 %v9641
    %v10444 = vpop.f32.mrf.mxu0
    %v10445 = vadd.f32 %v10432, %v10444
    %v10446 = vpop.f32.mrf.mxu0
    %10447 = vdwg.mxu0
    %10448 = vmatpush.bf16.msra.mxu0 %v10258
    %10449 = vmatpush.bf16.msra.mxu0 %v10254
    %10450 = vmatpush.bf16.msra.mxu0 %v10250
    %10451 = vmatpush.bf16.msra.mxu0 %v10246
    %10452 = vmatpush.bf16.msra.mxu0 %v10242
    %10453 = vmatpush.bf16.msra.mxu0 %v10238
    %10454 = vmatpush.bf16.msra.mxu0 %v10234
    %10455 = vmatpush.bf16.msra.mxu0 %v10230
    %10456 = vmatmul.bf16.gmra.mxu0 %v9642
    %v10457 = vpop.f32.mrf.mxu0
    %v10458 = vadd.f32 %v10445, %v10457
    %v10459 = vpop.f32.mrf.mxu0
    %10460 = vdwg.mxu0
    %10461 = vmatpush.bf16.msra.mxu0 %v10290
    %10462 = vmatpush.bf16.msra.mxu0 %v10286
    %10463 = vmatpush.bf16.msra.mxu0 %v10282
    %10464 = vmatpush.bf16.msra.mxu0 %v10278
    %10465 = vmatpush.bf16.msra.mxu0 %v10274
    %10466 = vmatpush.bf16.msra.mxu0 %v10270
    %10467 = vmatpush.bf16.msra.mxu0 %v10266
    %10468 = vmatpush.bf16.msra.mxu0 %v10262
    %10469 = vmatmul.bf16.gmra.mxu0 %v9643
    %v10470 = vpop.f32.mrf.mxu0
    %v10471 = vadd.f32 %v10458, %v10470
    %v10472 = vpop.f32.mrf.mxu0
    %10473 = vdwg.mxu0
    %10474 = vmatpush.bf16.msra.mxu0 %v10195
    %10475 = vmatpush.bf16.msra.mxu0 %v10191
    %10476 = vmatpush.bf16.msra.mxu0 %v10187
    %10477 = vmatpush.bf16.msra.mxu0 %v10183
    %10478 = vmatpush.bf16.msra.mxu0 %v10179
    %10479 = vmatpush.bf16.msra.mxu0 %v10175
    %10480 = vmatpush.bf16.msra.mxu0 %v10171
    %10481 = vmatpush.bf16.msra.mxu0 %v10167
    %10482 = vmatmul.bf16.gmra.mxu0 %v9640
    %v10483 = vpop.f32.mrf.mxu0
    %v10484 = vadd.f32 %v9775, %v10483
    %v10485 = vpop.f32.mrf.mxu0
    %10486 = vdwg.mxu0
    %10487 = vmatpush.bf16.msra.mxu0 %v10227
    %10488 = vmatpush.bf16.msra.mxu0 %v10223
    %10489 = vmatpush.bf16.msra.mxu0 %v10219
    %10490 = vmatpush.bf16.msra.mxu0 %v10215
    %10491 = vmatpush.bf16.msra.mxu0 %v10211
    %10492 = vmatpush.bf16.msra.mxu0 %v10207
    %10493 = vmatpush.bf16.msra.mxu0 %v10203
    %10494 = vmatpush.bf16.msra.mxu0 %v10199
    %10495 = vmatmul.bf16.gmra.mxu0 %v9641
    %v10496 = vpop.f32.mrf.mxu0
    %v10497 = vadd.f32 %v10484, %v10496
    %v10498 = vpop.f32.mrf.mxu0
    %10499 = vdwg.mxu0
    %10500 = vmatpush.bf16.msra.mxu0 %v10259
    %10501 = vmatpush.bf16.msra.mxu0 %v10255
    %10502 = vmatpush.bf16.msra.mxu0 %v10251
    %10503 = vmatpush.bf16.msra.mxu0 %v10247
    %10504 = vmatpush.bf16.msra.mxu0 %v10243
    %10505 = vmatpush.bf16.msra.mxu0 %v10239
    %10506 = vmatpush.bf16.msra.mxu0 %v10235
    %10507 = vmatpush.bf16.msra.mxu0 %v10231
    %10508 = vmatmul.bf16.gmra.mxu0 %v9642
    %v10509 = vpop.f32.mrf.mxu0
    %v10510 = vadd.f32 %v10497, %v10509
    %v10511 = vpop.f32.mrf.mxu0
    %10512 = vdwg.mxu0
    %10513 = vmatpush.bf16.msra.mxu0 %v10291
    %10514 = vmatpush.bf16.msra.mxu0 %v10287
    %10515 = vmatpush.bf16.msra.mxu0 %v10283
    %10516 = vmatpush.bf16.msra.mxu0 %v10279
    %10517 = vmatpush.bf16.msra.mxu0 %v10275
    %10518 = vmatpush.bf16.msra.mxu0 %v10271
    %10519 = vmatpush.bf16.msra.mxu0 %v10267
    %10520 = vmatpush.bf16.msra.mxu0 %v10263
    %10521 = vmatmul.bf16.gmra.mxu0 %v9643
    %v10522 = vpop.f32.mrf.mxu0
    %v10523 = vadd.f32 %v10510, %v10522
    %v10524 = vpop.f32.mrf.mxu0
    %10525 = vdwg.mxu0
    %10526 = vmatpush.bf16.msra.mxu0 %v10196
    %10527 = vmatpush.bf16.msra.mxu0 %v10192
    %10528 = vmatpush.bf16.msra.mxu0 %v10188
    %10529 = vmatpush.bf16.msra.mxu0 %v10184
    %10530 = vmatpush.bf16.msra.mxu0 %v10180
    %10531 = vmatpush.bf16.msra.mxu0 %v10176
    %10532 = vmatpush.bf16.msra.mxu0 %v10172
    %10533 = vmatpush.bf16.msra.mxu0 %v10168
    %10534 = vmatmul.bf16.gmra.mxu0 %v9640
    %v10535 = vpop.f32.mrf.mxu0
    %v10536 = vadd.f32 %v9776, %v10535
    %v10537 = vpop.f32.mrf.mxu0
    %10538 = vdwg.mxu0
    %10539 = vmatpush.bf16.msra.mxu0 %v10228
    %10540 = vmatpush.bf16.msra.mxu0 %v10224
    %10541 = vmatpush.bf16.msra.mxu0 %v10220
    %10542 = vmatpush.bf16.msra.mxu0 %v10216
    %10543 = vmatpush.bf16.msra.mxu0 %v10212
    %10544 = vmatpush.bf16.msra.mxu0 %v10208
    %10545 = vmatpush.bf16.msra.mxu0 %v10204
    %10546 = vmatpush.bf16.msra.mxu0 %v10200
    %10547 = vmatmul.bf16.gmra.mxu0 %v9641
    %v10548 = vpop.f32.mrf.mxu0
    %v10549 = vadd.f32 %v10536, %v10548
    %v10550 = vpop.f32.mrf.mxu0
    %10551 = vdwg.mxu0
    %10552 = vmatpush.bf16.msra.mxu0 %v10260
    %10553 = vmatpush.bf16.msra.mxu0 %v10256
    %10554 = vmatpush.bf16.msra.mxu0 %v10252
    %10555 = vmatpush.bf16.msra.mxu0 %v10248
    %10556 = vmatpush.bf16.msra.mxu0 %v10244
    %10557 = vmatpush.bf16.msra.mxu0 %v10240
    %10558 = vmatpush.bf16.msra.mxu0 %v10236
    %10559 = vmatpush.bf16.msra.mxu0 %v10232
    %10560 = vmatmul.bf16.gmra.mxu0 %v9642
    %v10561 = vpop.f32.mrf.mxu0
    %v10562 = vadd.f32 %v10549, %v10561
    %v10563 = vpop.f32.mrf.mxu0
    %10564 = vdwg.mxu0
    %10565 = vmatpush.bf16.msra.mxu0 %v10292
    %10566 = vmatpush.bf16.msra.mxu0 %v10288
    %10567 = vmatpush.bf16.msra.mxu0 %v10284
    %10568 = vmatpush.bf16.msra.mxu0 %v10280
    %10569 = vmatpush.bf16.msra.mxu0 %v10276
    %10570 = vmatpush.bf16.msra.mxu0 %v10272
    %10571 = vmatpush.bf16.msra.mxu0 %v10268
    %10572 = vmatpush.bf16.msra.mxu0 %v10264
    %10573 = vmatmul.bf16.gmra.mxu0 %v9643
    %v10574 = vpop.f32.mrf.mxu0
    %v10575 = vadd.f32 %v10562, %v10574
    %v10576 = vpop.f32.mrf.mxu0
    %10577 = vdwg.mxu0
    %10578 = vmatpush.bf16.msra.mxu0 %v10197
    %10579 = vmatpush.bf16.msra.mxu0 %v10193
    %10580 = vmatpush.bf16.msra.mxu0 %v10189
    %10581 = vmatpush.bf16.msra.mxu0 %v10185
    %10582 = vmatpush.bf16.msra.mxu0 %v10181
    %10583 = vmatpush.bf16.msra.mxu0 %v10177
    %10584 = vmatpush.bf16.msra.mxu0 %v10173
    %10585 = vmatpush.bf16.msra.mxu0 %v10169
    %10586 = vmatmul.bf16.gmra.mxu0 %v9640
    %v10587 = vpop.f32.mrf.mxu0
    %v10588 = vadd.f32 %v9777, %v10587
    %v10589 = vpop.f32.mrf.mxu0
    %10590 = vdwg.mxu0
    %10591 = vmatpush.bf16.msra.mxu0 %v10229
    %10592 = vmatpush.bf16.msra.mxu0 %v10225
    %10593 = vmatpush.bf16.msra.mxu0 %v10221
    %10594 = vmatpush.bf16.msra.mxu0 %v10217
    %10595 = vmatpush.bf16.msra.mxu0 %v10213
    %10596 = vmatpush.bf16.msra.mxu0 %v10209
    %10597 = vmatpush.bf16.msra.mxu0 %v10205
    %10598 = vmatpush.bf16.msra.mxu0 %v10201
    %10599 = vmatmul.bf16.gmra.mxu0 %v9641
    %v10600 = vpop.f32.mrf.mxu0
    %v10601 = vadd.f32 %v10588, %v10600
    %v10602 = vpop.f32.mrf.mxu0
    %10603 = vdwg.mxu0
    %10604 = vmatpush.bf16.msra.mxu0 %v10261
    %10605 = vmatpush.bf16.msra.mxu0 %v10257
    %10606 = vmatpush.bf16.msra.mxu0 %v10253
    %10607 = vmatpush.bf16.msra.mxu0 %v10249
    %10608 = vmatpush.bf16.msra.mxu0 %v10245
    %10609 = vmatpush.bf16.msra.mxu0 %v10241
    %10610 = vmatpush.bf16.msra.mxu0 %v10237
    %10611 = vmatpush.bf16.msra.mxu0 %v10233
    %10612 = vmatmul.bf16.gmra.mxu0 %v9642
    %v10613 = vpop.f32.mrf.mxu0
    %v10614 = vadd.f32 %v10601, %v10613
    %v10615 = vpop.f32.mrf.mxu0
    %10616 = vdwg.mxu0
    %10617 = vmatpush.bf16.msra.mxu0 %v10293
    %10618 = vmatpush.bf16.msra.mxu0 %v10289
    %10619 = vmatpush.bf16.msra.mxu0 %v10285
    %10620 = vmatpush.bf16.msra.mxu0 %v10281
    %10621 = vmatpush.bf16.msra.mxu0 %v10277
    %10622 = vmatpush.bf16.msra.mxu0 %v10273
    %10623 = vmatpush.bf16.msra.mxu0 %v10269
    %10624 = vmatpush.bf16.msra.mxu0 %v10265
    %10625 = vmatmul.bf16.gmra.mxu0 %v9643
    %v10626 = vpop.f32.mrf.mxu0
    %v10627 = vadd.f32 %v10614, %v10626
    %v10628 = vpop.f32.mrf.mxu0
    %10629 = vdwg.mxu0
    %v10630 = vadd.f32 %v8642, %v10471
    %v10631 = vadd.f32 %v8643, %v10523
    %v10632 = vadd.f32 %v8644, %v10575
    %v10633 = vadd.f32 %v8645, %v10627
    %v10634 = vpack.c.bf16 %v10630, %v10630
    %v10635 = vpack.c.bf16 %v10631, %v10631
    %v10636 = vpack.c.bf16 %v10632, %v10632
    %v10637 = vpack.c.bf16 %v10633, %v10633
    %v10638 = vld [vmem:[%s21] sm:$0xf]
    %v10639 = vld [vmem:[%s21 + $0x4] sm:$0xf]
    %v10640 = vld [vmem:[%s21 + $0x8] sm:$0xf]
    %v10641 = vld [vmem:[%s21 + $0xc] sm:$0xf]
    %v10642 = vld [vmem:[%s21 + $0x10] sm:$0xf]
    %v10643 = vld [vmem:[%s21 + $0x14] sm:$0xf]
    %v10644 = vld [vmem:[%s21 + $0x18] sm:$0xf]
    %v10645 = vld [vmem:[%s21 + $0x1c] sm:$0xf]
    %v10646 = vld [vmem:[%s21 + $0x20] sm:$0xf]
    %v10647 = vld [vmem:[%s21 + $0x24] sm:$0xf]
    %v10648 = vld [vmem:[%s21 + $0x28] sm:$0xf]
    %v10649 = vld [vmem:[%s21 + $0x2c] sm:$0xf]
    %v10650 = vld [vmem:[%s21 + $0x30] sm:$0xf]
    %v10651 = vld [vmem:[%s21 + $0x34] sm:$0xf]
    %v10652 = vld [vmem:[%s21 + $0x38] sm:$0xf]
    %v10653 = vld [vmem:[%s21 + $0x3c] sm:$0xf]
    %v10654 = vld [vmem:[%s21 + $0x40] sm:$0xf]
    %v10655 = vld [vmem:[%s21 + $0x44] sm:$0xf]
    %v10656 = vld [vmem:[%s21 + $0x48] sm:$0xf]
    %v10657 = vld [vmem:[%s21 + $0x4c] sm:$0xf]
    %v10658 = vld [vmem:[%s21 + $0x50] sm:$0xf]
    %v10659 = vld [vmem:[%s21 + $0x54] sm:$0xf]
    %v10660 = vld [vmem:[%s21 + $0x58] sm:$0xf]
    %v10661 = vld [vmem:[%s21 + $0x5c] sm:$0xf]
    %v10662 = vld [vmem:[%s21 + $0x60] sm:$0xf]
    %v10663 = vld [vmem:[%s21 + $0x64] sm:$0xf]
    %v10664 = vld [vmem:[%s21 + $0x68] sm:$0xf]
    %v10665 = vld [vmem:[%s21 + $0x6c] sm:$0xf]
    %v10666 = vld [vmem:[%s21 + $0x70] sm:$0xf]
    %v10667 = vld [vmem:[%s21 + $0x74] sm:$0xf]
    %v10668 = vld [vmem:[%s21 + $0x78] sm:$0xf]
    %v10669 = vld [vmem:[%s21 + $0x7c] sm:$0xf]
    %v10670 = vld [vmem:[%s21 + $0x80] sm:$0xf]
    %v10671 = vld [vmem:[%s21 + $0x84] sm:$0xf]
    %v10672 = vld [vmem:[%s21 + $0x88] sm:$0xf]
    %v10673 = vld [vmem:[%s21 + $0x8c] sm:$0xf]
    %v10674 = vld [vmem:[%s21 + $0x90] sm:$0xf]
    %v10675 = vld [vmem:[%s21 + $0x94] sm:$0xf]
    %v10676 = vld [vmem:[%s21 + $0x98] sm:$0xf]
    %v10677 = vld [vmem:[%s21 + $0x9c] sm:$0xf]
    %v10678 = vld [vmem:[%s21 + $0xa0] sm:$0xf]
    %v10679 = vld [vmem:[%s21 + $0xa4] sm:$0xf]
    %v10680 = vld [vmem:[%s21 + $0xa8] sm:$0xf]
    %v10681 = vld [vmem:[%s21 + $0xac] sm:$0xf]
    %v10682 = vld [vmem:[%s21 + $0xb0] sm:$0xf]
    %v10683 = vld [vmem:[%s21 + $0xb4] sm:$0xf]
    %v10684 = vld [vmem:[%s21 + $0xb8] sm:$0xf]
    %v10685 = vld [vmem:[%s21 + $0xbc] sm:$0xf]
    %v10686 = vld [vmem:[%s21 + $0xc0] sm:$0xf]
    %v10687 = vld [vmem:[%s21 + $0xc4] sm:$0xf]
    %v10688 = vld [vmem:[%s21 + $0xc8] sm:$0xf]
    %v10689 = vld [vmem:[%s21 + $0xcc] sm:$0xf]
    %v10690 = vld [vmem:[%s21 + $0xd0] sm:$0xf]
    %v10691 = vld [vmem:[%s21 + $0xd4] sm:$0xf]
    %v10692 = vld [vmem:[%s21 + $0xd8] sm:$0xf]
    %v10693 = vld [vmem:[%s21 + $0xdc] sm:$0xf]
    %v10694 = vld [vmem:[%s21 + $0xe0] sm:$0xf]
    %v10695 = vld [vmem:[%s21 + $0xe4] sm:$0xf]
    %v10696 = vld [vmem:[%s21 + $0xe8] sm:$0xf]
    %v10697 = vld [vmem:[%s21 + $0xec] sm:$0xf]
    %v10698 = vld [vmem:[%s21 + $0xf0] sm:$0xf]
    %v10699 = vld [vmem:[%s21 + $0xf4] sm:$0xf]
    %v10700 = vld [vmem:[%s21 + $0xf8] sm:$0xf]
    %v10701 = vld [vmem:[%s21 + $0xfc] sm:$0xf]
    %v10702 = vld [vmem:[%s77] sm:$0x1]
    %v10704 = vperm.slane %v10702, 0
    %v10770 = vunpack.c.l.b16 %v10638
    %v10771 = vunpack.c.l.b16 %v10639
    %v10772 = vunpack.c.l.b16 %v10640
    %v10773 = vunpack.c.l.b16 %v10641
    %v10774 = vunpack.c.l.b16 %v10642
    %v10775 = vunpack.c.l.b16 %v10643
    %v10776 = vunpack.c.l.b16 %v10644
    %v10777 = vunpack.c.l.b16 %v10645
    %v10778 = vunpack.c.l.b16 %v10646
    %v10779 = vunpack.c.l.b16 %v10647
    %v10780 = vunpack.c.l.b16 %v10648
    %v10781 = vunpack.c.l.b16 %v10649
    %v10782 = vunpack.c.l.b16 %v10650
    %v10783 = vunpack.c.l.b16 %v10651
    %v10784 = vunpack.c.l.b16 %v10652
    %v10785 = vunpack.c.l.b16 %v10653
    %v10786 = vunpack.c.l.b16 %v10654
    %v10787 = vunpack.c.l.b16 %v10655
    %v10788 = vunpack.c.l.b16 %v10656
    %v10789 = vunpack.c.l.b16 %v10657
    %v10790 = vunpack.c.l.b16 %v10658
    %v10791 = vunpack.c.l.b16 %v10659
    %v10792 = vunpack.c.l.b16 %v10660
    %v10793 = vunpack.c.l.b16 %v10661
    %v10794 = vunpack.c.l.b16 %v10662
    %v10795 = vunpack.c.l.b16 %v10663
    %v10796 = vunpack.c.l.b16 %v10664
    %v10797 = vunpack.c.l.b16 %v10665
    %v10798 = vunpack.c.l.b16 %v10666
    %v10799 = vunpack.c.l.b16 %v10667
    %v10800 = vunpack.c.l.b16 %v10668
    %v10801 = vunpack.c.l.b16 %v10669
    %v10802 = vunpack.c.l.b16 %v10670
    %v10803 = vunpack.c.l.b16 %v10671
    %v10804 = vunpack.c.l.b16 %v10672
    %v10805 = vunpack.c.l.b16 %v10673
    %v10806 = vunpack.c.l.b16 %v10674
    %v10807 = vunpack.c.l.b16 %v10675
    %v10808 = vunpack.c.l.b16 %v10676
    %v10809 = vunpack.c.l.b16 %v10677
    %v10810 = vunpack.c.l.b16 %v10678
    %v10811 = vunpack.c.l.b16 %v10679
    %v10812 = vunpack.c.l.b16 %v10680
    %v10813 = vunpack.c.l.b16 %v10681
    %v10814 = vunpack.c.l.b16 %v10682
    %v10815 = vunpack.c.l.b16 %v10683
    %v10816 = vunpack.c.l.b16 %v10684
    %v10817 = vunpack.c.l.b16 %v10685
    %v10818 = vunpack.c.l.b16 %v10686
    %v10819 = vunpack.c.l.b16 %v10687
    %v10820 = vunpack.c.l.b16 %v10688
    %v10821 = vunpack.c.l.b16 %v10689
    %v10822 = vunpack.c.l.b16 %v10690
    %v10823 = vunpack.c.l.b16 %v10691
    %v10824 = vunpack.c.l.b16 %v10692
    %v10825 = vunpack.c.l.b16 %v10693
    %v10826 = vunpack.c.l.b16 %v10694
    %v10827 = vunpack.c.l.b16 %v10695
    %v10828 = vunpack.c.l.b16 %v10696
    %v10829 = vunpack.c.l.b16 %v10697
    %v10830 = vunpack.c.l.b16 %v10698
    %v10831 = vunpack.c.l.b16 %v10699
    %v10832 = vunpack.c.l.b16 %v10700
    %v10833 = vunpack.c.l.b16 %v10701
    %v10834 = vpack.c.b16 %v10771, %v10770
    %v10835 = vpack.c.b16 %v10773, %v10772
    %v10836 = vpack.c.b16 %v10775, %v10774
    %v10837 = vpack.c.b16 %v10777, %v10776
    %v10838 = vpack.c.b16 %v10779, %v10778
    %v10839 = vpack.c.b16 %v10781, %v10780
    %v10840 = vpack.c.b16 %v10783, %v10782
    %v10841 = vpack.c.b16 %v10785, %v10784
    %v10842 = vpack.c.b16 %v10787, %v10786
    %v10843 = vpack.c.b16 %v10789, %v10788
    %v10844 = vpack.c.b16 %v10791, %v10790
    %v10845 = vpack.c.b16 %v10793, %v10792
    %v10846 = vpack.c.b16 %v10795, %v10794
    %v10847 = vpack.c.b16 %v10797, %v10796
    %v10848 = vpack.c.b16 %v10799, %v10798
    %v10849 = vpack.c.b16 %v10801, %v10800
    %v10850 = vpack.c.b16 %v10803, %v10802
    %v10851 = vpack.c.b16 %v10805, %v10804
    %v10852 = vpack.c.b16 %v10807, %v10806
    %v10853 = vpack.c.b16 %v10809, %v10808
    %v10854 = vpack.c.b16 %v10811, %v10810
    %v10855 = vpack.c.b16 %v10813, %v10812
    %v10856 = vpack.c.b16 %v10815, %v10814
    %v10857 = vpack.c.b16 %v10817, %v10816
    %v10858 = vpack.c.b16 %v10819, %v10818
    %v10859 = vpack.c.b16 %v10821, %v10820
    %v10860 = vpack.c.b16 %v10823, %v10822
    %v10861 = vpack.c.b16 %v10825, %v10824
    %v10862 = vpack.c.b16 %v10827, %v10826
    %v10863 = vpack.c.b16 %v10829, %v10828
    %v10864 = vpack.c.b16 %v10831, %v10830
    %v10865 = vpack.c.b16 %v10833, %v10832
    %10898 = vmatpush.bf16.msra.mxu0 %v10841
    %10899 = vmatpush.bf16.msra.mxu0 %v10840
    %10900 = vmatpush.bf16.msra.mxu0 %v10839
    %10901 = vmatpush.bf16.msra.mxu0 %v10838
    %10902 = vmatpush.bf16.msra.mxu0 %v10837
    %10903 = vmatpush.bf16.msra.mxu0 %v10836
    %10904 = vmatpush.bf16.msra.mxu0 %v10835
    %10905 = vmatpush.bf16.msra.mxu0 %v10834
    %10906 = vmatmul.bf16.gmra.mxu0 %v10634
    %v10907 = vpop.f32.mrf.mxu0
    %v10908 = vadd.f32 %v10704, %v10907
    %v10909 = vpop.f32.mrf.mxu0
    %10910 = vdwg.mxu0
    %10911 = vmatpush.bf16.msra.mxu0 %v10849
    %10912 = vmatpush.bf16.msra.mxu0 %v10848
    %10913 = vmatpush.bf16.msra.mxu0 %v10847
    %10914 = vmatpush.bf16.msra.mxu0 %v10846
    %10915 = vmatpush.bf16.msra.mxu0 %v10845
    %10916 = vmatpush.bf16.msra.mxu0 %v10844
    %10917 = vmatpush.bf16.msra.mxu0 %v10843
    %10918 = vmatpush.bf16.msra.mxu0 %v10842
    %10919 = vmatmul.bf16.gmra.mxu0 %v10635
    %v10920 = vpop.f32.mrf.mxu0
    %v10921 = vadd.f32 %v10908, %v10920
    %v10922 = vpop.f32.mrf.mxu0
    %10923 = vdwg.mxu0
    %10924 = vmatpush.bf16.msra.mxu0 %v10857
    %10925 = vmatpush.bf16.msra.mxu0 %v10856
    %10926 = vmatpush.bf16.msra.mxu0 %v10855
    %10927 = vmatpush.bf16.msra.mxu0 %v10854
    %10928 = vmatpush.bf16.msra.mxu0 %v10853
    %10929 = vmatpush.bf16.msra.mxu0 %v10852
    %10930 = vmatpush.bf16.msra.mxu0 %v10851
    %10931 = vmatpush.bf16.msra.mxu0 %v10850
    %10932 = vmatmul.bf16.gmra.mxu0 %v10636
    %v10933 = vpop.f32.mrf.mxu0
    %v10934 = vadd.f32 %v10921, %v10933
    %v10935 = vpop.f32.mrf.mxu0
    %10936 = vdwg.mxu0
    %10937 = vmatpush.bf16.msra.mxu0 %v10865
    %10938 = vmatpush.bf16.msra.mxu0 %v10864
    %10939 = vmatpush.bf16.msra.mxu0 %v10863
    %10940 = vmatpush.bf16.msra.mxu0 %v10862
    %10941 = vmatpush.bf16.msra.mxu0 %v10861
    %10942 = vmatpush.bf16.msra.mxu0 %v10860
    %10943 = vmatpush.bf16.msra.mxu0 %v10859
    %10944 = vmatpush.bf16.msra.mxu0 %v10858
    %10945 = vmatmul.bf16.gmra.mxu0 %v10637
    %v10946 = vpop.f32.mrf.mxu0
    %v10947 = vadd.f32 %v10934, %v10946
    %v10948 = vpop.f32.mrf.mxu0
    %10949 = vdwg.mxu0
    %v10950 = vpack.c.bf16 %v10947, %v10947
    %v10951 = vld [vmem:[#allocation16] sm:$0xf]
    %v10952 = vld [vmem:[#allocation16 + $0x4] sm:$0xf]
    %v10953 = vld [vmem:[#allocation16 + $0x8] sm:$0xf]
    %v10954 = vld [vmem:[#allocation16 + $0xc] sm:$0xf]
    %v10955 = vld [vmem:[#allocation16 + $0x10] sm:$0xf]
    %v10956 = vld [vmem:[#allocation16 + $0x14] sm:$0xf]
    %v10957 = vld [vmem:[#allocation16 + $0x18] sm:$0xf]
    %v10958 = vld [vmem:[#allocation16 + $0x1c] sm:$0xf]
    %v10959 = vld [vmem:[#allocation16 + $0x20] sm:$0xf]
    %v10960 = vld [vmem:[#allocation16 + $0x24] sm:$0xf]
    %v10961 = vld [vmem:[#allocation16 + $0x28] sm:$0xf]
    %v10962 = vld [vmem:[#allocation16 + $0x2c] sm:$0xf]
    %v10963 = vld [vmem:[#allocation16 + $0x30] sm:$0xf]
    %v10964 = vld [vmem:[#allocation16 + $0x34] sm:$0xf]
    %v10965 = vld [vmem:[#allocation16 + $0x38] sm:$0xf]
    %v10966 = vld [vmem:[#allocation16 + $0x3c] sm:$0xf]
    %v10967 = vld [vmem:[%s79] sm:$0x1]
    %v10969 = vperm.slane %v10967, 0
    %v10987 = vunpack.c.l.b16 %v10951
    %v10988 = vunpack.c.l.b16 %v10952
    %v10989 = vunpack.c.l.b16 %v10953
    %v10990 = vunpack.c.l.b16 %v10954
    %v10991 = vunpack.c.l.b16 %v10955
    %v10992 = vunpack.c.l.b16 %v10956
    %v10993 = vunpack.c.l.b16 %v10957
    %v10994 = vunpack.c.l.b16 %v10958
    %v10995 = vunpack.c.l.b16 %v10959
    %v10996 = vunpack.c.l.b16 %v10960
    %v10997 = vunpack.c.l.b16 %v10961
    %v10998 = vunpack.c.l.b16 %v10962
    %v10999 = vunpack.c.l.b16 %v10963
    %v11000 = vunpack.c.l.b16 %v10964
    %v11001 = vunpack.c.l.b16 %v10965
    %v11002 = vunpack.c.l.b16 %v10966
    %v11003 = vpack.c.b16 %v10988, %v10987
    %v11004 = vpack.c.b16 %v10990, %v10989
    %v11005 = vpack.c.b16 %v10992, %v10991
    %v11006 = vpack.c.b16 %v10994, %v10993
    %v11007 = vpack.c.b16 %v10996, %v10995
    %v11008 = vpack.c.b16 %v10998, %v10997
    %v11009 = vpack.c.b16 %v11000, %v10999
    %v11010 = vpack.c.b16 %v11002, %v11001
    %11019 = vmatpush.bf16.msra.mxu0 %v11010
    %11020 = vmatpush.bf16.msra.mxu0 %v11009
    %11021 = vmatpush.bf16.msra.mxu0 %v11008
    %11022 = vmatpush.bf16.msra.mxu0 %v11007
    %11023 = vmatpush.bf16.msra.mxu0 %v11006
    %11024 = vmatpush.bf16.msra.mxu0 %v11005
    %11025 = vmatpush.bf16.msra.mxu0 %v11004
    %11026 = vmatpush.bf16.msra.mxu0 %v11003
    %11027 = vmatmul.bf16.gmra.mxu0 %v10950
    %v11028 = vpop.f32.mrf.mxu0
    %v11029 = vadd.f32 %v10969, %v11028
    %v11030 = vpop.f32.mrf.mxu0
    %11031 = vdwg.mxu0
    %v11032 = vmax.f32 %v11029, 0.0
    %v11033 = vpack.c.bf16 %v11032, %v11032
    %v11034 = vld [vmem:[#allocation18] sm:$0xf]
    %v11035 = vld [vmem:[#allocation18 + $0x4] sm:$0xf]
    %v11036 = vld [vmem:[#allocation18 + $0x8] sm:$0xf]
    %v11037 = vld [vmem:[#allocation18 + $0xc] sm:$0xf]
    %v11038 = vld [vmem:[#allocation18 + $0x10] sm:$0xf]
    %v11039 = vld [vmem:[#allocation18 + $0x14] sm:$0xf]
    %v11040 = vld [vmem:[#allocation18 + $0x18] sm:$0xf]
    %v11041 = vld [vmem:[#allocation18 + $0x1c] sm:$0xf]
    %v11042 = vld [vmem:[#allocation18 + $0x20] sm:$0xf]
    %v11043 = vld [vmem:[#allocation18 + $0x24] sm:$0xf]
    %v11044 = vld [vmem:[#allocation18 + $0x28] sm:$0xf]
    %v11045 = vld [vmem:[#allocation18 + $0x2c] sm:$0xf]
    %v11046 = vld [vmem:[#allocation18 + $0x30] sm:$0xf]
    %v11047 = vld [vmem:[#allocation18 + $0x34] sm:$0xf]
    %v11048 = vld [vmem:[#allocation18 + $0x38] sm:$0xf]
    %v11049 = vld [vmem:[#allocation18 + $0x3c] sm:$0xf]
    %v11050 = vld [vmem:[%s81] sm:$0x1]
    %v11052 = vperm.slane %v11050, 0
    %v11070 = vunpack.c.l.b16 %v11034
    %v11071 = vunpack.c.l.b16 %v11035
    %v11072 = vunpack.c.l.b16 %v11036
    %v11073 = vunpack.c.l.b16 %v11037
    %v11074 = vunpack.c.l.b16 %v11038
    %v11075 = vunpack.c.l.b16 %v11039
    %v11076 = vunpack.c.l.b16 %v11040
    %v11077 = vunpack.c.l.b16 %v11041
    %v11078 = vunpack.c.l.b16 %v11042
    %v11079 = vunpack.c.l.b16 %v11043
    %v11080 = vunpack.c.l.b16 %v11044
    %v11081 = vunpack.c.l.b16 %v11045
    %v11082 = vunpack.c.l.b16 %v11046
    %v11083 = vunpack.c.l.b16 %v11047
    %v11084 = vunpack.c.l.b16 %v11048
    %v11085 = vunpack.c.l.b16 %v11049
    %v11086 = vpack.c.b16 %v11071, %v11070
    %v11087 = vpack.c.b16 %v11073, %v11072
    %v11088 = vpack.c.b16 %v11075, %v11074
    %v11089 = vpack.c.b16 %v11077, %v11076
    %v11090 = vpack.c.b16 %v11079, %v11078
    %v11091 = vpack.c.b16 %v11081, %v11080
    %v11092 = vpack.c.b16 %v11083, %v11082
    %v11093 = vpack.c.b16 %v11085, %v11084
    %11102 = vmatpush.bf16.msra.mxu0 %v11093
    %11103 = vmatpush.bf16.msra.mxu0 %v11092
    %11104 = vmatpush.bf16.msra.mxu0 %v11091
    %11105 = vmatpush.bf16.msra.mxu0 %v11090
    %11106 = vmatpush.bf16.msra.mxu0 %v11089
    %11107 = vmatpush.bf16.msra.mxu0 %v11088
    %11108 = vmatpush.bf16.msra.mxu0 %v11087
    %11109 = vmatpush.bf16.msra.mxu0 %v11086
    %11110 = vmatmul.bf16.gmra.mxu0 %v11033
    %v11111 = vpop.f32.mrf.mxu0
    %v11112 = vadd.f32 %v11052, %v11111
    %v11113 = vpop.f32.mrf.mxu0
    %11114 = vdwg.mxu0
    %v11115 = vadd.f32 %v10947, %v11112
    %v11116 = vpack.c.bf16 %v11115, %v11115
    %v11117 = vld [vmem:[#allocation19] sm:$0xf]
    %v11118 = vld [vmem:[#allocation19 + $0x4] sm:$0xf]
    %v11119 = vld [vmem:[#allocation19 + $0x8] sm:$0xf]
    %v11120 = vld [vmem:[#allocation19 + $0xc] sm:$0xf]
    %v11121 = vld [vmem:[#allocation19 + $0x10] sm:$0xf]
    %v11122 = vld [vmem:[#allocation19 + $0x14] sm:$0xf]
    %v11123 = vld [vmem:[#allocation19 + $0x18] sm:$0xf]
    %v11124 = vld [vmem:[#allocation19 + $0x1c] sm:$0xf]
    %v11125 = vld [vmem:[#allocation19 + $0x20] sm:$0xf]
    %v11126 = vld [vmem:[#allocation19 + $0x24] sm:$0xf]
    %v11127 = vld [vmem:[#allocation19 + $0x28] sm:$0xf]
    %v11128 = vld [vmem:[#allocation19 + $0x2c] sm:$0xf]
    %v11129 = vld [vmem:[#allocation19 + $0x30] sm:$0xf]
    %v11130 = vld [vmem:[#allocation19 + $0x34] sm:$0xf]
    %v11131 = vld [vmem:[#allocation19 + $0x38] sm:$0xf]
    %v11132 = vld [vmem:[#allocation19 + $0x3c] sm:$0xf]
    %v11133 = vld [vmem:[%s83] sm:$0x1]
    %v11135 = vperm.slane %v11133, 0
    %v11153 = vunpack.c.l.b16 %v11117
    %v11154 = vunpack.c.l.b16 %v11118
    %v11155 = vunpack.c.l.b16 %v11119
    %v11156 = vunpack.c.l.b16 %v11120
    %v11157 = vunpack.c.l.b16 %v11121
    %v11158 = vunpack.c.l.b16 %v11122
    %v11159 = vunpack.c.l.b16 %v11123
    %v11160 = vunpack.c.l.b16 %v11124
    %v11161 = vunpack.c.l.b16 %v11125
    %v11162 = vunpack.c.l.b16 %v11126
    %v11163 = vunpack.c.l.b16 %v11127
    %v11164 = vunpack.c.l.b16 %v11128
    %v11165 = vunpack.c.l.b16 %v11129
    %v11166 = vunpack.c.l.b16 %v11130
    %v11167 = vunpack.c.l.b16 %v11131
    %v11168 = vunpack.c.l.b16 %v11132
    %v11169 = vpack.c.b16 %v11154, %v11153
    %v11170 = vpack.c.b16 %v11156, %v11155
    %v11171 = vpack.c.b16 %v11158, %v11157
    %v11172 = vpack.c.b16 %v11160, %v11159
    %v11173 = vpack.c.b16 %v11162, %v11161
    %v11174 = vpack.c.b16 %v11164, %v11163
    %v11175 = vpack.c.b16 %v11166, %v11165
    %v11176 = vpack.c.b16 %v11168, %v11167
    %11185 = vmatpush.bf16.msra.mxu0 %v11176
    %11186 = vmatpush.bf16.msra.mxu0 %v11175
    %11187 = vmatpush.bf16.msra.mxu0 %v11174
    %11188 = vmatpush.bf16.msra.mxu0 %v11173
    %11189 = vmatpush.bf16.msra.mxu0 %v11172
    %11190 = vmatpush.bf16.msra.mxu0 %v11171
    %11191 = vmatpush.bf16.msra.mxu0 %v11170
    %11192 = vmatpush.bf16.msra.mxu0 %v11169
    %11193 = vmatmul.bf16.gmra.mxu0 %v11116
    %v11194 = vpop.f32.mrf.mxu0
    %v11195 = vadd.f32 %v11135, %v11194
    %v11196 = vpop.f32.mrf.mxu0
    %11197 = vdwg.mxu0
    %v11198 = vmax.f32 %v11195, 0.0
    %v11199 = vpack.c.bf16 %v11198, %v11198
    %v11200 = vld [vmem:[#allocation21] sm:$0xf]
    %v11201 = vld [vmem:[#allocation21 + $0x4] sm:$0xf]
    %v11202 = vld [vmem:[#allocation21 + $0x8] sm:$0xf]
    %v11203 = vld [vmem:[#allocation21 + $0xc] sm:$0xf]
    %v11204 = vld [vmem:[#allocation21 + $0x10] sm:$0xf]
    %v11205 = vld [vmem:[#allocation21 + $0x14] sm:$0xf]
    %v11206 = vld [vmem:[#allocation21 + $0x18] sm:$0xf]
    %v11207 = vld [vmem:[#allocation21 + $0x1c] sm:$0xf]
    %v11208 = vld [vmem:[#allocation21 + $0x20] sm:$0xf]
    %v11209 = vld [vmem:[#allocation21 + $0x24] sm:$0xf]
    %v11210 = vld [vmem:[#allocation21 + $0x28] sm:$0xf]
    %v11211 = vld [vmem:[#allocation21 + $0x2c] sm:$0xf]
    %v11212 = vld [vmem:[#allocation21 + $0x30] sm:$0xf]
    %v11213 = vld [vmem:[#allocation21 + $0x34] sm:$0xf]
    %v11214 = vld [vmem:[#allocation21 + $0x38] sm:$0xf]
    %v11215 = vld [vmem:[#allocation21 + $0x3c] sm:$0xf]
    %v11216 = vld [vmem:[%s85] sm:$0x1]
    %v11218 = vperm.slane %v11216, 0
    %v11236 = vunpack.c.l.b16 %v11200
    %v11237 = vunpack.c.l.b16 %v11201
    %v11238 = vunpack.c.l.b16 %v11202
    %v11239 = vunpack.c.l.b16 %v11203
    %v11240 = vunpack.c.l.b16 %v11204
    %v11241 = vunpack.c.l.b16 %v11205
    %v11242 = vunpack.c.l.b16 %v11206
    %v11243 = vunpack.c.l.b16 %v11207
    %v11244 = vunpack.c.l.b16 %v11208
    %v11245 = vunpack.c.l.b16 %v11209
    %v11246 = vunpack.c.l.b16 %v11210
    %v11247 = vunpack.c.l.b16 %v11211
    %v11248 = vunpack.c.l.b16 %v11212
    %v11249 = vunpack.c.l.b16 %v11213
    %v11250 = vunpack.c.l.b16 %v11214
    %v11251 = vunpack.c.l.b16 %v11215
    %v11252 = vpack.c.b16 %v11237, %v11236
    %v11253 = vpack.c.b16 %v11239, %v11238
    %v11254 = vpack.c.b16 %v11241, %v11240
    %v11255 = vpack.c.b16 %v11243, %v11242
    %v11256 = vpack.c.b16 %v11245, %v11244
    %v11257 = vpack.c.b16 %v11247, %v11246
    %v11258 = vpack.c.b16 %v11249, %v11248
    %v11259 = vpack.c.b16 %v11251, %v11250
    %11268 = vmatpush.bf16.msra.mxu0 %v11259
    %11269 = vmatpush.bf16.msra.mxu0 %v11258
    %11270 = vmatpush.bf16.msra.mxu0 %v11257
    %11271 = vmatpush.bf16.msra.mxu0 %v11256
    %11272 = vmatpush.bf16.msra.mxu0 %v11255
    %11273 = vmatpush.bf16.msra.mxu0 %v11254
    %11274 = vmatpush.bf16.msra.mxu0 %v11253
    %11275 = vmatpush.bf16.msra.mxu0 %v11252
    %11276 = vmatmul.bf16.gmra.mxu0 %v11199
    %v11277 = vpop.f32.mrf.mxu0
    %v11278 = vadd.f32 %v11218, %v11277
    %v11279 = vpop.f32.mrf.mxu0
    %11280 = vdwg.mxu0
    %v11281 = vadd.f32 %v11115, %v11278
    %v11282 = vpack.c.bf16 %v11281, %v11281
    %v11283 = vld [vmem:[#allocation22] sm:$0xf]
    %v11284 = vld [vmem:[#allocation22 + $0x4] sm:$0xf]
    %v11285 = vld [vmem:[#allocation22 + $0x8] sm:$0xf]
    %v11286 = vld [vmem:[#allocation22 + $0xc] sm:$0xf]
    %v11287 = vld [vmem:[#allocation22 + $0x10] sm:$0xf]
    %v11288 = vld [vmem:[#allocation22 + $0x14] sm:$0xf]
    %v11289 = vld [vmem:[#allocation22 + $0x18] sm:$0xf]
    %v11290 = vld [vmem:[#allocation22 + $0x1c] sm:$0xf]
    %v11291 = vld [vmem:[#allocation22 + $0x20] sm:$0xf]
    %v11292 = vld [vmem:[#allocation22 + $0x24] sm:$0xf]
    %v11293 = vld [vmem:[#allocation22 + $0x28] sm:$0xf]
    %v11294 = vld [vmem:[#allocation22 + $0x2c] sm:$0xf]
    %v11295 = vld [vmem:[#allocation22 + $0x30] sm:$0xf]
    %v11296 = vld [vmem:[#allocation22 + $0x34] sm:$0xf]
    %v11297 = vld [vmem:[#allocation22 + $0x38] sm:$0xf]
    %v11298 = vld [vmem:[#allocation22 + $0x3c] sm:$0xf]
    %v11299 = vld [vmem:[%s87] sm:$0x1]
    %v11301 = vperm.slane %v11299, 0
    %v11319 = vunpack.c.l.b16 %v11283
    %v11320 = vunpack.c.l.b16 %v11284
    %v11321 = vunpack.c.l.b16 %v11285
    %v11322 = vunpack.c.l.b16 %v11286
    %v11323 = vunpack.c.l.b16 %v11287
    %v11324 = vunpack.c.l.b16 %v11288
    %v11325 = vunpack.c.l.b16 %v11289
    %v11326 = vunpack.c.l.b16 %v11290
    %v11327 = vunpack.c.l.b16 %v11291
    %v11328 = vunpack.c.l.b16 %v11292
    %v11329 = vunpack.c.l.b16 %v11293
    %v11330 = vunpack.c.l.b16 %v11294
    %v11331 = vunpack.c.l.b16 %v11295
    %v11332 = vunpack.c.l.b16 %v11296
    %v11333 = vunpack.c.l.b16 %v11297
    %v11334 = vunpack.c.l.b16 %v11298
    %v11335 = vpack.c.b16 %v11320, %v11319
    %v11336 = vpack.c.b16 %v11322, %v11321
    %v11337 = vpack.c.b16 %v11324, %v11323
    %v11338 = vpack.c.b16 %v11326, %v11325
    %v11339 = vpack.c.b16 %v11328, %v11327
    %v11340 = vpack.c.b16 %v11330, %v11329
    %v11341 = vpack.c.b16 %v11332, %v11331
    %v11342 = vpack.c.b16 %v11334, %v11333
    %11351 = vmatpush.bf16.msra.mxu0 %v11342
    %11352 = vmatpush.bf16.msra.mxu0 %v11341
    %11353 = vmatpush.bf16.msra.mxu0 %v11340
    %11354 = vmatpush.bf16.msra.mxu0 %v11339
    %11355 = vmatpush.bf16.msra.mxu0 %v11338
    %11356 = vmatpush.bf16.msra.mxu0 %v11337
    %11357 = vmatpush.bf16.msra.mxu0 %v11336
    %11358 = vmatpush.bf16.msra.mxu0 %v11335
    %11359 = vmatmul.bf16.gmra.mxu0 %v11282
    %v11360 = vpop.f32.mrf.mxu0
    %v11361 = vadd.f32 %v11301, %v11360
    %v11362 = vpop.f32.mrf.mxu0
    %11363 = vdwg.mxu0
    %v11364 = vmax.f32 %v11361, 0.0
    %v11365 = vpack.c.bf16 %v11364, %v11364
    %v11366 = vld [vmem:[#allocation24] sm:$0xf]
    %v11367 = vld [vmem:[#allocation24 + $0x4] sm:$0xf]
    %v11368 = vld [vmem:[#allocation24 + $0x8] sm:$0xf]
    %v11369 = vld [vmem:[#allocation24 + $0xc] sm:$0xf]
    %v11370 = vld [vmem:[#allocation24 + $0x10] sm:$0xf]
    %v11371 = vld [vmem:[#allocation24 + $0x14] sm:$0xf]
    %v11372 = vld [vmem:[#allocation24 + $0x18] sm:$0xf]
    %v11373 = vld [vmem:[#allocation24 + $0x1c] sm:$0xf]
    %v11374 = vld [vmem:[#allocation24 + $0x20] sm:$0xf]
    %v11375 = vld [vmem:[#allocation24 + $0x24] sm:$0xf]
    %v11376 = vld [vmem:[#allocation24 + $0x28] sm:$0xf]
    %v11377 = vld [vmem:[#allocation24 + $0x2c] sm:$0xf]
    %v11378 = vld [vmem:[#allocation24 + $0x30] sm:$0xf]
    %v11379 = vld [vmem:[#allocation24 + $0x34] sm:$0xf]
    %v11380 = vld [vmem:[#allocation24 + $0x38] sm:$0xf]
    %v11381 = vld [vmem:[#allocation24 + $0x3c] sm:$0xf]
    %v11382 = vld [vmem:[%s89] sm:$0x1]
    %v11384 = vperm.slane %v11382, 0
    %v11402 = vunpack.c.l.b16 %v11366
    %v11403 = vunpack.c.l.b16 %v11367
    %v11404 = vunpack.c.l.b16 %v11368
    %v11405 = vunpack.c.l.b16 %v11369
    %v11406 = vunpack.c.l.b16 %v11370
    %v11407 = vunpack.c.l.b16 %v11371
    %v11408 = vunpack.c.l.b16 %v11372
    %v11409 = vunpack.c.l.b16 %v11373
    %v11410 = vunpack.c.l.b16 %v11374
    %v11411 = vunpack.c.l.b16 %v11375
    %v11412 = vunpack.c.l.b16 %v11376
    %v11413 = vunpack.c.l.b16 %v11377
    %v11414 = vunpack.c.l.b16 %v11378
    %v11415 = vunpack.c.l.b16 %v11379
    %v11416 = vunpack.c.l.b16 %v11380
    %v11417 = vunpack.c.l.b16 %v11381
    %v11418 = vpack.c.b16 %v11403, %v11402
    %v11419 = vpack.c.b16 %v11405, %v11404
    %v11420 = vpack.c.b16 %v11407, %v11406
    %v11421 = vpack.c.b16 %v11409, %v11408
    %v11422 = vpack.c.b16 %v11411, %v11410
    %v11423 = vpack.c.b16 %v11413, %v11412
    %v11424 = vpack.c.b16 %v11415, %v11414
    %v11425 = vpack.c.b16 %v11417, %v11416
    %11434 = vmatpush.bf16.msra.mxu0 %v11425
    %11435 = vmatpush.bf16.msra.mxu0 %v11424
    %11436 = vmatpush.bf16.msra.mxu0 %v11423
    %11437 = vmatpush.bf16.msra.mxu0 %v11422
    %11438 = vmatpush.bf16.msra.mxu0 %v11421
    %11439 = vmatpush.bf16.msra.mxu0 %v11420
    %11440 = vmatpush.bf16.msra.mxu0 %v11419
    %11441 = vmatpush.bf16.msra.mxu0 %v11418
    %11442 = vmatmul.bf16.gmra.mxu0 %v11365
    %v11443 = vpop.f32.mrf.mxu0
    %v11444 = vadd.f32 %v11384, %v11443
    %v11445 = vpop.f32.mrf.mxu0
    %11446 = vdwg.mxu0
    %v11447 = vadd.f32 %v11281, %v11444
    %v11448 = vpack.c.bf16 %v11447, %v11447
    %v11449 = vld [vmem:[%s35] sm:$0xf]
    %v11450 = vld [vmem:[%s35 + $0x4] sm:$0xf]
    %v11451 = vld [vmem:[%s35 + $0x8] sm:$0xf]
    %v11452 = vld [vmem:[%s35 + $0xc] sm:$0xf]
    %v11453 = vld [vmem:[%s35 + $0x10] sm:$0xf]
    %v11454 = vld [vmem:[%s35 + $0x14] sm:$0xf]
    %v11455 = vld [vmem:[%s35 + $0x18] sm:$0xf]
    %v11456 = vld [vmem:[%s35 + $0x1c] sm:$0xf]
    %v11457 = vld [vmem:[%s35 + $0x20] sm:$0xf]
    %v11458 = vld [vmem:[%s35 + $0x24] sm:$0xf]
    %v11459 = vld [vmem:[%s35 + $0x28] sm:$0xf]
    %v11460 = vld [vmem:[%s35 + $0x2c] sm:$0xf]
    %v11461 = vld [vmem:[%s35 + $0x30] sm:$0xf]
    %v11462 = vld [vmem:[%s35 + $0x34] sm:$0xf]
    %v11463 = vld [vmem:[%s35 + $0x38] sm:$0xf]
    %v11464 = vld [vmem:[%s35 + $0x3c] sm:$0xf]
    %v11465 = vld [vmem:[%s91] sm:$0x1]
    %v11467 = vperm.slane %v11465, 0
    %v11485 = vunpack.c.l.b16 %v11449
    %v11486 = vunpack.c.l.b16 %v11450
    %v11487 = vunpack.c.l.b16 %v11451
    %v11488 = vunpack.c.l.b16 %v11452
    %v11489 = vunpack.c.l.b16 %v11453
    %v11490 = vunpack.c.l.b16 %v11454
    %v11491 = vunpack.c.l.b16 %v11455
    %v11492 = vunpack.c.l.b16 %v11456
    %v11493 = vunpack.c.l.b16 %v11457
    %v11494 = vunpack.c.l.b16 %v11458
    %v11495 = vunpack.c.l.b16 %v11459
    %v11496 = vunpack.c.l.b16 %v11460
    %v11497 = vunpack.c.l.b16 %v11461
    %v11498 = vunpack.c.l.b16 %v11462
    %v11499 = vunpack.c.l.b16 %v11463
    %v11500 = vunpack.c.l.b16 %v11464
    %v11501 = vpack.c.b16 %v11486, %v11485
    %v11502 = vpack.c.b16 %v11488, %v11487
    %v11503 = vpack.c.b16 %v11490, %v11489
    %v11504 = vpack.c.b16 %v11492, %v11491
    %v11505 = vpack.c.b16 %v11494, %v11493
    %v11506 = vpack.c.b16 %v11496, %v11495
    %v11507 = vpack.c.b16 %v11498, %v11497
    %v11508 = vpack.c.b16 %v11500, %v11499
    %11517 = vmatpush.bf16.msra.mxu0 %v11508
    %11518 = vmatpush.bf16.msra.mxu0 %v11507
    %11519 = vmatpush.bf16.msra.mxu0 %v11506
    %11520 = vmatpush.bf16.msra.mxu0 %v11505
    %11521 = vmatpush.bf16.msra.mxu0 %v11504
    %11522 = vmatpush.bf16.msra.mxu0 %v11503
    %11523 = vmatpush.bf16.msra.mxu0 %v11502
    %11524 = vmatpush.bf16.msra.mxu0 %v11501
    %11525 = vmatmul.bf16.gmra.mxu0 %v11448
    %v11526 = vpop.f32.mrf.mxu0
    %v11527 = vadd.f32 %v11467, %v11526
    %v11528 = vpop.f32.mrf.mxu0
    %11529 = vdwg.mxu0
    %v11530 = vmax.f32 %v11527, 0.0
    %v11531 = vpack.c.bf16 %v11530, %v11530
    %v11532 = vld [vmem:[#allocation25] sm:$0xf]
    %v11533 = vld [vmem:[#allocation25 + $0x4] sm:$0xf]
    %v11534 = vld [vmem:[#allocation25 + $0x8] sm:$0xf]
    %v11535 = vld [vmem:[#allocation25 + $0xc] sm:$0xf]
    %v11536 = vld [vmem:[#allocation25 + $0x10] sm:$0xf]
    %v11537 = vld [vmem:[#allocation25 + $0x14] sm:$0xf]
    %v11538 = vld [vmem:[#allocation25 + $0x18] sm:$0xf]
    %v11539 = vld [vmem:[#allocation25 + $0x1c] sm:$0xf]
    %v11540 = vld [vmem:[#allocation25 + $0x20] sm:$0xf]
    %v11541 = vld [vmem:[#allocation25 + $0x24] sm:$0xf]
    %v11542 = vld [vmem:[#allocation25 + $0x28] sm:$0xf]
    %v11543 = vld [vmem:[#allocation25 + $0x2c] sm:$0xf]
    %v11544 = vld [vmem:[#allocation25 + $0x30] sm:$0xf]
    %v11545 = vld [vmem:[#allocation25 + $0x34] sm:$0xf]
    %v11546 = vld [vmem:[#allocation25 + $0x38] sm:$0xf]
    %v11547 = vld [vmem:[#allocation25 + $0x3c] sm:$0xf]
    %v11548 = vld [vmem:[%s93] sm:$0x1]
    %v11550 = vperm.slane %v11548, 0
    %v11568 = vunpack.c.l.b16 %v11532
    %v11569 = vunpack.c.l.b16 %v11533
    %v11570 = vunpack.c.l.b16 %v11534
    %v11571 = vunpack.c.l.b16 %v11535
    %v11572 = vunpack.c.l.b16 %v11536
    %v11573 = vunpack.c.l.b16 %v11537
    %v11574 = vunpack.c.l.b16 %v11538
    %v11575 = vunpack.c.l.b16 %v11539
    %v11576 = vunpack.c.l.b16 %v11540
    %v11577 = vunpack.c.l.b16 %v11541
    %v11578 = vunpack.c.l.b16 %v11542
    %v11579 = vunpack.c.l.b16 %v11543
    %v11580 = vunpack.c.l.b16 %v11544
    %v11581 = vunpack.c.l.b16 %v11545
    %v11582 = vunpack.c.l.b16 %v11546
    %v11583 = vunpack.c.l.b16 %v11547
    %v11584 = vpack.c.b16 %v11569, %v11568
    %v11585 = vpack.c.b16 %v11571, %v11570
    %v11586 = vpack.c.b16 %v11573, %v11572
    %v11587 = vpack.c.b16 %v11575, %v11574
    %v11588 = vpack.c.b16 %v11577, %v11576
    %v11589 = vpack.c.b16 %v11579, %v11578
    %v11590 = vpack.c.b16 %v11581, %v11580
    %v11591 = vpack.c.b16 %v11583, %v11582
    %11600 = vmatpush.bf16.msra.mxu0 %v11591
    %11601 = vmatpush.bf16.msra.mxu0 %v11590
    %11602 = vmatpush.bf16.msra.mxu0 %v11589
    %11603 = vmatpush.bf16.msra.mxu0 %v11588
    %11604 = vmatpush.bf16.msra.mxu0 %v11587
    %11605 = vmatpush.bf16.msra.mxu0 %v11586
    %11606 = vmatpush.bf16.msra.mxu0 %v11585
    %11607 = vmatpush.bf16.msra.mxu0 %v11584
    %11608 = vmatmul.bf16.gmra.mxu0 %v11531
    %v11609 = vpop.f32.mrf.mxu0
    %v11610 = vadd.f32 %v11550, %v11609
    %v11611 = vpop.f32.mrf.mxu0
    %11612 = vdwg.mxu0
    %v11613 = vadd.f32 %v11447, %v11610
    %v11614 = vpack.c.bf16 %v11613, %v11613
    %v11615 = vld [vmem:[%s39] sm:$0xf]
    %v11616 = vld [vmem:[%s39 + $0x4] sm:$0xf]
    %v11617 = vld [vmem:[%s39 + $0x8] sm:$0xf]
    %v11618 = vld [vmem:[%s39 + $0xc] sm:$0xf]
    %v11619 = vld [vmem:[%s39 + $0x10] sm:$0xf]
    %v11620 = vld [vmem:[%s39 + $0x14] sm:$0xf]
    %v11621 = vld [vmem:[%s39 + $0x18] sm:$0xf]
    %v11622 = vld [vmem:[%s39 + $0x1c] sm:$0xf]
    %v11623 = vld [vmem:[%s39 + $0x20] sm:$0xf]
    %v11624 = vld [vmem:[%s39 + $0x24] sm:$0xf]
    %v11625 = vld [vmem:[%s39 + $0x28] sm:$0xf]
    %v11626 = vld [vmem:[%s39 + $0x2c] sm:$0xf]
    %v11627 = vld [vmem:[%s39 + $0x30] sm:$0xf]
    %v11628 = vld [vmem:[%s39 + $0x34] sm:$0xf]
    %v11629 = vld [vmem:[%s39 + $0x38] sm:$0xf]
    %v11630 = vld [vmem:[%s39 + $0x3c] sm:$0xf]
    %v11631 = vld [vmem:[%s95] sm:$0x1]
    %v11633 = vperm.slane %v11631, 0
    %v11651 = vunpack.c.l.b16 %v11615
    %v11652 = vunpack.c.l.b16 %v11616
    %v11653 = vunpack.c.l.b16 %v11617
    %v11654 = vunpack.c.l.b16 %v11618
    %v11655 = vunpack.c.l.b16 %v11619
    %v11656 = vunpack.c.l.b16 %v11620
    %v11657 = vunpack.c.l.b16 %v11621
    %v11658 = vunpack.c.l.b16 %v11622
    %v11659 = vunpack.c.l.b16 %v11623
    %v11660 = vunpack.c.l.b16 %v11624
    %v11661 = vunpack.c.l.b16 %v11625
    %v11662 = vunpack.c.l.b16 %v11626
    %v11663 = vunpack.c.l.b16 %v11627
    %v11664 = vunpack.c.l.b16 %v11628
    %v11665 = vunpack.c.l.b16 %v11629
    %v11666 = vunpack.c.l.b16 %v11630
    %v11667 = vpack.c.b16 %v11652, %v11651
    %v11668 = vpack.c.b16 %v11654, %v11653
    %v11669 = vpack.c.b16 %v11656, %v11655
    %v11670 = vpack.c.b16 %v11658, %v11657
    %v11671 = vpack.c.b16 %v11660, %v11659
    %v11672 = vpack.c.b16 %v11662, %v11661
    %v11673 = vpack.c.b16 %v11664, %v11663
    %v11674 = vpack.c.b16 %v11666, %v11665
    %11683 = vmatpush.bf16.msra.mxu0 %v11674
    %11684 = vmatpush.bf16.msra.mxu0 %v11673
    %11685 = vmatpush.bf16.msra.mxu0 %v11672
    %11686 = vmatpush.bf16.msra.mxu0 %v11671
    %11687 = vmatpush.bf16.msra.mxu0 %v11670
    %11688 = vmatpush.bf16.msra.mxu0 %v11669
    %11689 = vmatpush.bf16.msra.mxu0 %v11668
    %11690 = vmatpush.bf16.msra.mxu0 %v11667
    %11691 = vmatmul.bf16.gmra.mxu0 %v11614
    %v11692 = vpop.f32.mrf.mxu0
    %v11693 = vadd.f32 %v11633, %v11692
    %v11694 = vpop.f32.mrf.mxu0
    %11695 = vdwg.mxu0
    %v11696 = vpack.c.bf16 %v11693, %v11693
    %v11697 = vld [vmem:[#allocation27] sm:$0xf]
    %v11698 = vld [vmem:[#allocation27 + $0x4] sm:$0xf]
    %v11699 = vld [vmem:[#allocation27 + $0x8] sm:$0xf]
    %v11700 = vld [vmem:[#allocation27 + $0xc] sm:$0xf]
    %v11701 = vld [vmem:[%s97] sm:$0x1]
    %v11703 = vperm.slane %v11701, 0
    %v11709 = vunpack.c.l.b16 %v11697
    %v11710 = vunpack.c.l.b16 %v11698
    %v11711 = vunpack.c.l.b16 %v11699
    %v11712 = vunpack.c.l.b16 %v11700
    %v11713 = vpack.c.b16 %v11710, %v11709
    %v11714 = vpack.c.b16 %v11712, %v11711
    %vm11717 = vcmask 261120
    %v11719 = vsel %vm11717, %v11696, 0
    %11721 = vmatpush.bf16.msra.mxu0 0
    %11722 = vmatpush.bf16.msra.mxu0 0
    %11723 = vmatpush.bf16.msra.mxu0 0
    %11724 = vmatpush.bf16.msra.mxu0 0
    %11725 = vmatpush.bf16.msra.mxu0 0
    %11726 = vmatpush.bf16.msra.mxu0 0
    %11727 = vmatpush.bf16.msra.mxu0 %v11714
    %11728 = vmatpush.bf16.msra.mxu0 %v11713
    %11729 = vmatmul.bf16.gmra.mxu0 %v11719
    %v11730 = vpop.f32.mrf.mxu0
    %v11731 = vadd.f32 %v11703, %v11730
    %v11732 = vpop.f32.mrf.mxu0
    %11733 = vdwg.mxu0
    %v11734 = vmax.f32 %v11731, 0.0
    %v11735 = vpack.c.bf16 %v11734, %v11734
    %v11736 = vld [vmem:[#allocation28] sm:$0xf]
    %v11737 = vld [vmem:[#allocation28 + $0x4] sm:$0xf]
    %v11738 = vld [vmem:[#allocation28 + $0x8] sm:$0xf]
    %v11739 = vld [vmem:[#allocation28 + $0xc] sm:$0xf]
    %v11740 = vld [vmem:[%s99] sm:$0x1]
    %v11742 = vperm.slane %v11740, 0
    %v11748 = vunpack.c.l.b16 %v11736
    %v11749 = vunpack.c.l.b16 %v11737
    %v11750 = vunpack.c.l.b16 %v11738
    %v11751 = vunpack.c.l.b16 %v11739
    %v11752 = vpack.c.b16 %v11749, %v11748
    %v11753 = vpack.c.b16 %v11751, %v11750
    %v11757 = vsel %vm11717, %v11735, 0
    %11759 = vmatpush.bf16.msra.mxu0 0
    %11760 = vmatpush.bf16.msra.mxu0 0
    %11761 = vmatpush.bf16.msra.mxu0 0
    %11762 = vmatpush.bf16.msra.mxu0 0
    %11763 = vmatpush.bf16.msra.mxu0 0
    %11764 = vmatpush.bf16.msra.mxu0 0
    %11765 = vmatpush.bf16.msra.mxu0 %v11753
    %11766 = vmatpush.bf16.msra.mxu0 %v11752
    %11767 = vmatmul.bf16.gmra.mxu0 %v11757
    %v11768 = vpop.f32.mrf.mxu0
    %v11769 = vadd.f32 %v11742, %v11768
    %v11770 = vpop.f32.mrf.mxu0
    %11771 = vdwg.mxu0
    %v11772 = vadd.f32 %v11693, %v11769
    %v11773 = vpack.c.bf16 %v11772, %v11772
    %v11774 = vld [vmem:[#allocation30] sm:$0xf]
    %v11775 = vld [vmem:[#allocation30 + $0x4] sm:$0xf]
    %v11776 = vld [vmem:[#allocation30 + $0x8] sm:$0xf]
    %v11777 = vld [vmem:[#allocation30 + $0xc] sm:$0xf]
    %v11778 = vld [vmem:[%s101] sm:$0x1]
    %v11780 = vperm.slane %v11778, 0
    %v11786 = vunpack.c.l.b16 %v11774
    %v11787 = vunpack.c.l.b16 %v11775
    %v11788 = vunpack.c.l.b16 %v11776
    %v11789 = vunpack.c.l.b16 %v11777
    %v11790 = vpack.c.b16 %v11787, %v11786
    %v11791 = vpack.c.b16 %v11789, %v11788
    %v11795 = vsel %vm11717, %v11773, 0
    %11797 = vmatpush.bf16.msra.mxu0 0
    %11798 = vmatpush.bf16.msra.mxu0 0
    %11799 = vmatpush.bf16.msra.mxu0 0
    %11800 = vmatpush.bf16.msra.mxu0 0
    %11801 = vmatpush.bf16.msra.mxu0 0
    %11802 = vmatpush.bf16.msra.mxu0 0
    %11803 = vmatpush.bf16.msra.mxu0 %v11791
    %11804 = vmatpush.bf16.msra.mxu0 %v11790
    %11805 = vmatmul.bf16.gmra.mxu0 %v11795
    %v11806 = vpop.f32.mrf.mxu0
    %v11807 = vadd.f32 %v11780, %v11806
    %v11808 = vpop.f32.mrf.mxu0
    %11809 = vdwg.mxu0
    %v11810 = vmax.f32 %v11807, 0.0
    %v11811 = vpack.c.bf16 %v11810, %v11810
    %v11812 = vld [vmem:[#allocation31] sm:$0xf]
    %v11813 = vld [vmem:[#allocation31 + $0x4] sm:$0xf]
    %v11814 = vld [vmem:[#allocation31 + $0x8] sm:$0xf]
    %v11815 = vld [vmem:[#allocation31 + $0xc] sm:$0xf]
    %v11816 = vld [vmem:[%s103] sm:$0x1]
    %v11818 = vperm.slane %v11816, 0
    %v11824 = vunpack.c.l.b16 %v11812
    %v11825 = vunpack.c.l.b16 %v11813
    %v11826 = vunpack.c.l.b16 %v11814
    %v11827 = vunpack.c.l.b16 %v11815
    %v11828 = vpack.c.b16 %v11825, %v11824
    %v11829 = vpack.c.b16 %v11827, %v11826
    %v11833 = vsel %vm11717, %v11811, 0
    %11835 = vmatpush.bf16.msra.mxu0 0
    %11836 = vmatpush.bf16.msra.mxu0 0
    %11837 = vmatpush.bf16.msra.mxu0 0
    %11838 = vmatpush.bf16.msra.mxu0 0
    %11839 = vmatpush.bf16.msra.mxu0 0
    %11840 = vmatpush.bf16.msra.mxu0 0
    %11841 = vmatpush.bf16.msra.mxu0 %v11829
    %11842 = vmatpush.bf16.msra.mxu0 %v11828
    %11843 = vmatmul.bf16.gmra.mxu0 %v11833
    %v11844 = vpop.f32.mrf.mxu0
    %v11845 = vadd.f32 %v11818, %v11844
    %v11846 = vpop.f32.mrf.mxu0
    %11847 = vdwg.mxu0
    %v11848 = vadd.f32 %v11772, %v11845
    %v11849 = vpack.c.bf16 %v11848, %v11848
    %v11850 = vld [vmem:[#allocation33] sm:$0xf]
    %v11851 = vld [vmem:[#allocation33 + $0x4] sm:$0xf]
    %v11852 = vld [vmem:[#allocation33 + $0x8] sm:$0xf]
    %v11853 = vld [vmem:[#allocation33 + $0xc] sm:$0xf]
    %v11854 = vld [vmem:[%s105] sm:$0x1]
    %v11856 = vperm.slane %v11854, 0
    %v11862 = vunpack.c.l.b16 %v11850
    %v11863 = vunpack.c.l.b16 %v11851
    %v11864 = vunpack.c.l.b16 %v11852
    %v11865 = vunpack.c.l.b16 %v11853
    %v11866 = vpack.c.b16 %v11863, %v11862
    %v11867 = vpack.c.b16 %v11865, %v11864
    %v11871 = vsel %vm11717, %v11849, 0
    %11873 = vmatpush.bf16.msra.mxu0 0
    %11874 = vmatpush.bf16.msra.mxu0 0
    %11875 = vmatpush.bf16.msra.mxu0 0
    %11876 = vmatpush.bf16.msra.mxu0 0
    %11877 = vmatpush.bf16.msra.mxu0 0
    %11878 = vmatpush.bf16.msra.mxu0 0
    %11879 = vmatpush.bf16.msra.mxu0 %v11867
    %11880 = vmatpush.bf16.msra.mxu0 %v11866
    %11881 = vmatmul.bf16.gmra.mxu0 %v11871
    %v11882 = vpop.f32.mrf.mxu0
    %v11883 = vadd.f32 %v11856, %v11882
    %v11884 = vpop.f32.mrf.mxu0
    %11885 = vdwg.mxu0
    %v11886 = vmax.f32 %v11883, 0.0
    %v11887 = vpack.c.bf16 %v11886, %v11886
    %v11888 = vld [vmem:[#allocation34] sm:$0xf]
    %v11889 = vld [vmem:[#allocation34 + $0x4] sm:$0xf]
    %v11890 = vld [vmem:[#allocation34 + $0x8] sm:$0xf]
    %v11891 = vld [vmem:[#allocation34 + $0xc] sm:$0xf]
    %v11892 = vld [vmem:[%s107] sm:$0x1]
    %v11894 = vperm.slane %v11892, 0
    %v11900 = vunpack.c.l.b16 %v11888
    %v11901 = vunpack.c.l.b16 %v11889
    %v11902 = vunpack.c.l.b16 %v11890
    %v11903 = vunpack.c.l.b16 %v11891
    %v11904 = vpack.c.b16 %v11901, %v11900
    %v11905 = vpack.c.b16 %v11903, %v11902
    %v11909 = vsel %vm11717, %v11887, 0
    %11911 = vmatpush.bf16.msra.mxu0 0
    %11912 = vmatpush.bf16.msra.mxu0 0
    %11913 = vmatpush.bf16.msra.mxu0 0
    %11914 = vmatpush.bf16.msra.mxu0 0
    %11915 = vmatpush.bf16.msra.mxu0 0
    %11916 = vmatpush.bf16.msra.mxu0 0
    %11917 = vmatpush.bf16.msra.mxu0 %v11905
    %11918 = vmatpush.bf16.msra.mxu0 %v11904
    %11919 = vmatmul.bf16.gmra.mxu0 %v11909
    %v11920 = vpop.f32.mrf.mxu0
    %v11921 = vadd.f32 %v11894, %v11920
    %v11922 = vpop.f32.mrf.mxu0
    %11923 = vdwg.mxu0
    %v11924 = vadd.f32 %v11848, %v11921
    %v11925 = vpack.c.bf16 %v11924, %v11924
    %v11926 = vld [vmem:[#allocation36] sm:$0xf]
    %v11927 = vld [vmem:[#allocation36 + $0x4] sm:$0xf]
    %v11928 = vld [vmem:[#allocation36 + $0x8] sm:$0xf]
    %v11929 = vld [vmem:[#allocation36 + $0xc] sm:$0xf]
    %v11930 = vld [vmem:[%s109] sm:$0x1]
    %v11932 = vperm.slane %v11930, 0
    %v11938 = vunpack.c.l.b16 %v11926
    %v11939 = vunpack.c.l.b16 %v11927
    %v11940 = vunpack.c.l.b16 %v11928
    %v11941 = vunpack.c.l.b16 %v11929
    %v11942 = vpack.c.b16 %v11939, %v11938
    %v11943 = vpack.c.b16 %v11941, %v11940
    %v11947 = vsel %vm11717, %v11925, 0
    %11949 = vmatpush.bf16.msra.mxu0 0
    %11950 = vmatpush.bf16.msra.mxu0 0
    %11951 = vmatpush.bf16.msra.mxu0 0
    %11952 = vmatpush.bf16.msra.mxu0 0
    %11953 = vmatpush.bf16.msra.mxu0 0
    %11954 = vmatpush.bf16.msra.mxu0 0
    %11955 = vmatpush.bf16.msra.mxu0 %v11943
    %11956 = vmatpush.bf16.msra.mxu0 %v11942
    %11957 = vmatmul.bf16.gmra.mxu0 %v11947
    %v11958 = vpop.f32.mrf.mxu0
    %v11959 = vadd.f32 %v11932, %v11958
    %v11960 = vpop.f32.mrf.mxu0
    %11961 = vdwg.mxu0
    %v11962 = vmax.f32 %v11959, 0.0
    %v11963 = vpack.c.bf16 %v11962, %v11962
    %v11964 = vld [vmem:[#allocation37] sm:$0xf]
    %v11965 = vld [vmem:[#allocation37 + $0x4] sm:$0xf]
    %v11966 = vld [vmem:[#allocation37 + $0x8] sm:$0xf]
    %v11967 = vld [vmem:[#allocation37 + $0xc] sm:$0xf]
    %v11968 = vld [vmem:[%s111] sm:$0x1]
    %v11970 = vperm.slane %v11968, 0
    %v11976 = vunpack.c.l.b16 %v11964
    %v11977 = vunpack.c.l.b16 %v11965
    %v11978 = vunpack.c.l.b16 %v11966
    %v11979 = vunpack.c.l.b16 %v11967
    %v11980 = vpack.c.b16 %v11977, %v11976
    %v11981 = vpack.c.b16 %v11979, %v11978
    %v11985 = vsel %vm11717, %v11963, 0
    %11987 = vmatpush.bf16.msra.mxu0 0
    %11988 = vmatpush.bf16.msra.mxu0 0
    %11989 = vmatpush.bf16.msra.mxu0 0
    %11990 = vmatpush.bf16.msra.mxu0 0
    %11991 = vmatpush.bf16.msra.mxu0 0
    %11992 = vmatpush.bf16.msra.mxu0 0
    %11993 = vmatpush.bf16.msra.mxu0 %v11981
    %11994 = vmatpush.bf16.msra.mxu0 %v11980
    %11995 = vmatmul.bf16.gmra.mxu0 %v11985
    %v11996 = vpop.f32.mrf.mxu0
    %v11997 = vadd.f32 %v11970, %v11996
    %v11998 = vpop.f32.mrf.mxu0
    %11999 = vdwg.mxu0
    %v12000 = vadd.f32 %v11924, %v11997
    %v12001 = vpack.c.bf16 %v12000, %v12000
    %v12002 = vld [vmem:[#allocation39] sm:$0xf]
    %v12003 = vld [vmem:[#allocation39 + $0x4] sm:$0xf]
    %v12004 = vld [vmem:[#allocation39 + $0x8] sm:$0xf]
    %v12005 = vld [vmem:[#allocation39 + $0xc] sm:$0xf]
    %v12006 = vld [vmem:[#allocation48] sm:$0x1]
    %v12008 = vperm.slane %v12006, 0
    %v12014 = vunpack.c.l.b16 %v12002
    %v12015 = vunpack.c.l.b16 %v12003
    %v12016 = vunpack.c.l.b16 %v12004
    %v12017 = vunpack.c.l.b16 %v12005
    %v12018 = vpack.c.b16 %v12015, %v12014
    %v12019 = vpack.c.b16 %v12017, %v12016
    %v12023 = vsel %vm11717, %v12001, 0
    %12025 = vmatpush.bf16.msra.mxu0 0
    %12026 = vmatpush.bf16.msra.mxu0 0
    %12027 = vmatpush.bf16.msra.mxu0 0
    %12028 = vmatpush.bf16.msra.mxu0 0
    %12029 = vmatpush.bf16.msra.mxu0 0
    %12030 = vmatpush.bf16.msra.mxu0 0
    %12031 = vmatpush.bf16.msra.mxu0 %v12019
    %12032 = vmatpush.bf16.msra.mxu0 %v12018
    %12033 = vmatmul.bf16.gmra.mxu0 %v12023
    %v12034 = vpop.f32.mrf.mxu0
    %v12035 = vadd.f32 %v12008, %v12034
    %v12036 = vpop.f32.mrf.mxu0
    %12037 = vdwg.mxu0
    %12038 = vst [vmem:[%s115] sm:$0xff] %v12035
    // Predicated region
    $region354: #{encoder_forward.1} parent=1 // pred_check
      _
    $region355: #{encoder_forward.1} parent=1 // pred_check_branch
      %12040 = sbr.rel (0) target = $region357
    $region356: #{encoder_forward.1} parent=1 // pred_region
      _
    $region357: #{encoder_forward.1} parent=1 // pred_fallthru
      _
    // Predicated region
    $region358: #{encoder_forward.1} parent=1 // pred_check
      _
    $region359: #{encoder_forward.1} parent=1 // pred_check_branch
      %12042 = sbr.rel (0) target = $region361
    $region360: #{encoder_forward.1} parent=1 // pred_region
      _
    $region361: #{encoder_forward.1} parent=1 // pred_fallthru
      _
    %12043 = vsyncpa [#allocation3], 1
    %12044 = vsyncpa [#allocation5], 1
    %12045 = vsyncpa [#allocation8], 1
    %12046 = vsyncpa [#allocation11], 1
    %12047 = vsyncpa [#allocation14], 1
    %12048 = vsyncpa [#allocation17], 1
    %12049 = vsyncpa [#allocation20], 1
    %12050 = vsyncpa [#allocation23], 1
    %12051 = vsyncpa [#allocation26], 1
    %12052 = vsyncpa [#allocation29], 1
    %12053 = vsyncpa [#allocation32], 1
    %12054 = vsyncpa [#allocation35], 1
    %12055 = vsyncpa [#allocation38], 1
    %12056 = vsyncpa [#allocation41], 1
    %12057 = vsyncpa [#allocation44], 1
    %12058 = vsyncpa [#allocation47], 1

</llo_original>
